<compile_context>
chip_gen: v6e
topology: v6e:2x2x1
jax: 0.10.0
libtpu: 0.0.40
codegen_flags: <defaults>
</compile_context>

<pallas_src>
import functools
import math

import numpy as np
import jax
import jax.numpy as jnp
from jax import lax
from jax.experimental import pallas as pl
from jax.experimental.pallas import tpu as pltpu


# ----------------------------------------------------------------------------
# Network geometry.
# ----------------------------------------------------------------------------
IN_CH = 4
CONV_CH = 32
H0 = W0 = 42
H1 = W1 = 20
H2 = W2 = 9
H3 = W3 = 4
FC1_IN = CONV_CH * H3 * W3      # 512
FC1_OUT = 128
HEAD_WIDTH = 128                # fused [fc2a | fc2s | zero-pad] head, lane dense
OUT_SUBLANES = 8                # output padded to a full (8, 128) tile


# ----------------------------------------------------------------------------
# The single fused kernel (one image per grid step).
# Activation layout inside the kernel is 2-D: (H, W*C) with channel fastest.
# ----------------------------------------------------------------------------
def _fused_kernel(x_ref,
                  s1_ref, t1_ref, b1_ref,
                  s2_ref, t2_ref, b2_ref,
                  s3_ref, t3_ref, b3_ref,
                  wf1_ref, bf1_ref,
                  wh_ref, bh_ref,
                  o_ref):
    f32 = jnp.float32
    bf16 = jnp.bfloat16

    # ---- conv1 (reads the raw NCHW block; the channel loop + per-channel
    #      Toeplitz slices fold the layout, no transpose needed) ---------------
    acc1 = jnp.zeros((H1, W1 * CONV_CH), f32)
    for i in range(3):
        s1_i = s1_ref[i]                                           # (20, 42) bf16
        for c in range(IN_CH):
            xc = x_ref[0, c].astype(bf16)                          # (42, 42)
            rows = jnp.dot(s1_i, xc, preferred_element_type=f32)   # (20, 42)
            acc1 = acc1 + jnp.dot(rows.astype(bf16), t1_ref[i, c],
                                  preferred_element_type=f32)      # (20, 640)
    a1 = jnp.maximum(acc1 + b1_ref[...], 0.0).astype(bf16)         # (20, 640)

    # ---- conv2 ---------------------------------------------------------------
    acc2 = jnp.zeros((H2, W2 * CONV_CH), f32)
    for i in range(3):
        rows = jnp.dot(s2_ref[i], a1, preferred_element_type=f32)  # (9, 640)
        acc2 = acc2 + jnp.dot(rows.astype(bf16), t2_ref[i],
                              preferred_element_type=f32)          # (9, 288)
    a2 = jnp.maximum(acc2 + b2_ref[...], 0.0).astype(bf16)         # (9, 288)

    # ---- conv3 ---------------------------------------------------------------
    acc3 = jnp.zeros((H3, W3 * CONV_CH), f32)
    for i in range(3):
        rows = jnp.dot(s3_ref[i], a2, preferred_element_type=f32)  # (4, 288)
        acc3 = acc3 + jnp.dot(rows.astype(bf16), t3_ref[i],
                              preferred_element_type=f32)          # (4, 128)
    a3 = jnp.maximum(acc3 + b3_ref[...], 0.0).astype(bf16)         # (4, 128)

    # ---- fc1 (PyTorch's (C,H,W) flatten is folded into wf1's row order) -----
    accf = jnp.zeros((1, FC1_OUT), f32)
    for h in range(H3):
        accf = accf + jnp.dot(a3[h:h + 1, :], wf1_ref[h],
                              preferred_element_type=f32)          # (1, 128)
    f1 = jnp.maximum(accf + bf1_ref[...], 0.0).astype(bf16)        # (1, 128)

    # ---- fused heads: [fc2a | fc2s | zero-pad] -> lane-dense (1, 128) -------
    head = jnp.dot(f1, wh_ref[...], preferred_element_type=f32) + bh_ref[...]

    # write one full, unmasked (8, 128) tile per image (row 0 carries the data)
    o_ref[0] = jnp.broadcast_to(head, (OUT_SUBLANES, HEAD_WIDTH))


# ----------------------------------------------------------------------------
# One-time weight preparation (all layout folding happens here, off the
# forward-pass critical path).
# ----------------------------------------------------------------------------
def _selection_matrices(h_in, h_out, stride=2, kh=3):
    """S[i, r, h] = 1 iff h == stride*r + i  (stride-2 row pick per tap row)."""
    i = jnp.arange(kh)[:, None, None]
    r = jnp.arange(h_out)[None, :, None]
    h = jnp.arange(h_in)[None, None, :]
    return (h == stride * r + i).astype(jnp.float32)


def _toeplitz_interleaved(wconv, w_in, w_out, stride=2):
    """T[i, w*Cin + c, ow*Cout + o] = wconv[o, c, i, w - stride*ow] (valid taps)."""
    cout, cin, kh, kw = wconv.shape
    j = jnp.arange(w_in)[:, None] - stride * jnp.arange(w_out)[None, :]
    valid = (j >= 0) & (j < kw)
    jc = jnp.clip(j, 0, kw - 1)
    wt = jnp.transpose(wconv, (2, 3, 1, 0))              # (kh, kw, cin, cout)
    t = wt[:, jc, :, :]                                  # (kh, w_in, w_out, cin, cout)
    t = jnp.where(valid[None, :, :, None, None], t, 0.0)
    t = jnp.transpose(t, (0, 1, 3, 2, 4))                # (kh, w_in, cin, w_out, cout)
    return t.reshape(kh, w_in * cin, w_out * cout)


def _toeplitz_per_channel(wconv, w_in, w_out, stride=2):
    """T[i, c, w, ow*Cout + o] = wconv[o, c, i, w - stride*ow] (valid taps)."""
    cout, cin, kh, kw = wconv.shape
    j = jnp.arange(w_in)[:, None] - stride * jnp.arange(w_out)[None, :]
    valid = (j >= 0) & (j < kw)
    jc = jnp.clip(j, 0, kw - 1)
    wt = jnp.transpose(wconv, (2, 3, 1, 0))              # (kh, kw, cin, cout)
    t = wt[:, jc, :, :]                                  # (kh, w_in, w_out, cin, cout)
    t = jnp.where(valid[None, :, :, None, None], t, 0.0)
    t = jnp.transpose(t, (0, 3, 1, 2, 4))                # (kh, cin, w_in, w_out, cout)
    return t.reshape(kh, cin, w_in, w_out * cout)


def prepare_kernel_params(params, action_size):
    assert action_size + 1 <= HEAD_WIDTH
    bf16, f32 = jnp.bfloat16, jnp.float32
    w1, b1 = params["conv1"]
    w2, b2 = params["conv2"]
    w3, b3 = params["conv3"]
    wf, bf = params["fc1"]          # (128, 512), (128,)   (PyTorch (out, in))
    wa, ba = params["fc2a"]         # (A, 128), (A,)
    ws, bs = params["fc2s"]         # (1, 128), (1,)

    kp = {}
    kp["s1"] = _selection_matrices(H0, H1).astype(bf16)           # (3, 20, 42)
    kp["t1"] = _toeplitz_per_channel(w1, W0, W1).astype(bf16)     # (3, 4, 42, 640)
    kp["b1"] = jnp.tile(b1, W1)[None, :].astype(f32)              # (1, 640)

    kp["s2"] = _selection_matrices(H1, H2).astype(bf16)           # (3, 9, 20)
    kp["t2"] = _toeplitz_interleaved(w2, W1, W2).astype(bf16)     # (3, 640, 288)
    kp["b2"] = jnp.tile(b2, W2)[None, :].astype(f32)              # (1, 288)

    kp["s3"] = _selection_matrices(H2, H3).astype(bf16)           # (3, 4, 9)
    kp["t3"] = _toeplitz_interleaved(w3, W2, W3).astype(bf16)     # (3, 288, 128)
    kp["b3"] = jnp.tile(b3, W3)[None, :].astype(f32)              # (1, 128)

    # fc1: fold the NCHW flatten order (c*16 + h*4 + w) into per-spatial-row
    # weight blocks acting on the kernel's (w*C + c) activation layout.
    wf1 = wf.reshape(FC1_OUT, CONV_CH, H3, W3)                    # (o, c, h, w)
    wf1 = jnp.transpose(wf1, (2, 3, 1, 0))                        # (h, w, c, o)
    kp["wf1"] = wf1.reshape(H3, W3 * CONV_CH, FC1_OUT).astype(bf16)
    kp["bf1"] = bf[None, :].astype(f32)                           # (1, 128)

    # fused heads: columns [0:A] = fc2a, column A = fc2s, rest zero.
    wh = jnp.concatenate([wa.T, ws.T], axis=1)                    # (128, A+1)
    wh = jnp.pad(wh, ((0, 0), (0, HEAD_WIDTH - (action_size + 1))))
    bh = jnp.pad(jnp.concatenate([ba, bs]),
                 (0, HEAD_WIDTH - (action_size + 1)))[None, :]
    kp["wh"] = wh.astype(bf16)                                    # (128, 128)
    kp["bh"] = bh.astype(f32)                                     # (1, 128)
    return kp


# ----------------------------------------------------------------------------
# Forward pass: one pallas_call for the whole network.
# ----------------------------------------------------------------------------
_WEIGHT_ORDER = ("s1", "t1", "b1", "s2", "t2", "b2", "s3", "t3", "b3",
                 "wf1", "bf1", "wh", "bh")


def network_forward(kparams, state, action_size):
    B = state.shape[0]
    assert state.shape[1:] == (IN_CH, H0, W0)

    weights = [kparams[k] for k in _WEIGHT_ORDER]

    def const_spec(arr):
        nd = arr.ndim
        return pl.BlockSpec(arr.shape, lambda b, _nd=nd: (0,) * _nd)

    in_specs = [pl.BlockSpec((1, IN_CH, H0, W0), lambda b: (b, 0, 0, 0))]
    in_specs += [const_spec(w) for w in weights]

    out = pl.pallas_call(
        _fused_kernel,
        out_shape=jax.ShapeDtypeStruct((B, OUT_SUBLANES, HEAD_WIDTH), jnp.float32),
        grid_spec=pltpu.PrefetchScalarGridSpec(
            num_scalar_prefetch=0,
            grid=(B,),
            in_specs=in_specs,
            out_specs=pl.BlockSpec((1, OUT_SUBLANES, HEAD_WIDTH),
                                   lambda b: (b, 0, 0)),
        ),
        compiler_params=pltpu.CompilerParams(
            dimension_semantics=("parallel",),
            vmem_limit_bytes=32 * 1024 * 1024,
        ),
    )(state, *weights)

    head = out[:, 0, :]                                      # (B, 128)
    action_values = head[:, :action_size]                    # (B, A)
    # Matches PyTorch `self.fc2s(x)[0]` -> shape (1,)
    state_values = head[0, action_size:action_size + 1]
    return action_values, state_values


# ----------------------------------------------------------------------------
# Parameters (PyTorch-layout, PyTorch-default-like uniform init) + f32 reference.
# ----------------------------------------------------------------------------
def _uniform(key, shape, bound):
    return jax.random.uniform(key, shape, jnp.float32, -bound, bound)


def init_params(key, action_size):
    keys = jax.random.split(key, 12)

    def conv(kw, kb, cout, cin):
        bound = 1.0 / math.sqrt(cin * 9)
        return _uniform(kw, (cout, cin, 3, 3), bound), _uniform(kb, (cout,), bound)

    def linear(kw, kb, fout, fin):
        bound = 1.0 / math.sqrt(fin)
        return _uniform(kw, (fout, fin), bound), _uniform(kb, (fout,), bound)

    return {
        "conv1": conv(keys[0], keys[1], CONV_CH, IN_CH),
        "conv2": conv(keys[2], keys[3], CONV_CH, CONV_CH),
        "conv3": conv(keys[4], keys[5], CONV_CH, CONV_CH),
        "fc1": linear(keys[6], keys[7], FC1_OUT, FC1_IN),
        "fc2a": linear(keys[8], keys[9], action_size, FC1_OUT),
        "fc2s": linear(keys[10], keys[11], 1, FC1_OUT),
    }


def reference_forward(params, state):
    x = state
    for name in ("conv1", "conv2", "conv3"):
        w, b = params[name]
        x = lax.conv_general_dilated(x, w, window_strides=(2, 2), padding="VALID",
                                     dimension_numbers=("NCHW", "OIHW", "NCHW"))
        x = jax.nn.relu(x + b[None, :, None, None])
    x = x.reshape(x.shape[0], -1)                            # (B, 512), (C,H,W) order
    wf, bf = params["fc1"]
    x = jax.nn.relu(x @ wf.T + bf)
    wa, ba = params["fc2a"]
    ws, bs = params["fc2s"]
    action_values = x @ wa.T + ba
    state_values = (x @ ws.T + bs)[0]
    return action_values, state_values


if __name__ == "__main__":
    ACTION_SIZE = 6
    BATCH = 2
    key = jax.random.PRNGKey(0)
    k_params, k_input = jax.random.split(key)

    params = init_params(k_params, ACTION_SIZE)
    kparams = prepare_kernel_params(params, ACTION_SIZE)     # one-time layout folding
    state = jax.random.normal(k_input, (BATCH, IN_CH, H0, W0), dtype=jnp.float32)

    fwd = jax.jit(functools.partial(network_forward, action_size=ACTION_SIZE))
    action_values, state_values = fwd(kparams, state)
    jax.block_until_ready((action_values, state_values))

    assert action_values.shape == (BATCH, ACTION_SIZE)
    assert state_values.shape == (1,)

    # Numerical check against a pure-JAX f32 reference (kernel matmuls run in
    # bf16 with f32 accumulation, hence the tolerance).
    ref_a, ref_s = jax.jit(reference_forward)(params, state)
    np.testing.assert_allclose(np.asarray(action_values), np.asarray(ref_a),
                               rtol=3e-2, atol=3e-2)
    np.testing.assert_allclose(np.asarray(state_values), np.asarray(ref_s),
                               rtol=3e-2, atol=3e-2)
    print("KERNEL_OK")
</pallas_src>

<mosaic_0001>
module attributes {stable_mosaic.version = 11 : i64} {
  func.func @_fused_kernel(%arg0: i32, %arg1: memref<1x4x42x42xf32, #tpu.memory_space<vmem>>, %arg2: memref<3x20x42xbf16, #tpu.memory_space<vmem>>, %arg3: memref<3x4x42x640xbf16, #tpu.memory_space<vmem>>, %arg4: memref<1x640xf32, #tpu.memory_space<vmem>>, %arg5: memref<3x9x20xbf16, #tpu.memory_space<vmem>>, %arg6: memref<3x640x288xbf16, #tpu.memory_space<vmem>>, %arg7: memref<1x288xf32, #tpu.memory_space<vmem>>, %arg8: memref<3x4x9xbf16, #tpu.memory_space<vmem>>, %arg9: memref<3x288x128xbf16, #tpu.memory_space<vmem>>, %arg10: memref<1x128xf32, #tpu.memory_space<vmem>>, %arg11: memref<4x128x128xbf16, #tpu.memory_space<vmem>>, %arg12: memref<1x128xf32, #tpu.memory_space<vmem>>, %arg13: memref<128x128xbf16, #tpu.memory_space<vmem>>, %arg14: memref<1x128xf32, #tpu.memory_space<vmem>>, %arg15: memref<1x8x128xf32, #tpu.memory_space<vmem>>) attributes {dimension_semantics = [#tpu.dimension_semantics<parallel>], iteration_bounds = array<i64: 2>, scalar_prefetch = 0 : i64, scratch_operands = 0 : i64, tpu.core_type = #tpu.core_type<tc>, window_params = [{transform_indices = @transform_0, window_bounds = array<i64: 1, 4, 42, 42>}, {pipeline_mode = #tpu.pipeline_mode<synchronous>, transform_indices = @transform_1, window_bounds = array<i64: 3, 20, 42>}, {pipeline_mode = #tpu.pipeline_mode<synchronous>, transform_indices = @transform_2, window_bounds = array<i64: 3, 4, 42, 640>}, {pipeline_mode = #tpu.pipeline_mode<synchronous>, transform_indices = @transform_3, window_bounds = array<i64: 1, 640>}, {pipeline_mode = #tpu.pipeline_mode<synchronous>, transform_indices = @transform_4, window_bounds = array<i64: 3, 9, 20>}, {pipeline_mode = #tpu.pipeline_mode<synchronous>, transform_indices = @transform_5, window_bounds = array<i64: 3, 640, 288>}, {pipeline_mode = #tpu.pipeline_mode<synchronous>, transform_indices = @transform_6, window_bounds = array<i64: 1, 288>}, {pipeline_mode = #tpu.pipeline_mode<synchronous>, transform_indices = @transform_7, window_bounds = array<i64: 3, 4, 9>}, {pipeline_mode = #tpu.pipeline_mode<synchronous>, transform_indices = @transform_8, window_bounds = array<i64: 3, 288, 128>}, {pipeline_mode = #tpu.pipeline_mode<synchronous>, transform_indices = @transform_9, window_bounds = array<i64: 1, 128>}, {pipeline_mode = #tpu.pipeline_mode<synchronous>, transform_indices = @transform_10, window_bounds = array<i64: 4, 128, 128>}, {pipeline_mode = #tpu.pipeline_mode<synchronous>, transform_indices = @transform_11, window_bounds = array<i64: 1, 128>}, {pipeline_mode = #tpu.pipeline_mode<synchronous>, transform_indices = @transform_12, window_bounds = array<i64: 128, 128>}, {pipeline_mode = #tpu.pipeline_mode<synchronous>, transform_indices = @transform_13, window_bounds = array<i64: 1, 128>}, {transform_indices = @transform_14, window_bounds = array<i64: 1, 8, 128>}]} {
    %cst = arith.constant 0.000000e+00 : f32
    %0 = vector.broadcast %cst : f32 to vector<20x640xf32>
    %c0 = arith.constant 0 : index
    %c0_0 = arith.constant 0 : index
    %c0_1 = arith.constant 0 : index
    %1 = vector.load %arg2[%c0, %c0_0, %c0_1] : memref<3x20x42xbf16, #tpu.memory_space<vmem>>, vector<1x20x42xbf16>
    %2 = vector.shape_cast %1 : vector<1x20x42xbf16> to vector<20x42xbf16>
    %c0_2 = arith.constant 0 : index
    %c0_3 = arith.constant 0 : index
    %c0_4 = arith.constant 0 : index
    %c0_5 = arith.constant 0 : index
    %3 = vector.load %arg1[%c0_2, %c0_3, %c0_4, %c0_5] : memref<1x4x42x42xf32, #tpu.memory_space<vmem>>, vector<1x1x42x42xf32>
    %4 = vector.shape_cast %3 : vector<1x1x42x42xf32> to vector<42x42xf32>
    %5 = arith.truncf %4 : vector<42x42xf32> to vector<42x42xbf16>
    %cst_6 = arith.constant dense<0.000000e+00> : vector<20x42xf32>
    %6 = tpu.matmul %2, %5, %cst_6 {dimension_numbers = #tpu.dot_dimension_numbers<[1], [0], [0], [1], [0, 0, 1, 1], [], []>} : vector<20x42xbf16>, vector<42x42xbf16>, vector<20x42xf32> -> vector<20x42xf32>
    %7 = arith.truncf %6 : vector<20x42xf32> to vector<20x42xbf16>
    %c0_7 = arith.constant 0 : index
    %c0_8 = arith.constant 0 : index
    %c0_9 = arith.constant 0 : index
    %c0_10 = arith.constant 0 : index
    %8 = vector.load %arg3[%c0_7, %c0_8, %c0_9, %c0_10] : memref<3x4x42x640xbf16, #tpu.memory_space<vmem>>, vector<1x1x42x640xbf16>
    %9 = vector.shape_cast %8 : vector<1x1x42x640xbf16> to vector<42x640xbf16>
    %cst_11 = arith.constant dense<0.000000e+00> : vector<20x640xf32>
    %10 = tpu.matmul %7, %9, %cst_11 {dimension_numbers = #tpu.dot_dimension_numbers<[1], [0], [0], [1], [0, 0, 1, 1], [], []>} : vector<20x42xbf16>, vector<42x640xbf16>, vector<20x640xf32> -> vector<20x640xf32>
    %11 = arith.addf %0, %10 : vector<20x640xf32>
    %c0_12 = arith.constant 0 : index
    %c1 = arith.constant 1 : index
    %c0_13 = arith.constant 0 : index
    %c0_14 = arith.constant 0 : index
    %12 = vector.load %arg1[%c0_12, %c1, %c0_13, %c0_14] : memref<1x4x42x42xf32, #tpu.memory_space<vmem>>, vector<1x1x42x42xf32>
    %13 = vector.shape_cast %12 : vector<1x1x42x42xf32> to vector<42x42xf32>
    %14 = arith.truncf %13 : vector<42x42xf32> to vector<42x42xbf16>
    %cst_15 = arith.constant dense<0.000000e+00> : vector<20x42xf32>
    %15 = tpu.matmul %2, %14, %cst_15 {dimension_numbers = #tpu.dot_dimension_numbers<[1], [0], [0], [1], [0, 0, 1, 1], [], []>} : vector<20x42xbf16>, vector<42x42xbf16>, vector<20x42xf32> -> vector<20x42xf32>
    %16 = arith.truncf %15 : vector<20x42xf32> to vector<20x42xbf16>
    %c0_16 = arith.constant 0 : index
    %c1_17 = arith.constant 1 : index
    %c0_18 = arith.constant 0 : index
    %c0_19 = arith.constant 0 : index
    %17 = vector.load %arg3[%c0_16, %c1_17, %c0_18, %c0_19] : memref<3x4x42x640xbf16, #tpu.memory_space<vmem>>, vector<1x1x42x640xbf16>
    %18 = vector.shape_cast %17 : vector<1x1x42x640xbf16> to vector<42x640xbf16>
    %cst_20 = arith.constant dense<0.000000e+00> : vector<20x640xf32>
    %19 = tpu.matmul %16, %18, %cst_20 {dimension_numbers = #tpu.dot_dimension_numbers<[1], [0], [0], [1], [0, 0, 1, 1], [], []>} : vector<20x42xbf16>, vector<42x640xbf16>, vector<20x640xf32> -> vector<20x640xf32>
    %20 = arith.addf %11, %19 : vector<20x640xf32>
    %c0_21 = arith.constant 0 : index
    %c2 = arith.constant 2 : index
    %c0_22 = arith.constant 0 : index
    %c0_23 = arith.constant 0 : index
    %21 = vector.load %arg1[%c0_21, %c2, %c0_22, %c0_23] : memref<1x4x42x42xf32, #tpu.memory_space<vmem>>, vector<1x1x42x42xf32>
    %22 = vector.shape_cast %21 : vector<1x1x42x42xf32> to vector<42x42xf32>
    %23 = arith.truncf %22 : vector<42x42xf32> to vector<42x42xbf16>
    %cst_24 = arith.constant dense<0.000000e+00> : vector<20x42xf32>
    %24 = tpu.matmul %2, %23, %cst_24 {dimension_numbers = #tpu.dot_dimension_numbers<[1], [0], [0], [1], [0, 0, 1, 1], [], []>} : vector<20x42xbf16>, vector<42x42xbf16>, vector<20x42xf32> -> vector<20x42xf32>
    %25 = arith.truncf %24 : vector<20x42xf32> to vector<20x42xbf16>
    %c0_25 = arith.constant 0 : index
    %c2_26 = arith.constant 2 : index
    %c0_27 = arith.constant 0 : index
    %c0_28 = arith.constant 0 : index
    %26 = vector.load %arg3[%c0_25, %c2_26, %c0_27, %c0_28] : memref<3x4x42x640xbf16, #tpu.memory_space<vmem>>, vector<1x1x42x640xbf16>
    %27 = vector.shape_cast %26 : vector<1x1x42x640xbf16> to vector<42x640xbf16>
    %cst_29 = arith.constant dense<0.000000e+00> : vector<20x640xf32>
    %28 = tpu.matmul %25, %27, %cst_29 {dimension_numbers = #tpu.dot_dimension_numbers<[1], [0], [0], [1], [0, 0, 1, 1], [], []>} : vector<20x42xbf16>, vector<42x640xbf16>, vector<20x640xf32> -> vector<20x640xf32>
    %29 = arith.addf %20, %28 : vector<20x640xf32>
    %c0_30 = arith.constant 0 : index
    %c3 = arith.constant 3 : index
    %c0_31 = arith.constant 0 : index
    %c0_32 = arith.constant 0 : index
    %30 = vector.load %arg1[%c0_30, %c3, %c0_31, %c0_32] : memref<1x4x42x42xf32, #tpu.memory_space<vmem>>, vector<1x1x42x42xf32>
    %31 = vector.shape_cast %30 : vector<1x1x42x42xf32> to vector<42x42xf32>
    %32 = arith.truncf %31 : vector<42x42xf32> to vector<42x42xbf16>
    %cst_33 = arith.constant dense<0.000000e+00> : vector<20x42xf32>
    %33 = tpu.matmul %2, %32, %cst_33 {dimension_numbers = #tpu.dot_dimension_numbers<[1], [0], [0], [1], [0, 0, 1, 1], [], []>} : vector<20x42xbf16>, vector<42x42xbf16>, vector<20x42xf32> -> vector<20x42xf32>
    %34 = arith.truncf %33 : vector<20x42xf32> to vector<20x42xbf16>
    %c0_34 = arith.constant 0 : index
    %c3_35 = arith.constant 3 : index
    %c0_36 = arith.constant 0 : index
    %c0_37 = arith.constant 0 : index
    %35 = vector.load %arg3[%c0_34, %c3_35, %c0_36, %c0_37] : memref<3x4x42x640xbf16, #tpu.memory_space<vmem>>, vector<1x1x42x640xbf16>
    %36 = vector.shape_cast %35 : vector<1x1x42x640xbf16> to vector<42x640xbf16>
    %cst_38 = arith.constant dense<0.000000e+00> : vector<20x640xf32>
    %37 = tpu.matmul %34, %36, %cst_38 {dimension_numbers = #tpu.dot_dimension_numbers<[1], [0], [0], [1], [0, 0, 1, 1], [], []>} : vector<20x42xbf16>, vector<42x640xbf16>, vector<20x640xf32> -> vector<20x640xf32>
    %38 = arith.addf %29, %37 : vector<20x640xf32>
    %c1_39 = arith.constant 1 : index
    %c0_40 = arith.constant 0 : index
    %c0_41 = arith.constant 0 : index
    %39 = vector.load %arg2[%c1_39, %c0_40, %c0_41] : memref<3x20x42xbf16, #tpu.memory_space<vmem>>, vector<1x20x42xbf16>
    %40 = vector.shape_cast %39 : vector<1x20x42xbf16> to vector<20x42xbf16>
    %c0_42 = arith.constant 0 : index
    %c0_43 = arith.constant 0 : index
    %c0_44 = arith.constant 0 : index
    %c0_45 = arith.constant 0 : index
    %41 = vector.load %arg1[%c0_42, %c0_43, %c0_44, %c0_45] : memref<1x4x42x42xf32, #tpu.memory_space<vmem>>, vector<1x1x42x42xf32>
    %42 = vector.shape_cast %41 : vector<1x1x42x42xf32> to vector<42x42xf32>
    %43 = arith.truncf %42 : vector<42x42xf32> to vector<42x42xbf16>
    %cst_46 = arith.constant dense<0.000000e+00> : vector<20x42xf32>
    %44 = tpu.matmul %40, %43, %cst_46 {dimension_numbers = #tpu.dot_dimension_numbers<[1], [0], [0], [1], [0, 0, 1, 1], [], []>} : vector<20x42xbf16>, vector<42x42xbf16>, vector<20x42xf32> -> vector<20x42xf32>
    %45 = arith.truncf %44 : vector<20x42xf32> to vector<20x42xbf16>
    %c1_47 = arith.constant 1 : index
    %c0_48 = arith.constant 0 : index
    %c0_49 = arith.constant 0 : index
    %c0_50 = arith.constant 0 : index
    %46 = vector.load %arg3[%c1_47, %c0_48, %c0_49, %c0_50] : memref<3x4x42x640xbf16, #tpu.memory_space<vmem>>, vector<1x1x42x640xbf16>
    %47 = vector.shape_cast %46 : vector<1x1x42x640xbf16> to vector<42x640xbf16>
    %cst_51 = arith.constant dense<0.000000e+00> : vector<20x640xf32>
    %48 = tpu.matmul %45, %47, %cst_51 {dimension_numbers = #tpu.dot_dimension_numbers<[1], [0], [0], [1], [0, 0, 1, 1], [], []>} : vector<20x42xbf16>, vector<42x640xbf16>, vector<20x640xf32> -> vector<20x640xf32>
    %49 = arith.addf %38, %48 : vector<20x640xf32>
    %c0_52 = arith.constant 0 : index
    %c1_53 = arith.constant 1 : index
    %c0_54 = arith.constant 0 : index
    %c0_55 = arith.constant 0 : index
    %50 = vector.load %arg1[%c0_52, %c1_53, %c0_54, %c0_55] : memref<1x4x42x42xf32, #tpu.memory_space<vmem>>, vector<1x1x42x42xf32>
    %51 = vector.shape_cast %50 : vector<1x1x42x42xf32> to vector<42x42xf32>
    %52 = arith.truncf %51 : vector<42x42xf32> to vector<42x42xbf16>
    %cst_56 = arith.constant dense<0.000000e+00> : vector<20x42xf32>
    %53 = tpu.matmul %40, %52, %cst_56 {dimension_numbers = #tpu.dot_dimension_numbers<[1], [0], [0], [1], [0, 0, 1, 1], [], []>} : vector<20x42xbf16>, vector<42x42xbf16>, vector<20x42xf32> -> vector<20x42xf32>
    %54 = arith.truncf %53 : vector<20x42xf32> to vector<20x42xbf16>
    %c1_57 = arith.constant 1 : index
    %c1_58 = arith.constant 1 : index
    %c0_59 = arith.constant 0 : index
    %c0_60 = arith.constant 0 : index
    %55 = vector.load %arg3[%c1_57, %c1_58, %c0_59, %c0_60] : memref<3x4x42x640xbf16, #tpu.memory_space<vmem>>, vector<1x1x42x640xbf16>
    %56 = vector.shape_cast %55 : vector<1x1x42x640xbf16> to vector<42x640xbf16>
    %cst_61 = arith.constant dense<0.000000e+00> : vector<20x640xf32>
    %57 = tpu.matmul %54, %56, %cst_61 {dimension_numbers = #tpu.dot_dimension_numbers<[1], [0], [0], [1], [0, 0, 1, 1], [], []>} : vector<20x42xbf16>, vector<42x640xbf16>, vector<20x640xf32> -> vector<20x640xf32>
    %58 = arith.addf %49, %57 : vector<20x640xf32>
    %c0_62 = arith.constant 0 : index
    %c2_63 = arith.constant 2 : index
    %c0_64 = arith.constant 0 : index
    %c0_65 = arith.constant 0 : index
    %59 = vector.load %arg1[%c0_62, %c2_63, %c0_64, %c0_65] : memref<1x4x42x42xf32, #tpu.memory_space<vmem>>, vector<1x1x42x42xf32>
    %60 = vector.shape_cast %59 : vector<1x1x42x42xf32> to vector<42x42xf32>
    %61 = arith.truncf %60 : vector<42x42xf32> to vector<42x42xbf16>
    %cst_66 = arith.constant dense<0.000000e+00> : vector<20x42xf32>
    %62 = tpu.matmul %40, %61, %cst_66 {dimension_numbers = #tpu.dot_dimension_numbers<[1], [0], [0], [1], [0, 0, 1, 1], [], []>} : vector<20x42xbf16>, vector<42x42xbf16>, vector<20x42xf32> -> vector<20x42xf32>
    %63 = arith.truncf %62 : vector<20x42xf32> to vector<20x42xbf16>
    %c1_67 = arith.constant 1 : index
    %c2_68 = arith.constant 2 : index
    %c0_69 = arith.constant 0 : index
    %c0_70 = arith.constant 0 : index
    %64 = vector.load %arg3[%c1_67, %c2_68, %c0_69, %c0_70] : memref<3x4x42x640xbf16, #tpu.memory_space<vmem>>, vector<1x1x42x640xbf16>
    %65 = vector.shape_cast %64 : vector<1x1x42x640xbf16> to vector<42x640xbf16>
    %cst_71 = arith.constant dense<0.000000e+00> : vector<20x640xf32>
    %66 = tpu.matmul %63, %65, %cst_71 {dimension_numbers = #tpu.dot_dimension_numbers<[1], [0], [0], [1], [0, 0, 1, 1], [], []>} : vector<20x42xbf16>, vector<42x640xbf16>, vector<20x640xf32> -> vector<20x640xf32>
    %67 = arith.addf %58, %66 : vector<20x640xf32>
    %c0_72 = arith.constant 0 : index
    %c3_73 = arith.constant 3 : index
    %c0_74 = arith.constant 0 : index
    %c0_75 = arith.constant 0 : index
    %68 = vector.load %arg1[%c0_72, %c3_73, %c0_74, %c0_75] : memref<1x4x42x42xf32, #tpu.memory_space<vmem>>, vector<1x1x42x42xf32>
    %69 = vector.shape_cast %68 : vector<1x1x42x42xf32> to vector<42x42xf32>
    %70 = arith.truncf %69 : vector<42x42xf32> to vector<42x42xbf16>
    %cst_76 = arith.constant dense<0.000000e+00> : vector<20x42xf32>
    %71 = tpu.matmul %40, %70, %cst_76 {dimension_numbers = #tpu.dot_dimension_numbers<[1], [0], [0], [1], [0, 0, 1, 1], [], []>} : vector<20x42xbf16>, vector<42x42xbf16>, vector<20x42xf32> -> vector<20x42xf32>
    %72 = arith.truncf %71 : vector<20x42xf32> to vector<20x42xbf16>
    %c1_77 = arith.constant 1 : index
    %c3_78 = arith.constant 3 : index
    %c0_79 = arith.constant 0 : index
    %c0_80 = arith.constant 0 : index
    %73 = vector.load %arg3[%c1_77, %c3_78, %c0_79, %c0_80] : memref<3x4x42x640xbf16, #tpu.memory_space<vmem>>, vector<1x1x42x640xbf16>
    %74 = vector.shape_cast %73 : vector<1x1x42x640xbf16> to vector<42x640xbf16>
    %cst_81 = arith.constant dense<0.000000e+00> : vector<20x640xf32>
    %75 = tpu.matmul %72, %74, %cst_81 {dimension_numbers = #tpu.dot_dimension_numbers<[1], [0], [0], [1], [0, 0, 1, 1], [], []>} : vector<20x42xbf16>, vector<42x640xbf16>, vector<20x640xf32> -> vector<20x640xf32>
    %76 = arith.addf %67, %75 : vector<20x640xf32>
    %c2_82 = arith.constant 2 : index
    %c0_83 = arith.constant 0 : index
    %c0_84 = arith.constant 0 : index
    %77 = vector.load %arg2[%c2_82, %c0_83, %c0_84] : memref<3x20x42xbf16, #tpu.memory_space<vmem>>, vector<1x20x42xbf16>
    %78 = vector.shape_cast %77 : vector<1x20x42xbf16> to vector<20x42xbf16>
    %c0_85 = arith.constant 0 : index
    %c0_86 = arith.constant 0 : index
    %c0_87 = arith.constant 0 : index
    %c0_88 = arith.constant 0 : index
    %79 = vector.load %arg1[%c0_85, %c0_86, %c0_87, %c0_88] : memref<1x4x42x42xf32, #tpu.memory_space<vmem>>, vector<1x1x42x42xf32>
    %80 = vector.shape_cast %79 : vector<1x1x42x42xf32> to vector<42x42xf32>
    %81 = arith.truncf %80 : vector<42x42xf32> to vector<42x42xbf16>
    %cst_89 = arith.constant dense<0.000000e+00> : vector<20x42xf32>
    %82 = tpu.matmul %78, %81, %cst_89 {dimension_numbers = #tpu.dot_dimension_numbers<[1], [0], [0], [1], [0, 0, 1, 1], [], []>} : vector<20x42xbf16>, vector<42x42xbf16>, vector<20x42xf32> -> vector<20x42xf32>
    %83 = arith.truncf %82 : vector<20x42xf32> to vector<20x42xbf16>
    %c2_90 = arith.constant 2 : index
    %c0_91 = arith.constant 0 : index
    %c0_92 = arith.constant 0 : index
    %c0_93 = arith.constant 0 : index
    %84 = vector.load %arg3[%c2_90, %c0_91, %c0_92, %c0_93] : memref<3x4x42x640xbf16, #tpu.memory_space<vmem>>, vector<1x1x42x640xbf16>
    %85 = vector.shape_cast %84 : vector<1x1x42x640xbf16> to vector<42x640xbf16>
    %cst_94 = arith.constant dense<0.000000e+00> : vector<20x640xf32>
    %86 = tpu.matmul %83, %85, %cst_94 {dimension_numbers = #tpu.dot_dimension_numbers<[1], [0], [0], [1], [0, 0, 1, 1], [], []>} : vector<20x42xbf16>, vector<42x640xbf16>, vector<20x640xf32> -> vector<20x640xf32>
    %87 = arith.addf %76, %86 : vector<20x640xf32>
    %c0_95 = arith.constant 0 : index
    %c1_96 = arith.constant 1 : index
    %c0_97 = arith.constant 0 : index
    %c0_98 = arith.constant 0 : index
    %88 = vector.load %arg1[%c0_95, %c1_96, %c0_97, %c0_98] : memref<1x4x42x42xf32, #tpu.memory_space<vmem>>, vector<1x1x42x42xf32>
    %89 = vector.shape_cast %88 : vector<1x1x42x42xf32> to vector<42x42xf32>
    %90 = arith.truncf %89 : vector<42x42xf32> to vector<42x42xbf16>
    %cst_99 = arith.constant dense<0.000000e+00> : vector<20x42xf32>
    %91 = tpu.matmul %78, %90, %cst_99 {dimension_numbers = #tpu.dot_dimension_numbers<[1], [0], [0], [1], [0, 0, 1, 1], [], []>} : vector<20x42xbf16>, vector<42x42xbf16>, vector<20x42xf32> -> vector<20x42xf32>
    %92 = arith.truncf %91 : vector<20x42xf32> to vector<20x42xbf16>
    %c2_100 = arith.constant 2 : index
    %c1_101 = arith.constant 1 : index
    %c0_102 = arith.constant 0 : index
    %c0_103 = arith.constant 0 : index
    %93 = vector.load %arg3[%c2_100, %c1_101, %c0_102, %c0_103] : memref<3x4x42x640xbf16, #tpu.memory_space<vmem>>, vector<1x1x42x640xbf16>
    %94 = vector.shape_cast %93 : vector<1x1x42x640xbf16> to vector<42x640xbf16>
    %cst_104 = arith.constant dense<0.000000e+00> : vector<20x640xf32>
    %95 = tpu.matmul %92, %94, %cst_104 {dimension_numbers = #tpu.dot_dimension_numbers<[1], [0], [0], [1], [0, 0, 1, 1], [], []>} : vector<20x42xbf16>, vector<42x640xbf16>, vector<20x640xf32> -> vector<20x640xf32>
    %96 = arith.addf %87, %95 : vector<20x640xf32>
    %c0_105 = arith.constant 0 : index
    %c2_106 = arith.constant 2 : index
    %c0_107 = arith.constant 0 : index
    %c0_108 = arith.constant 0 : index
    %97 = vector.load %arg1[%c0_105, %c2_106, %c0_107, %c0_108] : memref<1x4x42x42xf32, #tpu.memory_space<vmem>>, vector<1x1x42x42xf32>
    %98 = vector.shape_cast %97 : vector<1x1x42x42xf32> to vector<42x42xf32>
    %99 = arith.truncf %98 : vector<42x42xf32> to vector<42x42xbf16>
    %cst_109 = arith.constant dense<0.000000e+00> : vector<20x42xf32>
    %100 = tpu.matmul %78, %99, %cst_109 {dimension_numbers = #tpu.dot_dimension_numbers<[1], [0], [0], [1], [0, 0, 1, 1], [], []>} : vector<20x42xbf16>, vector<42x42xbf16>, vector<20x42xf32> -> vector<20x42xf32>
    %101 = arith.truncf %100 : vector<20x42xf32> to vector<20x42xbf16>
    %c2_110 = arith.constant 2 : index
    %c2_111 = arith.constant 2 : index
    %c0_112 = arith.constant 0 : index
    %c0_113 = arith.constant 0 : index
    %102 = vector.load %arg3[%c2_110, %c2_111, %c0_112, %c0_113] : memref<3x4x42x640xbf16, #tpu.memory_space<vmem>>, vector<1x1x42x640xbf16>
    %103 = vector.shape_cast %102 : vector<1x1x42x640xbf16> to vector<42x640xbf16>
    %cst_114 = arith.constant dense<0.000000e+00> : vector<20x640xf32>
    %104 = tpu.matmul %101, %103, %cst_114 {dimension_numbers = #tpu.dot_dimension_numbers<[1], [0], [0], [1], [0, 0, 1, 1], [], []>} : vector<20x42xbf16>, vector<42x640xbf16>, vector<20x640xf32> -> vector<20x640xf32>
    %105 = arith.addf %96, %104 : vector<20x640xf32>
    %c0_115 = arith.constant 0 : index
    %c3_116 = arith.constant 3 : index
    %c0_117 = arith.constant 0 : index
    %c0_118 = arith.constant 0 : index
    %106 = vector.load %arg1[%c0_115, %c3_116, %c0_117, %c0_118] : memref<1x4x42x42xf32, #tpu.memory_space<vmem>>, vector<1x1x42x42xf32>
    %107 = vector.shape_cast %106 : vector<1x1x42x42xf32> to vector<42x42xf32>
    %108 = arith.truncf %107 : vector<42x42xf32> to vector<42x42xbf16>
    %cst_119 = arith.constant dense<0.000000e+00> : vector<20x42xf32>
    %109 = tpu.matmul %78, %108, %cst_119 {dimension_numbers = #tpu.dot_dimension_numbers<[1], [0], [0], [1], [0, 0, 1, 1], [], []>} : vector<20x42xbf16>, vector<42x42xbf16>, vector<20x42xf32> -> vector<20x42xf32>
    %110 = arith.truncf %109 : vector<20x42xf32> to vector<20x42xbf16>
    %c2_120 = arith.constant 2 : index
    %c3_121 = arith.constant 3 : index
    %c0_122 = arith.constant 0 : index
    %c0_123 = arith.constant 0 : index
    %111 = vector.load %arg3[%c2_120, %c3_121, %c0_122, %c0_123] : memref<3x4x42x640xbf16, #tpu.memory_space<vmem>>, vector<1x1x42x640xbf16>
    %112 = vector.shape_cast %111 : vector<1x1x42x640xbf16> to vector<42x640xbf16>
    %cst_124 = arith.constant dense<0.000000e+00> : vector<20x640xf32>
    %113 = tpu.matmul %110, %112, %cst_124 {dimension_numbers = #tpu.dot_dimension_numbers<[1], [0], [0], [1], [0, 0, 1, 1], [], []>} : vector<20x42xbf16>, vector<42x640xbf16>, vector<20x640xf32> -> vector<20x640xf32>
    %114 = arith.addf %105, %113 : vector<20x640xf32>
    %c0_125 = arith.constant 0 : index
    %c0_126 = arith.constant 0 : index
    %115 = vector.load %arg4[%c0_125, %c0_126] : memref<1x640xf32, #tpu.memory_space<vmem>>, vector<1x640xf32>
    %116 = vector.broadcast %115 : vector<1x640xf32> to vector<20x640xf32>
    %117 = arith.addf %114, %116 : vector<20x640xf32>
    %cst_127 = arith.constant 0.000000e+00 : f32
    %118 = vector.broadcast %cst_127 : f32 to vector<20x640xf32>
    %119 = arith.maximumf %117, %118 : vector<20x640xf32>
    %120 = arith.truncf %119 : vector<20x640xf32> to vector<20x640xbf16>
    %cst_128 = arith.constant 0.000000e+00 : f32
    %121 = vector.broadcast %cst_128 : f32 to vector<9x288xf32>
    %c0_129 = arith.constant 0 : index
    %c0_130 = arith.constant 0 : index
    %c0_131 = arith.constant 0 : index
    %122 = vector.load %arg5[%c0_129, %c0_130, %c0_131] : memref<3x9x20xbf16, #tpu.memory_space<vmem>>, vector<1x9x20xbf16>
    %123 = vector.shape_cast %122 : vector<1x9x20xbf16> to vector<9x20xbf16>
    %cst_132 = arith.constant dense<0.000000e+00> : vector<9x640xf32>
    %124 = tpu.matmul %123, %120, %cst_132 {dimension_numbers = #tpu.dot_dimension_numbers<[1], [0], [0], [1], [0, 0, 1, 1], [], []>} : vector<9x20xbf16>, vector<20x640xbf16>, vector<9x640xf32> -> vector<9x640xf32>
    %125 = arith.truncf %124 : vector<9x640xf32> to vector<9x640xbf16>
    %c0_133 = arith.constant 0 : index
    %c0_134 = arith.constant 0 : index
    %c0_135 = arith.constant 0 : index
    %126 = vector.load %arg6[%c0_133, %c0_134, %c0_135] : memref<3x640x288xbf16, #tpu.memory_space<vmem>>, vector<1x640x288xbf16>
    %127 = vector.shape_cast %126 : vector<1x640x288xbf16> to vector<640x288xbf16>
    %cst_136 = arith.constant dense<0.000000e+00> : vector<9x288xf32>
    %128 = tpu.matmul %125, %127, %cst_136 {dimension_numbers = #tpu.dot_dimension_numbers<[1], [0], [0], [1], [0, 0, 1, 1], [], []>} : vector<9x640xbf16>, vector<640x288xbf16>, vector<9x288xf32> -> vector<9x288xf32>
    %129 = arith.addf %121, %128 : vector<9x288xf32>
    %c1_137 = arith.constant 1 : index
    %c0_138 = arith.constant 0 : index
    %c0_139 = arith.constant 0 : index
    %130 = vector.load %arg5[%c1_137, %c0_138, %c0_139] : memref<3x9x20xbf16, #tpu.memory_space<vmem>>, vector<1x9x20xbf16>
    %131 = vector.shape_cast %130 : vector<1x9x20xbf16> to vector<9x20xbf16>
    %cst_140 = arith.constant dense<0.000000e+00> : vector<9x640xf32>
    %132 = tpu.matmul %131, %120, %cst_140 {dimension_numbers = #tpu.dot_dimension_numbers<[1], [0], [0], [1], [0, 0, 1, 1], [], []>} : vector<9x20xbf16>, vector<20x640xbf16>, vector<9x640xf32> -> vector<9x640xf32>
    %133 = arith.truncf %132 : vector<9x640xf32> to vector<9x640xbf16>
    %c1_141 = arith.constant 1 : index
    %c0_142 = arith.constant 0 : index
    %c0_143 = arith.constant 0 : index
    %134 = vector.load %arg6[%c1_141, %c0_142, %c0_143] : memref<3x640x288xbf16, #tpu.memory_space<vmem>>, vector<1x640x288xbf16>
    %135 = vector.shape_cast %134 : vector<1x640x288xbf16> to vector<640x288xbf16>
    %cst_144 = arith.constant dense<0.000000e+00> : vector<9x288xf32>
    %136 = tpu.matmul %133, %135, %cst_144 {dimension_numbers = #tpu.dot_dimension_numbers<[1], [0], [0], [1], [0, 0, 1, 1], [], []>} : vector<9x640xbf16>, vector<640x288xbf16>, vector<9x288xf32> -> vector<9x288xf32>
    %137 = arith.addf %129, %136 : vector<9x288xf32>
    %c2_145 = arith.constant 2 : index
    %c0_146 = arith.constant 0 : index
    %c0_147 = arith.constant 0 : index
    %138 = vector.load %arg5[%c2_145, %c0_146, %c0_147] : memref<3x9x20xbf16, #tpu.memory_space<vmem>>, vector<1x9x20xbf16>
    %139 = vector.shape_cast %138 : vector<1x9x20xbf16> to vector<9x20xbf16>
    %cst_148 = arith.constant dense<0.000000e+00> : vector<9x640xf32>
    %140 = tpu.matmul %139, %120, %cst_148 {dimension_numbers = #tpu.dot_dimension_numbers<[1], [0], [0], [1], [0, 0, 1, 1], [], []>} : vector<9x20xbf16>, vector<20x640xbf16>, vector<9x640xf32> -> vector<9x640xf32>
    %141 = arith.truncf %140 : vector<9x640xf32> to vector<9x640xbf16>
    %c2_149 = arith.constant 2 : index
    %c0_150 = arith.constant 0 : index
    %c0_151 = arith.constant 0 : index
    %142 = vector.load %arg6[%c2_149, %c0_150, %c0_151] : memref<3x640x288xbf16, #tpu.memory_space<vmem>>, vector<1x640x288xbf16>
    %143 = vector.shape_cast %142 : vector<1x640x288xbf16> to vector<640x288xbf16>
    %cst_152 = arith.constant dense<0.000000e+00> : vector<9x288xf32>
    %144 = tpu.matmul %141, %143, %cst_152 {dimension_numbers = #tpu.dot_dimension_numbers<[1], [0], [0], [1], [0, 0, 1, 1], [], []>} : vector<9x640xbf16>, vector<640x288xbf16>, vector<9x288xf32> -> vector<9x288xf32>
    %145 = arith.addf %137, %144 : vector<9x288xf32>
    %c0_153 = arith.constant 0 : index
    %c0_154 = arith.constant 0 : index
    %146 = vector.load %arg7[%c0_153, %c0_154] : memref<1x288xf32, #tpu.memory_space<vmem>>, vector<1x288xf32>
    %147 = vector.broadcast %146 : vector<1x288xf32> to vector<9x288xf32>
    %148 = arith.addf %145, %147 : vector<9x288xf32>
    %cst_155 = arith.constant 0.000000e+00 : f32
    %149 = vector.broadcast %cst_155 : f32 to vector<9x288xf32>
    %150 = arith.maximumf %148, %149 : vector<9x288xf32>
    %151 = arith.truncf %150 : vector<9x288xf32> to vector<9x288xbf16>
    %cst_156 = arith.constant 0.000000e+00 : f32
    %152 = vector.broadcast %cst_156 : f32 to vector<4x128xf32>
    %c0_157 = arith.constant 0 : index
    %c0_158 = arith.constant 0 : index
    %c0_159 = arith.constant 0 : index
    %153 = vector.load %arg8[%c0_157, %c0_158, %c0_159] : memref<3x4x9xbf16, #tpu.memory_space<vmem>>, vector<1x4x9xbf16>
    %154 = vector.shape_cast %153 : vector<1x4x9xbf16> to vector<4x9xbf16>
    %cst_160 = arith.constant dense<0.000000e+00> : vector<4x288xf32>
    %155 = tpu.matmul %154, %151, %cst_160 {dimension_numbers = #tpu.dot_dimension_numbers<[1], [0], [0], [1], [0, 0, 1, 1], [], []>} : vector<4x9xbf16>, vector<9x288xbf16>, vector<4x288xf32> -> vector<4x288xf32>
    %156 = arith.truncf %155 : vector<4x288xf32> to vector<4x288xbf16>
    %c0_161 = arith.constant 0 : index
    %c0_162 = arith.constant 0 : index
    %c0_163 = arith.constant 0 : index
    %157 = vector.load %arg9[%c0_161, %c0_162, %c0_163] : memref<3x288x128xbf16, #tpu.memory_space<vmem>>, vector<1x288x128xbf16>
    %158 = vector.shape_cast %157 : vector<1x288x128xbf16> to vector<288x128xbf16>
    %cst_164 = arith.constant dense<0.000000e+00> : vector<4x128xf32>
    %159 = tpu.matmul %156, %158, %cst_164 {dimension_numbers = #tpu.dot_dimension_numbers<[1], [0], [0], [1], [0, 0, 1, 1], [], []>} : vector<4x288xbf16>, vector<288x128xbf16>, vector<4x128xf32> -> vector<4x128xf32>
    %160 = arith.addf %152, %159 : vector<4x128xf32>
    %c1_165 = arith.constant 1 : index
    %c0_166 = arith.constant 0 : index
    %c0_167 = arith.constant 0 : index
    %161 = vector.load %arg8[%c1_165, %c0_166, %c0_167] : memref<3x4x9xbf16, #tpu.memory_space<vmem>>, vector<1x4x9xbf16>
    %162 = vector.shape_cast %161 : vector<1x4x9xbf16> to vector<4x9xbf16>
    %cst_168 = arith.constant dense<0.000000e+00> : vector<4x288xf32>
    %163 = tpu.matmul %162, %151, %cst_168 {dimension_numbers = #tpu.dot_dimension_numbers<[1], [0], [0], [1], [0, 0, 1, 1], [], []>} : vector<4x9xbf16>, vector<9x288xbf16>, vector<4x288xf32> -> vector<4x288xf32>
    %164 = arith.truncf %163 : vector<4x288xf32> to vector<4x288xbf16>
    %c1_169 = arith.constant 1 : index
    %c0_170 = arith.constant 0 : index
    %c0_171 = arith.constant 0 : index
    %165 = vector.load %arg9[%c1_169, %c0_170, %c0_171] : memref<3x288x128xbf16, #tpu.memory_space<vmem>>, vector<1x288x128xbf16>
    %166 = vector.shape_cast %165 : vector<1x288x128xbf16> to vector<288x128xbf16>
    %cst_172 = arith.constant dense<0.000000e+00> : vector<4x128xf32>
    %167 = tpu.matmul %164, %166, %cst_172 {dimension_numbers = #tpu.dot_dimension_numbers<[1], [0], [0], [1], [0, 0, 1, 1], [], []>} : vector<4x288xbf16>, vector<288x128xbf16>, vector<4x128xf32> -> vector<4x128xf32>
    %168 = arith.addf %160, %167 : vector<4x128xf32>
    %c2_173 = arith.constant 2 : index
    %c0_174 = arith.constant 0 : index
    %c0_175 = arith.constant 0 : index
    %169 = vector.load %arg8[%c2_173, %c0_174, %c0_175] : memref<3x4x9xbf16, #tpu.memory_space<vmem>>, vector<1x4x9xbf16>
    %170 = vector.shape_cast %169 : vector<1x4x9xbf16> to vector<4x9xbf16>
    %cst_176 = arith.constant dense<0.000000e+00> : vector<4x288xf32>
    %171 = tpu.matmul %170, %151, %cst_176 {dimension_numbers = #tpu.dot_dimension_numbers<[1], [0], [0], [1], [0, 0, 1, 1], [], []>} : vector<4x9xbf16>, vector<9x288xbf16>, vector<4x288xf32> -> vector<4x288xf32>
    %172 = arith.truncf %171 : vector<4x288xf32> to vector<4x288xbf16>
    %c2_177 = arith.constant 2 : index
    %c0_178 = arith.constant 0 : index
    %c0_179 = arith.constant 0 : index
    %173 = vector.load %arg9[%c2_177, %c0_178, %c0_179] : memref<3x288x128xbf16, #tpu.memory_space<vmem>>, vector<1x288x128xbf16>
    %174 = vector.shape_cast %173 : vector<1x288x128xbf16> to vector<288x128xbf16>
    %cst_180 = arith.constant dense<0.000000e+00> : vector<4x128xf32>
    %175 = tpu.matmul %172, %174, %cst_180 {dimension_numbers = #tpu.dot_dimension_numbers<[1], [0], [0], [1], [0, 0, 1, 1], [], []>} : vector<4x288xbf16>, vector<288x128xbf16>, vector<4x128xf32> -> vector<4x128xf32>
    %176 = arith.addf %168, %175 : vector<4x128xf32>
    %c0_181 = arith.constant 0 : index
    %c0_182 = arith.constant 0 : index
    %177 = vector.load %arg10[%c0_181, %c0_182] : memref<1x128xf32, #tpu.memory_space<vmem>>, vector<1x128xf32>
    %178 = vector.broadcast %177 : vector<1x128xf32> to vector<4x128xf32>
    %179 = arith.addf %176, %178 : vector<4x128xf32>
    %cst_183 = arith.constant 0.000000e+00 : f32
    %180 = vector.broadcast %cst_183 : f32 to vector<4x128xf32>
    %181 = arith.maximumf %179, %180 : vector<4x128xf32>
    %182 = arith.truncf %181 : vector<4x128xf32> to vector<4x128xbf16>
    %cst_184 = arith.constant 0.000000e+00 : f32
    %183 = vector.broadcast %cst_184 : f32 to vector<1x128xf32>
    %184 = vector.extract_strided_slice %182 {offsets = [0, 0], sizes = [1, 128], strides = [1, 1]} : vector<4x128xbf16> to vector<1x128xbf16>
    %c0_185 = arith.constant 0 : index
    %c0_186 = arith.constant 0 : index
    %c0_187 = arith.constant 0 : index
    %185 = vector.load %arg11[%c0_185, %c0_186, %c0_187] : memref<4x128x128xbf16, #tpu.memory_space<vmem>>, vector<1x128x128xbf16>
    %186 = vector.shape_cast %185 : vector<1x128x128xbf16> to vector<128x128xbf16>
    %cst_188 = arith.constant dense<0.000000e+00> : vector<1x128xf32>
    %187 = tpu.matmul %184, %186, %cst_188 {dimension_numbers = #tpu.dot_dimension_numbers<[1], [0], [0], [1], [0, 0, 1, 1], [], []>} : vector<1x128xbf16>, vector<128x128xbf16>, vector<1x128xf32> -> vector<1x128xf32>
    %188 = arith.addf %183, %187 : vector<1x128xf32>
    %189 = vector.extract_strided_slice %182 {offsets = [1, 0], sizes = [1, 128], strides = [1, 1]} : vector<4x128xbf16> to vector<1x128xbf16>
    %c1_189 = arith.constant 1 : index
    %c0_190 = arith.constant 0 : index
    %c0_191 = arith.constant 0 : index
    %190 = vector.load %arg11[%c1_189, %c0_190, %c0_191] : memref<4x128x128xbf16, #tpu.memory_space<vmem>>, vector<1x128x128xbf16>
    %191 = vector.shape_cast %190 : vector<1x128x128xbf16> to vector<128x128xbf16>
    %cst_192 = arith.constant dense<0.000000e+00> : vector<1x128xf32>
    %192 = tpu.matmul %189, %191, %cst_192 {dimension_numbers = #tpu.dot_dimension_numbers<[1], [0], [0], [1], [0, 0, 1, 1], [], []>} : vector<1x128xbf16>, vector<128x128xbf16>, vector<1x128xf32> -> vector<1x128xf32>
    %193 = arith.addf %188, %192 : vector<1x128xf32>
    %194 = vector.extract_strided_slice %182 {offsets = [2, 0], sizes = [1, 128], strides = [1, 1]} : vector<4x128xbf16> to vector<1x128xbf16>
    %c2_193 = arith.constant 2 : index
    %c0_194 = arith.constant 0 : index
    %c0_195 = arith.constant 0 : index
    %195 = vector.load %arg11[%c2_193, %c0_194, %c0_195] : memref<4x128x128xbf16, #tpu.memory_space<vmem>>, vector<1x128x128xbf16>
    %196 = vector.shape_cast %195 : vector<1x128x128xbf16> to vector<128x128xbf16>
    %cst_196 = arith.constant dense<0.000000e+00> : vector<1x128xf32>
    %197 = tpu.matmul %194, %196, %cst_196 {dimension_numbers = #tpu.dot_dimension_numbers<[1], [0], [0], [1], [0, 0, 1, 1], [], []>} : vector<1x128xbf16>, vector<128x128xbf16>, vector<1x128xf32> -> vector<1x128xf32>
    %198 = arith.addf %193, %197 : vector<1x128xf32>
    %199 = vector.extract_strided_slice %182 {offsets = [3, 0], sizes = [1, 128], strides = [1, 1]} : vector<4x128xbf16> to vector<1x128xbf16>
    %c3_197 = arith.constant 3 : index
    %c0_198 = arith.constant 0 : index
    %c0_199 = arith.constant 0 : index
    %200 = vector.load %arg11[%c3_197, %c0_198, %c0_199] : memref<4x128x128xbf16, #tpu.memory_space<vmem>>, vector<1x128x128xbf16>
    %201 = vector.shape_cast %200 : vector<1x128x128xbf16> to vector<128x128xbf16>
    %cst_200 = arith.constant dense<0.000000e+00> : vector<1x128xf32>
    %202 = tpu.matmul %199, %201, %cst_200 {dimension_numbers = #tpu.dot_dimension_numbers<[1], [0], [0], [1], [0, 0, 1, 1], [], []>} : vector<1x128xbf16>, vector<128x128xbf16>, vector<1x128xf32> -> vector<1x128xf32>
    %203 = arith.addf %198, %202 : vector<1x128xf32>
    %c0_201 = arith.constant 0 : index
    %c0_202 = arith.constant 0 : index
    %204 = vector.load %arg12[%c0_201, %c0_202] : memref<1x128xf32, #tpu.memory_space<vmem>>, vector<1x128xf32>
    %205 = arith.addf %203, %204 : vector<1x128xf32>
    %cst_203 = arith.constant 0.000000e+00 : f32
    %206 = vector.broadcast %cst_203 : f32 to vector<1x128xf32>
    %207 = arith.maximumf %205, %206 : vector<1x128xf32>
    %208 = arith.truncf %207 : vector<1x128xf32> to vector<1x128xbf16>
    %c0_204 = arith.constant 0 : index
    %c0_205 = arith.constant 0 : index
    %209 = vector.load %arg13[%c0_204, %c0_205] : memref<128x128xbf16, #tpu.memory_space<vmem>>, vector<128x128xbf16>
    %cst_206 = arith.constant dense<0.000000e+00> : vector<1x128xf32>
    %210 = tpu.matmul %208, %209, %cst_206 {dimension_numbers = #tpu.dot_dimension_numbers<[1], [0], [0], [1], [0, 0, 1, 1], [], []>} : vector<1x128xbf16>, vector<128x128xbf16>, vector<1x128xf32> -> vector<1x128xf32>
    %c0_207 = arith.constant 0 : index
    %c0_208 = arith.constant 0 : index
    %211 = vector.load %arg14[%c0_207, %c0_208] : memref<1x128xf32, #tpu.memory_space<vmem>>, vector<1x128xf32>
    %212 = arith.addf %210, %211 : vector<1x128xf32>
    %213 = vector.shape_cast %212 : vector<1x128xf32> to vector<1x128xf32>
    %214 = vector.broadcast %213 : vector<1x128xf32> to vector<8x128xf32>
    %c0_209 = arith.constant 0 : index
    %c0_210 = arith.constant 0 : index
    %c0_211 = arith.constant 0 : index
    %215 = vector.load %arg15[%c0_209, %c0_210, %c0_211] : memref<1x8x128xf32, #tpu.memory_space<vmem>>, vector<1x8x128xf32>
    %216 = vector.shape_cast %215 : vector<1x8x128xf32> to vector<8x128xf32>
    %217 = vector.shape_cast %214 : vector<8x128xf32> to vector<1x8x128xf32>
    tpu.vector_store %arg15[%c0_209, %c0_210, %c0_211], %217 {strides = array<i32>} : memref<1x8x128xf32, #tpu.memory_space<vmem>>, vector<1x8x128xf32>,
    return
  }
  func.func @transform_0(%arg0: i32) -> (i32, i32, i32, i32) {
    %c0_i32 = arith.constant 0 : i32
    %c0_i32_0 = arith.constant 0 : i32
    %c0_i32_1 = arith.constant 0 : i32
    %c0_i32_2 = arith.constant 0 : i32
    return %arg0, %c0_i32, %c0_i32_0, %c0_i32_1 : i32, i32, i32, i32
  }
  func.func @transform_1(%arg0: i32) -> (i32, i32, i32) {
    %c0_i32 = arith.constant 0 : i32
    %c0_i32_0 = arith.constant 0 : i32
    %c0_i32_1 = arith.constant 0 : i32
    %c0_i32_2 = arith.constant 0 : i32
    return %c0_i32, %c0_i32_0, %c0_i32_1 : i32, i32, i32
  }
  func.func @transform_2(%arg0: i32) -> (i32, i32, i32, i32) {
    %c0_i32 = arith.constant 0 : i32
    %c0_i32_0 = arith.constant 0 : i32
    %c0_i32_1 = arith.constant 0 : i32
    %c0_i32_2 = arith.constant 0 : i32
    %c0_i32_3 = arith.constant 0 : i32
    return %c0_i32, %c0_i32_0, %c0_i32_1, %c0_i32_2 : i32, i32, i32, i32
  }
  func.func @transform_3(%arg0: i32) -> (i32, i32) {
    %c0_i32 = arith.constant 0 : i32
    %c0_i32_0 = arith.constant 0 : i32
    %c0_i32_1 = arith.constant 0 : i32
    return %c0_i32, %c0_i32_0 : i32, i32
  }
  func.func @transform_4(%arg0: i32) -> (i32, i32, i32) {
    %c0_i32 = arith.constant 0 : i32
    %c0_i32_0 = arith.constant 0 : i32
    %c0_i32_1 = arith.constant 0 : i32
    %c0_i32_2 = arith.constant 0 : i32
    return %c0_i32, %c0_i32_0, %c0_i32_1 : i32, i32, i32
  }
  func.func @transform_5(%arg0: i32) -> (i32, i32, i32) {
    %c0_i32 = arith.constant 0 : i32
    %c0_i32_0 = arith.constant 0 : i32
    %c0_i32_1 = arith.constant 0 : i32
    %c0_i32_2 = arith.constant 0 : i32
    return %c0_i32, %c0_i32_0, %c0_i32_1 : i32, i32, i32
  }
  func.func @transform_6(%arg0: i32) -> (i32, i32) {
    %c0_i32 = arith.constant 0 : i32
    %c0_i32_0 = arith.constant 0 : i32
    %c0_i32_1 = arith.constant 0 : i32
    return %c0_i32, %c0_i32_0 : i32, i32
  }
  func.func @transform_7(%arg0: i32) -> (i32, i32, i32) {
    %c0_i32 = arith.constant 0 : i32
    %c0_i32_0 = arith.constant 0 : i32
    %c0_i32_1 = arith.constant 0 : i32
    %c0_i32_2 = arith.constant 0 : i32
    return %c0_i32, %c0_i32_0, %c0_i32_1 : i32, i32, i32
  }
  func.func @transform_8(%arg0: i32) -> (i32, i32, i32) {
    %c0_i32 = arith.constant 0 : i32
    %c0_i32_0 = arith.constant 0 : i32
    %c0_i32_1 = arith.constant 0 : i32
    %c0_i32_2 = arith.constant 0 : i32
    return %c0_i32, %c0_i32_0, %c0_i32_1 : i32, i32, i32
  }
  func.func @transform_9(%arg0: i32) -> (i32, i32) {
    %c0_i32 = arith.constant 0 : i32
    %c0_i32_0 = arith.constant 0 : i32
    %c0_i32_1 = arith.constant 0 : i32
    return %c0_i32, %c0_i32_0 : i32, i32
  }
  func.func @transform_10(%arg0: i32) -> (i32, i32, i32) {
    %c0_i32 = arith.constant 0 : i32
    %c0_i32_0 = arith.constant 0 : i32
    %c0_i32_1 = arith.constant 0 : i32
    %c0_i32_2 = arith.constant 0 : i32
    return %c0_i32, %c0_i32_0, %c0_i32_1 : i32, i32, i32
  }
  func.func @transform_11(%arg0: i32) -> (i32, i32) {
    %c0_i32 = arith.constant 0 : i32
    %c0_i32_0 = arith.constant 0 : i32
    %c0_i32_1 = arith.constant 0 : i32
    return %c0_i32, %c0_i32_0 : i32, i32
  }
  func.func @transform_12(%arg0: i32) -> (i32, i32) {
    %c0_i32 = arith.constant 0 : i32
    %c0_i32_0 = arith.constant 0 : i32
    %c0_i32_1 = arith.constant 0 : i32
    return %c0_i32, %c0_i32_0 : i32, i32
  }
  func.func @transform_13(%arg0: i32) -> (i32, i32) {
    %c0_i32 = arith.constant 0 : i32
    %c0_i32_0 = arith.constant 0 : i32
    %c0_i32_1 = arith.constant 0 : i32
    return %c0_i32, %c0_i32_0 : i32, i32
  }
  func.func @transform_14(%arg0: i32) -> (i32, i32, i32) {
    %c0_i32 = arith.constant 0 : i32
    %c0_i32_0 = arith.constant 0 : i32
    %c0_i32_1 = arith.constant 0 : i32
    return %arg0, %c0_i32, %c0_i32_0 : i32, i32, i32
  }
}

</mosaic_0001>

<llo_original>
// kernel: network_forward.1
$region0: #{network_forward.1}
  #allocation0 [shape = 'u32[]', space=smem, size = 0x4, offset = 0x4, fixed_abs, tag = 'smem constant byte address 0x4 - core index']
  #allocation1 [shape = 'u32[144,128]{1,0:T(1,128)}', space=vmem, size = 0x12000, scoped, tag = 'internal scratch']
  %s0 = inlined_call_operand.vmem [shape: f32[2,4,42,42], index: 0, kind: input, shape index: {}]
  %s1 = inlined_call_operand.vmem [shape: bf16[3,20,42], index: 1, kind: input, shape index: {}]
  %s2 = inlined_call_operand.vmem [shape: bf16[3,4,42,640], index: 2, kind: input, shape index: {}]
  %s3 = inlined_call_operand.vmem [shape: f32[1,640], index: 3, kind: input, shape index: {}]
  %s4 = inlined_call_operand.vmem [shape: bf16[3,9,20], index: 4, kind: input, shape index: {}]
  %s5 = inlined_call_operand.vmem [shape: bf16[3,640,288], index: 5, kind: input, shape index: {}]
  %s6 = inlined_call_operand.vmem [shape: f32[1,288], index: 6, kind: input, shape index: {}]
  %s7 = inlined_call_operand.vmem [shape: bf16[3,4,9], index: 7, kind: input, shape index: {}]
  %s8 = inlined_call_operand.vmem [shape: bf16[3,288,128], index: 8, kind: input, shape index: {}]
  %s9 = inlined_call_operand.vmem [shape: f32[1,128], index: 9, kind: input, shape index: {}]
  %s10 = inlined_call_operand.vmem [shape: bf16[4,128,128], index: 10, kind: input, shape index: {}]
  %s11 = inlined_call_operand.vmem [shape: f32[1,128], index: 11, kind: input, shape index: {}]
  %s12 = inlined_call_operand.vmem [shape: bf16[128,128], index: 12, kind: input, shape index: {}]
  %s13 = inlined_call_operand.vmem [shape: f32[1,128], index: 13, kind: input, shape index: {}]
  %s14 = inlined_call_operand.vmem [shape: f32[2,8,128], index: 14, kind: output, shape index: {}]
  %s15 = sld [smem:[#allocation0]]
  $region89: #{network_forward.1} parent=0
    _
  %s17 = ssub.s32 1, %s15
  %s18 = scalar_select 0, %s17, %s15
  loop: start=0, step=1, limit=4
  $region2: #{network_forward.1} parent=0 // loop_pre_header
    _
  $region3: #{network_forward.1} parent=0 // loop_header
    %s20 = sphi 0, %s24
    %p21 = scmp.ge.s32.totalorder %s20, 4
    %s30 = sphi 0, %s32
    %s33 = sphi 0, %s30
    %s34 = sphi 0, %s33
    %s50 = sphi 0, %s34
    %s54 = sphi 0, %s54
    %s56 = sphi 0, %s54
    %s57 = sphi 0, %s56
    %s71 = sphi 0, %s57
    %s75 = sphi 0, %s75
    %s77 = sphi 0, %s75
    %s78 = sphi 0, %s77
    %s92 = sphi 0, %s78
    %s96 = sphi 0, %s96
    %s98 = sphi 0, %s96
    %s99 = sphi 0, %s98
    %s113 = sphi 0, %s99
    %s117 = sphi 0, %s117
    %s119 = sphi 0, %s117
    %s120 = sphi 0, %s119
    %s134 = sphi 0, %s120
    %s138 = sphi 0, %s138
    %s140 = sphi 0, %s138
    %s141 = sphi 0, %s140
    %s155 = sphi 0, %s141
    %s159 = sphi 0, %s159
    %s161 = sphi 0, %s159
    %s162 = sphi 0, %s161
    %s176 = sphi 0, %s162
    %s180 = sphi 0, %s180
    %s182 = sphi 0, %s180
    %s183 = sphi 0, %s182
    %s197 = sphi 0, %s183
    %s201 = sphi 0, %s201
    %s203 = sphi 0, %s201
    %s204 = sphi 0, %s203
    %s218 = sphi 0, %s204
    %s222 = sphi 0, %s222
    %s224 = sphi 0, %s222
    %s225 = sphi 0, %s224
    %s239 = sphi 0, %s225
    %s243 = sphi 0, %s243
    %s245 = sphi 0, %s243
    %s246 = sphi 0, %s245
    %s260 = sphi 0, %s246
    %s264 = sphi 0, %s264
    %s266 = sphi 0, %s264
    %s267 = sphi 0, %s266
    %s281 = sphi 0, %s267
    %s285 = sphi 0, %s285
    %s287 = sphi 0, %s285
    %s288 = sphi 0, %s287
    %s302 = sphi 0, %s288
    %s306 = sphi 0, %s306
    %s308 = sphi 0, %s306
    %s309 = sphi 0, %s308
    %s323 = sphi 0, %s309
    %s329 = sphi 0, %s331
    %s332 = sphi 0, %s329
    %s333 = sphi 0, %s332
    %s349 = sphi 0, %s333
  $region4: #{network_forward.1} parent=0 // loop_header_branch
    %23 = sbr.rel (%p21) target = $region8
  $region5: #{network_forward.1} parent=0 // loop_body
    %s25 = ssub.s32 %s20, 1
    %s26 = ssub.s32 %s20, 2
    %s27 = sadd.s32 %s20, 1
    %s28 = ssub.s32 %s20, %s27
    %p29 = scmp.eq.s32.totalorder %s28, 0
    %s31 = sadd.s32 %s30, 1
    %s32 = scalar_select %p29, %s30, %s31
    %p35 = pneg %p29
    %p36 = scmp.eq.s32.totalorder %s20, 1
    %p37 = por %p35, %p36
    %p38 = scmp.ne.s32.totalorder %s30, %s33
    %p39 = scmp.eq.s32.totalorder %s20, 0
    %p40 = por %p38, %p39
    %p41 = scmp.ne.s32.totalorder %s30, %s33
    %p42 = scmp.eq.s32.totalorder %s25, 1
    %p43 = por %p41, %p42
    %p44 = scmp.ne.s32.totalorder %s33, %s34
    %p45 = scmp.eq.s32.totalorder %s25, 0
    %p46 = por %p44, %p45
    %p47 = scmp.ne.s32.totalorder %s33, %s34
    %p48 = scmp.eq.s32.totalorder %s26, 1
    %p49 = por %p47, %p48
    %p51 = scmp.ne.s32.totalorder %s34, %s50
    %p52 = scmp.eq.s32.totalorder %s26, 0
    %p53 = por %p51, %p52
    %s55 = sadd.s32 %s54, 1
    %p58 = scmp.eq.s32.totalorder %s20, 1
    %p59 = scmp.ne.s32.totalorder %s54, %s56
    %p60 = scmp.eq.s32.totalorder %s20, 0
    %p61 = por %p59, %p60
    %p62 = scmp.ne.s32.totalorder %s54, %s56
    %p63 = scmp.eq.s32.totalorder %s25, 1
    %p64 = por %p62, %p63
    %p65 = scmp.ne.s32.totalorder %s56, %s57
    %p66 = scmp.eq.s32.totalorder %s25, 0
    %p67 = por %p65, %p66
    %p68 = scmp.ne.s32.totalorder %s56, %s57
    %p69 = scmp.eq.s32.totalorder %s26, 1
    %p70 = por %p68, %p69
    %p72 = scmp.ne.s32.totalorder %s57, %s71
    %p73 = scmp.eq.s32.totalorder %s26, 0
    %p74 = por %p72, %p73
    %s76 = sadd.s32 %s75, 1
    %p79 = scmp.eq.s32.totalorder %s20, 1
    %p80 = scmp.ne.s32.totalorder %s75, %s77
    %p81 = scmp.eq.s32.totalorder %s20, 0
    %p82 = por %p80, %p81
    %p83 = scmp.ne.s32.totalorder %s75, %s77
    %p84 = scmp.eq.s32.totalorder %s25, 1
    %p85 = por %p83, %p84
    %p86 = scmp.ne.s32.totalorder %s77, %s78
    %p87 = scmp.eq.s32.totalorder %s25, 0
    %p88 = por %p86, %p87
    %p89 = scmp.ne.s32.totalorder %s77, %s78
    %p90 = scmp.eq.s32.totalorder %s26, 1
    %p91 = por %p89, %p90
    %p93 = scmp.ne.s32.totalorder %s78, %s92
    %p94 = scmp.eq.s32.totalorder %s26, 0
    %p95 = por %p93, %p94
    %s97 = sadd.s32 %s96, 1
    %p100 = scmp.eq.s32.totalorder %s20, 1
    %p101 = scmp.ne.s32.totalorder %s96, %s98
    %p102 = scmp.eq.s32.totalorder %s20, 0
    %p103 = por %p101, %p102
    %p104 = scmp.ne.s32.totalorder %s96, %s98
    %p105 = scmp.eq.s32.totalorder %s25, 1
    %p106 = por %p104, %p105
    %p107 = scmp.ne.s32.totalorder %s98, %s99
    %p108 = scmp.eq.s32.totalorder %s25, 0
    %p109 = por %p107, %p108
    %p110 = scmp.ne.s32.totalorder %s98, %s99
    %p111 = scmp.eq.s32.totalorder %s26, 1
    %p112 = por %p110, %p111
    %p114 = scmp.ne.s32.totalorder %s99, %s113
    %p115 = scmp.eq.s32.totalorder %s26, 0
    %p116 = por %p114, %p115
    %s118 = sadd.s32 %s117, 1
    %p121 = scmp.eq.s32.totalorder %s20, 1
    %p122 = scmp.ne.s32.totalorder %s117, %s119
    %p123 = scmp.eq.s32.totalorder %s20, 0
    %p124 = por %p122, %p123
    %p125 = scmp.ne.s32.totalorder %s117, %s119
    %p126 = scmp.eq.s32.totalorder %s25, 1
    %p127 = por %p125, %p126
    %p128 = scmp.ne.s32.totalorder %s119, %s120
    %p129 = scmp.eq.s32.totalorder %s25, 0
    %p130 = por %p128, %p129
    %p131 = scmp.ne.s32.totalorder %s119, %s120
    %p132 = scmp.eq.s32.totalorder %s26, 1
    %p133 = por %p131, %p132
    %p135 = scmp.ne.s32.totalorder %s120, %s134
    %p136 = scmp.eq.s32.totalorder %s26, 0
    %p137 = por %p135, %p136
    %s139 = sadd.s32 %s138, 1
    %p142 = scmp.eq.s32.totalorder %s20, 1
    %p143 = scmp.ne.s32.totalorder %s138, %s140
    %p144 = scmp.eq.s32.totalorder %s20, 0
    %p145 = por %p143, %p144
    %p146 = scmp.ne.s32.totalorder %s138, %s140
    %p147 = scmp.eq.s32.totalorder %s25, 1
    %p148 = por %p146, %p147
    %p149 = scmp.ne.s32.totalorder %s140, %s141
    %p150 = scmp.eq.s32.totalorder %s25, 0
    %p151 = por %p149, %p150
    %p152 = scmp.ne.s32.totalorder %s140, %s141
    %p153 = scmp.eq.s32.totalorder %s26, 1
    %p154 = por %p152, %p153
    %p156 = scmp.ne.s32.totalorder %s141, %s155
    %p157 = scmp.eq.s32.totalorder %s26, 0
    %p158 = por %p156, %p157
    %s160 = sadd.s32 %s159, 1
    %p163 = scmp.eq.s32.totalorder %s20, 1
    %p164 = scmp.ne.s32.totalorder %s159, %s161
    %p165 = scmp.eq.s32.totalorder %s20, 0
    %p166 = por %p164, %p165
    %p167 = scmp.ne.s32.totalorder %s159, %s161
    %p168 = scmp.eq.s32.totalorder %s25, 1
    %p169 = por %p167, %p168
    %p170 = scmp.ne.s32.totalorder %s161, %s162
    %p171 = scmp.eq.s32.totalorder %s25, 0
    %p172 = por %p170, %p171
    %p173 = scmp.ne.s32.totalorder %s161, %s162
    %p174 = scmp.eq.s32.totalorder %s26, 1
    %p175 = por %p173, %p174
    %p177 = scmp.ne.s32.totalorder %s162, %s176
    %p178 = scmp.eq.s32.totalorder %s26, 0
    %p179 = por %p177, %p178
    %s181 = sadd.s32 %s180, 1
    %p184 = scmp.eq.s32.totalorder %s20, 1
    %p185 = scmp.ne.s32.totalorder %s180, %s182
    %p186 = scmp.eq.s32.totalorder %s20, 0
    %p187 = por %p185, %p186
    %p188 = scmp.ne.s32.totalorder %s180, %s182
    %p189 = scmp.eq.s32.totalorder %s25, 1
    %p190 = por %p188, %p189
    %p191 = scmp.ne.s32.totalorder %s182, %s183
    %p192 = scmp.eq.s32.totalorder %s25, 0
    %p193 = por %p191, %p192
    %p194 = scmp.ne.s32.totalorder %s182, %s183
    %p195 = scmp.eq.s32.totalorder %s26, 1
    %p196 = por %p194, %p195
    %p198 = scmp.ne.s32.totalorder %s183, %s197
    %p199 = scmp.eq.s32.totalorder %s26, 0
    %p200 = por %p198, %p199
    %s202 = sadd.s32 %s201, 1
    %p205 = scmp.eq.s32.totalorder %s20, 1
    %p206 = scmp.ne.s32.totalorder %s201, %s203
    %p207 = scmp.eq.s32.totalorder %s20, 0
    %p208 = por %p206, %p207
    %p209 = scmp.ne.s32.totalorder %s201, %s203
    %p210 = scmp.eq.s32.totalorder %s25, 1
    %p211 = por %p209, %p210
    %p212 = scmp.ne.s32.totalorder %s203, %s204
    %p213 = scmp.eq.s32.totalorder %s25, 0
    %p214 = por %p212, %p213
    %p215 = scmp.ne.s32.totalorder %s203, %s204
    %p216 = scmp.eq.s32.totalorder %s26, 1
    %p217 = por %p215, %p216
    %p219 = scmp.ne.s32.totalorder %s204, %s218
    %p220 = scmp.eq.s32.totalorder %s26, 0
    %p221 = por %p219, %p220
    %s223 = sadd.s32 %s222, 1
    %p226 = scmp.eq.s32.totalorder %s20, 1
    %p227 = scmp.ne.s32.totalorder %s222, %s224
    %p228 = scmp.eq.s32.totalorder %s20, 0
    %p229 = por %p227, %p228
    %p230 = scmp.ne.s32.totalorder %s222, %s224
    %p231 = scmp.eq.s32.totalorder %s25, 1
    %p232 = por %p230, %p231
    %p233 = scmp.ne.s32.totalorder %s224, %s225
    %p234 = scmp.eq.s32.totalorder %s25, 0
    %p235 = por %p233, %p234
    %p236 = scmp.ne.s32.totalorder %s224, %s225
    %p237 = scmp.eq.s32.totalorder %s26, 1
    %p238 = por %p236, %p237
    %p240 = scmp.ne.s32.totalorder %s225, %s239
    %p241 = scmp.eq.s32.totalorder %s26, 0
    %p242 = por %p240, %p241
    %s244 = sadd.s32 %s243, 1
    %p247 = scmp.eq.s32.totalorder %s20, 1
    %p248 = scmp.ne.s32.totalorder %s243, %s245
    %p249 = scmp.eq.s32.totalorder %s20, 0
    %p250 = por %p248, %p249
    %p251 = scmp.ne.s32.totalorder %s243, %s245
    %p252 = scmp.eq.s32.totalorder %s25, 1
    %p253 = por %p251, %p252
    %p254 = scmp.ne.s32.totalorder %s245, %s246
    %p255 = scmp.eq.s32.totalorder %s25, 0
    %p256 = por %p254, %p255
    %p257 = scmp.ne.s32.totalorder %s245, %s246
    %p258 = scmp.eq.s32.totalorder %s26, 1
    %p259 = por %p257, %p258
    %p261 = scmp.ne.s32.totalorder %s246, %s260
    %p262 = scmp.eq.s32.totalorder %s26, 0
    %p263 = por %p261, %p262
    %s265 = sadd.s32 %s264, 1
    %p268 = scmp.eq.s32.totalorder %s20, 1
    %p269 = scmp.ne.s32.totalorder %s264, %s266
    %p270 = scmp.eq.s32.totalorder %s20, 0
    %p271 = por %p269, %p270
    %p272 = scmp.ne.s32.totalorder %s264, %s266
    %p273 = scmp.eq.s32.totalorder %s25, 1
    %p274 = por %p272, %p273
    %p275 = scmp.ne.s32.totalorder %s266, %s267
    %p276 = scmp.eq.s32.totalorder %s25, 0
    %p277 = por %p275, %p276
    %p278 = scmp.ne.s32.totalorder %s266, %s267
    %p279 = scmp.eq.s32.totalorder %s26, 1
    %p280 = por %p278, %p279
    %p282 = scmp.ne.s32.totalorder %s267, %s281
    %p283 = scmp.eq.s32.totalorder %s26, 0
    %p284 = por %p282, %p283
    %s286 = sadd.s32 %s285, 1
    %p289 = scmp.eq.s32.totalorder %s20, 1
    %p290 = scmp.ne.s32.totalorder %s285, %s287
    %p291 = scmp.eq.s32.totalorder %s20, 0
    %p292 = por %p290, %p291
    %p293 = scmp.ne.s32.totalorder %s285, %s287
    %p294 = scmp.eq.s32.totalorder %s25, 1
    %p295 = por %p293, %p294
    %p296 = scmp.ne.s32.totalorder %s287, %s288
    %p297 = scmp.eq.s32.totalorder %s25, 0
    %p298 = por %p296, %p297
    %p299 = scmp.ne.s32.totalorder %s287, %s288
    %p300 = scmp.eq.s32.totalorder %s26, 1
    %p301 = por %p299, %p300
    %p303 = scmp.ne.s32.totalorder %s288, %s302
    %p304 = scmp.eq.s32.totalorder %s26, 0
    %p305 = por %p303, %p304
    %s307 = sadd.s32 %s306, 1
    %p310 = scmp.eq.s32.totalorder %s20, 1
    %p311 = scmp.ne.s32.totalorder %s306, %s308
    %p312 = scmp.eq.s32.totalorder %s20, 0
    %p313 = por %p311, %p312
    %p314 = scmp.ne.s32.totalorder %s306, %s308
    %p315 = scmp.eq.s32.totalorder %s25, 1
    %p316 = por %p314, %p315
    %p317 = scmp.ne.s32.totalorder %s308, %s309
    %p318 = scmp.eq.s32.totalorder %s25, 0
    %p319 = por %p317, %p318
    %p320 = scmp.ne.s32.totalorder %s308, %s309
    %p321 = scmp.eq.s32.totalorder %s26, 1
    %p322 = por %p320, %p321
    %p324 = scmp.ne.s32.totalorder %s309, %s323
    %p325 = scmp.eq.s32.totalorder %s26, 0
    %p326 = por %p324, %p325
    %s327 = ssub.s32 %s20, %s27
    %p328 = scmp.eq.s32.totalorder %s327, 0
    %s330 = sadd.s32 %s329, 1
    %s331 = scalar_select %p328, %s329, %s330
    %p334 = pneg %p328
    %p335 = scmp.eq.s32.totalorder %s20, 1
    %p336 = por %p334, %p335
    %p337 = scmp.ne.s32.totalorder %s329, %s332
    %p338 = scmp.eq.s32.totalorder %s20, 0
    %p339 = por %p337, %p338
    %p340 = scmp.ne.s32.totalorder %s329, %s332
    %p341 = scmp.eq.s32.totalorder %s25, 1
    %p342 = por %p340, %p341
    %p343 = scmp.ne.s32.totalorder %s332, %s333
    %p344 = scmp.eq.s32.totalorder %s25, 0
    %p345 = por %p343, %p344
    %p346 = scmp.ne.s32.totalorder %s332, %s333
    %p347 = scmp.eq.s32.totalorder %s26, 1
    %p348 = por %p346, %p347
    %p350 = scmp.ne.s32.totalorder %s333, %s349
    %p351 = scmp.eq.s32.totalorder %s26, 0
    %p352 = por %p350, %p351
    %p353 = scmp.le.s32.totalorder 1, %s20
    %p354 = scmp.lt.s32.totalorder %s20, 3
    %p355 = pnand %p353, %p354
    %p356 = pneg %p355
    // Predicated region
    $region9: #{network_forward.1} parent=5 // pred_check
      _
    $region10: #{network_forward.1} parent=5 // pred_check_branch
      %358 = sbr.rel (%p355) target = $region12
    $region11: #{network_forward.1} parent=5 // pred_region
      %s359 = ssub.s32 %s20, 1
      // Predicated region
      $region13: #{network_forward.1} parent=11 // pred_check
        %p360 = pneg %p67
      $region14: #{network_forward.1} parent=11 // pred_check_branch
        %362 = sbr.rel (%p360) target = $region16
      $region15: #{network_forward.1} parent=11 // pred_region
        _
      $region16: #{network_forward.1} parent=11 // pred_fallthru
        _
      // Predicated region
      $region17: #{network_forward.1} parent=11 // pred_check
        %p363 = pneg %p88
      $region18: #{network_forward.1} parent=11 // pred_check_branch
        %365 = sbr.rel (%p363) target = $region20
      $region19: #{network_forward.1} parent=11 // pred_region
        _
      $region20: #{network_forward.1} parent=11 // pred_fallthru
        _
      // Predicated region
      $region21: #{network_forward.1} parent=11 // pred_check
        %p366 = pneg %p109
      $region22: #{network_forward.1} parent=11 // pred_check_branch
        %368 = sbr.rel (%p366) target = $region24
      $region23: #{network_forward.1} parent=11 // pred_region
        _
      $region24: #{network_forward.1} parent=11 // pred_fallthru
        _
      // Predicated region
      $region25: #{network_forward.1} parent=11 // pred_check
        %p369 = pneg %p130
      $region26: #{network_forward.1} parent=11 // pred_check_branch
        %371 = sbr.rel (%p369) target = $region28
      $region27: #{network_forward.1} parent=11 // pred_region
        _
      $region28: #{network_forward.1} parent=11 // pred_fallthru
        _
      // Predicated region
      $region29: #{network_forward.1} parent=11 // pred_check
        %p372 = pneg %p151
      $region30: #{network_forward.1} parent=11 // pred_check_branch
        %374 = sbr.rel (%p372) target = $region32
      $region31: #{network_forward.1} parent=11 // pred_region
        _
      $region32: #{network_forward.1} parent=11 // pred_fallthru
        _
      // Predicated region
      $region33: #{network_forward.1} parent=11 // pred_check
        %p375 = pneg %p172
      $region34: #{network_forward.1} parent=11 // pred_check_branch
        %377 = sbr.rel (%p375) target = $region36
      $region35: #{network_forward.1} parent=11 // pred_region
        _
      $region36: #{network_forward.1} parent=11 // pred_fallthru
        _
      // Predicated region
      $region37: #{network_forward.1} parent=11 // pred_check
        %p378 = pneg %p193
      $region38: #{network_forward.1} parent=11 // pred_check_branch
        %380 = sbr.rel (%p378) target = $region40
      $region39: #{network_forward.1} parent=11 // pred_region
        _
      $region40: #{network_forward.1} parent=11 // pred_fallthru
        _
      // Predicated region
      $region41: #{network_forward.1} parent=11 // pred_check
        %p381 = pneg %p214
      $region42: #{network_forward.1} parent=11 // pred_check_branch
        %383 = sbr.rel (%p381) target = $region44
      $region43: #{network_forward.1} parent=11 // pred_region
        _
      $region44: #{network_forward.1} parent=11 // pred_fallthru
        _
      // Predicated region
      $region45: #{network_forward.1} parent=11 // pred_check
        %p384 = pneg %p235
      $region46: #{network_forward.1} parent=11 // pred_check_branch
        %386 = sbr.rel (%p384) target = $region48
      $region47: #{network_forward.1} parent=11 // pred_region
        _
      $region48: #{network_forward.1} parent=11 // pred_fallthru
        _
      // Predicated region
      $region49: #{network_forward.1} parent=11 // pred_check
        %p387 = pneg %p256
      $region50: #{network_forward.1} parent=11 // pred_check_branch
        %389 = sbr.rel (%p387) target = $region52
      $region51: #{network_forward.1} parent=11 // pred_region
        _
      $region52: #{network_forward.1} parent=11 // pred_fallthru
        _
      // Predicated region
      $region53: #{network_forward.1} parent=11 // pred_check
        %p390 = pneg %p277
      $region54: #{network_forward.1} parent=11 // pred_check_branch
        %392 = sbr.rel (%p390) target = $region56
      $region55: #{network_forward.1} parent=11 // pred_region
        _
      $region56: #{network_forward.1} parent=11 // pred_fallthru
        _
      // Predicated region
      $region57: #{network_forward.1} parent=11 // pred_check
        %p393 = pneg %p298
      $region58: #{network_forward.1} parent=11 // pred_check_branch
        %395 = sbr.rel (%p393) target = $region60
      $region59: #{network_forward.1} parent=11 // pred_region
        _
      $region60: #{network_forward.1} parent=11 // pred_fallthru
        _
      // Predicated region
      $region61: #{network_forward.1} parent=11 // pred_check
        %p396 = pneg %p319
      $region62: #{network_forward.1} parent=11 // pred_check_branch
        %398 = sbr.rel (%p396) target = $region64
      $region63: #{network_forward.1} parent=11 // pred_region
        _
      $region64: #{network_forward.1} parent=11 // pred_fallthru
        _
    $region12: #{network_forward.1} parent=5 // pred_fallthru
      _
    %p399 = scmp.lt.s32.totalorder %s20, 2
    // Predicated region
    $region65: #{network_forward.1} parent=5 // pred_check
      %p400 = pneg %p399
    $region66: #{network_forward.1} parent=5 // pred_check_branch
      %402 = sbr.rel (%p400) target = $region68
    $region67: #{network_forward.1} parent=5 // pred_region
      // Predicated region
      $region69: #{network_forward.1} parent=67 // pred_check
        %p403 = pneg %p40
      $region70: #{network_forward.1} parent=67 // pred_check_branch
        %405 = sbr.rel (%p403) target = $region72
      $region71: #{network_forward.1} parent=67 // pred_region
        %p406 = scmp.lt.s32.totalorder %s20, 1
        %s407 = scalar_select %p406, %s20, 1
        %s408 = smul.addr %s407, 24
        %s409 = smul.addr %s408, 8
        %s410 = scalar_lea.vmem %s0, %s409
      $region72: #{network_forward.1} parent=67 // pred_fallthru
        _
    $region68: #{network_forward.1} parent=5 // pred_fallthru
      _
    %p411 = scmp.le.s32.totalorder 1, %s20
    %p412 = scmp.lt.s32.totalorder %s20, 3
    %p413 = pnand %p411, %p412
    %p414 = pneg %p413
    // Predicated region
    $region73: #{network_forward.1} parent=5 // pred_check
      _
    $region74: #{network_forward.1} parent=5 // pred_check_branch
      %416 = sbr.rel (%p413) target = $region76
    $region75: #{network_forward.1} parent=5 // pred_region
      %s417 = ssub.s32 %s20, 1
      %p418 = scmp.lt.s32.totalorder %s25, 1
      %s419 = scalar_select %p418, %s25, 1
      %s420 = smul.addr %s419, 24
      %s421 = smul.addr %s420, 8
      %s422 = scalar_lea.vmem %s0, %s421
      %p423 = pneg %p46
      %p424 = pneg %p43
      %p425 = pneg %p67
      %p426 = pneg %p64
      %p427 = pneg %p88
      %p428 = pneg %p85
      %p429 = pneg %p109
      %p430 = pneg %p106
      %p431 = pneg %p130
      %p432 = pneg %p127
      %p433 = pneg %p151
      %p434 = pneg %p148
      %p435 = pneg %p172
      %p436 = pneg %p169
      %p437 = pneg %p193
      %p438 = pneg %p190
      %p439 = pneg %p214
      %p440 = pneg %p211
      %p441 = pneg %p235
      %p442 = pneg %p232
      %p443 = pneg %p256
      %p444 = pneg %p253
      %p445 = pneg %p277
      %p446 = pneg %p274
      %p447 = pneg %p298
      %p448 = pneg %p295
      %p449 = pneg %p319
      %p450 = pneg %p316
      %p451 = pneg %p345
      %p452 = pneg %p342
      %p453 = scmp.lt.s32.totalorder %s25, 1
      %s454 = scalar_select %p453, %s25, 1
      %s455 = smul.addr %s454, 8
      %s456 = scalar_lea.vmem %s14, %s455
      %p457 = scmp.lt.s32.totalorder %s25, 1
      %s458 = scalar_select %p457, %s25, 1
      %s459 = smul.addr %s458, 24
      %s460 = smul.addr %s459, 8
      %s461 = scalar_lea.vmem %s0, %s460
      %p462 = scmp.lt.s32.totalorder %s25, 1
      %s463 = scalar_select %p462, %s25, 1
      %s464 = smul.addr %s463, 8
      %s465 = scalar_lea.vmem %s14, %s464
      %v467 = vld [vmem:[%s1] sm:$0xf]
      %v468 = vld [vmem:[%s1 + $0x4] sm:$0xf]
      %v469 = vld [vmem:[%s1 + $0x8] sm:$0x3]
      %v470 = vld [vmem:[%s461] sm:$0xff]
      %v471 = vld [vmem:[%s461 + $0x8] sm:$0xff]
      %v472 = vld [vmem:[%s461 + $0x10] sm:$0xff]
      %v473 = vld [vmem:[%s461 + $0x18] sm:$0xff]
      %v474 = vld [vmem:[%s461 + $0x20] sm:$0xff]
      %v475 = vld [vmem:[%s461 + $0x28] sm:$0x3]
      %v476 = vpack.c.bf16 %v471, %v470
      %v477 = vpack.c.bf16 %v473, %v472
      %v478 = vpack.c.bf16 %v475, %v474
      %v482 = vunpack.c.l.b16 %v467
      %v483 = vunpack.c.l.b16 %v468
      %v484 = vunpack.c.l.b16 %v469
      %v485 = vpack.c.b16 %v483, %v482
      %v486 = vpack.c.b16 %v484, %v484
      %vm487 = vcmask 343040
      %v489 = vsel %vm487, %v485, 0
      %v492 = vsel %vm487, %v486, 0
      %vm494 = vcmask 1044480
      %v496 = vsel %vm494, %v478, 0
      %498 = vmatprep.subr.bf16.mxu0 0
      %499 = vmatpush1.bf16.msra.mxu0 0
      %500 = vmatprep.subr.bf16.mxu0 0
      %501 = vmatpush1.bf16.msra.mxu0 0
      %502 = vmatprep.subr.bf16.mxu0 0
      %503 = vmatpush1.bf16.msra.mxu0 0
      %504 = vmatprep.subr.bf16.mxu0 0
      %505 = vmatpush1.bf16.msra.mxu0 0
      %506 = vmatprep.subr.bf16.mxu0 0
      %507 = vmatpush1.bf16.msra.mxu0 0
      %508 = vmatprep.subr.bf16.mxu0 0
      %509 = vmatpush1.bf16.msra.mxu0 %v496
      %510 = vmatprep.subr.bf16.mxu0 0
      %511 = vmatpush1.bf16.msra.mxu0 %v477
      %512 = vmatprep.subr.bf16.mxu0 0
      %513 = vmatpush1.bf16.msra.mxu0 %v476
      %514 = vmatprep.subr.bf16.mxu0 0
      %515 = vmatpush2.bf16.msra.mxu0 0
      %516 = vmatprep.subr.bf16.mxu0 0
      %517 = vmatpush2.bf16.msra.mxu0 0
      %518 = vmatprep.subr.bf16.mxu0 0
      %519 = vmatpush2.bf16.msra.mxu0 0
      %520 = vmatprep.subr.bf16.mxu0 0
      %521 = vmatpush2.bf16.msra.mxu0 0
      %522 = vmatprep.subr.bf16.mxu0 0
      %523 = vmatpush2.bf16.msra.mxu0 0
      %524 = vmatprep.subr.bf16.mxu0 0
      %525 = vmatpush2.bf16.msra.mxu0 0
      %526 = vmatprep.subr.bf16.mxu0 0
      %527 = vmatpush2.bf16.msra.mxu0 0
      %528 = vmatprep.subr.bf16.mxu0 0
      %529 = vmatpush2.bf16.msra.mxu0 0
      %530 = vmatprep.mubr.bf16.mxu0 0
      %531 = vmatmul.mubr.bf16.gmra.mxu0 %v489
      %v532 = vpop.f32.mrf.mxu0
      %v533 = vadd.f32 0.0, %v532
      %v534 = vpop.f32.mrf.mxu0
      %v535 = vpop.f32.mrf.mxu0
      %v536 = vadd.f32 0.0, %v535
      %v537 = vpop.f32.mrf.mxu0
      %538 = vmatprep.mubr.bf16.mxu0 0
      %539 = vmatmul.mubr.bf16.gmra.mxu0 %v492
      %v540 = vpop.f32.mrf.mxu0
      %v541 = vadd.f32 0.0, %v540
      %v542 = vpop.f32.mrf.mxu0
      %v543 = vpop.f32.mrf.mxu0
      %v544 = vpop.f32.mrf.mxu0
      %545 = vdwg.mxu0
      %v546 = vpack.c.bf16 %v536, %v533
      %v547 = vpack.c.bf16 %v541, %v541
      %v548 = vld [vmem:[%s2] sm:$0xff]
      %v549 = vld [vmem:[%s2 + $0x8] sm:$0xff]
      %v550 = vld [vmem:[%s2 + $0x10] sm:$0xf]
      %v551 = vld [vmem:[%s2 + $0x14] sm:$0xff]
      %v552 = vld [vmem:[%s2 + $0x1c] sm:$0xff]
      %v553 = vld [vmem:[%s2 + $0x24] sm:$0xf]
      %v554 = vld [vmem:[%s2 + $0x28] sm:$0xff]
      %v555 = vld [vmem:[%s2 + $0x30] sm:$0xff]
      %v556 = vld [vmem:[%s2 + $0x38] sm:$0xf]
      %v557 = vld [vmem:[%s2 + $0x3c] sm:$0xff]
      %v558 = vld [vmem:[%s2 + $0x44] sm:$0xff]
      %v559 = vld [vmem:[%s2 + $0x4c] sm:$0xf]
      %v560 = vld [vmem:[%s2 + $0x50] sm:$0xff]
      %v561 = vld [vmem:[%s2 + $0x58] sm:$0xff]
      %v562 = vld [vmem:[%s2 + $0x60] sm:$0xf]
      %v563 = vld [vmem:[%s2 + $0x64] sm:$0x11]
      %v564 = vld [vmem:[%s2 + $0x6c] sm:$0x11]
      %v565 = vld [vmem:[%s2 + $0x74] sm:$0x1]
      %s566 = scalar_lea.vmem %s461, 48
      %v567 = vld [vmem:[%s566] sm:$0xff]
      %v568 = vld [vmem:[%s566 + $0x8] sm:$0xff]
      %v569 = vld [vmem:[%s566 + $0x10] sm:$0xff]
      %v570 = vld [vmem:[%s566 + $0x18] sm:$0xff]
      %v571 = vld [vmem:[%s566 + $0x20] sm:$0xff]
      %v572 = vld [vmem:[%s566 + $0x28] sm:$0x3]
      %v573 = vpack.c.bf16 %v568, %v567
      %v574 = vpack.c.bf16 %v570, %v569
      %v575 = vpack.c.bf16 %v572, %v571
      %v577 = vsel %vm494, %v575, 0
      %579 = vmatprep.subr.bf16.mxu0 0
      %580 = vmatpush1.bf16.msra.mxu0 0
      %581 = vmatprep.subr.bf16.mxu0 0
      %582 = vmatpush1.bf16.msra.mxu0 0
      %583 = vmatprep.subr.bf16.mxu0 0
      %584 = vmatpush1.bf16.msra.mxu0 0
      %585 = vmatprep.subr.bf16.mxu0 0
      %586 = vmatpush1.bf16.msra.mxu0 0
      %587 = vmatprep.subr.bf16.mxu0 0
      %588 = vmatpush1.bf16.msra.mxu0 0
      %589 = vmatprep.subr.bf16.mxu0 0
      %590 = vmatpush1.bf16.msra.mxu0 %v577
      %591 = vmatprep.subr.bf16.mxu0 0
      %592 = vmatpush1.bf16.msra.mxu0 %v574
      %593 = vmatprep.subr.bf16.mxu0 0
      %594 = vmatpush1.bf16.msra.mxu0 %v573
      %595 = vmatprep.subr.bf16.mxu0 0
      %596 = vmatpush2.bf16.msra.mxu0 0
      %597 = vmatprep.subr.bf16.mxu0 0
      %598 = vmatpush2.bf16.msra.mxu0 0
      %599 = vmatprep.subr.bf16.mxu0 0
      %600 = vmatpush2.bf16.msra.mxu0 0
      %601 = vmatprep.subr.bf16.mxu0 0
      %602 = vmatpush2.bf16.msra.mxu0 0
      %603 = vmatprep.subr.bf16.mxu0 0
      %604 = vmatpush2.bf16.msra.mxu0 0
      %605 = vmatprep.subr.bf16.mxu0 0
      %606 = vmatpush2.bf16.msra.mxu0 0
      %607 = vmatprep.subr.bf16.mxu0 0
      %608 = vmatpush2.bf16.msra.mxu0 0
      %609 = vmatprep.subr.bf16.mxu0 0
      %610 = vmatpush2.bf16.msra.mxu0 0
      %611 = vmatprep.mubr.bf16.mxu0 0
      %612 = vmatmul.mubr.bf16.gmra.mxu0 %v489
      %v613 = vpop.f32.mrf.mxu0
      %v614 = vadd.f32 0.0, %v613
      %v615 = vpop.f32.mrf.mxu0
      %v616 = vpop.f32.mrf.mxu0
      %v617 = vadd.f32 0.0, %v616
      %v618 = vpop.f32.mrf.mxu0
      %619 = vmatprep.mubr.bf16.mxu0 0
      %620 = vmatmul.mubr.bf16.gmra.mxu0 %v492
      %v621 = vpop.f32.mrf.mxu0
      %v622 = vadd.f32 0.0, %v621
      %v623 = vpop.f32.mrf.mxu0
      %v624 = vpop.f32.mrf.mxu0
      %v625 = vpop.f32.mrf.mxu0
      %626 = vdwg.mxu0
      %v627 = vpack.c.bf16 %v617, %v614
      %v628 = vpack.c.bf16 %v622, %v622
      %s629 = scalar_lea.vmem %s2, 120
      %v630 = vld [vmem:[%s629] sm:$0xff]
      %v631 = vld [vmem:[%s629 + $0x8] sm:$0xff]
      %v632 = vld [vmem:[%s629 + $0x10] sm:$0xf]
      %v633 = vld [vmem:[%s629 + $0x14] sm:$0xff]
      %v634 = vld [vmem:[%s629 + $0x1c] sm:$0xff]
      %v635 = vld [vmem:[%s629 + $0x24] sm:$0xf]
      %v636 = vld [vmem:[%s629 + $0x28] sm:$0xff]
      %v637 = vld [vmem:[%s629 + $0x30] sm:$0xff]
      %v638 = vld [vmem:[%s629 + $0x38] sm:$0xf]
      %v639 = vld [vmem:[%s629 + $0x3c] sm:$0xff]
      %v640 = vld [vmem:[%s629 + $0x44] sm:$0xff]
      %v641 = vld [vmem:[%s629 + $0x4c] sm:$0xf]
      %v642 = vld [vmem:[%s629 + $0x50] sm:$0xff]
      %v643 = vld [vmem:[%s629 + $0x58] sm:$0xff]
      %v644 = vld [vmem:[%s629 + $0x60] sm:$0xf]
      %v645 = vld [vmem:[%s629 + $0x64] sm:$0x11]
      %v646 = vld [vmem:[%s629 + $0x6c] sm:$0x11]
      %v647 = vld [vmem:[%s629 + $0x74] sm:$0x1]
      %v666 = vunpack.c.l.b16 %v630
      %v667 = vunpack.c.h.b16 %v630
      %v668 = vunpack.c.l.b16 %v631
      %v669 = vunpack.c.h.b16 %v631
      %v670 = vunpack.c.l.b16 %v632
      %v671 = vunpack.c.l.b16 %v633
      %v672 = vunpack.c.h.b16 %v633
      %v673 = vunpack.c.l.b16 %v634
      %v674 = vunpack.c.h.b16 %v634
      %v675 = vunpack.c.l.b16 %v635
      %v676 = vunpack.c.l.b16 %v636
      %v677 = vunpack.c.h.b16 %v636
      %v678 = vunpack.c.l.b16 %v637
      %v679 = vunpack.c.h.b16 %v637
      %v680 = vunpack.c.l.b16 %v638
      %v681 = vunpack.c.l.b16 %v639
      %v682 = vunpack.c.h.b16 %v639
      %v683 = vunpack.c.l.b16 %v640
      %v684 = vunpack.c.h.b16 %v640
      %v685 = vunpack.c.l.b16 %v641
      %v686 = vunpack.c.l.b16 %v642
      %v687 = vunpack.c.h.b16 %v642
      %v688 = vunpack.c.l.b16 %v643
      %v689 = vunpack.c.h.b16 %v643
      %v690 = vunpack.c.l.b16 %v644
      %v691 = vunpack.c.l.b16 %v645
      %v692 = vunpack.c.h.b16 %v645
      %v693 = vunpack.c.l.b16 %v646
      %v694 = vunpack.c.h.b16 %v646
      %v695 = vunpack.c.l.b16 %v647
      %v696 = vpack.c.b16 %v671, %v666
      %v697 = vpack.c.b16 %v672, %v667
      %v698 = vpack.c.b16 %v673, %v668
      %v699 = vpack.c.b16 %v674, %v669
      %v700 = vpack.c.b16 %v675, %v670
      %v701 = vpack.c.b16 %v681, %v676
      %v702 = vpack.c.b16 %v682, %v677
      %v703 = vpack.c.b16 %v683, %v678
      %v704 = vpack.c.b16 %v684, %v679
      %v705 = vpack.c.b16 %v685, %v680
      %v706 = vpack.c.b16 %v691, %v686
      %v707 = vpack.c.b16 %v692, %v687
      %v708 = vpack.c.b16 %v693, %v688
      %v709 = vpack.c.b16 %v694, %v689
      %v710 = vpack.c.b16 %v695, %v690
      %v722 = vsel %vm487, %v627, 0
      %v725 = vsel %vm487, %v628, 0
      %v728 = vsel %vm494, %v706, 0
      %v731 = vsel %vm494, %v707, 0
      %v734 = vsel %vm494, %v708, 0
      %v737 = vsel %vm494, %v709, 0
      %v740 = vsel %vm494, %v710, 0
      %742 = vmatprep.subr.bf16.mxu0 0
      %743 = vmatpush1.bf16.msra.mxu0 0
      %744 = vmatprep.subr.bf16.mxu0 0
      %745 = vmatpush1.bf16.msra.mxu0 0
      %746 = vmatprep.subr.bf16.mxu0 0
      %747 = vmatpush1.bf16.msra.mxu0 0
      %748 = vmatprep.subr.bf16.mxu0 0
      %749 = vmatpush1.bf16.msra.mxu0 0
      %750 = vmatprep.subr.bf16.mxu0 0
      %751 = vmatpush1.bf16.msra.mxu0 0
      %752 = vmatprep.subr.bf16.mxu0 %v731
      %753 = vmatpush1.bf16.msra.mxu0 %v728
      %754 = vmatprep.subr.bf16.mxu0 %v702
      %755 = vmatpush1.bf16.msra.mxu0 %v701
      %756 = vmatprep.subr.bf16.mxu0 %v697
      %757 = vmatpush1.bf16.msra.mxu0 %v696
      %758 = vmatprep.subr.bf16.mxu0 0
      %759 = vmatpush2.bf16.msra.mxu0 0
      %760 = vmatprep.subr.bf16.mxu0 0
      %761 = vmatpush2.bf16.msra.mxu0 0
      %762 = vmatprep.subr.bf16.mxu0 0
      %763 = vmatpush2.bf16.msra.mxu0 0
      %764 = vmatprep.subr.bf16.mxu0 0
      %765 = vmatpush2.bf16.msra.mxu0 0
      %766 = vmatprep.subr.bf16.mxu0 0
      %767 = vmatpush2.bf16.msra.mxu0 0
      %768 = vmatprep.subr.bf16.mxu0 0
      %769 = vmatpush2.bf16.msra.mxu0 0
      %770 = vmatprep.subr.bf16.mxu0 0
      %771 = vmatpush2.bf16.msra.mxu0 0
      %772 = vmatprep.subr.bf16.mxu0 0
      %773 = vmatpush2.bf16.msra.mxu0 0
      %774 = vmatprep.mubr.bf16.mxu0 0
      %775 = vmatmul.mubr.bf16.gmra.mxu0 %v722
      %v776 = vpop.f32.mrf.mxu0
      %v777 = vadd.f32 0.0, %v776
      %v778 = vpop.f32.mrf.mxu0
      %v779 = vadd.f32 0.0, %v778
      %v780 = vpop.f32.mrf.mxu0
      %v781 = vadd.f32 0.0, %v780
      %v782 = vpop.f32.mrf.mxu0
      %v783 = vadd.f32 0.0, %v782
      %784 = vmatprep.mubr.bf16.mxu0 0
      %785 = vmatmul.mubr.bf16.gmra.mxu0 %v725
      %v786 = vpop.f32.mrf.mxu0
      %v787 = vadd.f32 0.0, %v786
      %v788 = vpop.f32.mrf.mxu0
      %v789 = vadd.f32 0.0, %v788
      %v790 = vpop.f32.mrf.mxu0
      %v791 = vpop.f32.mrf.mxu0
      %792 = vdwg.mxu0
      %793 = vmatprep.subr.bf16.mxu0 0
      %794 = vmatpush1.bf16.msra.mxu0 0
      %795 = vmatprep.subr.bf16.mxu0 0
      %796 = vmatpush1.bf16.msra.mxu0 0
      %797 = vmatprep.subr.bf16.mxu0 0
      %798 = vmatpush1.bf16.msra.mxu0 0
      %799 = vmatprep.subr.bf16.mxu0 0
      %800 = vmatpush1.bf16.msra.mxu0 0
      %801 = vmatprep.subr.bf16.mxu0 0
      %802 = vmatpush1.bf16.msra.mxu0 0
      %803 = vmatprep.subr.bf16.mxu0 %v737
      %804 = vmatpush1.bf16.msra.mxu0 %v734
      %805 = vmatprep.subr.bf16.mxu0 %v704
      %806 = vmatpush1.bf16.msra.mxu0 %v703
      %807 = vmatprep.subr.bf16.mxu0 %v699
      %808 = vmatpush1.bf16.msra.mxu0 %v698
      %809 = vmatprep.subr.bf16.mxu0 0
      %810 = vmatpush2.bf16.msra.mxu0 0
      %811 = vmatprep.subr.bf16.mxu0 0
      %812 = vmatpush2.bf16.msra.mxu0 0
      %813 = vmatprep.subr.bf16.mxu0 0
      %814 = vmatpush2.bf16.msra.mxu0 0
      %815 = vmatprep.subr.bf16.mxu0 0
      %816 = vmatpush2.bf16.msra.mxu0 0
      %817 = vmatprep.subr.bf16.mxu0 0
      %818 = vmatpush2.bf16.msra.mxu0 0
      %819 = vmatprep.subr.bf16.mxu0 0
      %820 = vmatpush2.bf16.msra.mxu0 0
      %821 = vmatprep.subr.bf16.mxu0 0
      %822 = vmatpush2.bf16.msra.mxu0 0
      %823 = vmatprep.subr.bf16.mxu0 0
      %824 = vmatpush2.bf16.msra.mxu0 0
      %825 = vmatprep.mubr.bf16.mxu0 0
      %826 = vmatmul.mubr.bf16.gmra.mxu0 %v722
      %v827 = vpop.f32.mrf.mxu0
      %v828 = vadd.f32 0.0, %v827
      %v829 = vpop.f32.mrf.mxu0
      %v830 = vadd.f32 0.0, %v829
      %v831 = vpop.f32.mrf.mxu0
      %v832 = vadd.f32 0.0, %v831
      %v833 = vpop.f32.mrf.mxu0
      %v834 = vadd.f32 0.0, %v833
      %835 = vmatprep.mubr.bf16.mxu0 0
      %836 = vmatmul.mubr.bf16.gmra.mxu0 %v725
      %v837 = vpop.f32.mrf.mxu0
      %v838 = vadd.f32 0.0, %v837
      %v839 = vpop.f32.mrf.mxu0
      %v840 = vadd.f32 0.0, %v839
      %v841 = vpop.f32.mrf.mxu0
      %v842 = vpop.f32.mrf.mxu0
      %843 = vdwg.mxu0
      %844 = vmatprep.subr.bf16.mxu0 0
      %845 = vmatpush1.bf16.msra.mxu0 0
      %846 = vmatprep.subr.bf16.mxu0 0
      %847 = vmatpush1.bf16.msra.mxu0 0
      %848 = vmatprep.subr.bf16.mxu0 0
      %849 = vmatpush1.bf16.msra.mxu0 0
      %850 = vmatprep.subr.bf16.mxu0 0
      %851 = vmatpush1.bf16.msra.mxu0 0
      %852 = vmatprep.subr.bf16.mxu0 0
      %853 = vmatpush1.bf16.msra.mxu0 0
      %854 = vmatprep.subr.bf16.mxu0 0
      %855 = vmatpush1.bf16.msra.mxu0 %v740
      %856 = vmatprep.subr.bf16.mxu0 0
      %857 = vmatpush1.bf16.msra.mxu0 %v705
      %858 = vmatprep.subr.bf16.mxu0 0
      %859 = vmatpush1.bf16.msra.mxu0 %v700
      %860 = vmatprep.subr.bf16.mxu0 0
      %861 = vmatpush2.bf16.msra.mxu0 0
      %862 = vmatprep.subr.bf16.mxu0 0
      %863 = vmatpush2.bf16.msra.mxu0 0
      %864 = vmatprep.subr.bf16.mxu0 0
      %865 = vmatpush2.bf16.msra.mxu0 0
      %866 = vmatprep.subr.bf16.mxu0 0
      %867 = vmatpush2.bf16.msra.mxu0 0
      %868 = vmatprep.subr.bf16.mxu0 0
      %869 = vmatpush2.bf16.msra.mxu0 0
      %870 = vmatprep.subr.bf16.mxu0 0
      %871 = vmatpush2.bf16.msra.mxu0 0
      %872 = vmatprep.subr.bf16.mxu0 0
      %873 = vmatpush2.bf16.msra.mxu0 0
      %874 = vmatprep.subr.bf16.mxu0 0
      %875 = vmatpush2.bf16.msra.mxu0 0
      %876 = vmatprep.mubr.bf16.mxu0 0
      %877 = vmatmul.mubr.bf16.gmra.mxu0 %v722
      %v878 = vpop.f32.mrf.mxu0
      %v879 = vadd.f32 0.0, %v878
      %v880 = vpop.f32.mrf.mxu0
      %v881 = vpop.f32.mrf.mxu0
      %v882 = vadd.f32 0.0, %v881
      %v883 = vpop.f32.mrf.mxu0
      %884 = vmatprep.mubr.bf16.mxu0 0
      %885 = vmatmul.mubr.bf16.gmra.mxu0 %v725
      %v886 = vpop.f32.mrf.mxu0
      %v887 = vadd.f32 0.0, %v886
      %v888 = vpop.f32.mrf.mxu0
      %v889 = vpop.f32.mrf.mxu0
      %v890 = vpop.f32.mrf.mxu0
      %891 = vdwg.mxu0
      %v910 = vunpack.c.l.b16 %v548
      %v911 = vunpack.c.h.b16 %v548
      %v912 = vunpack.c.l.b16 %v549
      %v913 = vunpack.c.h.b16 %v549
      %v914 = vunpack.c.l.b16 %v550
      %v915 = vunpack.c.l.b16 %v551
      %v916 = vunpack.c.h.b16 %v551
      %v917 = vunpack.c.l.b16 %v552
      %v918 = vunpack.c.h.b16 %v552
      %v919 = vunpack.c.l.b16 %v553
      %v920 = vunpack.c.l.b16 %v554
      %v921 = vunpack.c.h.b16 %v554
      %v922 = vunpack.c.l.b16 %v555
      %v923 = vunpack.c.h.b16 %v555
      %v924 = vunpack.c.l.b16 %v556
      %v925 = vunpack.c.l.b16 %v557
      %v926 = vunpack.c.h.b16 %v557
      %v927 = vunpack.c.l.b16 %v558
      %v928 = vunpack.c.h.b16 %v558
      %v929 = vunpack.c.l.b16 %v559
      %v930 = vunpack.c.l.b16 %v560
      %v931 = vunpack.c.h.b16 %v560
      %v932 = vunpack.c.l.b16 %v561
      %v933 = vunpack.c.h.b16 %v561
      %v934 = vunpack.c.l.b16 %v562
      %v935 = vunpack.c.l.b16 %v563
      %v936 = vunpack.c.h.b16 %v563
      %v937 = vunpack.c.l.b16 %v564
      %v938 = vunpack.c.h.b16 %v564
      %v939 = vunpack.c.l.b16 %v565
      %v940 = vpack.c.b16 %v915, %v910
      %v941 = vpack.c.b16 %v916, %v911
      %v942 = vpack.c.b16 %v917, %v912
      %v943 = vpack.c.b16 %v918, %v913
      %v944 = vpack.c.b16 %v919, %v914
      %v945 = vpack.c.b16 %v925, %v920
      %v946 = vpack.c.b16 %v926, %v921
      %v947 = vpack.c.b16 %v927, %v922
      %v948 = vpack.c.b16 %v928, %v923
      %v949 = vpack.c.b16 %v929, %v924
      %v950 = vpack.c.b16 %v935, %v930
      %v951 = vpack.c.b16 %v936, %v931
      %v952 = vpack.c.b16 %v937, %v932
      %v953 = vpack.c.b16 %v938, %v933
      %v954 = vpack.c.b16 %v939, %v934
      %v966 = vsel %vm487, %v546, 0
      %v969 = vsel %vm487, %v547, 0
      %v972 = vsel %vm494, %v950, 0
      %v975 = vsel %vm494, %v951, 0
      %v978 = vsel %vm494, %v952, 0
      %v981 = vsel %vm494, %v953, 0
      %v984 = vsel %vm494, %v954, 0
      %986 = vmatprep.subr.bf16.mxu0 0
      %987 = vmatpush1.bf16.msra.mxu0 0
      %988 = vmatprep.subr.bf16.mxu0 0
      %989 = vmatpush1.bf16.msra.mxu0 0
      %990 = vmatprep.subr.bf16.mxu0 0
      %991 = vmatpush1.bf16.msra.mxu0 0
      %992 = vmatprep.subr.bf16.mxu0 0
      %993 = vmatpush1.bf16.msra.mxu0 0
      %994 = vmatprep.subr.bf16.mxu0 0
      %995 = vmatpush1.bf16.msra.mxu0 0
      %996 = vmatprep.subr.bf16.mxu0 %v975
      %997 = vmatpush1.bf16.msra.mxu0 %v972
      %998 = vmatprep.subr.bf16.mxu0 %v946
      %999 = vmatpush1.bf16.msra.mxu0 %v945
      %1000 = vmatprep.subr.bf16.mxu0 %v941
      %1001 = vmatpush1.bf16.msra.mxu0 %v940
      %1002 = vmatprep.subr.bf16.mxu0 0
      %1003 = vmatpush2.bf16.msra.mxu0 0
      %1004 = vmatprep.subr.bf16.mxu0 0
      %1005 = vmatpush2.bf16.msra.mxu0 0
      %1006 = vmatprep.subr.bf16.mxu0 0
      %1007 = vmatpush2.bf16.msra.mxu0 0
      %1008 = vmatprep.subr.bf16.mxu0 0
      %1009 = vmatpush2.bf16.msra.mxu0 0
      %1010 = vmatprep.subr.bf16.mxu0 0
      %1011 = vmatpush2.bf16.msra.mxu0 0
      %1012 = vmatprep.subr.bf16.mxu0 0
      %1013 = vmatpush2.bf16.msra.mxu0 0
      %1014 = vmatprep.subr.bf16.mxu0 0
      %1015 = vmatpush2.bf16.msra.mxu0 0
      %1016 = vmatprep.subr.bf16.mxu0 0
      %1017 = vmatpush2.bf16.msra.mxu0 0
      %1018 = vmatprep.mubr.bf16.mxu0 0
      %1019 = vmatmul.mubr.bf16.gmra.mxu0 %v966
      %v1020 = vpop.f32.mrf.mxu0
      %v1021 = vadd.f32 %v777, %v1020
      %v1022 = vpop.f32.mrf.mxu0
      %v1023 = vadd.f32 %v779, %v1022
      %v1024 = vpop.f32.mrf.mxu0
      %v1025 = vadd.f32 %v781, %v1024
      %v1026 = vpop.f32.mrf.mxu0
      %v1027 = vadd.f32 %v783, %v1026
      %1028 = vmatprep.mubr.bf16.mxu0 0
      %1029 = vmatmul.mubr.bf16.gmra.mxu0 %v969
      %v1030 = vpop.f32.mrf.mxu0
      %v1031 = vadd.f32 %v787, %v1030
      %v1032 = vpop.f32.mrf.mxu0
      %v1033 = vadd.f32 %v789, %v1032
      %v1034 = vpop.f32.mrf.mxu0
      %v1035 = vpop.f32.mrf.mxu0
      %1036 = vdwg.mxu0
      %1037 = vmatprep.subr.bf16.mxu0 0
      %1038 = vmatpush1.bf16.msra.mxu0 0
      %1039 = vmatprep.subr.bf16.mxu0 0
      %1040 = vmatpush1.bf16.msra.mxu0 0
      %1041 = vmatprep.subr.bf16.mxu0 0
      %1042 = vmatpush1.bf16.msra.mxu0 0
      %1043 = vmatprep.subr.bf16.mxu0 0
      %1044 = vmatpush1.bf16.msra.mxu0 0
      %1045 = vmatprep.subr.bf16.mxu0 0
      %1046 = vmatpush1.bf16.msra.mxu0 0
      %1047 = vmatprep.subr.bf16.mxu0 %v981
      %1048 = vmatpush1.bf16.msra.mxu0 %v978
      %1049 = vmatprep.subr.bf16.mxu0 %v948
      %1050 = vmatpush1.bf16.msra.mxu0 %v947
      %1051 = vmatprep.subr.bf16.mxu0 %v943
      %1052 = vmatpush1.bf16.msra.mxu0 %v942
      %1053 = vmatprep.subr.bf16.mxu0 0
      %1054 = vmatpush2.bf16.msra.mxu0 0
      %1055 = vmatprep.subr.bf16.mxu0 0
      %1056 = vmatpush2.bf16.msra.mxu0 0
      %1057 = vmatprep.subr.bf16.mxu0 0
      %1058 = vmatpush2.bf16.msra.mxu0 0
      %1059 = vmatprep.subr.bf16.mxu0 0
      %1060 = vmatpush2.bf16.msra.mxu0 0
      %1061 = vmatprep.subr.bf16.mxu0 0
      %1062 = vmatpush2.bf16.msra.mxu0 0
      %1063 = vmatprep.subr.bf16.mxu0 0
      %1064 = vmatpush2.bf16.msra.mxu0 0
      %1065 = vmatprep.subr.bf16.mxu0 0
      %1066 = vmatpush2.bf16.msra.mxu0 0
      %1067 = vmatprep.subr.bf16.mxu0 0
      %1068 = vmatpush2.bf16.msra.mxu0 0
      %1069 = vmatprep.mubr.bf16.mxu0 0
      %1070 = vmatmul.mubr.bf16.gmra.mxu0 %v966
      %v1071 = vpop.f32.mrf.mxu0
      %v1072 = vadd.f32 %v828, %v1071
      %v1073 = vpop.f32.mrf.mxu0
      %v1074 = vadd.f32 %v830, %v1073
      %v1075 = vpop.f32.mrf.mxu0
      %v1076 = vadd.f32 %v832, %v1075
      %v1077 = vpop.f32.mrf.mxu0
      %v1078 = vadd.f32 %v834, %v1077
      %1079 = vmatprep.mubr.bf16.mxu0 0
      %1080 = vmatmul.mubr.bf16.gmra.mxu0 %v969
      %v1081 = vpop.f32.mrf.mxu0
      %v1082 = vadd.f32 %v838, %v1081
      %v1083 = vpop.f32.mrf.mxu0
      %v1084 = vadd.f32 %v840, %v1083
      %v1085 = vpop.f32.mrf.mxu0
      %v1086 = vpop.f32.mrf.mxu0
      %1087 = vdwg.mxu0
      %1088 = vmatprep.subr.bf16.mxu0 0
      %1089 = vmatpush1.bf16.msra.mxu0 0
      %1090 = vmatprep.subr.bf16.mxu0 0
      %1091 = vmatpush1.bf16.msra.mxu0 0
      %1092 = vmatprep.subr.bf16.mxu0 0
      %1093 = vmatpush1.bf16.msra.mxu0 0
      %1094 = vmatprep.subr.bf16.mxu0 0
      %1095 = vmatpush1.bf16.msra.mxu0 0
      %1096 = vmatprep.subr.bf16.mxu0 0
      %1097 = vmatpush1.bf16.msra.mxu0 0
      %1098 = vmatprep.subr.bf16.mxu0 0
      %1099 = vmatpush1.bf16.msra.mxu0 %v984
      %1100 = vmatprep.subr.bf16.mxu0 0
      %1101 = vmatpush1.bf16.msra.mxu0 %v949
      %1102 = vmatprep.subr.bf16.mxu0 0
      %1103 = vmatpush1.bf16.msra.mxu0 %v944
      %1104 = vmatprep.subr.bf16.mxu0 0
      %1105 = vmatpush2.bf16.msra.mxu0 0
      %1106 = vmatprep.subr.bf16.mxu0 0
      %1107 = vmatpush2.bf16.msra.mxu0 0
      %1108 = vmatprep.subr.bf16.mxu0 0
      %1109 = vmatpush2.bf16.msra.mxu0 0
      %1110 = vmatprep.subr.bf16.mxu0 0
      %1111 = vmatpush2.bf16.msra.mxu0 0
      %1112 = vmatprep.subr.bf16.mxu0 0
      %1113 = vmatpush2.bf16.msra.mxu0 0
      %1114 = vmatprep.subr.bf16.mxu0 0
      %1115 = vmatpush2.bf16.msra.mxu0 0
      %1116 = vmatprep.subr.bf16.mxu0 0
      %1117 = vmatpush2.bf16.msra.mxu0 0
      %1118 = vmatprep.subr.bf16.mxu0 0
      %1119 = vmatpush2.bf16.msra.mxu0 0
      %1120 = vmatprep.mubr.bf16.mxu0 0
      %1121 = vmatmul.mubr.bf16.gmra.mxu0 %v966
      %v1122 = vpop.f32.mrf.mxu0
      %v1123 = vadd.f32 %v879, %v1122
      %v1124 = vpop.f32.mrf.mxu0
      %v1125 = vpop.f32.mrf.mxu0
      %v1126 = vadd.f32 %v882, %v1125
      %v1127 = vpop.f32.mrf.mxu0
      %1128 = vmatprep.mubr.bf16.mxu0 0
      %1129 = vmatmul.mubr.bf16.gmra.mxu0 %v969
      %v1130 = vpop.f32.mrf.mxu0
      %v1131 = vadd.f32 %v887, %v1130
      %v1132 = vpop.f32.mrf.mxu0
      %v1133 = vpop.f32.mrf.mxu0
      %v1134 = vpop.f32.mrf.mxu0
      %1135 = vdwg.mxu0
      %s1136 = scalar_lea.vmem %s461, 96
      %v1137 = vld [vmem:[%s1136] sm:$0xff]
      %v1138 = vld [vmem:[%s1136 + $0x8] sm:$0xff]
      %v1139 = vld [vmem:[%s1136 + $0x10] sm:$0xff]
      %v1140 = vld [vmem:[%s1136 + $0x18] sm:$0xff]
      %v1141 = vld [vmem:[%s1136 + $0x20] sm:$0xff]
      %v1142 = vld [vmem:[%s1136 + $0x28] sm:$0x3]
      %v1143 = vpack.c.bf16 %v1138, %v1137
      %v1144 = vpack.c.bf16 %v1140, %v1139
      %v1145 = vpack.c.bf16 %v1142, %v1141
      %v1147 = vsel %vm494, %v1145, 0
      %1149 = vmatprep.subr.bf16.mxu0 0
      %1150 = vmatpush1.bf16.msra.mxu0 0
      %1151 = vmatprep.subr.bf16.mxu0 0
      %1152 = vmatpush1.bf16.msra.mxu0 0
      %1153 = vmatprep.subr.bf16.mxu0 0
      %1154 = vmatpush1.bf16.msra.mxu0 0
      %1155 = vmatprep.subr.bf16.mxu0 0
      %1156 = vmatpush1.bf16.msra.mxu0 0
      %1157 = vmatprep.subr.bf16.mxu0 0
      %1158 = vmatpush1.bf16.msra.mxu0 0
      %1159 = vmatprep.subr.bf16.mxu0 0
      %1160 = vmatpush1.bf16.msra.mxu0 %v1147
      %1161 = vmatprep.subr.bf16.mxu0 0
      %1162 = vmatpush1.bf16.msra.mxu0 %v1144
      %1163 = vmatprep.subr.bf16.mxu0 0
      %1164 = vmatpush1.bf16.msra.mxu0 %v1143
      %1165 = vmatprep.subr.bf16.mxu0 0
      %1166 = vmatpush2.bf16.msra.mxu0 0
      %1167 = vmatprep.subr.bf16.mxu0 0
      %1168 = vmatpush2.bf16.msra.mxu0 0
      %1169 = vmatprep.subr.bf16.mxu0 0
      %1170 = vmatpush2.bf16.msra.mxu0 0
      %1171 = vmatprep.subr.bf16.mxu0 0
      %1172 = vmatpush2.bf16.msra.mxu0 0
      %1173 = vmatprep.subr.bf16.mxu0 0
      %1174 = vmatpush2.bf16.msra.mxu0 0
      %1175 = vmatprep.subr.bf16.mxu0 0
      %1176 = vmatpush2.bf16.msra.mxu0 0
      %1177 = vmatprep.subr.bf16.mxu0 0
      %1178 = vmatpush2.bf16.msra.mxu0 0
      %1179 = vmatprep.subr.bf16.mxu0 0
      %1180 = vmatpush2.bf16.msra.mxu0 0
      %1181 = vmatprep.mubr.bf16.mxu0 0
      %1182 = vmatmul.mubr.bf16.gmra.mxu0 %v489
      %v1183 = vpop.f32.mrf.mxu0
      %v1184 = vadd.f32 0.0, %v1183
      %v1185 = vpop.f32.mrf.mxu0
      %v1186 = vpop.f32.mrf.mxu0
      %v1187 = vadd.f32 0.0, %v1186
      %v1188 = vpop.f32.mrf.mxu0
      %1189 = vmatprep.mubr.bf16.mxu0 0
      %1190 = vmatmul.mubr.bf16.gmra.mxu0 %v492
      %v1191 = vpop.f32.mrf.mxu0
      %v1192 = vadd.f32 0.0, %v1191
      %v1193 = vpop.f32.mrf.mxu0
      %v1194 = vpop.f32.mrf.mxu0
      %v1195 = vpop.f32.mrf.mxu0
      %1196 = vdwg.mxu0
      %v1197 = vpack.c.bf16 %v1187, %v1184
      %v1198 = vpack.c.bf16 %v1192, %v1192
      %s1199 = scalar_lea.vmem %s2, 240
      %v1200 = vld [vmem:[%s1199] sm:$0xff]
      %v1201 = vld [vmem:[%s1199 + $0x8] sm:$0xff]
      %v1202 = vld [vmem:[%s1199 + $0x10] sm:$0xf]
      %v1203 = vld [vmem:[%s1199 + $0x14] sm:$0xff]
      %v1204 = vld [vmem:[%s1199 + $0x1c] sm:$0xff]
      %v1205 = vld [vmem:[%s1199 + $0x24] sm:$0xf]
      %v1206 = vld [vmem:[%s1199 + $0x28] sm:$0xff]
      %v1207 = vld [vmem:[%s1199 + $0x30] sm:$0xff]
      %v1208 = vld [vmem:[%s1199 + $0x38] sm:$0xf]
      %v1209 = vld [vmem:[%s1199 + $0x3c] sm:$0xff]
      %v1210 = vld [vmem:[%s1199 + $0x44] sm:$0xff]
      %v1211 = vld [vmem:[%s1199 + $0x4c] sm:$0xf]
      %v1212 = vld [vmem:[%s1199 + $0x50] sm:$0xff]
      %v1213 = vld [vmem:[%s1199 + $0x58] sm:$0xff]
      %v1214 = vld [vmem:[%s1199 + $0x60] sm:$0xf]
      %v1215 = vld [vmem:[%s1199 + $0x64] sm:$0x11]
      %v1216 = vld [vmem:[%s1199 + $0x6c] sm:$0x11]
      %v1217 = vld [vmem:[%s1199 + $0x74] sm:$0x1]
      %v1236 = vunpack.c.l.b16 %v1200
      %v1237 = vunpack.c.h.b16 %v1200
      %v1238 = vunpack.c.l.b16 %v1201
      %v1239 = vunpack.c.h.b16 %v1201
      %v1240 = vunpack.c.l.b16 %v1202
      %v1241 = vunpack.c.l.b16 %v1203
      %v1242 = vunpack.c.h.b16 %v1203
      %v1243 = vunpack.c.l.b16 %v1204
      %v1244 = vunpack.c.h.b16 %v1204
      %v1245 = vunpack.c.l.b16 %v1205
      %v1246 = vunpack.c.l.b16 %v1206
      %v1247 = vunpack.c.h.b16 %v1206
      %v1248 = vunpack.c.l.b16 %v1207
      %v1249 = vunpack.c.h.b16 %v1207
      %v1250 = vunpack.c.l.b16 %v1208
      %v1251 = vunpack.c.l.b16 %v1209
      %v1252 = vunpack.c.h.b16 %v1209
      %v1253 = vunpack.c.l.b16 %v1210
      %v1254 = vunpack.c.h.b16 %v1210
      %v1255 = vunpack.c.l.b16 %v1211
      %v1256 = vunpack.c.l.b16 %v1212
      %v1257 = vunpack.c.h.b16 %v1212
      %v1258 = vunpack.c.l.b16 %v1213
      %v1259 = vunpack.c.h.b16 %v1213
      %v1260 = vunpack.c.l.b16 %v1214
      %v1261 = vunpack.c.l.b16 %v1215
      %v1262 = vunpack.c.h.b16 %v1215
      %v1263 = vunpack.c.l.b16 %v1216
      %v1264 = vunpack.c.h.b16 %v1216
      %v1265 = vunpack.c.l.b16 %v1217
      %v1266 = vpack.c.b16 %v1241, %v1236
      %v1267 = vpack.c.b16 %v1242, %v1237
      %v1268 = vpack.c.b16 %v1243, %v1238
      %v1269 = vpack.c.b16 %v1244, %v1239
      %v1270 = vpack.c.b16 %v1245, %v1240
      %v1271 = vpack.c.b16 %v1251, %v1246
      %v1272 = vpack.c.b16 %v1252, %v1247
      %v1273 = vpack.c.b16 %v1253, %v1248
      %v1274 = vpack.c.b16 %v1254, %v1249
      %v1275 = vpack.c.b16 %v1255, %v1250
      %v1276 = vpack.c.b16 %v1261, %v1256
      %v1277 = vpack.c.b16 %v1262, %v1257
      %v1278 = vpack.c.b16 %v1263, %v1258
      %v1279 = vpack.c.b16 %v1264, %v1259
      %v1280 = vpack.c.b16 %v1265, %v1260
      %v1292 = vsel %vm487, %v1197, 0
      %v1295 = vsel %vm487, %v1198, 0
      %v1298 = vsel %vm494, %v1276, 0
      %v1301 = vsel %vm494, %v1277, 0
      %v1304 = vsel %vm494, %v1278, 0
      %v1307 = vsel %vm494, %v1279, 0
      %v1310 = vsel %vm494, %v1280, 0
      %1312 = vmatprep.subr.bf16.mxu0 0
      %1313 = vmatpush1.bf16.msra.mxu0 0
      %1314 = vmatprep.subr.bf16.mxu0 0
      %1315 = vmatpush1.bf16.msra.mxu0 0
      %1316 = vmatprep.subr.bf16.mxu0 0
      %1317 = vmatpush1.bf16.msra.mxu0 0
      %1318 = vmatprep.subr.bf16.mxu0 0
      %1319 = vmatpush1.bf16.msra.mxu0 0
      %1320 = vmatprep.subr.bf16.mxu0 0
      %1321 = vmatpush1.bf16.msra.mxu0 0
      %1322 = vmatprep.subr.bf16.mxu0 %v1301
      %1323 = vmatpush1.bf16.msra.mxu0 %v1298
      %1324 = vmatprep.subr.bf16.mxu0 %v1272
      %1325 = vmatpush1.bf16.msra.mxu0 %v1271
      %1326 = vmatprep.subr.bf16.mxu0 %v1267
      %1327 = vmatpush1.bf16.msra.mxu0 %v1266
      %1328 = vmatprep.subr.bf16.mxu0 0
      %1329 = vmatpush2.bf16.msra.mxu0 0
      %1330 = vmatprep.subr.bf16.mxu0 0
      %1331 = vmatpush2.bf16.msra.mxu0 0
      %1332 = vmatprep.subr.bf16.mxu0 0
      %1333 = vmatpush2.bf16.msra.mxu0 0
      %1334 = vmatprep.subr.bf16.mxu0 0
      %1335 = vmatpush2.bf16.msra.mxu0 0
      %1336 = vmatprep.subr.bf16.mxu0 0
      %1337 = vmatpush2.bf16.msra.mxu0 0
      %1338 = vmatprep.subr.bf16.mxu0 0
      %1339 = vmatpush2.bf16.msra.mxu0 0
      %1340 = vmatprep.subr.bf16.mxu0 0
      %1341 = vmatpush2.bf16.msra.mxu0 0
      %1342 = vmatprep.subr.bf16.mxu0 0
      %1343 = vmatpush2.bf16.msra.mxu0 0
      %1344 = vmatprep.mubr.bf16.mxu0 0
      %1345 = vmatmul.mubr.bf16.gmra.mxu0 %v1292
      %v1346 = vpop.f32.mrf.mxu0
      %v1347 = vadd.f32 0.0, %v1346
      %v1348 = vpop.f32.mrf.mxu0
      %v1349 = vadd.f32 0.0, %v1348
      %v1350 = vpop.f32.mrf.mxu0
      %v1351 = vadd.f32 0.0, %v1350
      %v1352 = vpop.f32.mrf.mxu0
      %v1353 = vadd.f32 0.0, %v1352
      %1354 = vmatprep.mubr.bf16.mxu0 0
      %1355 = vmatmul.mubr.bf16.gmra.mxu0 %v1295
      %v1356 = vpop.f32.mrf.mxu0
      %v1357 = vadd.f32 0.0, %v1356
      %v1358 = vpop.f32.mrf.mxu0
      %v1359 = vadd.f32 0.0, %v1358
      %v1360 = vpop.f32.mrf.mxu0
      %v1361 = vpop.f32.mrf.mxu0
      %1362 = vdwg.mxu0
      %1363 = vmatprep.subr.bf16.mxu0 0
      %1364 = vmatpush1.bf16.msra.mxu0 0
      %1365 = vmatprep.subr.bf16.mxu0 0
      %1366 = vmatpush1.bf16.msra.mxu0 0
      %1367 = vmatprep.subr.bf16.mxu0 0
      %1368 = vmatpush1.bf16.msra.mxu0 0
      %1369 = vmatprep.subr.bf16.mxu0 0
      %1370 = vmatpush1.bf16.msra.mxu0 0
      %1371 = vmatprep.subr.bf16.mxu0 0
      %1372 = vmatpush1.bf16.msra.mxu0 0
      %1373 = vmatprep.subr.bf16.mxu0 %v1307
      %1374 = vmatpush1.bf16.msra.mxu0 %v1304
      %1375 = vmatprep.subr.bf16.mxu0 %v1274
      %1376 = vmatpush1.bf16.msra.mxu0 %v1273
      %1377 = vmatprep.subr.bf16.mxu0 %v1269
      %1378 = vmatpush1.bf16.msra.mxu0 %v1268
      %1379 = vmatprep.subr.bf16.mxu0 0
      %1380 = vmatpush2.bf16.msra.mxu0 0
      %1381 = vmatprep.subr.bf16.mxu0 0
      %1382 = vmatpush2.bf16.msra.mxu0 0
      %1383 = vmatprep.subr.bf16.mxu0 0
      %1384 = vmatpush2.bf16.msra.mxu0 0
      %1385 = vmatprep.subr.bf16.mxu0 0
      %1386 = vmatpush2.bf16.msra.mxu0 0
      %1387 = vmatprep.subr.bf16.mxu0 0
      %1388 = vmatpush2.bf16.msra.mxu0 0
      %1389 = vmatprep.subr.bf16.mxu0 0
      %1390 = vmatpush2.bf16.msra.mxu0 0
      %1391 = vmatprep.subr.bf16.mxu0 0
      %1392 = vmatpush2.bf16.msra.mxu0 0
      %1393 = vmatprep.subr.bf16.mxu0 0
      %1394 = vmatpush2.bf16.msra.mxu0 0
      %1395 = vmatprep.mubr.bf16.mxu0 0
      %1396 = vmatmul.mubr.bf16.gmra.mxu0 %v1292
      %v1397 = vpop.f32.mrf.mxu0
      %v1398 = vadd.f32 0.0, %v1397
      %v1399 = vpop.f32.mrf.mxu0
      %v1400 = vadd.f32 0.0, %v1399
      %v1401 = vpop.f32.mrf.mxu0
      %v1402 = vadd.f32 0.0, %v1401
      %v1403 = vpop.f32.mrf.mxu0
      %v1404 = vadd.f32 0.0, %v1403
      %1405 = vmatprep.mubr.bf16.mxu0 0
      %1406 = vmatmul.mubr.bf16.gmra.mxu0 %v1295
      %v1407 = vpop.f32.mrf.mxu0
      %v1408 = vadd.f32 0.0, %v1407
      %v1409 = vpop.f32.mrf.mxu0
      %v1410 = vadd.f32 0.0, %v1409
      %v1411 = vpop.f32.mrf.mxu0
      %v1412 = vpop.f32.mrf.mxu0
      %1413 = vdwg.mxu0
      %1414 = vmatprep.subr.bf16.mxu0 0
      %1415 = vmatpush1.bf16.msra.mxu0 0
      %1416 = vmatprep.subr.bf16.mxu0 0
      %1417 = vmatpush1.bf16.msra.mxu0 0
      %1418 = vmatprep.subr.bf16.mxu0 0
      %1419 = vmatpush1.bf16.msra.mxu0 0
      %1420 = vmatprep.subr.bf16.mxu0 0
      %1421 = vmatpush1.bf16.msra.mxu0 0
      %1422 = vmatprep.subr.bf16.mxu0 0
      %1423 = vmatpush1.bf16.msra.mxu0 0
      %1424 = vmatprep.subr.bf16.mxu0 0
      %1425 = vmatpush1.bf16.msra.mxu0 %v1310
      %1426 = vmatprep.subr.bf16.mxu0 0
      %1427 = vmatpush1.bf16.msra.mxu0 %v1275
      %1428 = vmatprep.subr.bf16.mxu0 0
      %1429 = vmatpush1.bf16.msra.mxu0 %v1270
      %1430 = vmatprep.subr.bf16.mxu0 0
      %1431 = vmatpush2.bf16.msra.mxu0 0
      %1432 = vmatprep.subr.bf16.mxu0 0
      %1433 = vmatpush2.bf16.msra.mxu0 0
      %1434 = vmatprep.subr.bf16.mxu0 0
      %1435 = vmatpush2.bf16.msra.mxu0 0
      %1436 = vmatprep.subr.bf16.mxu0 0
      %1437 = vmatpush2.bf16.msra.mxu0 0
      %1438 = vmatprep.subr.bf16.mxu0 0
      %1439 = vmatpush2.bf16.msra.mxu0 0
      %1440 = vmatprep.subr.bf16.mxu0 0
      %1441 = vmatpush2.bf16.msra.mxu0 0
      %1442 = vmatprep.subr.bf16.mxu0 0
      %1443 = vmatpush2.bf16.msra.mxu0 0
      %1444 = vmatprep.subr.bf16.mxu0 0
      %1445 = vmatpush2.bf16.msra.mxu0 0
      %1446 = vmatprep.mubr.bf16.mxu0 0
      %1447 = vmatmul.mubr.bf16.gmra.mxu0 %v1292
      %v1448 = vpop.f32.mrf.mxu0
      %v1449 = vadd.f32 0.0, %v1448
      %v1450 = vpop.f32.mrf.mxu0
      %v1451 = vpop.f32.mrf.mxu0
      %v1452 = vadd.f32 0.0, %v1451
      %v1453 = vpop.f32.mrf.mxu0
      %1454 = vmatprep.mubr.bf16.mxu0 0
      %1455 = vmatmul.mubr.bf16.gmra.mxu0 %v1295
      %v1456 = vpop.f32.mrf.mxu0
      %v1457 = vadd.f32 0.0, %v1456
      %v1458 = vpop.f32.mrf.mxu0
      %v1459 = vpop.f32.mrf.mxu0
      %v1460 = vpop.f32.mrf.mxu0
      %1461 = vdwg.mxu0
      %v1462 = vadd.f32 %v1021, %v1347
      %v1463 = vadd.f32 %v1023, %v1349
      %v1464 = vadd.f32 %v1072, %v1398
      %v1465 = vadd.f32 %v1074, %v1400
      %v1466 = vadd.f32 %v1123, %v1449
      %v1467 = vadd.f32 %v1025, %v1351
      %v1468 = vadd.f32 %v1027, %v1353
      %v1469 = vadd.f32 %v1076, %v1402
      %v1470 = vadd.f32 %v1078, %v1404
      %v1471 = vadd.f32 %v1126, %v1452
      %v1472 = vadd.f32 %v1031, %v1357
      %v1473 = vadd.f32 %v1033, %v1359
      %v1474 = vadd.f32 %v1082, %v1408
      %v1475 = vadd.f32 %v1084, %v1410
      %v1476 = vadd.f32 %v1131, %v1457
      %s1477 = scalar_lea.vmem %s461, 144
      %v1478 = vld [vmem:[%s1477] sm:$0xff]
      %v1479 = vld [vmem:[%s1477 + $0x8] sm:$0xff]
      %v1480 = vld [vmem:[%s1477 + $0x10] sm:$0xff]
      %v1481 = vld [vmem:[%s1477 + $0x18] sm:$0xff]
      %v1482 = vld [vmem:[%s1477 + $0x20] sm:$0xff]
      %v1483 = vld [vmem:[%s1477 + $0x28] sm:$0x3]
      %v1484 = vpack.c.bf16 %v1479, %v1478
      %v1485 = vpack.c.bf16 %v1481, %v1480
      %v1486 = vpack.c.bf16 %v1483, %v1482
      %v1488 = vsel %vm494, %v1486, 0
      %1490 = vmatprep.subr.bf16.mxu0 0
      %1491 = vmatpush1.bf16.msra.mxu0 0
      %1492 = vmatprep.subr.bf16.mxu0 0
      %1493 = vmatpush1.bf16.msra.mxu0 0
      %1494 = vmatprep.subr.bf16.mxu0 0
      %1495 = vmatpush1.bf16.msra.mxu0 0
      %1496 = vmatprep.subr.bf16.mxu0 0
      %1497 = vmatpush1.bf16.msra.mxu0 0
      %1498 = vmatprep.subr.bf16.mxu0 0
      %1499 = vmatpush1.bf16.msra.mxu0 0
      %1500 = vmatprep.subr.bf16.mxu0 0
      %1501 = vmatpush1.bf16.msra.mxu0 %v1488
      %1502 = vmatprep.subr.bf16.mxu0 0
      %1503 = vmatpush1.bf16.msra.mxu0 %v1485
      %1504 = vmatprep.subr.bf16.mxu0 0
      %1505 = vmatpush1.bf16.msra.mxu0 %v1484
      %1506 = vmatprep.subr.bf16.mxu0 0
      %1507 = vmatpush2.bf16.msra.mxu0 0
      %1508 = vmatprep.subr.bf16.mxu0 0
      %1509 = vmatpush2.bf16.msra.mxu0 0
      %1510 = vmatprep.subr.bf16.mxu0 0
      %1511 = vmatpush2.bf16.msra.mxu0 0
      %1512 = vmatprep.subr.bf16.mxu0 0
      %1513 = vmatpush2.bf16.msra.mxu0 0
      %1514 = vmatprep.subr.bf16.mxu0 0
      %1515 = vmatpush2.bf16.msra.mxu0 0
      %1516 = vmatprep.subr.bf16.mxu0 0
      %1517 = vmatpush2.bf16.msra.mxu0 0
      %1518 = vmatprep.subr.bf16.mxu0 0
      %1519 = vmatpush2.bf16.msra.mxu0 0
      %1520 = vmatprep.subr.bf16.mxu0 0
      %1521 = vmatpush2.bf16.msra.mxu0 0
      %1522 = vmatprep.mubr.bf16.mxu0 0
      %1523 = vmatmul.mubr.bf16.gmra.mxu0 %v489
      %v1524 = vpop.f32.mrf.mxu0
      %v1525 = vadd.f32 0.0, %v1524
      %v1526 = vpop.f32.mrf.mxu0
      %v1527 = vpop.f32.mrf.mxu0
      %v1528 = vadd.f32 0.0, %v1527
      %v1529 = vpop.f32.mrf.mxu0
      %1530 = vmatprep.mubr.bf16.mxu0 0
      %1531 = vmatmul.mubr.bf16.gmra.mxu0 %v492
      %v1532 = vpop.f32.mrf.mxu0
      %v1533 = vadd.f32 0.0, %v1532
      %v1534 = vpop.f32.mrf.mxu0
      %v1535 = vpop.f32.mrf.mxu0
      %v1536 = vpop.f32.mrf.mxu0
      %1537 = vdwg.mxu0
      %v1538 = vpack.c.bf16 %v1528, %v1525
      %v1539 = vpack.c.bf16 %v1533, %v1533
      %s1540 = scalar_lea.vmem %s2, 360
      %v1541 = vld [vmem:[%s1540] sm:$0xff]
      %v1542 = vld [vmem:[%s1540 + $0x8] sm:$0xff]
      %v1543 = vld [vmem:[%s1540 + $0x10] sm:$0xf]
      %v1544 = vld [vmem:[%s1540 + $0x14] sm:$0xff]
      %v1545 = vld [vmem:[%s1540 + $0x1c] sm:$0xff]
      %v1546 = vld [vmem:[%s1540 + $0x24] sm:$0xf]
      %v1547 = vld [vmem:[%s1540 + $0x28] sm:$0xff]
      %v1548 = vld [vmem:[%s1540 + $0x30] sm:$0xff]
      %v1549 = vld [vmem:[%s1540 + $0x38] sm:$0xf]
      %v1550 = vld [vmem:[%s1540 + $0x3c] sm:$0xff]
      %v1551 = vld [vmem:[%s1540 + $0x44] sm:$0xff]
      %v1552 = vld [vmem:[%s1540 + $0x4c] sm:$0xf]
      %v1553 = vld [vmem:[%s1540 + $0x50] sm:$0xff]
      %v1554 = vld [vmem:[%s1540 + $0x58] sm:$0xff]
      %v1555 = vld [vmem:[%s1540 + $0x60] sm:$0xf]
      %v1556 = vld [vmem:[%s1540 + $0x64] sm:$0x11]
      %v1557 = vld [vmem:[%s1540 + $0x6c] sm:$0x11]
      %v1558 = vld [vmem:[%s1540 + $0x74] sm:$0x1]
      %v1577 = vunpack.c.l.b16 %v1541
      %v1578 = vunpack.c.h.b16 %v1541
      %v1579 = vunpack.c.l.b16 %v1542
      %v1580 = vunpack.c.h.b16 %v1542
      %v1581 = vunpack.c.l.b16 %v1543
      %v1582 = vunpack.c.l.b16 %v1544
      %v1583 = vunpack.c.h.b16 %v1544
      %v1584 = vunpack.c.l.b16 %v1545
      %v1585 = vunpack.c.h.b16 %v1545
      %v1586 = vunpack.c.l.b16 %v1546
      %v1587 = vunpack.c.l.b16 %v1547
      %v1588 = vunpack.c.h.b16 %v1547
      %v1589 = vunpack.c.l.b16 %v1548
      %v1590 = vunpack.c.h.b16 %v1548
      %v1591 = vunpack.c.l.b16 %v1549
      %v1592 = vunpack.c.l.b16 %v1550
      %v1593 = vunpack.c.h.b16 %v1550
      %v1594 = vunpack.c.l.b16 %v1551
      %v1595 = vunpack.c.h.b16 %v1551
      %v1596 = vunpack.c.l.b16 %v1552
      %v1597 = vunpack.c.l.b16 %v1553
      %v1598 = vunpack.c.h.b16 %v1553
      %v1599 = vunpack.c.l.b16 %v1554
      %v1600 = vunpack.c.h.b16 %v1554
      %v1601 = vunpack.c.l.b16 %v1555
      %v1602 = vunpack.c.l.b16 %v1556
      %v1603 = vunpack.c.h.b16 %v1556
      %v1604 = vunpack.c.l.b16 %v1557
      %v1605 = vunpack.c.h.b16 %v1557
      %v1606 = vunpack.c.l.b16 %v1558
      %v1607 = vpack.c.b16 %v1582, %v1577
      %v1608 = vpack.c.b16 %v1583, %v1578
      %v1609 = vpack.c.b16 %v1584, %v1579
      %v1610 = vpack.c.b16 %v1585, %v1580
      %v1611 = vpack.c.b16 %v1586, %v1581
      %v1612 = vpack.c.b16 %v1592, %v1587
      %v1613 = vpack.c.b16 %v1593, %v1588
      %v1614 = vpack.c.b16 %v1594, %v1589
      %v1615 = vpack.c.b16 %v1595, %v1590
      %v1616 = vpack.c.b16 %v1596, %v1591
      %v1617 = vpack.c.b16 %v1602, %v1597
      %v1618 = vpack.c.b16 %v1603, %v1598
      %v1619 = vpack.c.b16 %v1604, %v1599
      %v1620 = vpack.c.b16 %v1605, %v1600
      %v1621 = vpack.c.b16 %v1606, %v1601
      %v1633 = vsel %vm487, %v1538, 0
      %v1636 = vsel %vm487, %v1539, 0
      %v1639 = vsel %vm494, %v1617, 0
      %v1642 = vsel %vm494, %v1618, 0
      %v1645 = vsel %vm494, %v1619, 0
      %v1648 = vsel %vm494, %v1620, 0
      %v1651 = vsel %vm494, %v1621, 0
      %1653 = vmatprep.subr.bf16.mxu0 0
      %1654 = vmatpush1.bf16.msra.mxu0 0
      %1655 = vmatprep.subr.bf16.mxu0 0
      %1656 = vmatpush1.bf16.msra.mxu0 0
      %1657 = vmatprep.subr.bf16.mxu0 0
      %1658 = vmatpush1.bf16.msra.mxu0 0
      %1659 = vmatprep.subr.bf16.mxu0 0
      %1660 = vmatpush1.bf16.msra.mxu0 0
      %1661 = vmatprep.subr.bf16.mxu0 0
      %1662 = vmatpush1.bf16.msra.mxu0 0
      %1663 = vmatprep.subr.bf16.mxu0 %v1642
      %1664 = vmatpush1.bf16.msra.mxu0 %v1639
      %1665 = vmatprep.subr.bf16.mxu0 %v1613
      %1666 = vmatpush1.bf16.msra.mxu0 %v1612
      %1667 = vmatprep.subr.bf16.mxu0 %v1608
      %1668 = vmatpush1.bf16.msra.mxu0 %v1607
      %1669 = vmatprep.subr.bf16.mxu0 0
      %1670 = vmatpush2.bf16.msra.mxu0 0
      %1671 = vmatprep.subr.bf16.mxu0 0
      %1672 = vmatpush2.bf16.msra.mxu0 0
      %1673 = vmatprep.subr.bf16.mxu0 0
      %1674 = vmatpush2.bf16.msra.mxu0 0
      %1675 = vmatprep.subr.bf16.mxu0 0
      %1676 = vmatpush2.bf16.msra.mxu0 0
      %1677 = vmatprep.subr.bf16.mxu0 0
      %1678 = vmatpush2.bf16.msra.mxu0 0
      %1679 = vmatprep.subr.bf16.mxu0 0
      %1680 = vmatpush2.bf16.msra.mxu0 0
      %1681 = vmatprep.subr.bf16.mxu0 0
      %1682 = vmatpush2.bf16.msra.mxu0 0
      %1683 = vmatprep.subr.bf16.mxu0 0
      %1684 = vmatpush2.bf16.msra.mxu0 0
      %1685 = vmatprep.mubr.bf16.mxu0 0
      %1686 = vmatmul.mubr.bf16.gmra.mxu0 %v1633
      %v1687 = vpop.f32.mrf.mxu0
      %v1688 = vadd.f32 0.0, %v1687
      %v1689 = vpop.f32.mrf.mxu0
      %v1690 = vadd.f32 0.0, %v1689
      %v1691 = vpop.f32.mrf.mxu0
      %v1692 = vadd.f32 0.0, %v1691
      %v1693 = vpop.f32.mrf.mxu0
      %v1694 = vadd.f32 0.0, %v1693
      %1695 = vmatprep.mubr.bf16.mxu0 0
      %1696 = vmatmul.mubr.bf16.gmra.mxu0 %v1636
      %v1697 = vpop.f32.mrf.mxu0
      %v1698 = vadd.f32 0.0, %v1697
      %v1699 = vpop.f32.mrf.mxu0
      %v1700 = vadd.f32 0.0, %v1699
      %v1701 = vpop.f32.mrf.mxu0
      %v1702 = vpop.f32.mrf.mxu0
      %1703 = vdwg.mxu0
      %1704 = vmatprep.subr.bf16.mxu0 0
      %1705 = vmatpush1.bf16.msra.mxu0 0
      %1706 = vmatprep.subr.bf16.mxu0 0
      %1707 = vmatpush1.bf16.msra.mxu0 0
      %1708 = vmatprep.subr.bf16.mxu0 0
      %1709 = vmatpush1.bf16.msra.mxu0 0
      %1710 = vmatprep.subr.bf16.mxu0 0
      %1711 = vmatpush1.bf16.msra.mxu0 0
      %1712 = vmatprep.subr.bf16.mxu0 0
      %1713 = vmatpush1.bf16.msra.mxu0 0
      %1714 = vmatprep.subr.bf16.mxu0 %v1648
      %1715 = vmatpush1.bf16.msra.mxu0 %v1645
      %1716 = vmatprep.subr.bf16.mxu0 %v1615
      %1717 = vmatpush1.bf16.msra.mxu0 %v1614
      %1718 = vmatprep.subr.bf16.mxu0 %v1610
      %1719 = vmatpush1.bf16.msra.mxu0 %v1609
      %1720 = vmatprep.subr.bf16.mxu0 0
      %1721 = vmatpush2.bf16.msra.mxu0 0
      %1722 = vmatprep.subr.bf16.mxu0 0
      %1723 = vmatpush2.bf16.msra.mxu0 0
      %1724 = vmatprep.subr.bf16.mxu0 0
      %1725 = vmatpush2.bf16.msra.mxu0 0
      %1726 = vmatprep.subr.bf16.mxu0 0
      %1727 = vmatpush2.bf16.msra.mxu0 0
      %1728 = vmatprep.subr.bf16.mxu0 0
      %1729 = vmatpush2.bf16.msra.mxu0 0
      %1730 = vmatprep.subr.bf16.mxu0 0
      %1731 = vmatpush2.bf16.msra.mxu0 0
      %1732 = vmatprep.subr.bf16.mxu0 0
      %1733 = vmatpush2.bf16.msra.mxu0 0
      %1734 = vmatprep.subr.bf16.mxu0 0
      %1735 = vmatpush2.bf16.msra.mxu0 0
      %1736 = vmatprep.mubr.bf16.mxu0 0
      %1737 = vmatmul.mubr.bf16.gmra.mxu0 %v1633
      %v1738 = vpop.f32.mrf.mxu0
      %v1739 = vadd.f32 0.0, %v1738
      %v1740 = vpop.f32.mrf.mxu0
      %v1741 = vadd.f32 0.0, %v1740
      %v1742 = vpop.f32.mrf.mxu0
      %v1743 = vadd.f32 0.0, %v1742
      %v1744 = vpop.f32.mrf.mxu0
      %v1745 = vadd.f32 0.0, %v1744
      %1746 = vmatprep.mubr.bf16.mxu0 0
      %1747 = vmatmul.mubr.bf16.gmra.mxu0 %v1636
      %v1748 = vpop.f32.mrf.mxu0
      %v1749 = vadd.f32 0.0, %v1748
      %v1750 = vpop.f32.mrf.mxu0
      %v1751 = vadd.f32 0.0, %v1750
      %v1752 = vpop.f32.mrf.mxu0
      %v1753 = vpop.f32.mrf.mxu0
      %1754 = vdwg.mxu0
      %1755 = vmatprep.subr.bf16.mxu0 0
      %1756 = vmatpush1.bf16.msra.mxu0 0
      %1757 = vmatprep.subr.bf16.mxu0 0
      %1758 = vmatpush1.bf16.msra.mxu0 0
      %1759 = vmatprep.subr.bf16.mxu0 0
      %1760 = vmatpush1.bf16.msra.mxu0 0
      %1761 = vmatprep.subr.bf16.mxu0 0
      %1762 = vmatpush1.bf16.msra.mxu0 0
      %1763 = vmatprep.subr.bf16.mxu0 0
      %1764 = vmatpush1.bf16.msra.mxu0 0
      %1765 = vmatprep.subr.bf16.mxu0 0
      %1766 = vmatpush1.bf16.msra.mxu0 %v1651
      %1767 = vmatprep.subr.bf16.mxu0 0
      %1768 = vmatpush1.bf16.msra.mxu0 %v1616
      %1769 = vmatprep.subr.bf16.mxu0 0
      %1770 = vmatpush1.bf16.msra.mxu0 %v1611
      %1771 = vmatprep.subr.bf16.mxu0 0
      %1772 = vmatpush2.bf16.msra.mxu0 0
      %1773 = vmatprep.subr.bf16.mxu0 0
      %1774 = vmatpush2.bf16.msra.mxu0 0
      %1775 = vmatprep.subr.bf16.mxu0 0
      %1776 = vmatpush2.bf16.msra.mxu0 0
      %1777 = vmatprep.subr.bf16.mxu0 0
      %1778 = vmatpush2.bf16.msra.mxu0 0
      %1779 = vmatprep.subr.bf16.mxu0 0
      %1780 = vmatpush2.bf16.msra.mxu0 0
      %1781 = vmatprep.subr.bf16.mxu0 0
      %1782 = vmatpush2.bf16.msra.mxu0 0
      %1783 = vmatprep.subr.bf16.mxu0 0
      %1784 = vmatpush2.bf16.msra.mxu0 0
      %1785 = vmatprep.subr.bf16.mxu0 0
      %1786 = vmatpush2.bf16.msra.mxu0 0
      %1787 = vmatprep.mubr.bf16.mxu0 0
      %1788 = vmatmul.mubr.bf16.gmra.mxu0 %v1633
      %v1789 = vpop.f32.mrf.mxu0
      %v1790 = vadd.f32 0.0, %v1789
      %v1791 = vpop.f32.mrf.mxu0
      %v1792 = vpop.f32.mrf.mxu0
      %v1793 = vadd.f32 0.0, %v1792
      %v1794 = vpop.f32.mrf.mxu0
      %1795 = vmatprep.mubr.bf16.mxu0 0
      %1796 = vmatmul.mubr.bf16.gmra.mxu0 %v1636
      %v1797 = vpop.f32.mrf.mxu0
      %v1798 = vadd.f32 0.0, %v1797
      %v1799 = vpop.f32.mrf.mxu0
      %v1800 = vpop.f32.mrf.mxu0
      %v1801 = vpop.f32.mrf.mxu0
      %1802 = vdwg.mxu0
      %v1803 = vadd.f32 %v1462, %v1688
      %v1804 = vadd.f32 %v1463, %v1690
      %v1805 = vadd.f32 %v1464, %v1739
      %v1806 = vadd.f32 %v1465, %v1741
      %v1807 = vadd.f32 %v1466, %v1790
      %v1808 = vadd.f32 %v1467, %v1692
      %v1809 = vadd.f32 %v1468, %v1694
      %v1810 = vadd.f32 %v1469, %v1743
      %v1811 = vadd.f32 %v1470, %v1745
      %v1812 = vadd.f32 %v1471, %v1793
      %v1813 = vadd.f32 %v1472, %v1698
      %v1814 = vadd.f32 %v1473, %v1700
      %v1815 = vadd.f32 %v1474, %v1749
      %v1816 = vadd.f32 %v1475, %v1751
      %v1817 = vadd.f32 %v1476, %v1798
      %s1818 = scalar_lea.vmem %s1, 12
      %v1819 = vld [vmem:[%s1818] sm:$0xf]
      %v1820 = vld [vmem:[%s1818 + $0x4] sm:$0xf]
      %v1821 = vld [vmem:[%s1818 + $0x8] sm:$0x3]
      %v1825 = vunpack.c.l.b16 %v1819
      %v1826 = vunpack.c.l.b16 %v1820
      %v1827 = vunpack.c.l.b16 %v1821
      %v1828 = vpack.c.b16 %v1826, %v1825
      %v1829 = vpack.c.b16 %v1827, %v1827
      %v1831 = vsel %vm487, %v1828, 0
      %v1834 = vsel %vm487, %v1829, 0
      %1836 = vmatprep.subr.bf16.mxu0 0
      %1837 = vmatpush1.bf16.msra.mxu0 0
      %1838 = vmatprep.subr.bf16.mxu0 0
      %1839 = vmatpush1.bf16.msra.mxu0 0
      %1840 = vmatprep.subr.bf16.mxu0 0
      %1841 = vmatpush1.bf16.msra.mxu0 0
      %1842 = vmatprep.subr.bf16.mxu0 0
      %1843 = vmatpush1.bf16.msra.mxu0 0
      %1844 = vmatprep.subr.bf16.mxu0 0
      %1845 = vmatpush1.bf16.msra.mxu0 0
      %1846 = vmatprep.subr.bf16.mxu0 0
      %1847 = vmatpush1.bf16.msra.mxu0 %v496
      %1848 = vmatprep.subr.bf16.mxu0 0
      %1849 = vmatpush1.bf16.msra.mxu0 %v477
      %1850 = vmatprep.subr.bf16.mxu0 0
      %1851 = vmatpush1.bf16.msra.mxu0 %v476
      %1852 = vmatprep.subr.bf16.mxu0 0
      %1853 = vmatpush2.bf16.msra.mxu0 0
      %1854 = vmatprep.subr.bf16.mxu0 0
      %1855 = vmatpush2.bf16.msra.mxu0 0
      %1856 = vmatprep.subr.bf16.mxu0 0
      %1857 = vmatpush2.bf16.msra.mxu0 0
      %1858 = vmatprep.subr.bf16.mxu0 0
      %1859 = vmatpush2.bf16.msra.mxu0 0
      %1860 = vmatprep.subr.bf16.mxu0 0
      %1861 = vmatpush2.bf16.msra.mxu0 0
      %1862 = vmatprep.subr.bf16.mxu0 0
      %1863 = vmatpush2.bf16.msra.mxu0 0
      %1864 = vmatprep.subr.bf16.mxu0 0
      %1865 = vmatpush2.bf16.msra.mxu0 0
      %1866 = vmatprep.subr.bf16.mxu0 0
      %1867 = vmatpush2.bf16.msra.mxu0 0
      %1868 = vmatprep.mubr.bf16.mxu0 0
      %1869 = vmatmul.mubr.bf16.gmra.mxu0 %v1831
      %v1870 = vpop.f32.mrf.mxu0
      %v1871 = vadd.f32 0.0, %v1870
      %v1872 = vpop.f32.mrf.mxu0
      %v1873 = vpop.f32.mrf.mxu0
      %v1874 = vadd.f32 0.0, %v1873
      %v1875 = vpop.f32.mrf.mxu0
      %1876 = vmatprep.mubr.bf16.mxu0 0
      %1877 = vmatmul.mubr.bf16.gmra.mxu0 %v1834
      %v1878 = vpop.f32.mrf.mxu0
      %v1879 = vadd.f32 0.0, %v1878
      %v1880 = vpop.f32.mrf.mxu0
      %v1881 = vpop.f32.mrf.mxu0
      %v1882 = vpop.f32.mrf.mxu0
      %1883 = vdwg.mxu0
      %v1884 = vpack.c.bf16 %v1874, %v1871
      %v1885 = vpack.c.bf16 %v1879, %v1879
      %s1886 = scalar_lea.vmem %s2, 480
      %v1887 = vld [vmem:[%s1886] sm:$0xff]
      %v1888 = vld [vmem:[%s1886 + $0x8] sm:$0xff]
      %v1889 = vld [vmem:[%s1886 + $0x10] sm:$0xf]
      %v1890 = vld [vmem:[%s1886 + $0x14] sm:$0xff]
      %v1891 = vld [vmem:[%s1886 + $0x1c] sm:$0xff]
      %v1892 = vld [vmem:[%s1886 + $0x24] sm:$0xf]
      %v1893 = vld [vmem:[%s1886 + $0x28] sm:$0xff]
      %v1894 = vld [vmem:[%s1886 + $0x30] sm:$0xff]
      %v1895 = vld [vmem:[%s1886 + $0x38] sm:$0xf]
      %v1896 = vld [vmem:[%s1886 + $0x3c] sm:$0xff]
      %v1897 = vld [vmem:[%s1886 + $0x44] sm:$0xff]
      %v1898 = vld [vmem:[%s1886 + $0x4c] sm:$0xf]
      %v1899 = vld [vmem:[%s1886 + $0x50] sm:$0xff]
      %v1900 = vld [vmem:[%s1886 + $0x58] sm:$0xff]
      %v1901 = vld [vmem:[%s1886 + $0x60] sm:$0xf]
      %v1902 = vld [vmem:[%s1886 + $0x64] sm:$0x11]
      %v1903 = vld [vmem:[%s1886 + $0x6c] sm:$0x11]
      %v1904 = vld [vmem:[%s1886 + $0x74] sm:$0x1]
      %v1923 = vunpack.c.l.b16 %v1887
      %v1924 = vunpack.c.h.b16 %v1887
      %v1925 = vunpack.c.l.b16 %v1888
      %v1926 = vunpack.c.h.b16 %v1888
      %v1927 = vunpack.c.l.b16 %v1889
      %v1928 = vunpack.c.l.b16 %v1890
      %v1929 = vunpack.c.h.b16 %v1890
      %v1930 = vunpack.c.l.b16 %v1891
      %v1931 = vunpack.c.h.b16 %v1891
      %v1932 = vunpack.c.l.b16 %v1892
      %v1933 = vunpack.c.l.b16 %v1893
      %v1934 = vunpack.c.h.b16 %v1893
      %v1935 = vunpack.c.l.b16 %v1894
      %v1936 = vunpack.c.h.b16 %v1894
      %v1937 = vunpack.c.l.b16 %v1895
      %v1938 = vunpack.c.l.b16 %v1896
      %v1939 = vunpack.c.h.b16 %v1896
      %v1940 = vunpack.c.l.b16 %v1897
      %v1941 = vunpack.c.h.b16 %v1897
      %v1942 = vunpack.c.l.b16 %v1898
      %v1943 = vunpack.c.l.b16 %v1899
      %v1944 = vunpack.c.h.b16 %v1899
      %v1945 = vunpack.c.l.b16 %v1900
      %v1946 = vunpack.c.h.b16 %v1900
      %v1947 = vunpack.c.l.b16 %v1901
      %v1948 = vunpack.c.l.b16 %v1902
      %v1949 = vunpack.c.h.b16 %v1902
      %v1950 = vunpack.c.l.b16 %v1903
      %v1951 = vunpack.c.h.b16 %v1903
      %v1952 = vunpack.c.l.b16 %v1904
      %v1953 = vpack.c.b16 %v1928, %v1923
      %v1954 = vpack.c.b16 %v1929, %v1924
      %v1955 = vpack.c.b16 %v1930, %v1925
      %v1956 = vpack.c.b16 %v1931, %v1926
      %v1957 = vpack.c.b16 %v1932, %v1927
      %v1958 = vpack.c.b16 %v1938, %v1933
      %v1959 = vpack.c.b16 %v1939, %v1934
      %v1960 = vpack.c.b16 %v1940, %v1935
      %v1961 = vpack.c.b16 %v1941, %v1936
      %v1962 = vpack.c.b16 %v1942, %v1937
      %v1963 = vpack.c.b16 %v1948, %v1943
      %v1964 = vpack.c.b16 %v1949, %v1944
      %v1965 = vpack.c.b16 %v1950, %v1945
      %v1966 = vpack.c.b16 %v1951, %v1946
      %v1967 = vpack.c.b16 %v1952, %v1947
      %v1979 = vsel %vm487, %v1884, 0
      %v1982 = vsel %vm487, %v1885, 0
      %v1985 = vsel %vm494, %v1963, 0
      %v1988 = vsel %vm494, %v1964, 0
      %v1991 = vsel %vm494, %v1965, 0
      %v1994 = vsel %vm494, %v1966, 0
      %v1997 = vsel %vm494, %v1967, 0
      %1999 = vmatprep.subr.bf16.mxu0 0
      %2000 = vmatpush1.bf16.msra.mxu0 0
      %2001 = vmatprep.subr.bf16.mxu0 0
      %2002 = vmatpush1.bf16.msra.mxu0 0
      %2003 = vmatprep.subr.bf16.mxu0 0
      %2004 = vmatpush1.bf16.msra.mxu0 0
      %2005 = vmatprep.subr.bf16.mxu0 0
      %2006 = vmatpush1.bf16.msra.mxu0 0
      %2007 = vmatprep.subr.bf16.mxu0 0
      %2008 = vmatpush1.bf16.msra.mxu0 0
      %2009 = vmatprep.subr.bf16.mxu0 %v1988
      %2010 = vmatpush1.bf16.msra.mxu0 %v1985
      %2011 = vmatprep.subr.bf16.mxu0 %v1959
      %2012 = vmatpush1.bf16.msra.mxu0 %v1958
      %2013 = vmatprep.subr.bf16.mxu0 %v1954
      %2014 = vmatpush1.bf16.msra.mxu0 %v1953
      %2015 = vmatprep.subr.bf16.mxu0 0
      %2016 = vmatpush2.bf16.msra.mxu0 0
      %2017 = vmatprep.subr.bf16.mxu0 0
      %2018 = vmatpush2.bf16.msra.mxu0 0
      %2019 = vmatprep.subr.bf16.mxu0 0
      %2020 = vmatpush2.bf16.msra.mxu0 0
      %2021 = vmatprep.subr.bf16.mxu0 0
      %2022 = vmatpush2.bf16.msra.mxu0 0
      %2023 = vmatprep.subr.bf16.mxu0 0
      %2024 = vmatpush2.bf16.msra.mxu0 0
      %2025 = vmatprep.subr.bf16.mxu0 0
      %2026 = vmatpush2.bf16.msra.mxu0 0
      %2027 = vmatprep.subr.bf16.mxu0 0
      %2028 = vmatpush2.bf16.msra.mxu0 0
      %2029 = vmatprep.subr.bf16.mxu0 0
      %2030 = vmatpush2.bf16.msra.mxu0 0
      %2031 = vmatprep.mubr.bf16.mxu0 0
      %2032 = vmatmul.mubr.bf16.gmra.mxu0 %v1979
      %v2033 = vpop.f32.mrf.mxu0
      %v2034 = vadd.f32 0.0, %v2033
      %v2035 = vpop.f32.mrf.mxu0
      %v2036 = vadd.f32 0.0, %v2035
      %v2037 = vpop.f32.mrf.mxu0
      %v2038 = vadd.f32 0.0, %v2037
      %v2039 = vpop.f32.mrf.mxu0
      %v2040 = vadd.f32 0.0, %v2039
      %2041 = vmatprep.mubr.bf16.mxu0 0
      %2042 = vmatmul.mubr.bf16.gmra.mxu0 %v1982
      %v2043 = vpop.f32.mrf.mxu0
      %v2044 = vadd.f32 0.0, %v2043
      %v2045 = vpop.f32.mrf.mxu0
      %v2046 = vadd.f32 0.0, %v2045
      %v2047 = vpop.f32.mrf.mxu0
      %v2048 = vpop.f32.mrf.mxu0
      %2049 = vdwg.mxu0
      %2050 = vmatprep.subr.bf16.mxu0 0
      %2051 = vmatpush1.bf16.msra.mxu0 0
      %2052 = vmatprep.subr.bf16.mxu0 0
      %2053 = vmatpush1.bf16.msra.mxu0 0
      %2054 = vmatprep.subr.bf16.mxu0 0
      %2055 = vmatpush1.bf16.msra.mxu0 0
      %2056 = vmatprep.subr.bf16.mxu0 0
      %2057 = vmatpush1.bf16.msra.mxu0 0
      %2058 = vmatprep.subr.bf16.mxu0 0
      %2059 = vmatpush1.bf16.msra.mxu0 0
      %2060 = vmatprep.subr.bf16.mxu0 %v1994
      %2061 = vmatpush1.bf16.msra.mxu0 %v1991
      %2062 = vmatprep.subr.bf16.mxu0 %v1961
      %2063 = vmatpush1.bf16.msra.mxu0 %v1960
      %2064 = vmatprep.subr.bf16.mxu0 %v1956
      %2065 = vmatpush1.bf16.msra.mxu0 %v1955
      %2066 = vmatprep.subr.bf16.mxu0 0
      %2067 = vmatpush2.bf16.msra.mxu0 0
      %2068 = vmatprep.subr.bf16.mxu0 0
      %2069 = vmatpush2.bf16.msra.mxu0 0
      %2070 = vmatprep.subr.bf16.mxu0 0
      %2071 = vmatpush2.bf16.msra.mxu0 0
      %2072 = vmatprep.subr.bf16.mxu0 0
      %2073 = vmatpush2.bf16.msra.mxu0 0
      %2074 = vmatprep.subr.bf16.mxu0 0
      %2075 = vmatpush2.bf16.msra.mxu0 0
      %2076 = vmatprep.subr.bf16.mxu0 0
      %2077 = vmatpush2.bf16.msra.mxu0 0
      %2078 = vmatprep.subr.bf16.mxu0 0
      %2079 = vmatpush2.bf16.msra.mxu0 0
      %2080 = vmatprep.subr.bf16.mxu0 0
      %2081 = vmatpush2.bf16.msra.mxu0 0
      %2082 = vmatprep.mubr.bf16.mxu0 0
      %2083 = vmatmul.mubr.bf16.gmra.mxu0 %v1979
      %v2084 = vpop.f32.mrf.mxu0
      %v2085 = vadd.f32 0.0, %v2084
      %v2086 = vpop.f32.mrf.mxu0
      %v2087 = vadd.f32 0.0, %v2086
      %v2088 = vpop.f32.mrf.mxu0
      %v2089 = vadd.f32 0.0, %v2088
      %v2090 = vpop.f32.mrf.mxu0
      %v2091 = vadd.f32 0.0, %v2090
      %2092 = vmatprep.mubr.bf16.mxu0 0
      %2093 = vmatmul.mubr.bf16.gmra.mxu0 %v1982
      %v2094 = vpop.f32.mrf.mxu0
      %v2095 = vadd.f32 0.0, %v2094
      %v2096 = vpop.f32.mrf.mxu0
      %v2097 = vadd.f32 0.0, %v2096
      %v2098 = vpop.f32.mrf.mxu0
      %v2099 = vpop.f32.mrf.mxu0
      %2100 = vdwg.mxu0
      %2101 = vmatprep.subr.bf16.mxu0 0
      %2102 = vmatpush1.bf16.msra.mxu0 0
      %2103 = vmatprep.subr.bf16.mxu0 0
      %2104 = vmatpush1.bf16.msra.mxu0 0
      %2105 = vmatprep.subr.bf16.mxu0 0
      %2106 = vmatpush1.bf16.msra.mxu0 0
      %2107 = vmatprep.subr.bf16.mxu0 0
      %2108 = vmatpush1.bf16.msra.mxu0 0
      %2109 = vmatprep.subr.bf16.mxu0 0
      %2110 = vmatpush1.bf16.msra.mxu0 0
      %2111 = vmatprep.subr.bf16.mxu0 0
      %2112 = vmatpush1.bf16.msra.mxu0 %v1997
      %2113 = vmatprep.subr.bf16.mxu0 0
      %2114 = vmatpush1.bf16.msra.mxu0 %v1962
      %2115 = vmatprep.subr.bf16.mxu0 0
      %2116 = vmatpush1.bf16.msra.mxu0 %v1957
      %2117 = vmatprep.subr.bf16.mxu0 0
      %2118 = vmatpush2.bf16.msra.mxu0 0
      %2119 = vmatprep.subr.bf16.mxu0 0
      %2120 = vmatpush2.bf16.msra.mxu0 0
      %2121 = vmatprep.subr.bf16.mxu0 0
      %2122 = vmatpush2.bf16.msra.mxu0 0
      %2123 = vmatprep.subr.bf16.mxu0 0
      %2124 = vmatpush2.bf16.msra.mxu0 0
      %2125 = vmatprep.subr.bf16.mxu0 0
      %2126 = vmatpush2.bf16.msra.mxu0 0
      %2127 = vmatprep.subr.bf16.mxu0 0
      %2128 = vmatpush2.bf16.msra.mxu0 0
      %2129 = vmatprep.subr.bf16.mxu0 0
      %2130 = vmatpush2.bf16.msra.mxu0 0
      %2131 = vmatprep.subr.bf16.mxu0 0
      %2132 = vmatpush2.bf16.msra.mxu0 0
      %2133 = vmatprep.mubr.bf16.mxu0 0
      %2134 = vmatmul.mubr.bf16.gmra.mxu0 %v1979
      %v2135 = vpop.f32.mrf.mxu0
      %v2136 = vadd.f32 0.0, %v2135
      %v2137 = vpop.f32.mrf.mxu0
      %v2138 = vpop.f32.mrf.mxu0
      %v2139 = vadd.f32 0.0, %v2138
      %v2140 = vpop.f32.mrf.mxu0
      %2141 = vmatprep.mubr.bf16.mxu0 0
      %2142 = vmatmul.mubr.bf16.gmra.mxu0 %v1982
      %v2143 = vpop.f32.mrf.mxu0
      %v2144 = vadd.f32 0.0, %v2143
      %v2145 = vpop.f32.mrf.mxu0
      %v2146 = vpop.f32.mrf.mxu0
      %v2147 = vpop.f32.mrf.mxu0
      %2148 = vdwg.mxu0
      %v2149 = vadd.f32 %v1803, %v2034
      %v2150 = vadd.f32 %v1804, %v2036
      %v2151 = vadd.f32 %v1805, %v2085
      %v2152 = vadd.f32 %v1806, %v2087
      %v2153 = vadd.f32 %v1807, %v2136
      %v2154 = vadd.f32 %v1808, %v2038
      %v2155 = vadd.f32 %v1809, %v2040
      %v2156 = vadd.f32 %v1810, %v2089
      %v2157 = vadd.f32 %v1811, %v2091
      %v2158 = vadd.f32 %v1812, %v2139
      %v2159 = vadd.f32 %v1813, %v2044
      %v2160 = vadd.f32 %v1814, %v2046
      %v2161 = vadd.f32 %v1815, %v2095
      %v2162 = vadd.f32 %v1816, %v2097
      %v2163 = vadd.f32 %v1817, %v2144
      %2164 = vmatprep.subr.bf16.mxu0 0
      %2165 = vmatpush1.bf16.msra.mxu0 0
      %2166 = vmatprep.subr.bf16.mxu0 0
      %2167 = vmatpush1.bf16.msra.mxu0 0
      %2168 = vmatprep.subr.bf16.mxu0 0
      %2169 = vmatpush1.bf16.msra.mxu0 0
      %2170 = vmatprep.subr.bf16.mxu0 0
      %2171 = vmatpush1.bf16.msra.mxu0 0
      %2172 = vmatprep.subr.bf16.mxu0 0
      %2173 = vmatpush1.bf16.msra.mxu0 0
      %2174 = vmatprep.subr.bf16.mxu0 0
      %2175 = vmatpush1.bf16.msra.mxu0 %v577
      %2176 = vmatprep.subr.bf16.mxu0 0
      %2177 = vmatpush1.bf16.msra.mxu0 %v574
      %2178 = vmatprep.subr.bf16.mxu0 0
      %2179 = vmatpush1.bf16.msra.mxu0 %v573
      %2180 = vmatprep.subr.bf16.mxu0 0
      %2181 = vmatpush2.bf16.msra.mxu0 0
      %2182 = vmatprep.subr.bf16.mxu0 0
      %2183 = vmatpush2.bf16.msra.mxu0 0
      %2184 = vmatprep.subr.bf16.mxu0 0
      %2185 = vmatpush2.bf16.msra.mxu0 0
      %2186 = vmatprep.subr.bf16.mxu0 0
      %2187 = vmatpush2.bf16.msra.mxu0 0
      %2188 = vmatprep.subr.bf16.mxu0 0
      %2189 = vmatpush2.bf16.msra.mxu0 0
      %2190 = vmatprep.subr.bf16.mxu0 0
      %2191 = vmatpush2.bf16.msra.mxu0 0
      %2192 = vmatprep.subr.bf16.mxu0 0
      %2193 = vmatpush2.bf16.msra.mxu0 0
      %2194 = vmatprep.subr.bf16.mxu0 0
      %2195 = vmatpush2.bf16.msra.mxu0 0
      %2196 = vmatprep.mubr.bf16.mxu0 0
      %2197 = vmatmul.mubr.bf16.gmra.mxu0 %v1831
      %v2198 = vpop.f32.mrf.mxu0
      %v2199 = vadd.f32 0.0, %v2198
      %v2200 = vpop.f32.mrf.mxu0
      %v2201 = vpop.f32.mrf.mxu0
      %v2202 = vadd.f32 0.0, %v2201
      %v2203 = vpop.f32.mrf.mxu0
      %2204 = vmatprep.mubr.bf16.mxu0 0
      %2205 = vmatmul.mubr.bf16.gmra.mxu0 %v1834
      %v2206 = vpop.f32.mrf.mxu0
      %v2207 = vadd.f32 0.0, %v2206
      %v2208 = vpop.f32.mrf.mxu0
      %v2209 = vpop.f32.mrf.mxu0
      %v2210 = vpop.f32.mrf.mxu0
      %2211 = vdwg.mxu0
      %v2212 = vpack.c.bf16 %v2202, %v2199
      %v2213 = vpack.c.bf16 %v2207, %v2207
      %s2214 = scalar_lea.vmem %s2, 600
      %v2215 = vld [vmem:[%s2214] sm:$0xff]
      %v2216 = vld [vmem:[%s2214 + $0x8] sm:$0xff]
      %v2217 = vld [vmem:[%s2214 + $0x10] sm:$0xf]
      %v2218 = vld [vmem:[%s2214 + $0x14] sm:$0xff]
      %v2219 = vld [vmem:[%s2214 + $0x1c] sm:$0xff]
      %v2220 = vld [vmem:[%s2214 + $0x24] sm:$0xf]
      %v2221 = vld [vmem:[%s2214 + $0x28] sm:$0xff]
      %v2222 = vld [vmem:[%s2214 + $0x30] sm:$0xff]
      %v2223 = vld [vmem:[%s2214 + $0x38] sm:$0xf]
      %v2224 = vld [vmem:[%s2214 + $0x3c] sm:$0xff]
      %v2225 = vld [vmem:[%s2214 + $0x44] sm:$0xff]
      %v2226 = vld [vmem:[%s2214 + $0x4c] sm:$0xf]
      %v2227 = vld [vmem:[%s2214 + $0x50] sm:$0xff]
      %v2228 = vld [vmem:[%s2214 + $0x58] sm:$0xff]
      %v2229 = vld [vmem:[%s2214 + $0x60] sm:$0xf]
      %v2230 = vld [vmem:[%s2214 + $0x64] sm:$0x11]
      %v2231 = vld [vmem:[%s2214 + $0x6c] sm:$0x11]
      %v2232 = vld [vmem:[%s2214 + $0x74] sm:$0x1]
      %v2251 = vunpack.c.l.b16 %v2215
      %v2252 = vunpack.c.h.b16 %v2215
      %v2253 = vunpack.c.l.b16 %v2216
      %v2254 = vunpack.c.h.b16 %v2216
      %v2255 = vunpack.c.l.b16 %v2217
      %v2256 = vunpack.c.l.b16 %v2218
      %v2257 = vunpack.c.h.b16 %v2218
      %v2258 = vunpack.c.l.b16 %v2219
      %v2259 = vunpack.c.h.b16 %v2219
      %v2260 = vunpack.c.l.b16 %v2220
      %v2261 = vunpack.c.l.b16 %v2221
      %v2262 = vunpack.c.h.b16 %v2221
      %v2263 = vunpack.c.l.b16 %v2222
      %v2264 = vunpack.c.h.b16 %v2222
      %v2265 = vunpack.c.l.b16 %v2223
      %v2266 = vunpack.c.l.b16 %v2224
      %v2267 = vunpack.c.h.b16 %v2224
      %v2268 = vunpack.c.l.b16 %v2225
      %v2269 = vunpack.c.h.b16 %v2225
      %v2270 = vunpack.c.l.b16 %v2226
      %v2271 = vunpack.c.l.b16 %v2227
      %v2272 = vunpack.c.h.b16 %v2227
      %v2273 = vunpack.c.l.b16 %v2228
      %v2274 = vunpack.c.h.b16 %v2228
      %v2275 = vunpack.c.l.b16 %v2229
      %v2276 = vunpack.c.l.b16 %v2230
      %v2277 = vunpack.c.h.b16 %v2230
      %v2278 = vunpack.c.l.b16 %v2231
      %v2279 = vunpack.c.h.b16 %v2231
      %v2280 = vunpack.c.l.b16 %v2232
      %v2281 = vpack.c.b16 %v2256, %v2251
      %v2282 = vpack.c.b16 %v2257, %v2252
      %v2283 = vpack.c.b16 %v2258, %v2253
      %v2284 = vpack.c.b16 %v2259, %v2254
      %v2285 = vpack.c.b16 %v2260, %v2255
      %v2286 = vpack.c.b16 %v2266, %v2261
      %v2287 = vpack.c.b16 %v2267, %v2262
      %v2288 = vpack.c.b16 %v2268, %v2263
      %v2289 = vpack.c.b16 %v2269, %v2264
      %v2290 = vpack.c.b16 %v2270, %v2265
      %v2291 = vpack.c.b16 %v2276, %v2271
      %v2292 = vpack.c.b16 %v2277, %v2272
      %v2293 = vpack.c.b16 %v2278, %v2273
      %v2294 = vpack.c.b16 %v2279, %v2274
      %v2295 = vpack.c.b16 %v2280, %v2275
      %v2307 = vsel %vm487, %v2212, 0
      %v2310 = vsel %vm487, %v2213, 0
      %v2313 = vsel %vm494, %v2291, 0
      %v2316 = vsel %vm494, %v2292, 0
      %v2319 = vsel %vm494, %v2293, 0
      %v2322 = vsel %vm494, %v2294, 0
      %v2325 = vsel %vm494, %v2295, 0
      %2327 = vmatprep.subr.bf16.mxu0 0
      %2328 = vmatpush1.bf16.msra.mxu0 0
      %2329 = vmatprep.subr.bf16.mxu0 0
      %2330 = vmatpush1.bf16.msra.mxu0 0
      %2331 = vmatprep.subr.bf16.mxu0 0
      %2332 = vmatpush1.bf16.msra.mxu0 0
      %2333 = vmatprep.subr.bf16.mxu0 0
      %2334 = vmatpush1.bf16.msra.mxu0 0
      %2335 = vmatprep.subr.bf16.mxu0 0
      %2336 = vmatpush1.bf16.msra.mxu0 0
      %2337 = vmatprep.subr.bf16.mxu0 %v2316
      %2338 = vmatpush1.bf16.msra.mxu0 %v2313
      %2339 = vmatprep.subr.bf16.mxu0 %v2287
      %2340 = vmatpush1.bf16.msra.mxu0 %v2286
      %2341 = vmatprep.subr.bf16.mxu0 %v2282
      %2342 = vmatpush1.bf16.msra.mxu0 %v2281
      %2343 = vmatprep.subr.bf16.mxu0 0
      %2344 = vmatpush2.bf16.msra.mxu0 0
      %2345 = vmatprep.subr.bf16.mxu0 0
      %2346 = vmatpush2.bf16.msra.mxu0 0
      %2347 = vmatprep.subr.bf16.mxu0 0
      %2348 = vmatpush2.bf16.msra.mxu0 0
      %2349 = vmatprep.subr.bf16.mxu0 0
      %2350 = vmatpush2.bf16.msra.mxu0 0
      %2351 = vmatprep.subr.bf16.mxu0 0
      %2352 = vmatpush2.bf16.msra.mxu0 0
      %2353 = vmatprep.subr.bf16.mxu0 0
      %2354 = vmatpush2.bf16.msra.mxu0 0
      %2355 = vmatprep.subr.bf16.mxu0 0
      %2356 = vmatpush2.bf16.msra.mxu0 0
      %2357 = vmatprep.subr.bf16.mxu0 0
      %2358 = vmatpush2.bf16.msra.mxu0 0
      %2359 = vmatprep.mubr.bf16.mxu0 0
      %2360 = vmatmul.mubr.bf16.gmra.mxu0 %v2307
      %v2361 = vpop.f32.mrf.mxu0
      %v2362 = vadd.f32 0.0, %v2361
      %v2363 = vpop.f32.mrf.mxu0
      %v2364 = vadd.f32 0.0, %v2363
      %v2365 = vpop.f32.mrf.mxu0
      %v2366 = vadd.f32 0.0, %v2365
      %v2367 = vpop.f32.mrf.mxu0
      %v2368 = vadd.f32 0.0, %v2367
      %2369 = vmatprep.mubr.bf16.mxu0 0
      %2370 = vmatmul.mubr.bf16.gmra.mxu0 %v2310
      %v2371 = vpop.f32.mrf.mxu0
      %v2372 = vadd.f32 0.0, %v2371
      %v2373 = vpop.f32.mrf.mxu0
      %v2374 = vadd.f32 0.0, %v2373
      %v2375 = vpop.f32.mrf.mxu0
      %v2376 = vpop.f32.mrf.mxu0
      %2377 = vdwg.mxu0
      %2378 = vmatprep.subr.bf16.mxu0 0
      %2379 = vmatpush1.bf16.msra.mxu0 0
      %2380 = vmatprep.subr.bf16.mxu0 0
      %2381 = vmatpush1.bf16.msra.mxu0 0
      %2382 = vmatprep.subr.bf16.mxu0 0
      %2383 = vmatpush1.bf16.msra.mxu0 0
      %2384 = vmatprep.subr.bf16.mxu0 0
      %2385 = vmatpush1.bf16.msra.mxu0 0
      %2386 = vmatprep.subr.bf16.mxu0 0
      %2387 = vmatpush1.bf16.msra.mxu0 0
      %2388 = vmatprep.subr.bf16.mxu0 %v2322
      %2389 = vmatpush1.bf16.msra.mxu0 %v2319
      %2390 = vmatprep.subr.bf16.mxu0 %v2289
      %2391 = vmatpush1.bf16.msra.mxu0 %v2288
      %2392 = vmatprep.subr.bf16.mxu0 %v2284
      %2393 = vmatpush1.bf16.msra.mxu0 %v2283
      %2394 = vmatprep.subr.bf16.mxu0 0
      %2395 = vmatpush2.bf16.msra.mxu0 0
      %2396 = vmatprep.subr.bf16.mxu0 0
      %2397 = vmatpush2.bf16.msra.mxu0 0
      %2398 = vmatprep.subr.bf16.mxu0 0
      %2399 = vmatpush2.bf16.msra.mxu0 0
      %2400 = vmatprep.subr.bf16.mxu0 0
      %2401 = vmatpush2.bf16.msra.mxu0 0
      %2402 = vmatprep.subr.bf16.mxu0 0
      %2403 = vmatpush2.bf16.msra.mxu0 0
      %2404 = vmatprep.subr.bf16.mxu0 0
      %2405 = vmatpush2.bf16.msra.mxu0 0
      %2406 = vmatprep.subr.bf16.mxu0 0
      %2407 = vmatpush2.bf16.msra.mxu0 0
      %2408 = vmatprep.subr.bf16.mxu0 0
      %2409 = vmatpush2.bf16.msra.mxu0 0
      %2410 = vmatprep.mubr.bf16.mxu0 0
      %2411 = vmatmul.mubr.bf16.gmra.mxu0 %v2307
      %v2412 = vpop.f32.mrf.mxu0
      %v2413 = vadd.f32 0.0, %v2412
      %v2414 = vpop.f32.mrf.mxu0
      %v2415 = vadd.f32 0.0, %v2414
      %v2416 = vpop.f32.mrf.mxu0
      %v2417 = vadd.f32 0.0, %v2416
      %v2418 = vpop.f32.mrf.mxu0
      %v2419 = vadd.f32 0.0, %v2418
      %2420 = vmatprep.mubr.bf16.mxu0 0
      %2421 = vmatmul.mubr.bf16.gmra.mxu0 %v2310
      %v2422 = vpop.f32.mrf.mxu0
      %v2423 = vadd.f32 0.0, %v2422
      %v2424 = vpop.f32.mrf.mxu0
      %v2425 = vadd.f32 0.0, %v2424
      %v2426 = vpop.f32.mrf.mxu0
      %v2427 = vpop.f32.mrf.mxu0
      %2428 = vdwg.mxu0
      %2429 = vmatprep.subr.bf16.mxu0 0
      %2430 = vmatpush1.bf16.msra.mxu0 0
      %2431 = vmatprep.subr.bf16.mxu0 0
      %2432 = vmatpush1.bf16.msra.mxu0 0
      %2433 = vmatprep.subr.bf16.mxu0 0
      %2434 = vmatpush1.bf16.msra.mxu0 0
      %2435 = vmatprep.subr.bf16.mxu0 0
      %2436 = vmatpush1.bf16.msra.mxu0 0
      %2437 = vmatprep.subr.bf16.mxu0 0
      %2438 = vmatpush1.bf16.msra.mxu0 0
      %2439 = vmatprep.subr.bf16.mxu0 0
      %2440 = vmatpush1.bf16.msra.mxu0 %v2325
      %2441 = vmatprep.subr.bf16.mxu0 0
      %2442 = vmatpush1.bf16.msra.mxu0 %v2290
      %2443 = vmatprep.subr.bf16.mxu0 0
      %2444 = vmatpush1.bf16.msra.mxu0 %v2285
      %2445 = vmatprep.subr.bf16.mxu0 0
      %2446 = vmatpush2.bf16.msra.mxu0 0
      %2447 = vmatprep.subr.bf16.mxu0 0
      %2448 = vmatpush2.bf16.msra.mxu0 0
      %2449 = vmatprep.subr.bf16.mxu0 0
      %2450 = vmatpush2.bf16.msra.mxu0 0
      %2451 = vmatprep.subr.bf16.mxu0 0
      %2452 = vmatpush2.bf16.msra.mxu0 0
      %2453 = vmatprep.subr.bf16.mxu0 0
      %2454 = vmatpush2.bf16.msra.mxu0 0
      %2455 = vmatprep.subr.bf16.mxu0 0
      %2456 = vmatpush2.bf16.msra.mxu0 0
      %2457 = vmatprep.subr.bf16.mxu0 0
      %2458 = vmatpush2.bf16.msra.mxu0 0
      %2459 = vmatprep.subr.bf16.mxu0 0
      %2460 = vmatpush2.bf16.msra.mxu0 0
      %2461 = vmatprep.mubr.bf16.mxu0 0
      %2462 = vmatmul.mubr.bf16.gmra.mxu0 %v2307
      %v2463 = vpop.f32.mrf.mxu0
      %v2464 = vadd.f32 0.0, %v2463
      %v2465 = vpop.f32.mrf.mxu0
      %v2466 = vpop.f32.mrf.mxu0
      %v2467 = vadd.f32 0.0, %v2466
      %v2468 = vpop.f32.mrf.mxu0
      %2469 = vmatprep.mubr.bf16.mxu0 0
      %2470 = vmatmul.mubr.bf16.gmra.mxu0 %v2310
      %v2471 = vpop.f32.mrf.mxu0
      %v2472 = vadd.f32 0.0, %v2471
      %v2473 = vpop.f32.mrf.mxu0
      %v2474 = vpop.f32.mrf.mxu0
      %v2475 = vpop.f32.mrf.mxu0
      %2476 = vdwg.mxu0
      %v2477 = vadd.f32 %v2149, %v2362
      %v2478 = vadd.f32 %v2150, %v2364
      %v2479 = vadd.f32 %v2151, %v2413
      %v2480 = vadd.f32 %v2152, %v2415
      %v2481 = vadd.f32 %v2153, %v2464
      %v2482 = vadd.f32 %v2154, %v2366
      %v2483 = vadd.f32 %v2155, %v2368
      %v2484 = vadd.f32 %v2156, %v2417
      %v2485 = vadd.f32 %v2157, %v2419
      %v2486 = vadd.f32 %v2158, %v2467
      %v2487 = vadd.f32 %v2159, %v2372
      %v2488 = vadd.f32 %v2160, %v2374
      %v2489 = vadd.f32 %v2161, %v2423
      %v2490 = vadd.f32 %v2162, %v2425
      %v2491 = vadd.f32 %v2163, %v2472
      %2492 = vmatprep.subr.bf16.mxu0 0
      %2493 = vmatpush1.bf16.msra.mxu0 0
      %2494 = vmatprep.subr.bf16.mxu0 0
      %2495 = vmatpush1.bf16.msra.mxu0 0
      %2496 = vmatprep.subr.bf16.mxu0 0
      %2497 = vmatpush1.bf16.msra.mxu0 0
      %2498 = vmatprep.subr.bf16.mxu0 0
      %2499 = vmatpush1.bf16.msra.mxu0 0
      %2500 = vmatprep.subr.bf16.mxu0 0
      %2501 = vmatpush1.bf16.msra.mxu0 0
      %2502 = vmatprep.subr.bf16.mxu0 0
      %2503 = vmatpush1.bf16.msra.mxu0 %v1147
      %2504 = vmatprep.subr.bf16.mxu0 0
      %2505 = vmatpush1.bf16.msra.mxu0 %v1144
      %2506 = vmatprep.subr.bf16.mxu0 0
      %2507 = vmatpush1.bf16.msra.mxu0 %v1143
      %2508 = vmatprep.subr.bf16.mxu0 0
      %2509 = vmatpush2.bf16.msra.mxu0 0
      %2510 = vmatprep.subr.bf16.mxu0 0
      %2511 = vmatpush2.bf16.msra.mxu0 0
      %2512 = vmatprep.subr.bf16.mxu0 0
      %2513 = vmatpush2.bf16.msra.mxu0 0
      %2514 = vmatprep.subr.bf16.mxu0 0
      %2515 = vmatpush2.bf16.msra.mxu0 0
      %2516 = vmatprep.subr.bf16.mxu0 0
      %2517 = vmatpush2.bf16.msra.mxu0 0
      %2518 = vmatprep.subr.bf16.mxu0 0
      %2519 = vmatpush2.bf16.msra.mxu0 0
      %2520 = vmatprep.subr.bf16.mxu0 0
      %2521 = vmatpush2.bf16.msra.mxu0 0
      %2522 = vmatprep.subr.bf16.mxu0 0
      %2523 = vmatpush2.bf16.msra.mxu0 0
      %2524 = vmatprep.mubr.bf16.mxu0 0
      %2525 = vmatmul.mubr.bf16.gmra.mxu0 %v1831
      %v2526 = vpop.f32.mrf.mxu0
      %v2527 = vadd.f32 0.0, %v2526
      %v2528 = vpop.f32.mrf.mxu0
      %v2529 = vpop.f32.mrf.mxu0
      %v2530 = vadd.f32 0.0, %v2529
      %v2531 = vpop.f32.mrf.mxu0
      %2532 = vmatprep.mubr.bf16.mxu0 0
      %2533 = vmatmul.mubr.bf16.gmra.mxu0 %v1834
      %v2534 = vpop.f32.mrf.mxu0
      %v2535 = vadd.f32 0.0, %v2534
      %v2536 = vpop.f32.mrf.mxu0
      %v2537 = vpop.f32.mrf.mxu0
      %v2538 = vpop.f32.mrf.mxu0
      %2539 = vdwg.mxu0
      %v2540 = vpack.c.bf16 %v2530, %v2527
      %v2541 = vpack.c.bf16 %v2535, %v2535
      %s2542 = scalar_lea.vmem %s2, 720
      %v2543 = vld [vmem:[%s2542] sm:$0xff]
      %v2544 = vld [vmem:[%s2542 + $0x8] sm:$0xff]
      %v2545 = vld [vmem:[%s2542 + $0x10] sm:$0xf]
      %v2546 = vld [vmem:[%s2542 + $0x14] sm:$0xff]
      %v2547 = vld [vmem:[%s2542 + $0x1c] sm:$0xff]
      %v2548 = vld [vmem:[%s2542 + $0x24] sm:$0xf]
      %v2549 = vld [vmem:[%s2542 + $0x28] sm:$0xff]
      %v2550 = vld [vmem:[%s2542 + $0x30] sm:$0xff]
      %v2551 = vld [vmem:[%s2542 + $0x38] sm:$0xf]
      %v2552 = vld [vmem:[%s2542 + $0x3c] sm:$0xff]
      %v2553 = vld [vmem:[%s2542 + $0x44] sm:$0xff]
      %v2554 = vld [vmem:[%s2542 + $0x4c] sm:$0xf]
      %v2555 = vld [vmem:[%s2542 + $0x50] sm:$0xff]
      %v2556 = vld [vmem:[%s2542 + $0x58] sm:$0xff]
      %v2557 = vld [vmem:[%s2542 + $0x60] sm:$0xf]
      %v2558 = vld [vmem:[%s2542 + $0x64] sm:$0x11]
      %v2559 = vld [vmem:[%s2542 + $0x6c] sm:$0x11]
      %v2560 = vld [vmem:[%s2542 + $0x74] sm:$0x1]
      %v2579 = vunpack.c.l.b16 %v2543
      %v2580 = vunpack.c.h.b16 %v2543
      %v2581 = vunpack.c.l.b16 %v2544
      %v2582 = vunpack.c.h.b16 %v2544
      %v2583 = vunpack.c.l.b16 %v2545
      %v2584 = vunpack.c.l.b16 %v2546
      %v2585 = vunpack.c.h.b16 %v2546
      %v2586 = vunpack.c.l.b16 %v2547
      %v2587 = vunpack.c.h.b16 %v2547
      %v2588 = vunpack.c.l.b16 %v2548
      %v2589 = vunpack.c.l.b16 %v2549
      %v2590 = vunpack.c.h.b16 %v2549
      %v2591 = vunpack.c.l.b16 %v2550
      %v2592 = vunpack.c.h.b16 %v2550
      %v2593 = vunpack.c.l.b16 %v2551
      %v2594 = vunpack.c.l.b16 %v2552
      %v2595 = vunpack.c.h.b16 %v2552
      %v2596 = vunpack.c.l.b16 %v2553
      %v2597 = vunpack.c.h.b16 %v2553
      %v2598 = vunpack.c.l.b16 %v2554
      %v2599 = vunpack.c.l.b16 %v2555
      %v2600 = vunpack.c.h.b16 %v2555
      %v2601 = vunpack.c.l.b16 %v2556
      %v2602 = vunpack.c.h.b16 %v2556
      %v2603 = vunpack.c.l.b16 %v2557
      %v2604 = vunpack.c.l.b16 %v2558
      %v2605 = vunpack.c.h.b16 %v2558
      %v2606 = vunpack.c.l.b16 %v2559
      %v2607 = vunpack.c.h.b16 %v2559
      %v2608 = vunpack.c.l.b16 %v2560
      %v2609 = vpack.c.b16 %v2584, %v2579
      %v2610 = vpack.c.b16 %v2585, %v2580
      %v2611 = vpack.c.b16 %v2586, %v2581
      %v2612 = vpack.c.b16 %v2587, %v2582
      %v2613 = vpack.c.b16 %v2588, %v2583
      %v2614 = vpack.c.b16 %v2594, %v2589
      %v2615 = vpack.c.b16 %v2595, %v2590
      %v2616 = vpack.c.b16 %v2596, %v2591
      %v2617 = vpack.c.b16 %v2597, %v2592
      %v2618 = vpack.c.b16 %v2598, %v2593
      %v2619 = vpack.c.b16 %v2604, %v2599
      %v2620 = vpack.c.b16 %v2605, %v2600
      %v2621 = vpack.c.b16 %v2606, %v2601
      %v2622 = vpack.c.b16 %v2607, %v2602
      %v2623 = vpack.c.b16 %v2608, %v2603
      %v2635 = vsel %vm487, %v2540, 0
      %v2638 = vsel %vm487, %v2541, 0
      %v2641 = vsel %vm494, %v2619, 0
      %v2644 = vsel %vm494, %v2620, 0
      %v2647 = vsel %vm494, %v2621, 0
      %v2650 = vsel %vm494, %v2622, 0
      %v2653 = vsel %vm494, %v2623, 0
      %2655 = vmatprep.subr.bf16.mxu0 0
      %2656 = vmatpush1.bf16.msra.mxu0 0
      %2657 = vmatprep.subr.bf16.mxu0 0
      %2658 = vmatpush1.bf16.msra.mxu0 0
      %2659 = vmatprep.subr.bf16.mxu0 0
      %2660 = vmatpush1.bf16.msra.mxu0 0
      %2661 = vmatprep.subr.bf16.mxu0 0
      %2662 = vmatpush1.bf16.msra.mxu0 0
      %2663 = vmatprep.subr.bf16.mxu0 0
      %2664 = vmatpush1.bf16.msra.mxu0 0
      %2665 = vmatprep.subr.bf16.mxu0 %v2644
      %2666 = vmatpush1.bf16.msra.mxu0 %v2641
      %2667 = vmatprep.subr.bf16.mxu0 %v2615
      %2668 = vmatpush1.bf16.msra.mxu0 %v2614
      %2669 = vmatprep.subr.bf16.mxu0 %v2610
      %2670 = vmatpush1.bf16.msra.mxu0 %v2609
      %2671 = vmatprep.subr.bf16.mxu0 0
      %2672 = vmatpush2.bf16.msra.mxu0 0
      %2673 = vmatprep.subr.bf16.mxu0 0
      %2674 = vmatpush2.bf16.msra.mxu0 0
      %2675 = vmatprep.subr.bf16.mxu0 0
      %2676 = vmatpush2.bf16.msra.mxu0 0
      %2677 = vmatprep.subr.bf16.mxu0 0
      %2678 = vmatpush2.bf16.msra.mxu0 0
      %2679 = vmatprep.subr.bf16.mxu0 0
      %2680 = vmatpush2.bf16.msra.mxu0 0
      %2681 = vmatprep.subr.bf16.mxu0 0
      %2682 = vmatpush2.bf16.msra.mxu0 0
      %2683 = vmatprep.subr.bf16.mxu0 0
      %2684 = vmatpush2.bf16.msra.mxu0 0
      %2685 = vmatprep.subr.bf16.mxu0 0
      %2686 = vmatpush2.bf16.msra.mxu0 0
      %2687 = vmatprep.mubr.bf16.mxu0 0
      %2688 = vmatmul.mubr.bf16.gmra.mxu0 %v2635
      %v2689 = vpop.f32.mrf.mxu0
      %v2690 = vadd.f32 0.0, %v2689
      %v2691 = vpop.f32.mrf.mxu0
      %v2692 = vadd.f32 0.0, %v2691
      %v2693 = vpop.f32.mrf.mxu0
      %v2694 = vadd.f32 0.0, %v2693
      %v2695 = vpop.f32.mrf.mxu0
      %v2696 = vadd.f32 0.0, %v2695
      %2697 = vmatprep.mubr.bf16.mxu0 0
      %2698 = vmatmul.mubr.bf16.gmra.mxu0 %v2638
      %v2699 = vpop.f32.mrf.mxu0
      %v2700 = vadd.f32 0.0, %v2699
      %v2701 = vpop.f32.mrf.mxu0
      %v2702 = vadd.f32 0.0, %v2701
      %v2703 = vpop.f32.mrf.mxu0
      %v2704 = vpop.f32.mrf.mxu0
      %2705 = vdwg.mxu0
      %2706 = vmatprep.subr.bf16.mxu0 0
      %2707 = vmatpush1.bf16.msra.mxu0 0
      %2708 = vmatprep.subr.bf16.mxu0 0
      %2709 = vmatpush1.bf16.msra.mxu0 0
      %2710 = vmatprep.subr.bf16.mxu0 0
      %2711 = vmatpush1.bf16.msra.mxu0 0
      %2712 = vmatprep.subr.bf16.mxu0 0
      %2713 = vmatpush1.bf16.msra.mxu0 0
      %2714 = vmatprep.subr.bf16.mxu0 0
      %2715 = vmatpush1.bf16.msra.mxu0 0
      %2716 = vmatprep.subr.bf16.mxu0 %v2650
      %2717 = vmatpush1.bf16.msra.mxu0 %v2647
      %2718 = vmatprep.subr.bf16.mxu0 %v2617
      %2719 = vmatpush1.bf16.msra.mxu0 %v2616
      %2720 = vmatprep.subr.bf16.mxu0 %v2612
      %2721 = vmatpush1.bf16.msra.mxu0 %v2611
      %2722 = vmatprep.subr.bf16.mxu0 0
      %2723 = vmatpush2.bf16.msra.mxu0 0
      %2724 = vmatprep.subr.bf16.mxu0 0
      %2725 = vmatpush2.bf16.msra.mxu0 0
      %2726 = vmatprep.subr.bf16.mxu0 0
      %2727 = vmatpush2.bf16.msra.mxu0 0
      %2728 = vmatprep.subr.bf16.mxu0 0
      %2729 = vmatpush2.bf16.msra.mxu0 0
      %2730 = vmatprep.subr.bf16.mxu0 0
      %2731 = vmatpush2.bf16.msra.mxu0 0
      %2732 = vmatprep.subr.bf16.mxu0 0
      %2733 = vmatpush2.bf16.msra.mxu0 0
      %2734 = vmatprep.subr.bf16.mxu0 0
      %2735 = vmatpush2.bf16.msra.mxu0 0
      %2736 = vmatprep.subr.bf16.mxu0 0
      %2737 = vmatpush2.bf16.msra.mxu0 0
      %2738 = vmatprep.mubr.bf16.mxu0 0
      %2739 = vmatmul.mubr.bf16.gmra.mxu0 %v2635
      %v2740 = vpop.f32.mrf.mxu0
      %v2741 = vadd.f32 0.0, %v2740
      %v2742 = vpop.f32.mrf.mxu0
      %v2743 = vadd.f32 0.0, %v2742
      %v2744 = vpop.f32.mrf.mxu0
      %v2745 = vadd.f32 0.0, %v2744
      %v2746 = vpop.f32.mrf.mxu0
      %v2747 = vadd.f32 0.0, %v2746
      %2748 = vmatprep.mubr.bf16.mxu0 0
      %2749 = vmatmul.mubr.bf16.gmra.mxu0 %v2638
      %v2750 = vpop.f32.mrf.mxu0
      %v2751 = vadd.f32 0.0, %v2750
      %v2752 = vpop.f32.mrf.mxu0
      %v2753 = vadd.f32 0.0, %v2752
      %v2754 = vpop.f32.mrf.mxu0
      %v2755 = vpop.f32.mrf.mxu0
      %2756 = vdwg.mxu0
      %2757 = vmatprep.subr.bf16.mxu0 0
      %2758 = vmatpush1.bf16.msra.mxu0 0
      %2759 = vmatprep.subr.bf16.mxu0 0
      %2760 = vmatpush1.bf16.msra.mxu0 0
      %2761 = vmatprep.subr.bf16.mxu0 0
      %2762 = vmatpush1.bf16.msra.mxu0 0
      %2763 = vmatprep.subr.bf16.mxu0 0
      %2764 = vmatpush1.bf16.msra.mxu0 0
      %2765 = vmatprep.subr.bf16.mxu0 0
      %2766 = vmatpush1.bf16.msra.mxu0 0
      %2767 = vmatprep.subr.bf16.mxu0 0
      %2768 = vmatpush1.bf16.msra.mxu0 %v2653
      %2769 = vmatprep.subr.bf16.mxu0 0
      %2770 = vmatpush1.bf16.msra.mxu0 %v2618
      %2771 = vmatprep.subr.bf16.mxu0 0
      %2772 = vmatpush1.bf16.msra.mxu0 %v2613
      %2773 = vmatprep.subr.bf16.mxu0 0
      %2774 = vmatpush2.bf16.msra.mxu0 0
      %2775 = vmatprep.subr.bf16.mxu0 0
      %2776 = vmatpush2.bf16.msra.mxu0 0
      %2777 = vmatprep.subr.bf16.mxu0 0
      %2778 = vmatpush2.bf16.msra.mxu0 0
      %2779 = vmatprep.subr.bf16.mxu0 0
      %2780 = vmatpush2.bf16.msra.mxu0 0
      %2781 = vmatprep.subr.bf16.mxu0 0
      %2782 = vmatpush2.bf16.msra.mxu0 0
      %2783 = vmatprep.subr.bf16.mxu0 0
      %2784 = vmatpush2.bf16.msra.mxu0 0
      %2785 = vmatprep.subr.bf16.mxu0 0
      %2786 = vmatpush2.bf16.msra.mxu0 0
      %2787 = vmatprep.subr.bf16.mxu0 0
      %2788 = vmatpush2.bf16.msra.mxu0 0
      %2789 = vmatprep.mubr.bf16.mxu0 0
      %2790 = vmatmul.mubr.bf16.gmra.mxu0 %v2635
      %v2791 = vpop.f32.mrf.mxu0
      %v2792 = vadd.f32 0.0, %v2791
      %v2793 = vpop.f32.mrf.mxu0
      %v2794 = vpop.f32.mrf.mxu0
      %v2795 = vadd.f32 0.0, %v2794
      %v2796 = vpop.f32.mrf.mxu0
      %2797 = vmatprep.mubr.bf16.mxu0 0
      %2798 = vmatmul.mubr.bf16.gmra.mxu0 %v2638
      %v2799 = vpop.f32.mrf.mxu0
      %v2800 = vadd.f32 0.0, %v2799
      %v2801 = vpop.f32.mrf.mxu0
      %v2802 = vpop.f32.mrf.mxu0
      %v2803 = vpop.f32.mrf.mxu0
      %2804 = vdwg.mxu0
      %v2805 = vadd.f32 %v2477, %v2690
      %v2806 = vadd.f32 %v2478, %v2692
      %v2807 = vadd.f32 %v2479, %v2741
      %v2808 = vadd.f32 %v2480, %v2743
      %v2809 = vadd.f32 %v2481, %v2792
      %v2810 = vadd.f32 %v2482, %v2694
      %v2811 = vadd.f32 %v2483, %v2696
      %v2812 = vadd.f32 %v2484, %v2745
      %v2813 = vadd.f32 %v2485, %v2747
      %v2814 = vadd.f32 %v2486, %v2795
      %v2815 = vadd.f32 %v2487, %v2700
      %v2816 = vadd.f32 %v2488, %v2702
      %v2817 = vadd.f32 %v2489, %v2751
      %v2818 = vadd.f32 %v2490, %v2753
      %v2819 = vadd.f32 %v2491, %v2800
      %2820 = vmatprep.subr.bf16.mxu0 0
      %2821 = vmatpush1.bf16.msra.mxu0 0
      %2822 = vmatprep.subr.bf16.mxu0 0
      %2823 = vmatpush1.bf16.msra.mxu0 0
      %2824 = vmatprep.subr.bf16.mxu0 0
      %2825 = vmatpush1.bf16.msra.mxu0 0
      %2826 = vmatprep.subr.bf16.mxu0 0
      %2827 = vmatpush1.bf16.msra.mxu0 0
      %2828 = vmatprep.subr.bf16.mxu0 0
      %2829 = vmatpush1.bf16.msra.mxu0 0
      %2830 = vmatprep.subr.bf16.mxu0 0
      %2831 = vmatpush1.bf16.msra.mxu0 %v1488
      %2832 = vmatprep.subr.bf16.mxu0 0
      %2833 = vmatpush1.bf16.msra.mxu0 %v1485
      %2834 = vmatprep.subr.bf16.mxu0 0
      %2835 = vmatpush1.bf16.msra.mxu0 %v1484
      %2836 = vmatprep.subr.bf16.mxu0 0
      %2837 = vmatpush2.bf16.msra.mxu0 0
      %2838 = vmatprep.subr.bf16.mxu0 0
      %2839 = vmatpush2.bf16.msra.mxu0 0
      %2840 = vmatprep.subr.bf16.mxu0 0
      %2841 = vmatpush2.bf16.msra.mxu0 0
      %2842 = vmatprep.subr.bf16.mxu0 0
      %2843 = vmatpush2.bf16.msra.mxu0 0
      %2844 = vmatprep.subr.bf16.mxu0 0
      %2845 = vmatpush2.bf16.msra.mxu0 0
      %2846 = vmatprep.subr.bf16.mxu0 0
      %2847 = vmatpush2.bf16.msra.mxu0 0
      %2848 = vmatprep.subr.bf16.mxu0 0
      %2849 = vmatpush2.bf16.msra.mxu0 0
      %2850 = vmatprep.subr.bf16.mxu0 0
      %2851 = vmatpush2.bf16.msra.mxu0 0
      %2852 = vmatprep.mubr.bf16.mxu0 0
      %2853 = vmatmul.mubr.bf16.gmra.mxu0 %v1831
      %v2854 = vpop.f32.mrf.mxu0
      %v2855 = vadd.f32 0.0, %v2854
      %v2856 = vpop.f32.mrf.mxu0
      %v2857 = vpop.f32.mrf.mxu0
      %v2858 = vadd.f32 0.0, %v2857
      %v2859 = vpop.f32.mrf.mxu0
      %2860 = vmatprep.mubr.bf16.mxu0 0
      %2861 = vmatmul.mubr.bf16.gmra.mxu0 %v1834
      %v2862 = vpop.f32.mrf.mxu0
      %v2863 = vadd.f32 0.0, %v2862
      %v2864 = vpop.f32.mrf.mxu0
      %v2865 = vpop.f32.mrf.mxu0
      %v2866 = vpop.f32.mrf.mxu0
      %2867 = vdwg.mxu0
      %v2868 = vpack.c.bf16 %v2858, %v2855
      %v2869 = vpack.c.bf16 %v2863, %v2863
      %s2870 = scalar_lea.vmem %s2, 840
      %v2871 = vld [vmem:[%s2870] sm:$0xff]
      %v2872 = vld [vmem:[%s2870 + $0x8] sm:$0xff]
      %v2873 = vld [vmem:[%s2870 + $0x10] sm:$0xf]
      %v2874 = vld [vmem:[%s2870 + $0x14] sm:$0xff]
      %v2875 = vld [vmem:[%s2870 + $0x1c] sm:$0xff]
      %v2876 = vld [vmem:[%s2870 + $0x24] sm:$0xf]
      %v2877 = vld [vmem:[%s2870 + $0x28] sm:$0xff]
      %v2878 = vld [vmem:[%s2870 + $0x30] sm:$0xff]
      %v2879 = vld [vmem:[%s2870 + $0x38] sm:$0xf]
      %v2880 = vld [vmem:[%s2870 + $0x3c] sm:$0xff]
      %v2881 = vld [vmem:[%s2870 + $0x44] sm:$0xff]
      %v2882 = vld [vmem:[%s2870 + $0x4c] sm:$0xf]
      %v2883 = vld [vmem:[%s2870 + $0x50] sm:$0xff]
      %v2884 = vld [vmem:[%s2870 + $0x58] sm:$0xff]
      %v2885 = vld [vmem:[%s2870 + $0x60] sm:$0xf]
      %v2886 = vld [vmem:[%s2870 + $0x64] sm:$0x11]
      %v2887 = vld [vmem:[%s2870 + $0x6c] sm:$0x11]
      %v2888 = vld [vmem:[%s2870 + $0x74] sm:$0x1]
      %v2907 = vunpack.c.l.b16 %v2871
      %v2908 = vunpack.c.h.b16 %v2871
      %v2909 = vunpack.c.l.b16 %v2872
      %v2910 = vunpack.c.h.b16 %v2872
      %v2911 = vunpack.c.l.b16 %v2873
      %v2912 = vunpack.c.l.b16 %v2874
      %v2913 = vunpack.c.h.b16 %v2874
      %v2914 = vunpack.c.l.b16 %v2875
      %v2915 = vunpack.c.h.b16 %v2875
      %v2916 = vunpack.c.l.b16 %v2876
      %v2917 = vunpack.c.l.b16 %v2877
      %v2918 = vunpack.c.h.b16 %v2877
      %v2919 = vunpack.c.l.b16 %v2878
      %v2920 = vunpack.c.h.b16 %v2878
      %v2921 = vunpack.c.l.b16 %v2879
      %v2922 = vunpack.c.l.b16 %v2880
      %v2923 = vunpack.c.h.b16 %v2880
      %v2924 = vunpack.c.l.b16 %v2881
      %v2925 = vunpack.c.h.b16 %v2881
      %v2926 = vunpack.c.l.b16 %v2882
      %v2927 = vunpack.c.l.b16 %v2883
      %v2928 = vunpack.c.h.b16 %v2883
      %v2929 = vunpack.c.l.b16 %v2884
      %v2930 = vunpack.c.h.b16 %v2884
      %v2931 = vunpack.c.l.b16 %v2885
      %v2932 = vunpack.c.l.b16 %v2886
      %v2933 = vunpack.c.h.b16 %v2886
      %v2934 = vunpack.c.l.b16 %v2887
      %v2935 = vunpack.c.h.b16 %v2887
      %v2936 = vunpack.c.l.b16 %v2888
      %v2937 = vpack.c.b16 %v2912, %v2907
      %v2938 = vpack.c.b16 %v2913, %v2908
      %v2939 = vpack.c.b16 %v2914, %v2909
      %v2940 = vpack.c.b16 %v2915, %v2910
      %v2941 = vpack.c.b16 %v2916, %v2911
      %v2942 = vpack.c.b16 %v2922, %v2917
      %v2943 = vpack.c.b16 %v2923, %v2918
      %v2944 = vpack.c.b16 %v2924, %v2919
      %v2945 = vpack.c.b16 %v2925, %v2920
      %v2946 = vpack.c.b16 %v2926, %v2921
      %v2947 = vpack.c.b16 %v2932, %v2927
      %v2948 = vpack.c.b16 %v2933, %v2928
      %v2949 = vpack.c.b16 %v2934, %v2929
      %v2950 = vpack.c.b16 %v2935, %v2930
      %v2951 = vpack.c.b16 %v2936, %v2931
      %v2963 = vsel %vm487, %v2868, 0
      %v2966 = vsel %vm487, %v2869, 0
      %v2969 = vsel %vm494, %v2947, 0
      %v2972 = vsel %vm494, %v2948, 0
      %v2975 = vsel %vm494, %v2949, 0
      %v2978 = vsel %vm494, %v2950, 0
      %v2981 = vsel %vm494, %v2951, 0
      %2983 = vmatprep.subr.bf16.mxu0 0
      %2984 = vmatpush1.bf16.msra.mxu0 0
      %2985 = vmatprep.subr.bf16.mxu0 0
      %2986 = vmatpush1.bf16.msra.mxu0 0
      %2987 = vmatprep.subr.bf16.mxu0 0
      %2988 = vmatpush1.bf16.msra.mxu0 0
      %2989 = vmatprep.subr.bf16.mxu0 0
      %2990 = vmatpush1.bf16.msra.mxu0 0
      %2991 = vmatprep.subr.bf16.mxu0 0
      %2992 = vmatpush1.bf16.msra.mxu0 0
      %2993 = vmatprep.subr.bf16.mxu0 %v2972
      %2994 = vmatpush1.bf16.msra.mxu0 %v2969
      %2995 = vmatprep.subr.bf16.mxu0 %v2943
      %2996 = vmatpush1.bf16.msra.mxu0 %v2942
      %2997 = vmatprep.subr.bf16.mxu0 %v2938
      %2998 = vmatpush1.bf16.msra.mxu0 %v2937
      %2999 = vmatprep.subr.bf16.mxu0 0
      %3000 = vmatpush2.bf16.msra.mxu0 0
      %3001 = vmatprep.subr.bf16.mxu0 0
      %3002 = vmatpush2.bf16.msra.mxu0 0
      %3003 = vmatprep.subr.bf16.mxu0 0
      %3004 = vmatpush2.bf16.msra.mxu0 0
      %3005 = vmatprep.subr.bf16.mxu0 0
      %3006 = vmatpush2.bf16.msra.mxu0 0
      %3007 = vmatprep.subr.bf16.mxu0 0
      %3008 = vmatpush2.bf16.msra.mxu0 0
      %3009 = vmatprep.subr.bf16.mxu0 0
      %3010 = vmatpush2.bf16.msra.mxu0 0
      %3011 = vmatprep.subr.bf16.mxu0 0
      %3012 = vmatpush2.bf16.msra.mxu0 0
      %3013 = vmatprep.subr.bf16.mxu0 0
      %3014 = vmatpush2.bf16.msra.mxu0 0
      %3015 = vmatprep.mubr.bf16.mxu0 0
      %3016 = vmatmul.mubr.bf16.gmra.mxu0 %v2963
      %v3017 = vpop.f32.mrf.mxu0
      %v3018 = vadd.f32 0.0, %v3017
      %v3019 = vpop.f32.mrf.mxu0
      %v3020 = vadd.f32 0.0, %v3019
      %v3021 = vpop.f32.mrf.mxu0
      %v3022 = vadd.f32 0.0, %v3021
      %v3023 = vpop.f32.mrf.mxu0
      %v3024 = vadd.f32 0.0, %v3023
      %3025 = vmatprep.mubr.bf16.mxu0 0
      %3026 = vmatmul.mubr.bf16.gmra.mxu0 %v2966
      %v3027 = vpop.f32.mrf.mxu0
      %v3028 = vadd.f32 0.0, %v3027
      %v3029 = vpop.f32.mrf.mxu0
      %v3030 = vadd.f32 0.0, %v3029
      %v3031 = vpop.f32.mrf.mxu0
      %v3032 = vpop.f32.mrf.mxu0
      %3033 = vdwg.mxu0
      %3034 = vmatprep.subr.bf16.mxu0 0
      %3035 = vmatpush1.bf16.msra.mxu0 0
      %3036 = vmatprep.subr.bf16.mxu0 0
      %3037 = vmatpush1.bf16.msra.mxu0 0
      %3038 = vmatprep.subr.bf16.mxu0 0
      %3039 = vmatpush1.bf16.msra.mxu0 0
      %3040 = vmatprep.subr.bf16.mxu0 0
      %3041 = vmatpush1.bf16.msra.mxu0 0
      %3042 = vmatprep.subr.bf16.mxu0 0
      %3043 = vmatpush1.bf16.msra.mxu0 0
      %3044 = vmatprep.subr.bf16.mxu0 %v2978
      %3045 = vmatpush1.bf16.msra.mxu0 %v2975
      %3046 = vmatprep.subr.bf16.mxu0 %v2945
      %3047 = vmatpush1.bf16.msra.mxu0 %v2944
      %3048 = vmatprep.subr.bf16.mxu0 %v2940
      %3049 = vmatpush1.bf16.msra.mxu0 %v2939
      %3050 = vmatprep.subr.bf16.mxu0 0
      %3051 = vmatpush2.bf16.msra.mxu0 0
      %3052 = vmatprep.subr.bf16.mxu0 0
      %3053 = vmatpush2.bf16.msra.mxu0 0
      %3054 = vmatprep.subr.bf16.mxu0 0
      %3055 = vmatpush2.bf16.msra.mxu0 0
      %3056 = vmatprep.subr.bf16.mxu0 0
      %3057 = vmatpush2.bf16.msra.mxu0 0
      %3058 = vmatprep.subr.bf16.mxu0 0
      %3059 = vmatpush2.bf16.msra.mxu0 0
      %3060 = vmatprep.subr.bf16.mxu0 0
      %3061 = vmatpush2.bf16.msra.mxu0 0
      %3062 = vmatprep.subr.bf16.mxu0 0
      %3063 = vmatpush2.bf16.msra.mxu0 0
      %3064 = vmatprep.subr.bf16.mxu0 0
      %3065 = vmatpush2.bf16.msra.mxu0 0
      %3066 = vmatprep.mubr.bf16.mxu0 0
      %3067 = vmatmul.mubr.bf16.gmra.mxu0 %v2963
      %v3068 = vpop.f32.mrf.mxu0
      %v3069 = vadd.f32 0.0, %v3068
      %v3070 = vpop.f32.mrf.mxu0
      %v3071 = vadd.f32 0.0, %v3070
      %v3072 = vpop.f32.mrf.mxu0
      %v3073 = vadd.f32 0.0, %v3072
      %v3074 = vpop.f32.mrf.mxu0
      %v3075 = vadd.f32 0.0, %v3074
      %3076 = vmatprep.mubr.bf16.mxu0 0
      %3077 = vmatmul.mubr.bf16.gmra.mxu0 %v2966
      %v3078 = vpop.f32.mrf.mxu0
      %v3079 = vadd.f32 0.0, %v3078
      %v3080 = vpop.f32.mrf.mxu0
      %v3081 = vadd.f32 0.0, %v3080
      %v3082 = vpop.f32.mrf.mxu0
      %v3083 = vpop.f32.mrf.mxu0
      %3084 = vdwg.mxu0
      %3085 = vmatprep.subr.bf16.mxu0 0
      %3086 = vmatpush1.bf16.msra.mxu0 0
      %3087 = vmatprep.subr.bf16.mxu0 0
      %3088 = vmatpush1.bf16.msra.mxu0 0
      %3089 = vmatprep.subr.bf16.mxu0 0
      %3090 = vmatpush1.bf16.msra.mxu0 0
      %3091 = vmatprep.subr.bf16.mxu0 0
      %3092 = vmatpush1.bf16.msra.mxu0 0
      %3093 = vmatprep.subr.bf16.mxu0 0
      %3094 = vmatpush1.bf16.msra.mxu0 0
      %3095 = vmatprep.subr.bf16.mxu0 0
      %3096 = vmatpush1.bf16.msra.mxu0 %v2981
      %3097 = vmatprep.subr.bf16.mxu0 0
      %3098 = vmatpush1.bf16.msra.mxu0 %v2946
      %3099 = vmatprep.subr.bf16.mxu0 0
      %3100 = vmatpush1.bf16.msra.mxu0 %v2941
      %3101 = vmatprep.subr.bf16.mxu0 0
      %3102 = vmatpush2.bf16.msra.mxu0 0
      %3103 = vmatprep.subr.bf16.mxu0 0
      %3104 = vmatpush2.bf16.msra.mxu0 0
      %3105 = vmatprep.subr.bf16.mxu0 0
      %3106 = vmatpush2.bf16.msra.mxu0 0
      %3107 = vmatprep.subr.bf16.mxu0 0
      %3108 = vmatpush2.bf16.msra.mxu0 0
      %3109 = vmatprep.subr.bf16.mxu0 0
      %3110 = vmatpush2.bf16.msra.mxu0 0
      %3111 = vmatprep.subr.bf16.mxu0 0
      %3112 = vmatpush2.bf16.msra.mxu0 0
      %3113 = vmatprep.subr.bf16.mxu0 0
      %3114 = vmatpush2.bf16.msra.mxu0 0
      %3115 = vmatprep.subr.bf16.mxu0 0
      %3116 = vmatpush2.bf16.msra.mxu0 0
      %3117 = vmatprep.mubr.bf16.mxu0 0
      %3118 = vmatmul.mubr.bf16.gmra.mxu0 %v2963
      %v3119 = vpop.f32.mrf.mxu0
      %v3120 = vadd.f32 0.0, %v3119
      %v3121 = vpop.f32.mrf.mxu0
      %v3122 = vpop.f32.mrf.mxu0
      %v3123 = vadd.f32 0.0, %v3122
      %v3124 = vpop.f32.mrf.mxu0
      %3125 = vmatprep.mubr.bf16.mxu0 0
      %3126 = vmatmul.mubr.bf16.gmra.mxu0 %v2966
      %v3127 = vpop.f32.mrf.mxu0
      %v3128 = vadd.f32 0.0, %v3127
      %v3129 = vpop.f32.mrf.mxu0
      %v3130 = vpop.f32.mrf.mxu0
      %v3131 = vpop.f32.mrf.mxu0
      %3132 = vdwg.mxu0
      %v3133 = vadd.f32 %v2805, %v3018
      %v3134 = vadd.f32 %v2806, %v3020
      %v3135 = vadd.f32 %v2807, %v3069
      %v3136 = vadd.f32 %v2808, %v3071
      %v3137 = vadd.f32 %v2809, %v3120
      %v3138 = vadd.f32 %v2810, %v3022
      %v3139 = vadd.f32 %v2811, %v3024
      %v3140 = vadd.f32 %v2812, %v3073
      %v3141 = vadd.f32 %v2813, %v3075
      %v3142 = vadd.f32 %v2814, %v3123
      %v3143 = vadd.f32 %v2815, %v3028
      %v3144 = vadd.f32 %v2816, %v3030
      %v3145 = vadd.f32 %v2817, %v3079
      %v3146 = vadd.f32 %v2818, %v3081
      %v3147 = vadd.f32 %v2819, %v3128
      %s3148 = scalar_lea.vmem %s1, 24
      %v3149 = vld [vmem:[%s3148] sm:$0xf]
      %v3150 = vld [vmem:[%s3148 + $0x4] sm:$0xf]
      %v3151 = vld [vmem:[%s3148 + $0x8] sm:$0x3]
      %v3155 = vunpack.c.l.b16 %v3149
      %v3156 = vunpack.c.l.b16 %v3150
      %v3157 = vunpack.c.l.b16 %v3151
      %v3158 = vpack.c.b16 %v3156, %v3155
      %v3159 = vpack.c.b16 %v3157, %v3157
      %v3161 = vsel %vm487, %v3158, 0
      %v3164 = vsel %vm487, %v3159, 0
      %3166 = vmatprep.subr.bf16.mxu0 0
      %3167 = vmatpush1.bf16.msra.mxu0 0
      %3168 = vmatprep.subr.bf16.mxu0 0
      %3169 = vmatpush1.bf16.msra.mxu0 0
      %3170 = vmatprep.subr.bf16.mxu0 0
      %3171 = vmatpush1.bf16.msra.mxu0 0
      %3172 = vmatprep.subr.bf16.mxu0 0
      %3173 = vmatpush1.bf16.msra.mxu0 0
      %3174 = vmatprep.subr.bf16.mxu0 0
      %3175 = vmatpush1.bf16.msra.mxu0 0
      %3176 = vmatprep.subr.bf16.mxu0 0
      %3177 = vmatpush1.bf16.msra.mxu0 %v496
      %3178 = vmatprep.subr.bf16.mxu0 0
      %3179 = vmatpush1.bf16.msra.mxu0 %v477
      %3180 = vmatprep.subr.bf16.mxu0 0
      %3181 = vmatpush1.bf16.msra.mxu0 %v476
      %3182 = vmatprep.subr.bf16.mxu0 0
      %3183 = vmatpush2.bf16.msra.mxu0 0
      %3184 = vmatprep.subr.bf16.mxu0 0
      %3185 = vmatpush2.bf16.msra.mxu0 0
      %3186 = vmatprep.subr.bf16.mxu0 0
      %3187 = vmatpush2.bf16.msra.mxu0 0
      %3188 = vmatprep.subr.bf16.mxu0 0
      %3189 = vmatpush2.bf16.msra.mxu0 0
      %3190 = vmatprep.subr.bf16.mxu0 0
      %3191 = vmatpush2.bf16.msra.mxu0 0
      %3192 = vmatprep.subr.bf16.mxu0 0
      %3193 = vmatpush2.bf16.msra.mxu0 0
      %3194 = vmatprep.subr.bf16.mxu0 0
      %3195 = vmatpush2.bf16.msra.mxu0 0
      %3196 = vmatprep.subr.bf16.mxu0 0
      %3197 = vmatpush2.bf16.msra.mxu0 0
      %3198 = vmatprep.mubr.bf16.mxu0 0
      %3199 = vmatmul.mubr.bf16.gmra.mxu0 %v3161
      %v3200 = vpop.f32.mrf.mxu0
      %v3201 = vadd.f32 0.0, %v3200
      %v3202 = vpop.f32.mrf.mxu0
      %v3203 = vpop.f32.mrf.mxu0
      %v3204 = vadd.f32 0.0, %v3203
      %v3205 = vpop.f32.mrf.mxu0
      %3206 = vmatprep.mubr.bf16.mxu0 0
      %3207 = vmatmul.mubr.bf16.gmra.mxu0 %v3164
      %v3208 = vpop.f32.mrf.mxu0
      %v3209 = vadd.f32 0.0, %v3208
      %v3210 = vpop.f32.mrf.mxu0
      %v3211 = vpop.f32.mrf.mxu0
      %v3212 = vpop.f32.mrf.mxu0
      %3213 = vdwg.mxu0
      %v3214 = vpack.c.bf16 %v3204, %v3201
      %v3215 = vpack.c.bf16 %v3209, %v3209
      %s3216 = scalar_lea.vmem %s2, 960
      %v3217 = vld [vmem:[%s3216] sm:$0xff]
      %v3218 = vld [vmem:[%s3216 + $0x8] sm:$0xff]
      %v3219 = vld [vmem:[%s3216 + $0x10] sm:$0xf]
      %v3220 = vld [vmem:[%s3216 + $0x14] sm:$0xff]
      %v3221 = vld [vmem:[%s3216 + $0x1c] sm:$0xff]
      %v3222 = vld [vmem:[%s3216 + $0x24] sm:$0xf]
      %v3223 = vld [vmem:[%s3216 + $0x28] sm:$0xff]
      %v3224 = vld [vmem:[%s3216 + $0x30] sm:$0xff]
      %v3225 = vld [vmem:[%s3216 + $0x38] sm:$0xf]
      %v3226 = vld [vmem:[%s3216 + $0x3c] sm:$0xff]
      %v3227 = vld [vmem:[%s3216 + $0x44] sm:$0xff]
      %v3228 = vld [vmem:[%s3216 + $0x4c] sm:$0xf]
      %v3229 = vld [vmem:[%s3216 + $0x50] sm:$0xff]
      %v3230 = vld [vmem:[%s3216 + $0x58] sm:$0xff]
      %v3231 = vld [vmem:[%s3216 + $0x60] sm:$0xf]
      %v3232 = vld [vmem:[%s3216 + $0x64] sm:$0x11]
      %v3233 = vld [vmem:[%s3216 + $0x6c] sm:$0x11]
      %v3234 = vld [vmem:[%s3216 + $0x74] sm:$0x1]
      %v3253 = vunpack.c.l.b16 %v3217
      %v3254 = vunpack.c.h.b16 %v3217
      %v3255 = vunpack.c.l.b16 %v3218
      %v3256 = vunpack.c.h.b16 %v3218
      %v3257 = vunpack.c.l.b16 %v3219
      %v3258 = vunpack.c.l.b16 %v3220
      %v3259 = vunpack.c.h.b16 %v3220
      %v3260 = vunpack.c.l.b16 %v3221
      %v3261 = vunpack.c.h.b16 %v3221
      %v3262 = vunpack.c.l.b16 %v3222
      %v3263 = vunpack.c.l.b16 %v3223
      %v3264 = vunpack.c.h.b16 %v3223
      %v3265 = vunpack.c.l.b16 %v3224
      %v3266 = vunpack.c.h.b16 %v3224
      %v3267 = vunpack.c.l.b16 %v3225
      %v3268 = vunpack.c.l.b16 %v3226
      %v3269 = vunpack.c.h.b16 %v3226
      %v3270 = vunpack.c.l.b16 %v3227
      %v3271 = vunpack.c.h.b16 %v3227
      %v3272 = vunpack.c.l.b16 %v3228
      %v3273 = vunpack.c.l.b16 %v3229
      %v3274 = vunpack.c.h.b16 %v3229
      %v3275 = vunpack.c.l.b16 %v3230
      %v3276 = vunpack.c.h.b16 %v3230
      %v3277 = vunpack.c.l.b16 %v3231
      %v3278 = vunpack.c.l.b16 %v3232
      %v3279 = vunpack.c.h.b16 %v3232
      %v3280 = vunpack.c.l.b16 %v3233
      %v3281 = vunpack.c.h.b16 %v3233
      %v3282 = vunpack.c.l.b16 %v3234
      %v3283 = vpack.c.b16 %v3258, %v3253
      %v3284 = vpack.c.b16 %v3259, %v3254
      %v3285 = vpack.c.b16 %v3260, %v3255
      %v3286 = vpack.c.b16 %v3261, %v3256
      %v3287 = vpack.c.b16 %v3262, %v3257
      %v3288 = vpack.c.b16 %v3268, %v3263
      %v3289 = vpack.c.b16 %v3269, %v3264
      %v3290 = vpack.c.b16 %v3270, %v3265
      %v3291 = vpack.c.b16 %v3271, %v3266
      %v3292 = vpack.c.b16 %v3272, %v3267
      %v3293 = vpack.c.b16 %v3278, %v3273
      %v3294 = vpack.c.b16 %v3279, %v3274
      %v3295 = vpack.c.b16 %v3280, %v3275
      %v3296 = vpack.c.b16 %v3281, %v3276
      %v3297 = vpack.c.b16 %v3282, %v3277
      %v3309 = vsel %vm487, %v3214, 0
      %v3312 = vsel %vm487, %v3215, 0
      %v3315 = vsel %vm494, %v3293, 0
      %v3318 = vsel %vm494, %v3294, 0
      %v3321 = vsel %vm494, %v3295, 0
      %v3324 = vsel %vm494, %v3296, 0
      %v3327 = vsel %vm494, %v3297, 0
      %3329 = vmatprep.subr.bf16.mxu0 0
      %3330 = vmatpush1.bf16.msra.mxu0 0
      %3331 = vmatprep.subr.bf16.mxu0 0
      %3332 = vmatpush1.bf16.msra.mxu0 0
      %3333 = vmatprep.subr.bf16.mxu0 0
      %3334 = vmatpush1.bf16.msra.mxu0 0
      %3335 = vmatprep.subr.bf16.mxu0 0
      %3336 = vmatpush1.bf16.msra.mxu0 0
      %3337 = vmatprep.subr.bf16.mxu0 0
      %3338 = vmatpush1.bf16.msra.mxu0 0
      %3339 = vmatprep.subr.bf16.mxu0 %v3318
      %3340 = vmatpush1.bf16.msra.mxu0 %v3315
      %3341 = vmatprep.subr.bf16.mxu0 %v3289
      %3342 = vmatpush1.bf16.msra.mxu0 %v3288
      %3343 = vmatprep.subr.bf16.mxu0 %v3284
      %3344 = vmatpush1.bf16.msra.mxu0 %v3283
      %3345 = vmatprep.subr.bf16.mxu0 0
      %3346 = vmatpush2.bf16.msra.mxu0 0
      %3347 = vmatprep.subr.bf16.mxu0 0
      %3348 = vmatpush2.bf16.msra.mxu0 0
      %3349 = vmatprep.subr.bf16.mxu0 0
      %3350 = vmatpush2.bf16.msra.mxu0 0
      %3351 = vmatprep.subr.bf16.mxu0 0
      %3352 = vmatpush2.bf16.msra.mxu0 0
      %3353 = vmatprep.subr.bf16.mxu0 0
      %3354 = vmatpush2.bf16.msra.mxu0 0
      %3355 = vmatprep.subr.bf16.mxu0 0
      %3356 = vmatpush2.bf16.msra.mxu0 0
      %3357 = vmatprep.subr.bf16.mxu0 0
      %3358 = vmatpush2.bf16.msra.mxu0 0
      %3359 = vmatprep.subr.bf16.mxu0 0
      %3360 = vmatpush2.bf16.msra.mxu0 0
      %3361 = vmatprep.mubr.bf16.mxu0 0
      %3362 = vmatmul.mubr.bf16.gmra.mxu0 %v3309
      %v3363 = vpop.f32.mrf.mxu0
      %v3364 = vadd.f32 0.0, %v3363
      %v3365 = vpop.f32.mrf.mxu0
      %v3366 = vadd.f32 0.0, %v3365
      %v3367 = vpop.f32.mrf.mxu0
      %v3368 = vadd.f32 0.0, %v3367
      %v3369 = vpop.f32.mrf.mxu0
      %v3370 = vadd.f32 0.0, %v3369
      %3371 = vmatprep.mubr.bf16.mxu0 0
      %3372 = vmatmul.mubr.bf16.gmra.mxu0 %v3312
      %v3373 = vpop.f32.mrf.mxu0
      %v3374 = vadd.f32 0.0, %v3373
      %v3375 = vpop.f32.mrf.mxu0
      %v3376 = vadd.f32 0.0, %v3375
      %v3377 = vpop.f32.mrf.mxu0
      %v3378 = vpop.f32.mrf.mxu0
      %3379 = vdwg.mxu0
      %3380 = vmatprep.subr.bf16.mxu0 0
      %3381 = vmatpush1.bf16.msra.mxu0 0
      %3382 = vmatprep.subr.bf16.mxu0 0
      %3383 = vmatpush1.bf16.msra.mxu0 0
      %3384 = vmatprep.subr.bf16.mxu0 0
      %3385 = vmatpush1.bf16.msra.mxu0 0
      %3386 = vmatprep.subr.bf16.mxu0 0
      %3387 = vmatpush1.bf16.msra.mxu0 0
      %3388 = vmatprep.subr.bf16.mxu0 0
      %3389 = vmatpush1.bf16.msra.mxu0 0
      %3390 = vmatprep.subr.bf16.mxu0 %v3324
      %3391 = vmatpush1.bf16.msra.mxu0 %v3321
      %3392 = vmatprep.subr.bf16.mxu0 %v3291
      %3393 = vmatpush1.bf16.msra.mxu0 %v3290
      %3394 = vmatprep.subr.bf16.mxu0 %v3286
      %3395 = vmatpush1.bf16.msra.mxu0 %v3285
      %3396 = vmatprep.subr.bf16.mxu0 0
      %3397 = vmatpush2.bf16.msra.mxu0 0
      %3398 = vmatprep.subr.bf16.mxu0 0
      %3399 = vmatpush2.bf16.msra.mxu0 0
      %3400 = vmatprep.subr.bf16.mxu0 0
      %3401 = vmatpush2.bf16.msra.mxu0 0
      %3402 = vmatprep.subr.bf16.mxu0 0
      %3403 = vmatpush2.bf16.msra.mxu0 0
      %3404 = vmatprep.subr.bf16.mxu0 0
      %3405 = vmatpush2.bf16.msra.mxu0 0
      %3406 = vmatprep.subr.bf16.mxu0 0
      %3407 = vmatpush2.bf16.msra.mxu0 0
      %3408 = vmatprep.subr.bf16.mxu0 0
      %3409 = vmatpush2.bf16.msra.mxu0 0
      %3410 = vmatprep.subr.bf16.mxu0 0
      %3411 = vmatpush2.bf16.msra.mxu0 0
      %3412 = vmatprep.mubr.bf16.mxu0 0
      %3413 = vmatmul.mubr.bf16.gmra.mxu0 %v3309
      %v3414 = vpop.f32.mrf.mxu0
      %v3415 = vadd.f32 0.0, %v3414
      %v3416 = vpop.f32.mrf.mxu0
      %v3417 = vadd.f32 0.0, %v3416
      %v3418 = vpop.f32.mrf.mxu0
      %v3419 = vadd.f32 0.0, %v3418
      %v3420 = vpop.f32.mrf.mxu0
      %v3421 = vadd.f32 0.0, %v3420
      %3422 = vmatprep.mubr.bf16.mxu0 0
      %3423 = vmatmul.mubr.bf16.gmra.mxu0 %v3312
      %v3424 = vpop.f32.mrf.mxu0
      %v3425 = vadd.f32 0.0, %v3424
      %v3426 = vpop.f32.mrf.mxu0
      %v3427 = vadd.f32 0.0, %v3426
      %v3428 = vpop.f32.mrf.mxu0
      %v3429 = vpop.f32.mrf.mxu0
      %3430 = vdwg.mxu0
      %3431 = vmatprep.subr.bf16.mxu0 0
      %3432 = vmatpush1.bf16.msra.mxu0 0
      %3433 = vmatprep.subr.bf16.mxu0 0
      %3434 = vmatpush1.bf16.msra.mxu0 0
      %3435 = vmatprep.subr.bf16.mxu0 0
      %3436 = vmatpush1.bf16.msra.mxu0 0
      %3437 = vmatprep.subr.bf16.mxu0 0
      %3438 = vmatpush1.bf16.msra.mxu0 0
      %3439 = vmatprep.subr.bf16.mxu0 0
      %3440 = vmatpush1.bf16.msra.mxu0 0
      %3441 = vmatprep.subr.bf16.mxu0 0
      %3442 = vmatpush1.bf16.msra.mxu0 %v3327
      %3443 = vmatprep.subr.bf16.mxu0 0
      %3444 = vmatpush1.bf16.msra.mxu0 %v3292
      %3445 = vmatprep.subr.bf16.mxu0 0
      %3446 = vmatpush1.bf16.msra.mxu0 %v3287
      %3447 = vmatprep.subr.bf16.mxu0 0
      %3448 = vmatpush2.bf16.msra.mxu0 0
      %3449 = vmatprep.subr.bf16.mxu0 0
      %3450 = vmatpush2.bf16.msra.mxu0 0
      %3451 = vmatprep.subr.bf16.mxu0 0
      %3452 = vmatpush2.bf16.msra.mxu0 0
      %3453 = vmatprep.subr.bf16.mxu0 0
      %3454 = vmatpush2.bf16.msra.mxu0 0
      %3455 = vmatprep.subr.bf16.mxu0 0
      %3456 = vmatpush2.bf16.msra.mxu0 0
      %3457 = vmatprep.subr.bf16.mxu0 0
      %3458 = vmatpush2.bf16.msra.mxu0 0
      %3459 = vmatprep.subr.bf16.mxu0 0
      %3460 = vmatpush2.bf16.msra.mxu0 0
      %3461 = vmatprep.subr.bf16.mxu0 0
      %3462 = vmatpush2.bf16.msra.mxu0 0
      %3463 = vmatprep.mubr.bf16.mxu0 0
      %3464 = vmatmul.mubr.bf16.gmra.mxu0 %v3309
      %v3465 = vpop.f32.mrf.mxu0
      %v3466 = vadd.f32 0.0, %v3465
      %v3467 = vpop.f32.mrf.mxu0
      %v3468 = vpop.f32.mrf.mxu0
      %v3469 = vadd.f32 0.0, %v3468
      %v3470 = vpop.f32.mrf.mxu0
      %3471 = vmatprep.mubr.bf16.mxu0 0
      %3472 = vmatmul.mubr.bf16.gmra.mxu0 %v3312
      %v3473 = vpop.f32.mrf.mxu0
      %v3474 = vadd.f32 0.0, %v3473
      %v3475 = vpop.f32.mrf.mxu0
      %v3476 = vpop.f32.mrf.mxu0
      %v3477 = vpop.f32.mrf.mxu0
      %3478 = vdwg.mxu0
      %v3479 = vadd.f32 %v3133, %v3364
      %v3480 = vadd.f32 %v3134, %v3366
      %v3481 = vadd.f32 %v3135, %v3415
      %v3482 = vadd.f32 %v3136, %v3417
      %v3483 = vadd.f32 %v3137, %v3466
      %v3484 = vadd.f32 %v3138, %v3368
      %v3485 = vadd.f32 %v3139, %v3370
      %v3486 = vadd.f32 %v3140, %v3419
      %v3487 = vadd.f32 %v3141, %v3421
      %v3488 = vadd.f32 %v3142, %v3469
      %v3489 = vadd.f32 %v3143, %v3374
      %v3490 = vadd.f32 %v3144, %v3376
      %v3491 = vadd.f32 %v3145, %v3425
      %v3492 = vadd.f32 %v3146, %v3427
      %v3493 = vadd.f32 %v3147, %v3474
      %3494 = vmatprep.subr.bf16.mxu0 0
      %3495 = vmatpush1.bf16.msra.mxu0 0
      %3496 = vmatprep.subr.bf16.mxu0 0
      %3497 = vmatpush1.bf16.msra.mxu0 0
      %3498 = vmatprep.subr.bf16.mxu0 0
      %3499 = vmatpush1.bf16.msra.mxu0 0
      %3500 = vmatprep.subr.bf16.mxu0 0
      %3501 = vmatpush1.bf16.msra.mxu0 0
      %3502 = vmatprep.subr.bf16.mxu0 0
      %3503 = vmatpush1.bf16.msra.mxu0 0
      %3504 = vmatprep.subr.bf16.mxu0 0
      %3505 = vmatpush1.bf16.msra.mxu0 %v577
      %3506 = vmatprep.subr.bf16.mxu0 0
      %3507 = vmatpush1.bf16.msra.mxu0 %v574
      %3508 = vmatprep.subr.bf16.mxu0 0
      %3509 = vmatpush1.bf16.msra.mxu0 %v573
      %3510 = vmatprep.subr.bf16.mxu0 0
      %3511 = vmatpush2.bf16.msra.mxu0 0
      %3512 = vmatprep.subr.bf16.mxu0 0
      %3513 = vmatpush2.bf16.msra.mxu0 0
      %3514 = vmatprep.subr.bf16.mxu0 0
      %3515 = vmatpush2.bf16.msra.mxu0 0
      %3516 = vmatprep.subr.bf16.mxu0 0
      %3517 = vmatpush2.bf16.msra.mxu0 0
      %3518 = vmatprep.subr.bf16.mxu0 0
      %3519 = vmatpush2.bf16.msra.mxu0 0
      %3520 = vmatprep.subr.bf16.mxu0 0
      %3521 = vmatpush2.bf16.msra.mxu0 0
      %3522 = vmatprep.subr.bf16.mxu0 0
      %3523 = vmatpush2.bf16.msra.mxu0 0
      %3524 = vmatprep.subr.bf16.mxu0 0
      %3525 = vmatpush2.bf16.msra.mxu0 0
      %3526 = vmatprep.mubr.bf16.mxu0 0
      %3527 = vmatmul.mubr.bf16.gmra.mxu0 %v3161
      %v3528 = vpop.f32.mrf.mxu0
      %v3529 = vadd.f32 0.0, %v3528
      %v3530 = vpop.f32.mrf.mxu0
      %v3531 = vpop.f32.mrf.mxu0
      %v3532 = vadd.f32 0.0, %v3531
      %v3533 = vpop.f32.mrf.mxu0
      %3534 = vmatprep.mubr.bf16.mxu0 0
      %3535 = vmatmul.mubr.bf16.gmra.mxu0 %v3164
      %v3536 = vpop.f32.mrf.mxu0
      %v3537 = vadd.f32 0.0, %v3536
      %v3538 = vpop.f32.mrf.mxu0
      %v3539 = vpop.f32.mrf.mxu0
      %v3540 = vpop.f32.mrf.mxu0
      %3541 = vdwg.mxu0
      %v3542 = vpack.c.bf16 %v3532, %v3529
      %v3543 = vpack.c.bf16 %v3537, %v3537
      %s3544 = scalar_lea.vmem %s2, 1080
      %v3545 = vld [vmem:[%s3544] sm:$0xff]
      %v3546 = vld [vmem:[%s3544 + $0x8] sm:$0xff]
      %v3547 = vld [vmem:[%s3544 + $0x10] sm:$0xf]
      %v3548 = vld [vmem:[%s3544 + $0x14] sm:$0xff]
      %v3549 = vld [vmem:[%s3544 + $0x1c] sm:$0xff]
      %v3550 = vld [vmem:[%s3544 + $0x24] sm:$0xf]
      %v3551 = vld [vmem:[%s3544 + $0x28] sm:$0xff]
      %v3552 = vld [vmem:[%s3544 + $0x30] sm:$0xff]
      %v3553 = vld [vmem:[%s3544 + $0x38] sm:$0xf]
      %v3554 = vld [vmem:[%s3544 + $0x3c] sm:$0xff]
      %v3555 = vld [vmem:[%s3544 + $0x44] sm:$0xff]
      %v3556 = vld [vmem:[%s3544 + $0x4c] sm:$0xf]
      %v3557 = vld [vmem:[%s3544 + $0x50] sm:$0xff]
      %v3558 = vld [vmem:[%s3544 + $0x58] sm:$0xff]
      %v3559 = vld [vmem:[%s3544 + $0x60] sm:$0xf]
      %v3560 = vld [vmem:[%s3544 + $0x64] sm:$0x11]
      %v3561 = vld [vmem:[%s3544 + $0x6c] sm:$0x11]
      %v3562 = vld [vmem:[%s3544 + $0x74] sm:$0x1]
      %v3581 = vunpack.c.l.b16 %v3545
      %v3582 = vunpack.c.h.b16 %v3545
      %v3583 = vunpack.c.l.b16 %v3546
      %v3584 = vunpack.c.h.b16 %v3546
      %v3585 = vunpack.c.l.b16 %v3547
      %v3586 = vunpack.c.l.b16 %v3548
      %v3587 = vunpack.c.h.b16 %v3548
      %v3588 = vunpack.c.l.b16 %v3549
      %v3589 = vunpack.c.h.b16 %v3549
      %v3590 = vunpack.c.l.b16 %v3550
      %v3591 = vunpack.c.l.b16 %v3551
      %v3592 = vunpack.c.h.b16 %v3551
      %v3593 = vunpack.c.l.b16 %v3552
      %v3594 = vunpack.c.h.b16 %v3552
      %v3595 = vunpack.c.l.b16 %v3553
      %v3596 = vunpack.c.l.b16 %v3554
      %v3597 = vunpack.c.h.b16 %v3554
      %v3598 = vunpack.c.l.b16 %v3555
      %v3599 = vunpack.c.h.b16 %v3555
      %v3600 = vunpack.c.l.b16 %v3556
      %v3601 = vunpack.c.l.b16 %v3557
      %v3602 = vunpack.c.h.b16 %v3557
      %v3603 = vunpack.c.l.b16 %v3558
      %v3604 = vunpack.c.h.b16 %v3558
      %v3605 = vunpack.c.l.b16 %v3559
      %v3606 = vunpack.c.l.b16 %v3560
      %v3607 = vunpack.c.h.b16 %v3560
      %v3608 = vunpack.c.l.b16 %v3561
      %v3609 = vunpack.c.h.b16 %v3561
      %v3610 = vunpack.c.l.b16 %v3562
      %v3611 = vpack.c.b16 %v3586, %v3581
      %v3612 = vpack.c.b16 %v3587, %v3582
      %v3613 = vpack.c.b16 %v3588, %v3583
      %v3614 = vpack.c.b16 %v3589, %v3584
      %v3615 = vpack.c.b16 %v3590, %v3585
      %v3616 = vpack.c.b16 %v3596, %v3591
      %v3617 = vpack.c.b16 %v3597, %v3592
      %v3618 = vpack.c.b16 %v3598, %v3593
      %v3619 = vpack.c.b16 %v3599, %v3594
      %v3620 = vpack.c.b16 %v3600, %v3595
      %v3621 = vpack.c.b16 %v3606, %v3601
      %v3622 = vpack.c.b16 %v3607, %v3602
      %v3623 = vpack.c.b16 %v3608, %v3603
      %v3624 = vpack.c.b16 %v3609, %v3604
      %v3625 = vpack.c.b16 %v3610, %v3605
      %v3637 = vsel %vm487, %v3542, 0
      %v3640 = vsel %vm487, %v3543, 0
      %v3643 = vsel %vm494, %v3621, 0
      %v3646 = vsel %vm494, %v3622, 0
      %v3649 = vsel %vm494, %v3623, 0
      %v3652 = vsel %vm494, %v3624, 0
      %v3655 = vsel %vm494, %v3625, 0
      %3657 = vmatprep.subr.bf16.mxu0 0
      %3658 = vmatpush1.bf16.msra.mxu0 0
      %3659 = vmatprep.subr.bf16.mxu0 0
      %3660 = vmatpush1.bf16.msra.mxu0 0
      %3661 = vmatprep.subr.bf16.mxu0 0
      %3662 = vmatpush1.bf16.msra.mxu0 0
      %3663 = vmatprep.subr.bf16.mxu0 0
      %3664 = vmatpush1.bf16.msra.mxu0 0
      %3665 = vmatprep.subr.bf16.mxu0 0
      %3666 = vmatpush1.bf16.msra.mxu0 0
      %3667 = vmatprep.subr.bf16.mxu0 %v3646
      %3668 = vmatpush1.bf16.msra.mxu0 %v3643
      %3669 = vmatprep.subr.bf16.mxu0 %v3617
      %3670 = vmatpush1.bf16.msra.mxu0 %v3616
      %3671 = vmatprep.subr.bf16.mxu0 %v3612
      %3672 = vmatpush1.bf16.msra.mxu0 %v3611
      %3673 = vmatprep.subr.bf16.mxu0 0
      %3674 = vmatpush2.bf16.msra.mxu0 0
      %3675 = vmatprep.subr.bf16.mxu0 0
      %3676 = vmatpush2.bf16.msra.mxu0 0
      %3677 = vmatprep.subr.bf16.mxu0 0
      %3678 = vmatpush2.bf16.msra.mxu0 0
      %3679 = vmatprep.subr.bf16.mxu0 0
      %3680 = vmatpush2.bf16.msra.mxu0 0
      %3681 = vmatprep.subr.bf16.mxu0 0
      %3682 = vmatpush2.bf16.msra.mxu0 0
      %3683 = vmatprep.subr.bf16.mxu0 0
      %3684 = vmatpush2.bf16.msra.mxu0 0
      %3685 = vmatprep.subr.bf16.mxu0 0
      %3686 = vmatpush2.bf16.msra.mxu0 0
      %3687 = vmatprep.subr.bf16.mxu0 0
      %3688 = vmatpush2.bf16.msra.mxu0 0
      %3689 = vmatprep.mubr.bf16.mxu0 0
      %3690 = vmatmul.mubr.bf16.gmra.mxu0 %v3637
      %v3691 = vpop.f32.mrf.mxu0
      %v3692 = vadd.f32 0.0, %v3691
      %v3693 = vpop.f32.mrf.mxu0
      %v3694 = vadd.f32 0.0, %v3693
      %v3695 = vpop.f32.mrf.mxu0
      %v3696 = vadd.f32 0.0, %v3695
      %v3697 = vpop.f32.mrf.mxu0
      %v3698 = vadd.f32 0.0, %v3697
      %3699 = vmatprep.mubr.bf16.mxu0 0
      %3700 = vmatmul.mubr.bf16.gmra.mxu0 %v3640
      %v3701 = vpop.f32.mrf.mxu0
      %v3702 = vadd.f32 0.0, %v3701
      %v3703 = vpop.f32.mrf.mxu0
      %v3704 = vadd.f32 0.0, %v3703
      %v3705 = vpop.f32.mrf.mxu0
      %v3706 = vpop.f32.mrf.mxu0
      %3707 = vdwg.mxu0
      %3708 = vmatprep.subr.bf16.mxu0 0
      %3709 = vmatpush1.bf16.msra.mxu0 0
      %3710 = vmatprep.subr.bf16.mxu0 0
      %3711 = vmatpush1.bf16.msra.mxu0 0
      %3712 = vmatprep.subr.bf16.mxu0 0
      %3713 = vmatpush1.bf16.msra.mxu0 0
      %3714 = vmatprep.subr.bf16.mxu0 0
      %3715 = vmatpush1.bf16.msra.mxu0 0
      %3716 = vmatprep.subr.bf16.mxu0 0
      %3717 = vmatpush1.bf16.msra.mxu0 0
      %3718 = vmatprep.subr.bf16.mxu0 %v3652
      %3719 = vmatpush1.bf16.msra.mxu0 %v3649
      %3720 = vmatprep.subr.bf16.mxu0 %v3619
      %3721 = vmatpush1.bf16.msra.mxu0 %v3618
      %3722 = vmatprep.subr.bf16.mxu0 %v3614
      %3723 = vmatpush1.bf16.msra.mxu0 %v3613
      %3724 = vmatprep.subr.bf16.mxu0 0
      %3725 = vmatpush2.bf16.msra.mxu0 0
      %3726 = vmatprep.subr.bf16.mxu0 0
      %3727 = vmatpush2.bf16.msra.mxu0 0
      %3728 = vmatprep.subr.bf16.mxu0 0
      %3729 = vmatpush2.bf16.msra.mxu0 0
      %3730 = vmatprep.subr.bf16.mxu0 0
      %3731 = vmatpush2.bf16.msra.mxu0 0
      %3732 = vmatprep.subr.bf16.mxu0 0
      %3733 = vmatpush2.bf16.msra.mxu0 0
      %3734 = vmatprep.subr.bf16.mxu0 0
      %3735 = vmatpush2.bf16.msra.mxu0 0
      %3736 = vmatprep.subr.bf16.mxu0 0
      %3737 = vmatpush2.bf16.msra.mxu0 0
      %3738 = vmatprep.subr.bf16.mxu0 0
      %3739 = vmatpush2.bf16.msra.mxu0 0
      %3740 = vmatprep.mubr.bf16.mxu0 0
      %3741 = vmatmul.mubr.bf16.gmra.mxu0 %v3637
      %v3742 = vpop.f32.mrf.mxu0
      %v3743 = vadd.f32 0.0, %v3742
      %v3744 = vpop.f32.mrf.mxu0
      %v3745 = vadd.f32 0.0, %v3744
      %v3746 = vpop.f32.mrf.mxu0
      %v3747 = vadd.f32 0.0, %v3746
      %v3748 = vpop.f32.mrf.mxu0
      %v3749 = vadd.f32 0.0, %v3748
      %3750 = vmatprep.mubr.bf16.mxu0 0
      %3751 = vmatmul.mubr.bf16.gmra.mxu0 %v3640
      %v3752 = vpop.f32.mrf.mxu0
      %v3753 = vadd.f32 0.0, %v3752
      %v3754 = vpop.f32.mrf.mxu0
      %v3755 = vadd.f32 0.0, %v3754
      %v3756 = vpop.f32.mrf.mxu0
      %v3757 = vpop.f32.mrf.mxu0
      %3758 = vdwg.mxu0
      %3759 = vmatprep.subr.bf16.mxu0 0
      %3760 = vmatpush1.bf16.msra.mxu0 0
      %3761 = vmatprep.subr.bf16.mxu0 0
      %3762 = vmatpush1.bf16.msra.mxu0 0
      %3763 = vmatprep.subr.bf16.mxu0 0
      %3764 = vmatpush1.bf16.msra.mxu0 0
      %3765 = vmatprep.subr.bf16.mxu0 0
      %3766 = vmatpush1.bf16.msra.mxu0 0
      %3767 = vmatprep.subr.bf16.mxu0 0
      %3768 = vmatpush1.bf16.msra.mxu0 0
      %3769 = vmatprep.subr.bf16.mxu0 0
      %3770 = vmatpush1.bf16.msra.mxu0 %v3655
      %3771 = vmatprep.subr.bf16.mxu0 0
      %3772 = vmatpush1.bf16.msra.mxu0 %v3620
      %3773 = vmatprep.subr.bf16.mxu0 0
      %3774 = vmatpush1.bf16.msra.mxu0 %v3615
      %3775 = vmatprep.subr.bf16.mxu0 0
      %3776 = vmatpush2.bf16.msra.mxu0 0
      %3777 = vmatprep.subr.bf16.mxu0 0
      %3778 = vmatpush2.bf16.msra.mxu0 0
      %3779 = vmatprep.subr.bf16.mxu0 0
      %3780 = vmatpush2.bf16.msra.mxu0 0
      %3781 = vmatprep.subr.bf16.mxu0 0
      %3782 = vmatpush2.bf16.msra.mxu0 0
      %3783 = vmatprep.subr.bf16.mxu0 0
      %3784 = vmatpush2.bf16.msra.mxu0 0
      %3785 = vmatprep.subr.bf16.mxu0 0
      %3786 = vmatpush2.bf16.msra.mxu0 0
      %3787 = vmatprep.subr.bf16.mxu0 0
      %3788 = vmatpush2.bf16.msra.mxu0 0
      %3789 = vmatprep.subr.bf16.mxu0 0
      %3790 = vmatpush2.bf16.msra.mxu0 0
      %3791 = vmatprep.mubr.bf16.mxu0 0
      %3792 = vmatmul.mubr.bf16.gmra.mxu0 %v3637
      %v3793 = vpop.f32.mrf.mxu0
      %v3794 = vadd.f32 0.0, %v3793
      %v3795 = vpop.f32.mrf.mxu0
      %v3796 = vpop.f32.mrf.mxu0
      %v3797 = vadd.f32 0.0, %v3796
      %v3798 = vpop.f32.mrf.mxu0
      %3799 = vmatprep.mubr.bf16.mxu0 0
      %3800 = vmatmul.mubr.bf16.gmra.mxu0 %v3640
      %v3801 = vpop.f32.mrf.mxu0
      %v3802 = vadd.f32 0.0, %v3801
      %v3803 = vpop.f32.mrf.mxu0
      %v3804 = vpop.f32.mrf.mxu0
      %v3805 = vpop.f32.mrf.mxu0
      %3806 = vdwg.mxu0
      %v3807 = vadd.f32 %v3479, %v3692
      %v3808 = vadd.f32 %v3480, %v3694
      %v3809 = vadd.f32 %v3481, %v3743
      %v3810 = vadd.f32 %v3482, %v3745
      %v3811 = vadd.f32 %v3483, %v3794
      %v3812 = vadd.f32 %v3484, %v3696
      %v3813 = vadd.f32 %v3485, %v3698
      %v3814 = vadd.f32 %v3486, %v3747
      %v3815 = vadd.f32 %v3487, %v3749
      %v3816 = vadd.f32 %v3488, %v3797
      %v3817 = vadd.f32 %v3489, %v3702
      %v3818 = vadd.f32 %v3490, %v3704
      %v3819 = vadd.f32 %v3491, %v3753
      %v3820 = vadd.f32 %v3492, %v3755
      %v3821 = vadd.f32 %v3493, %v3802
      %3822 = vmatprep.subr.bf16.mxu0 0
      %3823 = vmatpush1.bf16.msra.mxu0 0
      %3824 = vmatprep.subr.bf16.mxu0 0
      %3825 = vmatpush1.bf16.msra.mxu0 0
      %3826 = vmatprep.subr.bf16.mxu0 0
      %3827 = vmatpush1.bf16.msra.mxu0 0
      %3828 = vmatprep.subr.bf16.mxu0 0
      %3829 = vmatpush1.bf16.msra.mxu0 0
      %3830 = vmatprep.subr.bf16.mxu0 0
      %3831 = vmatpush1.bf16.msra.mxu0 0
      %3832 = vmatprep.subr.bf16.mxu0 0
      %3833 = vmatpush1.bf16.msra.mxu0 %v1147
      %3834 = vmatprep.subr.bf16.mxu0 0
      %3835 = vmatpush1.bf16.msra.mxu0 %v1144
      %3836 = vmatprep.subr.bf16.mxu0 0
      %3837 = vmatpush1.bf16.msra.mxu0 %v1143
      %3838 = vmatprep.subr.bf16.mxu0 0
      %3839 = vmatpush2.bf16.msra.mxu0 0
      %3840 = vmatprep.subr.bf16.mxu0 0
      %3841 = vmatpush2.bf16.msra.mxu0 0
      %3842 = vmatprep.subr.bf16.mxu0 0
      %3843 = vmatpush2.bf16.msra.mxu0 0
      %3844 = vmatprep.subr.bf16.mxu0 0
      %3845 = vmatpush2.bf16.msra.mxu0 0
      %3846 = vmatprep.subr.bf16.mxu0 0
      %3847 = vmatpush2.bf16.msra.mxu0 0
      %3848 = vmatprep.subr.bf16.mxu0 0
      %3849 = vmatpush2.bf16.msra.mxu0 0
      %3850 = vmatprep.subr.bf16.mxu0 0
      %3851 = vmatpush2.bf16.msra.mxu0 0
      %3852 = vmatprep.subr.bf16.mxu0 0
      %3853 = vmatpush2.bf16.msra.mxu0 0
      %3854 = vmatprep.mubr.bf16.mxu0 0
      %3855 = vmatmul.mubr.bf16.gmra.mxu0 %v3161
      %v3856 = vpop.f32.mrf.mxu0
      %v3857 = vadd.f32 0.0, %v3856
      %v3858 = vpop.f32.mrf.mxu0
      %v3859 = vpop.f32.mrf.mxu0
      %v3860 = vadd.f32 0.0, %v3859
      %v3861 = vpop.f32.mrf.mxu0
      %3862 = vmatprep.mubr.bf16.mxu0 0
      %3863 = vmatmul.mubr.bf16.gmra.mxu0 %v3164
      %v3864 = vpop.f32.mrf.mxu0
      %v3865 = vadd.f32 0.0, %v3864
      %v3866 = vpop.f32.mrf.mxu0
      %v3867 = vpop.f32.mrf.mxu0
      %v3868 = vpop.f32.mrf.mxu0
      %3869 = vdwg.mxu0
      %v3870 = vpack.c.bf16 %v3860, %v3857
      %v3871 = vpack.c.bf16 %v3865, %v3865
      %s3872 = scalar_lea.vmem %s2, 1200
      %v3873 = vld [vmem:[%s3872] sm:$0xff]
      %v3874 = vld [vmem:[%s3872 + $0x8] sm:$0xff]
      %v3875 = vld [vmem:[%s3872 + $0x10] sm:$0xf]
      %v3876 = vld [vmem:[%s3872 + $0x14] sm:$0xff]
      %v3877 = vld [vmem:[%s3872 + $0x1c] sm:$0xff]
      %v3878 = vld [vmem:[%s3872 + $0x24] sm:$0xf]
      %v3879 = vld [vmem:[%s3872 + $0x28] sm:$0xff]
      %v3880 = vld [vmem:[%s3872 + $0x30] sm:$0xff]
      %v3881 = vld [vmem:[%s3872 + $0x38] sm:$0xf]
      %v3882 = vld [vmem:[%s3872 + $0x3c] sm:$0xff]
      %v3883 = vld [vmem:[%s3872 + $0x44] sm:$0xff]
      %v3884 = vld [vmem:[%s3872 + $0x4c] sm:$0xf]
      %v3885 = vld [vmem:[%s3872 + $0x50] sm:$0xff]
      %v3886 = vld [vmem:[%s3872 + $0x58] sm:$0xff]
      %v3887 = vld [vmem:[%s3872 + $0x60] sm:$0xf]
      %v3888 = vld [vmem:[%s3872 + $0x64] sm:$0x11]
      %v3889 = vld [vmem:[%s3872 + $0x6c] sm:$0x11]
      %v3890 = vld [vmem:[%s3872 + $0x74] sm:$0x1]
      %v3909 = vunpack.c.l.b16 %v3873
      %v3910 = vunpack.c.h.b16 %v3873
      %v3911 = vunpack.c.l.b16 %v3874
      %v3912 = vunpack.c.h.b16 %v3874
      %v3913 = vunpack.c.l.b16 %v3875
      %v3914 = vunpack.c.l.b16 %v3876
      %v3915 = vunpack.c.h.b16 %v3876
      %v3916 = vunpack.c.l.b16 %v3877
      %v3917 = vunpack.c.h.b16 %v3877
      %v3918 = vunpack.c.l.b16 %v3878
      %v3919 = vunpack.c.l.b16 %v3879
      %v3920 = vunpack.c.h.b16 %v3879
      %v3921 = vunpack.c.l.b16 %v3880
      %v3922 = vunpack.c.h.b16 %v3880
      %v3923 = vunpack.c.l.b16 %v3881
      %v3924 = vunpack.c.l.b16 %v3882
      %v3925 = vunpack.c.h.b16 %v3882
      %v3926 = vunpack.c.l.b16 %v3883
      %v3927 = vunpack.c.h.b16 %v3883
      %v3928 = vunpack.c.l.b16 %v3884
      %v3929 = vunpack.c.l.b16 %v3885
      %v3930 = vunpack.c.h.b16 %v3885
      %v3931 = vunpack.c.l.b16 %v3886
      %v3932 = vunpack.c.h.b16 %v3886
      %v3933 = vunpack.c.l.b16 %v3887
      %v3934 = vunpack.c.l.b16 %v3888
      %v3935 = vunpack.c.h.b16 %v3888
      %v3936 = vunpack.c.l.b16 %v3889
      %v3937 = vunpack.c.h.b16 %v3889
      %v3938 = vunpack.c.l.b16 %v3890
      %v3939 = vpack.c.b16 %v3914, %v3909
      %v3940 = vpack.c.b16 %v3915, %v3910
      %v3941 = vpack.c.b16 %v3916, %v3911
      %v3942 = vpack.c.b16 %v3917, %v3912
      %v3943 = vpack.c.b16 %v3918, %v3913
      %v3944 = vpack.c.b16 %v3924, %v3919
      %v3945 = vpack.c.b16 %v3925, %v3920
      %v3946 = vpack.c.b16 %v3926, %v3921
      %v3947 = vpack.c.b16 %v3927, %v3922
      %v3948 = vpack.c.b16 %v3928, %v3923
      %v3949 = vpack.c.b16 %v3934, %v3929
      %v3950 = vpack.c.b16 %v3935, %v3930
      %v3951 = vpack.c.b16 %v3936, %v3931
      %v3952 = vpack.c.b16 %v3937, %v3932
      %v3953 = vpack.c.b16 %v3938, %v3933
      %v3965 = vsel %vm487, %v3870, 0
      %v3968 = vsel %vm487, %v3871, 0
      %v3971 = vsel %vm494, %v3949, 0
      %v3974 = vsel %vm494, %v3950, 0
      %v3977 = vsel %vm494, %v3951, 0
      %v3980 = vsel %vm494, %v3952, 0
      %v3983 = vsel %vm494, %v3953, 0
      %3985 = vmatprep.subr.bf16.mxu0 0
      %3986 = vmatpush1.bf16.msra.mxu0 0
      %3987 = vmatprep.subr.bf16.mxu0 0
      %3988 = vmatpush1.bf16.msra.mxu0 0
      %3989 = vmatprep.subr.bf16.mxu0 0
      %3990 = vmatpush1.bf16.msra.mxu0 0
      %3991 = vmatprep.subr.bf16.mxu0 0
      %3992 = vmatpush1.bf16.msra.mxu0 0
      %3993 = vmatprep.subr.bf16.mxu0 0
      %3994 = vmatpush1.bf16.msra.mxu0 0
      %3995 = vmatprep.subr.bf16.mxu0 %v3974
      %3996 = vmatpush1.bf16.msra.mxu0 %v3971
      %3997 = vmatprep.subr.bf16.mxu0 %v3945
      %3998 = vmatpush1.bf16.msra.mxu0 %v3944
      %3999 = vmatprep.subr.bf16.mxu0 %v3940
      %4000 = vmatpush1.bf16.msra.mxu0 %v3939
      %4001 = vmatprep.subr.bf16.mxu0 0
      %4002 = vmatpush2.bf16.msra.mxu0 0
      %4003 = vmatprep.subr.bf16.mxu0 0
      %4004 = vmatpush2.bf16.msra.mxu0 0
      %4005 = vmatprep.subr.bf16.mxu0 0
      %4006 = vmatpush2.bf16.msra.mxu0 0
      %4007 = vmatprep.subr.bf16.mxu0 0
      %4008 = vmatpush2.bf16.msra.mxu0 0
      %4009 = vmatprep.subr.bf16.mxu0 0
      %4010 = vmatpush2.bf16.msra.mxu0 0
      %4011 = vmatprep.subr.bf16.mxu0 0
      %4012 = vmatpush2.bf16.msra.mxu0 0
      %4013 = vmatprep.subr.bf16.mxu0 0
      %4014 = vmatpush2.bf16.msra.mxu0 0
      %4015 = vmatprep.subr.bf16.mxu0 0
      %4016 = vmatpush2.bf16.msra.mxu0 0
      %4017 = vmatprep.mubr.bf16.mxu0 0
      %4018 = vmatmul.mubr.bf16.gmra.mxu0 %v3965
      %v4019 = vpop.f32.mrf.mxu0
      %v4020 = vadd.f32 0.0, %v4019
      %v4021 = vpop.f32.mrf.mxu0
      %v4022 = vadd.f32 0.0, %v4021
      %v4023 = vpop.f32.mrf.mxu0
      %v4024 = vadd.f32 0.0, %v4023
      %v4025 = vpop.f32.mrf.mxu0
      %v4026 = vadd.f32 0.0, %v4025
      %4027 = vmatprep.mubr.bf16.mxu0 0
      %4028 = vmatmul.mubr.bf16.gmra.mxu0 %v3968
      %v4029 = vpop.f32.mrf.mxu0
      %v4030 = vadd.f32 0.0, %v4029
      %v4031 = vpop.f32.mrf.mxu0
      %v4032 = vadd.f32 0.0, %v4031
      %v4033 = vpop.f32.mrf.mxu0
      %v4034 = vpop.f32.mrf.mxu0
      %4035 = vdwg.mxu0
      %4036 = vmatprep.subr.bf16.mxu0 0
      %4037 = vmatpush1.bf16.msra.mxu0 0
      %4038 = vmatprep.subr.bf16.mxu0 0
      %4039 = vmatpush1.bf16.msra.mxu0 0
      %4040 = vmatprep.subr.bf16.mxu0 0
      %4041 = vmatpush1.bf16.msra.mxu0 0
      %4042 = vmatprep.subr.bf16.mxu0 0
      %4043 = vmatpush1.bf16.msra.mxu0 0
      %4044 = vmatprep.subr.bf16.mxu0 0
      %4045 = vmatpush1.bf16.msra.mxu0 0
      %4046 = vmatprep.subr.bf16.mxu0 %v3980
      %4047 = vmatpush1.bf16.msra.mxu0 %v3977
      %4048 = vmatprep.subr.bf16.mxu0 %v3947
      %4049 = vmatpush1.bf16.msra.mxu0 %v3946
      %4050 = vmatprep.subr.bf16.mxu0 %v3942
      %4051 = vmatpush1.bf16.msra.mxu0 %v3941
      %4052 = vmatprep.subr.bf16.mxu0 0
      %4053 = vmatpush2.bf16.msra.mxu0 0
      %4054 = vmatprep.subr.bf16.mxu0 0
      %4055 = vmatpush2.bf16.msra.mxu0 0
      %4056 = vmatprep.subr.bf16.mxu0 0
      %4057 = vmatpush2.bf16.msra.mxu0 0
      %4058 = vmatprep.subr.bf16.mxu0 0
      %4059 = vmatpush2.bf16.msra.mxu0 0
      %4060 = vmatprep.subr.bf16.mxu0 0
      %4061 = vmatpush2.bf16.msra.mxu0 0
      %4062 = vmatprep.subr.bf16.mxu0 0
      %4063 = vmatpush2.bf16.msra.mxu0 0
      %4064 = vmatprep.subr.bf16.mxu0 0
      %4065 = vmatpush2.bf16.msra.mxu0 0
      %4066 = vmatprep.subr.bf16.mxu0 0
      %4067 = vmatpush2.bf16.msra.mxu0 0
      %4068 = vmatprep.mubr.bf16.mxu0 0
      %4069 = vmatmul.mubr.bf16.gmra.mxu0 %v3965
      %v4070 = vpop.f32.mrf.mxu0
      %v4071 = vadd.f32 0.0, %v4070
      %v4072 = vpop.f32.mrf.mxu0
      %v4073 = vadd.f32 0.0, %v4072
      %v4074 = vpop.f32.mrf.mxu0
      %v4075 = vadd.f32 0.0, %v4074
      %v4076 = vpop.f32.mrf.mxu0
      %v4077 = vadd.f32 0.0, %v4076
      %4078 = vmatprep.mubr.bf16.mxu0 0
      %4079 = vmatmul.mubr.bf16.gmra.mxu0 %v3968
      %v4080 = vpop.f32.mrf.mxu0
      %v4081 = vadd.f32 0.0, %v4080
      %v4082 = vpop.f32.mrf.mxu0
      %v4083 = vadd.f32 0.0, %v4082
      %v4084 = vpop.f32.mrf.mxu0
      %v4085 = vpop.f32.mrf.mxu0
      %4086 = vdwg.mxu0
      %4087 = vmatprep.subr.bf16.mxu0 0
      %4088 = vmatpush1.bf16.msra.mxu0 0
      %4089 = vmatprep.subr.bf16.mxu0 0
      %4090 = vmatpush1.bf16.msra.mxu0 0
      %4091 = vmatprep.subr.bf16.mxu0 0
      %4092 = vmatpush1.bf16.msra.mxu0 0
      %4093 = vmatprep.subr.bf16.mxu0 0
      %4094 = vmatpush1.bf16.msra.mxu0 0
      %4095 = vmatprep.subr.bf16.mxu0 0
      %4096 = vmatpush1.bf16.msra.mxu0 0
      %4097 = vmatprep.subr.bf16.mxu0 0
      %4098 = vmatpush1.bf16.msra.mxu0 %v3983
      %4099 = vmatprep.subr.bf16.mxu0 0
      %4100 = vmatpush1.bf16.msra.mxu0 %v3948
      %4101 = vmatprep.subr.bf16.mxu0 0
      %4102 = vmatpush1.bf16.msra.mxu0 %v3943
      %4103 = vmatprep.subr.bf16.mxu0 0
      %4104 = vmatpush2.bf16.msra.mxu0 0
      %4105 = vmatprep.subr.bf16.mxu0 0
      %4106 = vmatpush2.bf16.msra.mxu0 0
      %4107 = vmatprep.subr.bf16.mxu0 0
      %4108 = vmatpush2.bf16.msra.mxu0 0
      %4109 = vmatprep.subr.bf16.mxu0 0
      %4110 = vmatpush2.bf16.msra.mxu0 0
      %4111 = vmatprep.subr.bf16.mxu0 0
      %4112 = vmatpush2.bf16.msra.mxu0 0
      %4113 = vmatprep.subr.bf16.mxu0 0
      %4114 = vmatpush2.bf16.msra.mxu0 0
      %4115 = vmatprep.subr.bf16.mxu0 0
      %4116 = vmatpush2.bf16.msra.mxu0 0
      %4117 = vmatprep.subr.bf16.mxu0 0
      %4118 = vmatpush2.bf16.msra.mxu0 0
      %4119 = vmatprep.mubr.bf16.mxu0 0
      %4120 = vmatmul.mubr.bf16.gmra.mxu0 %v3965
      %v4121 = vpop.f32.mrf.mxu0
      %v4122 = vadd.f32 0.0, %v4121
      %v4123 = vpop.f32.mrf.mxu0
      %v4124 = vpop.f32.mrf.mxu0
      %v4125 = vadd.f32 0.0, %v4124
      %v4126 = vpop.f32.mrf.mxu0
      %4127 = vmatprep.mubr.bf16.mxu0 0
      %4128 = vmatmul.mubr.bf16.gmra.mxu0 %v3968
      %v4129 = vpop.f32.mrf.mxu0
      %v4130 = vadd.f32 0.0, %v4129
      %v4131 = vpop.f32.mrf.mxu0
      %v4132 = vpop.f32.mrf.mxu0
      %v4133 = vpop.f32.mrf.mxu0
      %4134 = vdwg.mxu0
      %v4135 = vadd.f32 %v3807, %v4020
      %v4136 = vadd.f32 %v3808, %v4022
      %v4137 = vadd.f32 %v3809, %v4071
      %v4138 = vadd.f32 %v3810, %v4073
      %v4139 = vadd.f32 %v3811, %v4122
      %v4140 = vadd.f32 %v3812, %v4024
      %v4141 = vadd.f32 %v3813, %v4026
      %v4142 = vadd.f32 %v3814, %v4075
      %v4143 = vadd.f32 %v3815, %v4077
      %v4144 = vadd.f32 %v3816, %v4125
      %v4145 = vadd.f32 %v3817, %v4030
      %v4146 = vadd.f32 %v3818, %v4032
      %v4147 = vadd.f32 %v3819, %v4081
      %v4148 = vadd.f32 %v3820, %v4083
      %v4149 = vadd.f32 %v3821, %v4130
      %4150 = vmatprep.subr.bf16.mxu0 0
      %4151 = vmatpush1.bf16.msra.mxu0 0
      %4152 = vmatprep.subr.bf16.mxu0 0
      %4153 = vmatpush1.bf16.msra.mxu0 0
      %4154 = vmatprep.subr.bf16.mxu0 0
      %4155 = vmatpush1.bf16.msra.mxu0 0
      %4156 = vmatprep.subr.bf16.mxu0 0
      %4157 = vmatpush1.bf16.msra.mxu0 0
      %4158 = vmatprep.subr.bf16.mxu0 0
      %4159 = vmatpush1.bf16.msra.mxu0 0
      %4160 = vmatprep.subr.bf16.mxu0 0
      %4161 = vmatpush1.bf16.msra.mxu0 %v1488
      %4162 = vmatprep.subr.bf16.mxu0 0
      %4163 = vmatpush1.bf16.msra.mxu0 %v1485
      %4164 = vmatprep.subr.bf16.mxu0 0
      %4165 = vmatpush1.bf16.msra.mxu0 %v1484
      %4166 = vmatprep.subr.bf16.mxu0 0
      %4167 = vmatpush2.bf16.msra.mxu0 0
      %4168 = vmatprep.subr.bf16.mxu0 0
      %4169 = vmatpush2.bf16.msra.mxu0 0
      %4170 = vmatprep.subr.bf16.mxu0 0
      %4171 = vmatpush2.bf16.msra.mxu0 0
      %4172 = vmatprep.subr.bf16.mxu0 0
      %4173 = vmatpush2.bf16.msra.mxu0 0
      %4174 = vmatprep.subr.bf16.mxu0 0
      %4175 = vmatpush2.bf16.msra.mxu0 0
      %4176 = vmatprep.subr.bf16.mxu0 0
      %4177 = vmatpush2.bf16.msra.mxu0 0
      %4178 = vmatprep.subr.bf16.mxu0 0
      %4179 = vmatpush2.bf16.msra.mxu0 0
      %4180 = vmatprep.subr.bf16.mxu0 0
      %4181 = vmatpush2.bf16.msra.mxu0 0
      %4182 = vmatprep.mubr.bf16.mxu0 0
      %4183 = vmatmul.mubr.bf16.gmra.mxu0 %v3161
      %v4184 = vpop.f32.mrf.mxu0
      %v4185 = vadd.f32 0.0, %v4184
      %v4186 = vpop.f32.mrf.mxu0
      %v4187 = vpop.f32.mrf.mxu0
      %v4188 = vadd.f32 0.0, %v4187
      %v4189 = vpop.f32.mrf.mxu0
      %4190 = vmatprep.mubr.bf16.mxu0 0
      %4191 = vmatmul.mubr.bf16.gmra.mxu0 %v3164
      %v4192 = vpop.f32.mrf.mxu0
      %v4193 = vadd.f32 0.0, %v4192
      %v4194 = vpop.f32.mrf.mxu0
      %v4195 = vpop.f32.mrf.mxu0
      %v4196 = vpop.f32.mrf.mxu0
      %4197 = vdwg.mxu0
      %v4198 = vpack.c.bf16 %v4188, %v4185
      %v4199 = vpack.c.bf16 %v4193, %v4193
      %s4200 = scalar_lea.vmem %s2, 1320
      %v4201 = vld [vmem:[%s4200] sm:$0xff]
      %v4202 = vld [vmem:[%s4200 + $0x8] sm:$0xff]
      %v4203 = vld [vmem:[%s4200 + $0x10] sm:$0xf]
      %v4204 = vld [vmem:[%s4200 + $0x14] sm:$0xff]
      %v4205 = vld [vmem:[%s4200 + $0x1c] sm:$0xff]
      %v4206 = vld [vmem:[%s4200 + $0x24] sm:$0xf]
      %v4207 = vld [vmem:[%s4200 + $0x28] sm:$0xff]
      %v4208 = vld [vmem:[%s4200 + $0x30] sm:$0xff]
      %v4209 = vld [vmem:[%s4200 + $0x38] sm:$0xf]
      %v4210 = vld [vmem:[%s4200 + $0x3c] sm:$0xff]
      %v4211 = vld [vmem:[%s4200 + $0x44] sm:$0xff]
      %v4212 = vld [vmem:[%s4200 + $0x4c] sm:$0xf]
      %v4213 = vld [vmem:[%s4200 + $0x50] sm:$0xff]
      %v4214 = vld [vmem:[%s4200 + $0x58] sm:$0xff]
      %v4215 = vld [vmem:[%s4200 + $0x60] sm:$0xf]
      %v4216 = vld [vmem:[%s4200 + $0x64] sm:$0x11]
      %v4217 = vld [vmem:[%s4200 + $0x6c] sm:$0x11]
      %v4218 = vld [vmem:[%s4200 + $0x74] sm:$0x1]
      %v4237 = vunpack.c.l.b16 %v4201
      %v4238 = vunpack.c.h.b16 %v4201
      %v4239 = vunpack.c.l.b16 %v4202
      %v4240 = vunpack.c.h.b16 %v4202
      %v4241 = vunpack.c.l.b16 %v4203
      %v4242 = vunpack.c.l.b16 %v4204
      %v4243 = vunpack.c.h.b16 %v4204
      %v4244 = vunpack.c.l.b16 %v4205
      %v4245 = vunpack.c.h.b16 %v4205
      %v4246 = vunpack.c.l.b16 %v4206
      %v4247 = vunpack.c.l.b16 %v4207
      %v4248 = vunpack.c.h.b16 %v4207
      %v4249 = vunpack.c.l.b16 %v4208
      %v4250 = vunpack.c.h.b16 %v4208
      %v4251 = vunpack.c.l.b16 %v4209
      %v4252 = vunpack.c.l.b16 %v4210
      %v4253 = vunpack.c.h.b16 %v4210
      %v4254 = vunpack.c.l.b16 %v4211
      %v4255 = vunpack.c.h.b16 %v4211
      %v4256 = vunpack.c.l.b16 %v4212
      %v4257 = vunpack.c.l.b16 %v4213
      %v4258 = vunpack.c.h.b16 %v4213
      %v4259 = vunpack.c.l.b16 %v4214
      %v4260 = vunpack.c.h.b16 %v4214
      %v4261 = vunpack.c.l.b16 %v4215
      %v4262 = vunpack.c.l.b16 %v4216
      %v4263 = vunpack.c.h.b16 %v4216
      %v4264 = vunpack.c.l.b16 %v4217
      %v4265 = vunpack.c.h.b16 %v4217
      %v4266 = vunpack.c.l.b16 %v4218
      %v4267 = vpack.c.b16 %v4242, %v4237
      %v4268 = vpack.c.b16 %v4243, %v4238
      %v4269 = vpack.c.b16 %v4244, %v4239
      %v4270 = vpack.c.b16 %v4245, %v4240
      %v4271 = vpack.c.b16 %v4246, %v4241
      %v4272 = vpack.c.b16 %v4252, %v4247
      %v4273 = vpack.c.b16 %v4253, %v4248
      %v4274 = vpack.c.b16 %v4254, %v4249
      %v4275 = vpack.c.b16 %v4255, %v4250
      %v4276 = vpack.c.b16 %v4256, %v4251
      %v4277 = vpack.c.b16 %v4262, %v4257
      %v4278 = vpack.c.b16 %v4263, %v4258
      %v4279 = vpack.c.b16 %v4264, %v4259
      %v4280 = vpack.c.b16 %v4265, %v4260
      %v4281 = vpack.c.b16 %v4266, %v4261
      %v4293 = vsel %vm487, %v4198, 0
      %v4296 = vsel %vm487, %v4199, 0
      %v4299 = vsel %vm494, %v4277, 0
      %v4302 = vsel %vm494, %v4278, 0
      %v4305 = vsel %vm494, %v4279, 0
      %v4308 = vsel %vm494, %v4280, 0
      %v4311 = vsel %vm494, %v4281, 0
      %4313 = vmatprep.subr.bf16.mxu0 0
      %4314 = vmatpush1.bf16.msra.mxu0 0
      %4315 = vmatprep.subr.bf16.mxu0 0
      %4316 = vmatpush1.bf16.msra.mxu0 0
      %4317 = vmatprep.subr.bf16.mxu0 0
      %4318 = vmatpush1.bf16.msra.mxu0 0
      %4319 = vmatprep.subr.bf16.mxu0 0
      %4320 = vmatpush1.bf16.msra.mxu0 0
      %4321 = vmatprep.subr.bf16.mxu0 0
      %4322 = vmatpush1.bf16.msra.mxu0 0
      %4323 = vmatprep.subr.bf16.mxu0 %v4302
      %4324 = vmatpush1.bf16.msra.mxu0 %v4299
      %4325 = vmatprep.subr.bf16.mxu0 %v4273
      %4326 = vmatpush1.bf16.msra.mxu0 %v4272
      %4327 = vmatprep.subr.bf16.mxu0 %v4268
      %4328 = vmatpush1.bf16.msra.mxu0 %v4267
      %4329 = vmatprep.subr.bf16.mxu0 0
      %4330 = vmatpush2.bf16.msra.mxu0 0
      %4331 = vmatprep.subr.bf16.mxu0 0
      %4332 = vmatpush2.bf16.msra.mxu0 0
      %4333 = vmatprep.subr.bf16.mxu0 0
      %4334 = vmatpush2.bf16.msra.mxu0 0
      %4335 = vmatprep.subr.bf16.mxu0 0
      %4336 = vmatpush2.bf16.msra.mxu0 0
      %4337 = vmatprep.subr.bf16.mxu0 0
      %4338 = vmatpush2.bf16.msra.mxu0 0
      %4339 = vmatprep.subr.bf16.mxu0 0
      %4340 = vmatpush2.bf16.msra.mxu0 0
      %4341 = vmatprep.subr.bf16.mxu0 0
      %4342 = vmatpush2.bf16.msra.mxu0 0
      %4343 = vmatprep.subr.bf16.mxu0 0
      %4344 = vmatpush2.bf16.msra.mxu0 0
      %4345 = vmatprep.mubr.bf16.mxu0 0
      %4346 = vmatmul.mubr.bf16.gmra.mxu0 %v4293
      %v4347 = vpop.f32.mrf.mxu0
      %v4348 = vadd.f32 0.0, %v4347
      %v4349 = vpop.f32.mrf.mxu0
      %v4350 = vadd.f32 0.0, %v4349
      %v4351 = vpop.f32.mrf.mxu0
      %v4352 = vadd.f32 0.0, %v4351
      %v4353 = vpop.f32.mrf.mxu0
      %v4354 = vadd.f32 0.0, %v4353
      %4355 = vmatprep.mubr.bf16.mxu0 0
      %4356 = vmatmul.mubr.bf16.gmra.mxu0 %v4296
      %v4357 = vpop.f32.mrf.mxu0
      %v4358 = vadd.f32 0.0, %v4357
      %v4359 = vpop.f32.mrf.mxu0
      %v4360 = vadd.f32 0.0, %v4359
      %v4361 = vpop.f32.mrf.mxu0
      %v4362 = vpop.f32.mrf.mxu0
      %4363 = vdwg.mxu0
      %4364 = vmatprep.subr.bf16.mxu0 0
      %4365 = vmatpush1.bf16.msra.mxu0 0
      %4366 = vmatprep.subr.bf16.mxu0 0
      %4367 = vmatpush1.bf16.msra.mxu0 0
      %4368 = vmatprep.subr.bf16.mxu0 0
      %4369 = vmatpush1.bf16.msra.mxu0 0
      %4370 = vmatprep.subr.bf16.mxu0 0
      %4371 = vmatpush1.bf16.msra.mxu0 0
      %4372 = vmatprep.subr.bf16.mxu0 0
      %4373 = vmatpush1.bf16.msra.mxu0 0
      %4374 = vmatprep.subr.bf16.mxu0 %v4308
      %4375 = vmatpush1.bf16.msra.mxu0 %v4305
      %4376 = vmatprep.subr.bf16.mxu0 %v4275
      %4377 = vmatpush1.bf16.msra.mxu0 %v4274
      %4378 = vmatprep.subr.bf16.mxu0 %v4270
      %4379 = vmatpush1.bf16.msra.mxu0 %v4269
      %4380 = vmatprep.subr.bf16.mxu0 0
      %4381 = vmatpush2.bf16.msra.mxu0 0
      %4382 = vmatprep.subr.bf16.mxu0 0
      %4383 = vmatpush2.bf16.msra.mxu0 0
      %4384 = vmatprep.subr.bf16.mxu0 0
      %4385 = vmatpush2.bf16.msra.mxu0 0
      %4386 = vmatprep.subr.bf16.mxu0 0
      %4387 = vmatpush2.bf16.msra.mxu0 0
      %4388 = vmatprep.subr.bf16.mxu0 0
      %4389 = vmatpush2.bf16.msra.mxu0 0
      %4390 = vmatprep.subr.bf16.mxu0 0
      %4391 = vmatpush2.bf16.msra.mxu0 0
      %4392 = vmatprep.subr.bf16.mxu0 0
      %4393 = vmatpush2.bf16.msra.mxu0 0
      %4394 = vmatprep.subr.bf16.mxu0 0
      %4395 = vmatpush2.bf16.msra.mxu0 0
      %4396 = vmatprep.mubr.bf16.mxu0 0
      %4397 = vmatmul.mubr.bf16.gmra.mxu0 %v4293
      %v4398 = vpop.f32.mrf.mxu0
      %v4399 = vadd.f32 0.0, %v4398
      %v4400 = vpop.f32.mrf.mxu0
      %v4401 = vadd.f32 0.0, %v4400
      %v4402 = vpop.f32.mrf.mxu0
      %v4403 = vadd.f32 0.0, %v4402
      %v4404 = vpop.f32.mrf.mxu0
      %v4405 = vadd.f32 0.0, %v4404
      %4406 = vmatprep.mubr.bf16.mxu0 0
      %4407 = vmatmul.mubr.bf16.gmra.mxu0 %v4296
      %v4408 = vpop.f32.mrf.mxu0
      %v4409 = vadd.f32 0.0, %v4408
      %v4410 = vpop.f32.mrf.mxu0
      %v4411 = vadd.f32 0.0, %v4410
      %v4412 = vpop.f32.mrf.mxu0
      %v4413 = vpop.f32.mrf.mxu0
      %4414 = vdwg.mxu0
      %4415 = vmatprep.subr.bf16.mxu0 0
      %4416 = vmatpush1.bf16.msra.mxu0 0
      %4417 = vmatprep.subr.bf16.mxu0 0
      %4418 = vmatpush1.bf16.msra.mxu0 0
      %4419 = vmatprep.subr.bf16.mxu0 0
      %4420 = vmatpush1.bf16.msra.mxu0 0
      %4421 = vmatprep.subr.bf16.mxu0 0
      %4422 = vmatpush1.bf16.msra.mxu0 0
      %4423 = vmatprep.subr.bf16.mxu0 0
      %4424 = vmatpush1.bf16.msra.mxu0 0
      %4425 = vmatprep.subr.bf16.mxu0 0
      %4426 = vmatpush1.bf16.msra.mxu0 %v4311
      %4427 = vmatprep.subr.bf16.mxu0 0
      %4428 = vmatpush1.bf16.msra.mxu0 %v4276
      %4429 = vmatprep.subr.bf16.mxu0 0
      %4430 = vmatpush1.bf16.msra.mxu0 %v4271
      %4431 = vmatprep.subr.bf16.mxu0 0
      %4432 = vmatpush2.bf16.msra.mxu0 0
      %4433 = vmatprep.subr.bf16.mxu0 0
      %4434 = vmatpush2.bf16.msra.mxu0 0
      %4435 = vmatprep.subr.bf16.mxu0 0
      %4436 = vmatpush2.bf16.msra.mxu0 0
      %4437 = vmatprep.subr.bf16.mxu0 0
      %4438 = vmatpush2.bf16.msra.mxu0 0
      %4439 = vmatprep.subr.bf16.mxu0 0
      %4440 = vmatpush2.bf16.msra.mxu0 0
      %4441 = vmatprep.subr.bf16.mxu0 0
      %4442 = vmatpush2.bf16.msra.mxu0 0
      %4443 = vmatprep.subr.bf16.mxu0 0
      %4444 = vmatpush2.bf16.msra.mxu0 0
      %4445 = vmatprep.subr.bf16.mxu0 0
      %4446 = vmatpush2.bf16.msra.mxu0 0
      %4447 = vmatprep.mubr.bf16.mxu0 0
      %4448 = vmatmul.mubr.bf16.gmra.mxu0 %v4293
      %v4449 = vpop.f32.mrf.mxu0
      %v4450 = vadd.f32 0.0, %v4449
      %v4451 = vpop.f32.mrf.mxu0
      %v4452 = vpop.f32.mrf.mxu0
      %v4453 = vadd.f32 0.0, %v4452
      %v4454 = vpop.f32.mrf.mxu0
      %4455 = vmatprep.mubr.bf16.mxu0 0
      %4456 = vmatmul.mubr.bf16.gmra.mxu0 %v4296
      %v4457 = vpop.f32.mrf.mxu0
      %v4458 = vadd.f32 0.0, %v4457
      %v4459 = vpop.f32.mrf.mxu0
      %v4460 = vpop.f32.mrf.mxu0
      %v4461 = vpop.f32.mrf.mxu0
      %4462 = vdwg.mxu0
      %v4463 = vadd.f32 %v4135, %v4348
      %v4464 = vadd.f32 %v4136, %v4350
      %v4465 = vadd.f32 %v4137, %v4399
      %v4466 = vadd.f32 %v4138, %v4401
      %v4467 = vadd.f32 %v4139, %v4450
      %v4468 = vadd.f32 %v4140, %v4352
      %v4469 = vadd.f32 %v4141, %v4354
      %v4470 = vadd.f32 %v4142, %v4403
      %v4471 = vadd.f32 %v4143, %v4405
      %v4472 = vadd.f32 %v4144, %v4453
      %v4473 = vadd.f32 %v4145, %v4358
      %v4474 = vadd.f32 %v4146, %v4360
      %v4475 = vadd.f32 %v4147, %v4409
      %v4476 = vadd.f32 %v4148, %v4411
      %v4477 = vadd.f32 %v4149, %v4458
      %v4478 = vld [vmem:[%s3] sm:$0x1f]
      %v4480 = vlaneseq
      %v4481 = vshrl.u32 %v4480, 7
      %v4482 = vsub.s32 0, %v4481
      %v4483 = vrot.slane %v4478, %v4482
      %v4484 = vlaneseq
      %v4485 = vshrl.u32 %v4484, 7
      %v4486 = vsub.s32 1, %v4485
      %v4487 = vrot.slane %v4478, %v4486
      %v4488 = vlaneseq
      %v4489 = vshrl.u32 %v4488, 7
      %v4490 = vsub.s32 2, %v4489
      %v4491 = vrot.slane %v4478, %v4490
      %v4492 = vlaneseq
      %v4493 = vshrl.u32 %v4492, 7
      %v4494 = vsub.s32 3, %v4493
      %v4495 = vrot.slane %v4478, %v4494
      %v4496 = vlaneseq
      %v4497 = vshrl.u32 %v4496, 7
      %v4498 = vsub.s32 4, %v4497
      %v4499 = vrot.slane %v4478, %v4498
      %v4505 = vadd.f32 %v4463, %v4483
      %v4506 = vadd.f32 %v4464, %v4487
      %v4507 = vadd.f32 %v4465, %v4491
      %v4508 = vadd.f32 %v4466, %v4495
      %v4509 = vadd.f32 %v4467, %v4499
      %v4510 = vadd.f32 %v4468, %v4483
      %v4511 = vadd.f32 %v4469, %v4487
      %v4512 = vadd.f32 %v4470, %v4491
      %v4513 = vadd.f32 %v4471, %v4495
      %v4514 = vadd.f32 %v4472, %v4499
      %v4515 = vadd.f32 %v4473, %v4483
      %v4516 = vadd.f32 %v4474, %v4487
      %v4517 = vadd.f32 %v4475, %v4491
      %v4518 = vadd.f32 %v4476, %v4495
      %v4519 = vadd.f32 %v4477, %v4499
      %v4520 = vmax.f32 %v4505, 0.0
      %v4521 = vmax.f32 %v4506, 0.0
      %v4522 = vmax.f32 %v4507, 0.0
      %v4523 = vmax.f32 %v4508, 0.0
      %v4524 = vmax.f32 %v4509, 0.0
      %v4525 = vmax.f32 %v4510, 0.0
      %v4526 = vmax.f32 %v4511, 0.0
      %v4527 = vmax.f32 %v4512, 0.0
      %v4528 = vmax.f32 %v4513, 0.0
      %v4529 = vmax.f32 %v4514, 0.0
      %v4530 = vmax.f32 %v4515, 0.0
      %v4531 = vmax.f32 %v4516, 0.0
      %v4532 = vmax.f32 %v4517, 0.0
      %v4533 = vmax.f32 %v4518, 0.0
      %v4534 = vmax.f32 %v4519, 0.0
      %v4535 = vpack.c.bf16 %v4525, %v4520
      %v4536 = vpack.c.bf16 %v4526, %v4521
      %v4537 = vpack.c.bf16 %v4527, %v4522
      %v4538 = vpack.c.bf16 %v4528, %v4523
      %v4539 = vpack.c.bf16 %v4529, %v4524
      %v4540 = vpack.c.bf16 %v4530, %v4530
      %v4541 = vpack.c.bf16 %v4531, %v4531
      %v4542 = vpack.c.bf16 %v4532, %v4532
      %v4543 = vpack.c.bf16 %v4533, %v4533
      %v4544 = vpack.c.bf16 %v4534, %v4534
      %v4545 = vld [vmem:[%s4] sm:$0xf]
      %v4546 = vld [vmem:[%s4 + $0x4] sm:$0x1]
      %v4549 = vunpack.c.l.b16 %v4545
      %v4550 = vunpack.c.l.b16 %v4546
      %v4551 = vpack.c.b16 %v4550, %v4549
      %vm4552 = vcmask 162816
      %v4554 = vsel %vm4552, %v4551, 0
      %vm4556 = vcmask 1041408
      %v4558 = vsel %vm4556, %v4540, 0
      %v4561 = vsel %vm4556, %v4541, 0
      %v4564 = vsel %vm4556, %v4542, 0
      %v4567 = vsel %vm4556, %v4543, 0
      %v4570 = vsel %vm4556, %v4544, 0
      %4572 = vmatprep.subr.bf16.mxu0 0
      %4573 = vmatpush1.bf16.msra.mxu0 0
      %4574 = vmatprep.subr.bf16.mxu0 0
      %4575 = vmatpush1.bf16.msra.mxu0 0
      %4576 = vmatprep.subr.bf16.mxu0 0
      %4577 = vmatpush1.bf16.msra.mxu0 0
      %4578 = vmatprep.subr.bf16.mxu0 0
      %4579 = vmatpush1.bf16.msra.mxu0 0
      %4580 = vmatprep.subr.bf16.mxu0 0
      %4581 = vmatpush1.bf16.msra.mxu0 0
      %4582 = vmatprep.subr.bf16.mxu0 0
      %4583 = vmatpush1.bf16.msra.mxu0 0
      %4584 = vmatprep.subr.bf16.mxu0 %v4561
      %4585 = vmatpush1.bf16.msra.mxu0 %v4558
      %4586 = vmatprep.subr.bf16.mxu0 %v4536
      %4587 = vmatpush1.bf16.msra.mxu0 %v4535
      %4588 = vmatprep.subr.bf16.mxu0 0
      %4589 = vmatpush2.bf16.msra.mxu0 0
      %4590 = vmatprep.subr.bf16.mxu0 0
      %4591 = vmatpush2.bf16.msra.mxu0 0
      %4592 = vmatprep.subr.bf16.mxu0 0
      %4593 = vmatpush2.bf16.msra.mxu0 0
      %4594 = vmatprep.subr.bf16.mxu0 0
      %4595 = vmatpush2.bf16.msra.mxu0 0
      %4596 = vmatprep.subr.bf16.mxu0 0
      %4597 = vmatpush2.bf16.msra.mxu0 0
      %4598 = vmatprep.subr.bf16.mxu0 0
      %4599 = vmatpush2.bf16.msra.mxu0 0
      %4600 = vmatprep.subr.bf16.mxu0 0
      %4601 = vmatpush2.bf16.msra.mxu0 0
      %4602 = vmatprep.subr.bf16.mxu0 0
      %4603 = vmatpush2.bf16.msra.mxu0 0
      %4604 = vmatprep.mubr.bf16.mxu0 0
      %4605 = vmatmul.mubr.bf16.gmra.mxu0 %v4554
      %v4606 = vpop.f32.mrf.mxu0
      %v4607 = vadd.f32 0.0, %v4606
      %v4608 = vpop.f32.mrf.mxu0
      %v4609 = vadd.f32 0.0, %v4608
      %v4610 = vpop.f32.mrf.mxu0
      %v4611 = vadd.f32 0.0, %v4610
      %v4612 = vpop.f32.mrf.mxu0
      %v4613 = vadd.f32 0.0, %v4612
      %4614 = vdwg.mxu0
      %4615 = vmatprep.subr.bf16.mxu0 0
      %4616 = vmatpush1.bf16.msra.mxu0 0
      %4617 = vmatprep.subr.bf16.mxu0 0
      %4618 = vmatpush1.bf16.msra.mxu0 0
      %4619 = vmatprep.subr.bf16.mxu0 0
      %4620 = vmatpush1.bf16.msra.mxu0 0
      %4621 = vmatprep.subr.bf16.mxu0 0
      %4622 = vmatpush1.bf16.msra.mxu0 0
      %4623 = vmatprep.subr.bf16.mxu0 0
      %4624 = vmatpush1.bf16.msra.mxu0 0
      %4625 = vmatprep.subr.bf16.mxu0 0
      %4626 = vmatpush1.bf16.msra.mxu0 0
      %4627 = vmatprep.subr.bf16.mxu0 %v4567
      %4628 = vmatpush1.bf16.msra.mxu0 %v4564
      %4629 = vmatprep.subr.bf16.mxu0 %v4538
      %4630 = vmatpush1.bf16.msra.mxu0 %v4537
      %4631 = vmatprep.subr.bf16.mxu0 0
      %4632 = vmatpush2.bf16.msra.mxu0 0
      %4633 = vmatprep.subr.bf16.mxu0 0
      %4634 = vmatpush2.bf16.msra.mxu0 0
      %4635 = vmatprep.subr.bf16.mxu0 0
      %4636 = vmatpush2.bf16.msra.mxu0 0
      %4637 = vmatprep.subr.bf16.mxu0 0
      %4638 = vmatpush2.bf16.msra.mxu0 0
      %4639 = vmatprep.subr.bf16.mxu0 0
      %4640 = vmatpush2.bf16.msra.mxu0 0
      %4641 = vmatprep.subr.bf16.mxu0 0
      %4642 = vmatpush2.bf16.msra.mxu0 0
      %4643 = vmatprep.subr.bf16.mxu0 0
      %4644 = vmatpush2.bf16.msra.mxu0 0
      %4645 = vmatprep.subr.bf16.mxu0 0
      %4646 = vmatpush2.bf16.msra.mxu0 0
      %4647 = vmatprep.mubr.bf16.mxu0 0
      %4648 = vmatmul.mubr.bf16.gmra.mxu0 %v4554
      %v4649 = vpop.f32.mrf.mxu0
      %v4650 = vadd.f32 0.0, %v4649
      %v4651 = vpop.f32.mrf.mxu0
      %v4652 = vadd.f32 0.0, %v4651
      %v4653 = vpop.f32.mrf.mxu0
      %v4654 = vadd.f32 0.0, %v4653
      %v4655 = vpop.f32.mrf.mxu0
      %v4656 = vadd.f32 0.0, %v4655
      %4657 = vdwg.mxu0
      %4658 = vmatprep.subr.bf16.mxu0 0
      %4659 = vmatpush1.bf16.msra.mxu0 0
      %4660 = vmatprep.subr.bf16.mxu0 0
      %4661 = vmatpush1.bf16.msra.mxu0 0
      %4662 = vmatprep.subr.bf16.mxu0 0
      %4663 = vmatpush1.bf16.msra.mxu0 0
      %4664 = vmatprep.subr.bf16.mxu0 0
      %4665 = vmatpush1.bf16.msra.mxu0 0
      %4666 = vmatprep.subr.bf16.mxu0 0
      %4667 = vmatpush1.bf16.msra.mxu0 0
      %4668 = vmatprep.subr.bf16.mxu0 0
      %4669 = vmatpush1.bf16.msra.mxu0 0
      %4670 = vmatprep.subr.bf16.mxu0 0
      %4671 = vmatpush1.bf16.msra.mxu0 %v4570
      %4672 = vmatprep.subr.bf16.mxu0 0
      %4673 = vmatpush1.bf16.msra.mxu0 %v4539
      %4674 = vmatprep.subr.bf16.mxu0 0
      %4675 = vmatpush2.bf16.msra.mxu0 0
      %4676 = vmatprep.subr.bf16.mxu0 0
      %4677 = vmatpush2.bf16.msra.mxu0 0
      %4678 = vmatprep.subr.bf16.mxu0 0
      %4679 = vmatpush2.bf16.msra.mxu0 0
      %4680 = vmatprep.subr.bf16.mxu0 0
      %4681 = vmatpush2.bf16.msra.mxu0 0
      %4682 = vmatprep.subr.bf16.mxu0 0
      %4683 = vmatpush2.bf16.msra.mxu0 0
      %4684 = vmatprep.subr.bf16.mxu0 0
      %4685 = vmatpush2.bf16.msra.mxu0 0
      %4686 = vmatprep.subr.bf16.mxu0 0
      %4687 = vmatpush2.bf16.msra.mxu0 0
      %4688 = vmatprep.subr.bf16.mxu0 0
      %4689 = vmatpush2.bf16.msra.mxu0 0
      %4690 = vmatprep.mubr.bf16.mxu0 0
      %4691 = vmatmul.mubr.bf16.gmra.mxu0 %v4554
      %v4692 = vpop.f32.mrf.mxu0
      %v4693 = vadd.f32 0.0, %v4692
      %v4694 = vpop.f32.mrf.mxu0
      %v4695 = vpop.f32.mrf.mxu0
      %v4696 = vadd.f32 0.0, %v4695
      %v4697 = vpop.f32.mrf.mxu0
      %4698 = vdwg.mxu0
      %v4699 = vpack.c.bf16 %v4611, %v4607
      %v4700 = vpack.c.bf16 %v4613, %v4609
      %v4701 = vpack.c.bf16 %v4654, %v4650
      %v4702 = vpack.c.bf16 %v4656, %v4652
      %v4703 = vpack.c.bf16 %v4696, %v4693
      %v4704 = vld [vmem:[%s5] sm:$0xff]
      %v4705 = vld [vmem:[%s5 + $0x8] sm:$0xf]
      %v4706 = vld [vmem:[%s5 + $0xc] sm:$0xff]
      %v4707 = vld [vmem:[%s5 + $0x14] sm:$0xf]
      %v4708 = vld [vmem:[%s5 + $0x18] sm:$0xff]
      %v4709 = vld [vmem:[%s5 + $0x20] sm:$0xf]
      %v4710 = vld [vmem:[%s5 + $0x24] sm:$0xff]
      %v4711 = vld [vmem:[%s5 + $0x2c] sm:$0xf]
      %v4712 = vld [vmem:[%s5 + $0x30] sm:$0xff]
      %v4713 = vld [vmem:[%s5 + $0x38] sm:$0xf]
      %v4714 = vld [vmem:[%s5 + $0x3c] sm:$0xff]
      %v4715 = vld [vmem:[%s5 + $0x44] sm:$0xf]
      %v4716 = vld [vmem:[%s5 + $0x48] sm:$0xff]
      %v4717 = vld [vmem:[%s5 + $0x50] sm:$0xf]
      %v4718 = vld [vmem:[%s5 + $0x54] sm:$0xff]
      %v4719 = vld [vmem:[%s5 + $0x5c] sm:$0xf]
      %v4720 = vld [vmem:[%s5 + $0x60] sm:$0xff]
      %v4721 = vld [vmem:[%s5 + $0x68] sm:$0xf]
      %v4722 = vld [vmem:[%s5 + $0x6c] sm:$0xff]
      %v4723 = vld [vmem:[%s5 + $0x74] sm:$0xf]
      %v4724 = vld [vmem:[%s5 + $0x78] sm:$0xff]
      %v4725 = vld [vmem:[%s5 + $0x80] sm:$0xf]
      %v4726 = vld [vmem:[%s5 + $0x84] sm:$0xff]
      %v4727 = vld [vmem:[%s5 + $0x8c] sm:$0xf]
      %v4728 = vld [vmem:[%s5 + $0x90] sm:$0xff]
      %v4729 = vld [vmem:[%s5 + $0x98] sm:$0xf]
      %v4730 = vld [vmem:[%s5 + $0x9c] sm:$0xff]
      %v4731 = vld [vmem:[%s5 + $0xa4] sm:$0xf]
      %v4732 = vld [vmem:[%s5 + $0xa8] sm:$0xff]
      %v4733 = vld [vmem:[%s5 + $0xb0] sm:$0xf]
      %v4734 = vld [vmem:[%s5 + $0xb4] sm:$0xff]
      %v4735 = vld [vmem:[%s5 + $0xbc] sm:$0xf]
      %v4736 = vld [vmem:[%s5 + $0xc0] sm:$0xff]
      %v4737 = vld [vmem:[%s5 + $0xc8] sm:$0xf]
      %v4738 = vld [vmem:[%s5 + $0xcc] sm:$0xff]
      %v4739 = vld [vmem:[%s5 + $0xd4] sm:$0xf]
      %v4740 = vld [vmem:[%s5 + $0xd8] sm:$0xff]
      %v4741 = vld [vmem:[%s5 + $0xe0] sm:$0xf]
      %v4742 = vld [vmem:[%s5 + $0xe4] sm:$0xff]
      %v4743 = vld [vmem:[%s5 + $0xec] sm:$0xf]
      %v4744 = vld [vmem:[%s5 + $0xf0] sm:$0xff]
      %v4745 = vld [vmem:[%s5 + $0xf8] sm:$0xf]
      %v4746 = vld [vmem:[%s5 + $0xfc] sm:$0xff]
      %v4747 = vld [vmem:[%s5 + $0x104] sm:$0xf]
      %v4748 = vld [vmem:[%s5 + $0x108] sm:$0xff]
      %v4749 = vld [vmem:[%s5 + $0x110] sm:$0xf]
      %v4750 = vld [vmem:[%s5 + $0x114] sm:$0xff]
      %v4751 = vld [vmem:[%s5 + $0x11c] sm:$0xf]
      %v4752 = vld [vmem:[%s5 + $0x120] sm:$0xff]
      %v4753 = vld [vmem:[%s5 + $0x128] sm:$0xf]
      %v4754 = vld [vmem:[%s5 + $0x12c] sm:$0xff]
      %v4755 = vld [vmem:[%s5 + $0x134] sm:$0xf]
      %v4756 = vld [vmem:[%s5 + $0x138] sm:$0xff]
      %v4757 = vld [vmem:[%s5 + $0x140] sm:$0xf]
      %v4758 = vld [vmem:[%s5 + $0x144] sm:$0xff]
      %v4759 = vld [vmem:[%s5 + $0x14c] sm:$0xf]
      %v4760 = vld [vmem:[%s5 + $0x150] sm:$0xff]
      %v4761 = vld [vmem:[%s5 + $0x158] sm:$0xf]
      %v4762 = vld [vmem:[%s5 + $0x15c] sm:$0xff]
      %v4763 = vld [vmem:[%s5 + $0x164] sm:$0xf]
      %v4764 = vld [vmem:[%s5 + $0x168] sm:$0xff]
      %v4765 = vld [vmem:[%s5 + $0x170] sm:$0xf]
      %v4766 = vld [vmem:[%s5 + $0x174] sm:$0xff]
      %v4767 = vld [vmem:[%s5 + $0x17c] sm:$0xf]
      %v4768 = vld [vmem:[%s5 + $0x180] sm:$0xff]
      %v4769 = vld [vmem:[%s5 + $0x188] sm:$0xf]
      %v4770 = vld [vmem:[%s5 + $0x18c] sm:$0xff]
      %v4771 = vld [vmem:[%s5 + $0x194] sm:$0xf]
      %v4772 = vld [vmem:[%s5 + $0x198] sm:$0xff]
      %v4773 = vld [vmem:[%s5 + $0x1a0] sm:$0xf]
      %v4774 = vld [vmem:[%s5 + $0x1a4] sm:$0xff]
      %v4775 = vld [vmem:[%s5 + $0x1ac] sm:$0xf]
      %v4776 = vld [vmem:[%s5 + $0x1b0] sm:$0xff]
      %v4777 = vld [vmem:[%s5 + $0x1b8] sm:$0xf]
      %v4778 = vld [vmem:[%s5 + $0x1bc] sm:$0xff]
      %v4779 = vld [vmem:[%s5 + $0x1c4] sm:$0xf]
      %v4780 = vld [vmem:[%s5 + $0x1c8] sm:$0xff]
      %v4781 = vld [vmem:[%s5 + $0x1d0] sm:$0xf]
      %v4782 = vld [vmem:[%s5 + $0x1d4] sm:$0xff]
      %v4783 = vld [vmem:[%s5 + $0x1dc] sm:$0xf]
      %v4784 = vld [vmem:[%s5 + $0x1e0] sm:$0xff]
      %v4785 = vld [vmem:[%s5 + $0x1e8] sm:$0xf]
      %v4786 = vld [vmem:[%s5 + $0x1ec] sm:$0xff]
      %v4787 = vld [vmem:[%s5 + $0x1f4] sm:$0xf]
      %v4788 = vld [vmem:[%s5 + $0x1f8] sm:$0xff]
      %v4789 = vld [vmem:[%s5 + $0x200] sm:$0xf]
      %v4790 = vld [vmem:[%s5 + $0x204] sm:$0xff]
      %v4791 = vld [vmem:[%s5 + $0x20c] sm:$0xf]
      %v4792 = vld [vmem:[%s5 + $0x210] sm:$0xff]
      %v4793 = vld [vmem:[%s5 + $0x218] sm:$0xf]
      %v4794 = vld [vmem:[%s5 + $0x21c] sm:$0xff]
      %v4795 = vld [vmem:[%s5 + $0x224] sm:$0xf]
      %v4796 = vld [vmem:[%s5 + $0x228] sm:$0xff]
      %v4797 = vld [vmem:[%s5 + $0x230] sm:$0xf]
      %v4798 = vld [vmem:[%s5 + $0x234] sm:$0xff]
      %v4799 = vld [vmem:[%s5 + $0x23c] sm:$0xf]
      %v4800 = vld [vmem:[%s5 + $0x240] sm:$0xff]
      %v4801 = vld [vmem:[%s5 + $0x248] sm:$0xf]
      %v4802 = vld [vmem:[%s5 + $0x24c] sm:$0xff]
      %v4803 = vld [vmem:[%s5 + $0x254] sm:$0xf]
      %v4804 = vld [vmem:[%s5 + $0x258] sm:$0xff]
      %v4805 = vld [vmem:[%s5 + $0x260] sm:$0xf]
      %v4806 = vld [vmem:[%s5 + $0x264] sm:$0xff]
      %v4807 = vld [vmem:[%s5 + $0x26c] sm:$0xf]
      %v4808 = vld [vmem:[%s5 + $0x270] sm:$0xff]
      %v4809 = vld [vmem:[%s5 + $0x278] sm:$0xf]
      %v4810 = vld [vmem:[%s5 + $0x27c] sm:$0xff]
      %v4811 = vld [vmem:[%s5 + $0x284] sm:$0xf]
      %v4812 = vld [vmem:[%s5 + $0x288] sm:$0xff]
      %v4813 = vld [vmem:[%s5 + $0x290] sm:$0xf]
      %v4814 = vld [vmem:[%s5 + $0x294] sm:$0xff]
      %v4815 = vld [vmem:[%s5 + $0x29c] sm:$0xf]
      %v4816 = vld [vmem:[%s5 + $0x2a0] sm:$0xff]
      %v4817 = vld [vmem:[%s5 + $0x2a8] sm:$0xf]
      %v4818 = vld [vmem:[%s5 + $0x2ac] sm:$0xff]
      %v4819 = vld [vmem:[%s5 + $0x2b4] sm:$0xf]
      %v4820 = vld [vmem:[%s5 + $0x2b8] sm:$0xff]
      %v4821 = vld [vmem:[%s5 + $0x2c0] sm:$0xf]
      %v4822 = vld [vmem:[%s5 + $0x2c4] sm:$0xff]
      %v4823 = vld [vmem:[%s5 + $0x2cc] sm:$0xf]
      %v4824 = vld [vmem:[%s5 + $0x2d0] sm:$0xff]
      %v4825 = vld [vmem:[%s5 + $0x2d8] sm:$0xf]
      %v4826 = vld [vmem:[%s5 + $0x2dc] sm:$0xff]
      %v4827 = vld [vmem:[%s5 + $0x2e4] sm:$0xf]
      %v4828 = vld [vmem:[%s5 + $0x2e8] sm:$0xff]
      %v4829 = vld [vmem:[%s5 + $0x2f0] sm:$0xf]
      %v4830 = vld [vmem:[%s5 + $0x2f4] sm:$0xff]
      %v4831 = vld [vmem:[%s5 + $0x2fc] sm:$0xf]
      %v4832 = vld [vmem:[%s5 + $0x300] sm:$0xff]
      %v4833 = vld [vmem:[%s5 + $0x308] sm:$0xf]
      %v4834 = vld [vmem:[%s5 + $0x30c] sm:$0xff]
      %v4835 = vld [vmem:[%s5 + $0x314] sm:$0xf]
      %v4836 = vld [vmem:[%s5 + $0x318] sm:$0xff]
      %v4837 = vld [vmem:[%s5 + $0x320] sm:$0xf]
      %v4838 = vld [vmem:[%s5 + $0x324] sm:$0xff]
      %v4839 = vld [vmem:[%s5 + $0x32c] sm:$0xf]
      %v4840 = vld [vmem:[%s5 + $0x330] sm:$0xff]
      %v4841 = vld [vmem:[%s5 + $0x338] sm:$0xf]
      %v4842 = vld [vmem:[%s5 + $0x33c] sm:$0xff]
      %v4843 = vld [vmem:[%s5 + $0x344] sm:$0xf]
      %v4844 = vld [vmem:[%s5 + $0x348] sm:$0xff]
      %v4845 = vld [vmem:[%s5 + $0x350] sm:$0xf]
      %v4846 = vld [vmem:[%s5 + $0x354] sm:$0xff]
      %v4847 = vld [vmem:[%s5 + $0x35c] sm:$0xf]
      %v4848 = vld [vmem:[%s5 + $0x360] sm:$0xff]
      %v4849 = vld [vmem:[%s5 + $0x368] sm:$0xf]
      %v4850 = vld [vmem:[%s5 + $0x36c] sm:$0xff]
      %v4851 = vld [vmem:[%s5 + $0x374] sm:$0xf]
      %v4852 = vld [vmem:[%s5 + $0x378] sm:$0xff]
      %v4853 = vld [vmem:[%s5 + $0x380] sm:$0xf]
      %v4854 = vld [vmem:[%s5 + $0x384] sm:$0xff]
      %v4855 = vld [vmem:[%s5 + $0x38c] sm:$0xf]
      %v4856 = vld [vmem:[%s5 + $0x390] sm:$0xff]
      %v4857 = vld [vmem:[%s5 + $0x398] sm:$0xf]
      %v4858 = vld [vmem:[%s5 + $0x39c] sm:$0xff]
      %v4859 = vld [vmem:[%s5 + $0x3a4] sm:$0xf]
      %v4860 = vld [vmem:[%s5 + $0x3a8] sm:$0xff]
      %v4861 = vld [vmem:[%s5 + $0x3b0] sm:$0xf]
      %v4862 = vld [vmem:[%s5 + $0x3b4] sm:$0xff]
      %v4863 = vld [vmem:[%s5 + $0x3bc] sm:$0xf]
      %s4864 = scalar_lea.vmem %s4, 8
      %v4865 = vld [vmem:[%s4864] sm:$0xf]
      %v4866 = vld [vmem:[%s4864 + $0x4] sm:$0x1]
      %v4869 = vunpack.c.l.b16 %v4865
      %v4870 = vunpack.c.l.b16 %v4866
      %v4871 = vpack.c.b16 %v4870, %v4869
      %v4873 = vsel %vm4552, %v4871, 0
      %4875 = vmatprep.subr.bf16.mxu0 0
      %4876 = vmatpush1.bf16.msra.mxu0 0
      %4877 = vmatprep.subr.bf16.mxu0 0
      %4878 = vmatpush1.bf16.msra.mxu0 0
      %4879 = vmatprep.subr.bf16.mxu0 0
      %4880 = vmatpush1.bf16.msra.mxu0 0
      %4881 = vmatprep.subr.bf16.mxu0 0
      %4882 = vmatpush1.bf16.msra.mxu0 0
      %4883 = vmatprep.subr.bf16.mxu0 0
      %4884 = vmatpush1.bf16.msra.mxu0 0
      %4885 = vmatprep.subr.bf16.mxu0 0
      %4886 = vmatpush1.bf16.msra.mxu0 0
      %4887 = vmatprep.subr.bf16.mxu0 %v4561
      %4888 = vmatpush1.bf16.msra.mxu0 %v4558
      %4889 = vmatprep.subr.bf16.mxu0 %v4536
      %4890 = vmatpush1.bf16.msra.mxu0 %v4535
      %4891 = vmatprep.subr.bf16.mxu0 0
      %4892 = vmatpush2.bf16.msra.mxu0 0
      %4893 = vmatprep.subr.bf16.mxu0 0
      %4894 = vmatpush2.bf16.msra.mxu0 0
      %4895 = vmatprep.subr.bf16.mxu0 0
      %4896 = vmatpush2.bf16.msra.mxu0 0
      %4897 = vmatprep.subr.bf16.mxu0 0
      %4898 = vmatpush2.bf16.msra.mxu0 0
      %4899 = vmatprep.subr.bf16.mxu0 0
      %4900 = vmatpush2.bf16.msra.mxu0 0
      %4901 = vmatprep.subr.bf16.mxu0 0
      %4902 = vmatpush2.bf16.msra.mxu0 0
      %4903 = vmatprep.subr.bf16.mxu0 0
      %4904 = vmatpush2.bf16.msra.mxu0 0
      %4905 = vmatprep.subr.bf16.mxu0 0
      %4906 = vmatpush2.bf16.msra.mxu0 0
      %4907 = vmatprep.mubr.bf16.mxu0 0
      %4908 = vmatmul.mubr.bf16.gmra.mxu0 %v4873
      %v4909 = vpop.f32.mrf.mxu0
      %v4910 = vadd.f32 0.0, %v4909
      %v4911 = vpop.f32.mrf.mxu0
      %v4912 = vadd.f32 0.0, %v4911
      %v4913 = vpop.f32.mrf.mxu0
      %v4914 = vadd.f32 0.0, %v4913
      %v4915 = vpop.f32.mrf.mxu0
      %v4916 = vadd.f32 0.0, %v4915
      %4917 = vdwg.mxu0
      %4918 = vmatprep.subr.bf16.mxu0 0
      %4919 = vmatpush1.bf16.msra.mxu0 0
      %4920 = vmatprep.subr.bf16.mxu0 0
      %4921 = vmatpush1.bf16.msra.mxu0 0
      %4922 = vmatprep.subr.bf16.mxu0 0
      %4923 = vmatpush1.bf16.msra.mxu0 0
      %4924 = vmatprep.subr.bf16.mxu0 0
      %4925 = vmatpush1.bf16.msra.mxu0 0
      %4926 = vmatprep.subr.bf16.mxu0 0
      %4927 = vmatpush1.bf16.msra.mxu0 0
      %4928 = vmatprep.subr.bf16.mxu0 0
      %4929 = vmatpush1.bf16.msra.mxu0 0
      %4930 = vmatprep.subr.bf16.mxu0 %v4567
      %4931 = vmatpush1.bf16.msra.mxu0 %v4564
      %4932 = vmatprep.subr.bf16.mxu0 %v4538
      %4933 = vmatpush1.bf16.msra.mxu0 %v4537
      %4934 = vmatprep.subr.bf16.mxu0 0
      %4935 = vmatpush2.bf16.msra.mxu0 0
      %4936 = vmatprep.subr.bf16.mxu0 0
      %4937 = vmatpush2.bf16.msra.mxu0 0
      %4938 = vmatprep.subr.bf16.mxu0 0
      %4939 = vmatpush2.bf16.msra.mxu0 0
      %4940 = vmatprep.subr.bf16.mxu0 0
      %4941 = vmatpush2.bf16.msra.mxu0 0
      %4942 = vmatprep.subr.bf16.mxu0 0
      %4943 = vmatpush2.bf16.msra.mxu0 0
      %4944 = vmatprep.subr.bf16.mxu0 0
      %4945 = vmatpush2.bf16.msra.mxu0 0
      %4946 = vmatprep.subr.bf16.mxu0 0
      %4947 = vmatpush2.bf16.msra.mxu0 0
      %4948 = vmatprep.subr.bf16.mxu0 0
      %4949 = vmatpush2.bf16.msra.mxu0 0
      %4950 = vmatprep.mubr.bf16.mxu0 0
      %4951 = vmatmul.mubr.bf16.gmra.mxu0 %v4873
      %v4952 = vpop.f32.mrf.mxu0
      %v4953 = vadd.f32 0.0, %v4952
      %v4954 = vpop.f32.mrf.mxu0
      %v4955 = vadd.f32 0.0, %v4954
      %v4956 = vpop.f32.mrf.mxu0
      %v4957 = vadd.f32 0.0, %v4956
      %v4958 = vpop.f32.mrf.mxu0
      %v4959 = vadd.f32 0.0, %v4958
      %4960 = vdwg.mxu0
      %4961 = vmatprep.subr.bf16.mxu0 0
      %4962 = vmatpush1.bf16.msra.mxu0 0
      %4963 = vmatprep.subr.bf16.mxu0 0
      %4964 = vmatpush1.bf16.msra.mxu0 0
      %4965 = vmatprep.subr.bf16.mxu0 0
      %4966 = vmatpush1.bf16.msra.mxu0 0
      %4967 = vmatprep.subr.bf16.mxu0 0
      %4968 = vmatpush1.bf16.msra.mxu0 0
      %4969 = vmatprep.subr.bf16.mxu0 0
      %4970 = vmatpush1.bf16.msra.mxu0 0
      %4971 = vmatprep.subr.bf16.mxu0 0
      %4972 = vmatpush1.bf16.msra.mxu0 0
      %4973 = vmatprep.subr.bf16.mxu0 0
      %4974 = vmatpush1.bf16.msra.mxu0 %v4570
      %4975 = vmatprep.subr.bf16.mxu0 0
      %4976 = vmatpush1.bf16.msra.mxu0 %v4539
      %4977 = vmatprep.subr.bf16.mxu0 0
      %4978 = vmatpush2.bf16.msra.mxu0 0
      %4979 = vmatprep.subr.bf16.mxu0 0
      %4980 = vmatpush2.bf16.msra.mxu0 0
      %4981 = vmatprep.subr.bf16.mxu0 0
      %4982 = vmatpush2.bf16.msra.mxu0 0
      %4983 = vmatprep.subr.bf16.mxu0 0
      %4984 = vmatpush2.bf16.msra.mxu0 0
      %4985 = vmatprep.subr.bf16.mxu0 0
      %4986 = vmatpush2.bf16.msra.mxu0 0
      %4987 = vmatprep.subr.bf16.mxu0 0
      %4988 = vmatpush2.bf16.msra.mxu0 0
      %4989 = vmatprep.subr.bf16.mxu0 0
      %4990 = vmatpush2.bf16.msra.mxu0 0
      %4991 = vmatprep.subr.bf16.mxu0 0
      %4992 = vmatpush2.bf16.msra.mxu0 0
      %4993 = vmatprep.mubr.bf16.mxu0 0
      %4994 = vmatmul.mubr.bf16.gmra.mxu0 %v4873
      %v4995 = vpop.f32.mrf.mxu0
      %v4996 = vadd.f32 0.0, %v4995
      %v4997 = vpop.f32.mrf.mxu0
      %v4998 = vpop.f32.mrf.mxu0
      %v4999 = vadd.f32 0.0, %v4998
      %v5000 = vpop.f32.mrf.mxu0
      %5001 = vdwg.mxu0
      %v5002 = vpack.c.bf16 %v4914, %v4910
      %v5003 = vpack.c.bf16 %v4916, %v4912
      %v5004 = vpack.c.bf16 %v4957, %v4953
      %v5005 = vpack.c.bf16 %v4959, %v4955
      %v5006 = vpack.c.bf16 %v4999, %v4996
      %s5007 = scalar_lea.vmem %s5, 960
      %v5008 = vld [vmem:[%s5007] sm:$0xff]
      %v5009 = vld [vmem:[%s5007 + $0x8] sm:$0xf]
      %v5010 = vld [vmem:[%s5007 + $0xc] sm:$0xff]
      %v5011 = vld [vmem:[%s5007 + $0x14] sm:$0xf]
      %v5012 = vld [vmem:[%s5007 + $0x18] sm:$0xff]
      %v5013 = vld [vmem:[%s5007 + $0x20] sm:$0xf]
      %v5014 = vld [vmem:[%s5007 + $0x24] sm:$0xff]
      %v5015 = vld [vmem:[%s5007 + $0x2c] sm:$0xf]
      %v5016 = vld [vmem:[%s5007 + $0x30] sm:$0xff]
      %v5017 = vld [vmem:[%s5007 + $0x38] sm:$0xf]
      %v5018 = vld [vmem:[%s5007 + $0x3c] sm:$0xff]
      %v5019 = vld [vmem:[%s5007 + $0x44] sm:$0xf]
      %v5020 = vld [vmem:[%s5007 + $0x48] sm:$0xff]
      %v5021 = vld [vmem:[%s5007 + $0x50] sm:$0xf]
      %v5022 = vld [vmem:[%s5007 + $0x54] sm:$0xff]
      %v5023 = vld [vmem:[%s5007 + $0x5c] sm:$0xf]
      %v5024 = vld [vmem:[%s5007 + $0x60] sm:$0xff]
      %v5025 = vld [vmem:[%s5007 + $0x68] sm:$0xf]
      %v5026 = vld [vmem:[%s5007 + $0x6c] sm:$0xff]
      %v5027 = vld [vmem:[%s5007 + $0x74] sm:$0xf]
      %v5028 = vld [vmem:[%s5007 + $0x78] sm:$0xff]
      %v5029 = vld [vmem:[%s5007 + $0x80] sm:$0xf]
      %v5030 = vld [vmem:[%s5007 + $0x84] sm:$0xff]
      %v5031 = vld [vmem:[%s5007 + $0x8c] sm:$0xf]
      %v5032 = vld [vmem:[%s5007 + $0x90] sm:$0xff]
      %v5033 = vld [vmem:[%s5007 + $0x98] sm:$0xf]
      %v5034 = vld [vmem:[%s5007 + $0x9c] sm:$0xff]
      %v5035 = vld [vmem:[%s5007 + $0xa4] sm:$0xf]
      %v5036 = vld [vmem:[%s5007 + $0xa8] sm:$0xff]
      %v5037 = vld [vmem:[%s5007 + $0xb0] sm:$0xf]
      %v5038 = vld [vmem:[%s5007 + $0xb4] sm:$0xff]
      %v5039 = vld [vmem:[%s5007 + $0xbc] sm:$0xf]
      %v5040 = vld [vmem:[%s5007 + $0xc0] sm:$0xff]
      %v5041 = vld [vmem:[%s5007 + $0xc8] sm:$0xf]
      %v5042 = vld [vmem:[%s5007 + $0xcc] sm:$0xff]
      %v5043 = vld [vmem:[%s5007 + $0xd4] sm:$0xf]
      %v5044 = vld [vmem:[%s5007 + $0xd8] sm:$0xff]
      %v5045 = vld [vmem:[%s5007 + $0xe0] sm:$0xf]
      %v5046 = vld [vmem:[%s5007 + $0xe4] sm:$0xff]
      %v5047 = vld [vmem:[%s5007 + $0xec] sm:$0xf]
      %v5048 = vld [vmem:[%s5007 + $0xf0] sm:$0xff]
      %v5049 = vld [vmem:[%s5007 + $0xf8] sm:$0xf]
      %v5050 = vld [vmem:[%s5007 + $0xfc] sm:$0xff]
      %v5051 = vld [vmem:[%s5007 + $0x104] sm:$0xf]
      %v5052 = vld [vmem:[%s5007 + $0x108] sm:$0xff]
      %v5053 = vld [vmem:[%s5007 + $0x110] sm:$0xf]
      %v5054 = vld [vmem:[%s5007 + $0x114] sm:$0xff]
      %v5055 = vld [vmem:[%s5007 + $0x11c] sm:$0xf]
      %v5056 = vld [vmem:[%s5007 + $0x120] sm:$0xff]
      %v5057 = vld [vmem:[%s5007 + $0x128] sm:$0xf]
      %v5058 = vld [vmem:[%s5007 + $0x12c] sm:$0xff]
      %v5059 = vld [vmem:[%s5007 + $0x134] sm:$0xf]
      %v5060 = vld [vmem:[%s5007 + $0x138] sm:$0xff]
      %v5061 = vld [vmem:[%s5007 + $0x140] sm:$0xf]
      %v5062 = vld [vmem:[%s5007 + $0x144] sm:$0xff]
      %v5063 = vld [vmem:[%s5007 + $0x14c] sm:$0xf]
      %v5064 = vld [vmem:[%s5007 + $0x150] sm:$0xff]
      %v5065 = vld [vmem:[%s5007 + $0x158] sm:$0xf]
      %v5066 = vld [vmem:[%s5007 + $0x15c] sm:$0xff]
      %v5067 = vld [vmem:[%s5007 + $0x164] sm:$0xf]
      %v5068 = vld [vmem:[%s5007 + $0x168] sm:$0xff]
      %v5069 = vld [vmem:[%s5007 + $0x170] sm:$0xf]
      %v5070 = vld [vmem:[%s5007 + $0x174] sm:$0xff]
      %v5071 = vld [vmem:[%s5007 + $0x17c] sm:$0xf]
      %v5072 = vld [vmem:[%s5007 + $0x180] sm:$0xff]
      %v5073 = vld [vmem:[%s5007 + $0x188] sm:$0xf]
      %v5074 = vld [vmem:[%s5007 + $0x18c] sm:$0xff]
      %v5075 = vld [vmem:[%s5007 + $0x194] sm:$0xf]
      %v5076 = vld [vmem:[%s5007 + $0x198] sm:$0xff]
      %v5077 = vld [vmem:[%s5007 + $0x1a0] sm:$0xf]
      %v5078 = vld [vmem:[%s5007 + $0x1a4] sm:$0xff]
      %v5079 = vld [vmem:[%s5007 + $0x1ac] sm:$0xf]
      %v5080 = vld [vmem:[%s5007 + $0x1b0] sm:$0xff]
      %v5081 = vld [vmem:[%s5007 + $0x1b8] sm:$0xf]
      %v5082 = vld [vmem:[%s5007 + $0x1bc] sm:$0xff]
      %v5083 = vld [vmem:[%s5007 + $0x1c4] sm:$0xf]
      %v5084 = vld [vmem:[%s5007 + $0x1c8] sm:$0xff]
      %v5085 = vld [vmem:[%s5007 + $0x1d0] sm:$0xf]
      %v5086 = vld [vmem:[%s5007 + $0x1d4] sm:$0xff]
      %v5087 = vld [vmem:[%s5007 + $0x1dc] sm:$0xf]
      %v5088 = vld [vmem:[%s5007 + $0x1e0] sm:$0xff]
      %v5089 = vld [vmem:[%s5007 + $0x1e8] sm:$0xf]
      %v5090 = vld [vmem:[%s5007 + $0x1ec] sm:$0xff]
      %v5091 = vld [vmem:[%s5007 + $0x1f4] sm:$0xf]
      %v5092 = vld [vmem:[%s5007 + $0x1f8] sm:$0xff]
      %v5093 = vld [vmem:[%s5007 + $0x200] sm:$0xf]
      %v5094 = vld [vmem:[%s5007 + $0x204] sm:$0xff]
      %v5095 = vld [vmem:[%s5007 + $0x20c] sm:$0xf]
      %v5096 = vld [vmem:[%s5007 + $0x210] sm:$0xff]
      %v5097 = vld [vmem:[%s5007 + $0x218] sm:$0xf]
      %v5098 = vld [vmem:[%s5007 + $0x21c] sm:$0xff]
      %v5099 = vld [vmem:[%s5007 + $0x224] sm:$0xf]
      %v5100 = vld [vmem:[%s5007 + $0x228] sm:$0xff]
      %v5101 = vld [vmem:[%s5007 + $0x230] sm:$0xf]
      %v5102 = vld [vmem:[%s5007 + $0x234] sm:$0xff]
      %v5103 = vld [vmem:[%s5007 + $0x23c] sm:$0xf]
      %v5104 = vld [vmem:[%s5007 + $0x240] sm:$0xff]
      %v5105 = vld [vmem:[%s5007 + $0x248] sm:$0xf]
      %v5106 = vld [vmem:[%s5007 + $0x24c] sm:$0xff]
      %v5107 = vld [vmem:[%s5007 + $0x254] sm:$0xf]
      %v5108 = vld [vmem:[%s5007 + $0x258] sm:$0xff]
      %v5109 = vld [vmem:[%s5007 + $0x260] sm:$0xf]
      %v5110 = vld [vmem:[%s5007 + $0x264] sm:$0xff]
      %v5111 = vld [vmem:[%s5007 + $0x26c] sm:$0xf]
      %v5112 = vld [vmem:[%s5007 + $0x270] sm:$0xff]
      %v5113 = vld [vmem:[%s5007 + $0x278] sm:$0xf]
      %v5114 = vld [vmem:[%s5007 + $0x27c] sm:$0xff]
      %v5115 = vld [vmem:[%s5007 + $0x284] sm:$0xf]
      %v5116 = vld [vmem:[%s5007 + $0x288] sm:$0xff]
      %v5117 = vld [vmem:[%s5007 + $0x290] sm:$0xf]
      %v5118 = vld [vmem:[%s5007 + $0x294] sm:$0xff]
      %v5119 = vld [vmem:[%s5007 + $0x29c] sm:$0xf]
      %v5120 = vld [vmem:[%s5007 + $0x2a0] sm:$0xff]
      %v5121 = vld [vmem:[%s5007 + $0x2a8] sm:$0xf]
      %v5122 = vld [vmem:[%s5007 + $0x2ac] sm:$0xff]
      %v5123 = vld [vmem:[%s5007 + $0x2b4] sm:$0xf]
      %v5124 = vld [vmem:[%s5007 + $0x2b8] sm:$0xff]
      %v5125 = vld [vmem:[%s5007 + $0x2c0] sm:$0xf]
      %v5126 = vld [vmem:[%s5007 + $0x2c4] sm:$0xff]
      %v5127 = vld [vmem:[%s5007 + $0x2cc] sm:$0xf]
      %v5128 = vld [vmem:[%s5007 + $0x2d0] sm:$0xff]
      %v5129 = vld [vmem:[%s5007 + $0x2d8] sm:$0xf]
      %v5130 = vld [vmem:[%s5007 + $0x2dc] sm:$0xff]
      %v5131 = vld [vmem:[%s5007 + $0x2e4] sm:$0xf]
      %v5132 = vld [vmem:[%s5007 + $0x2e8] sm:$0xff]
      %v5133 = vld [vmem:[%s5007 + $0x2f0] sm:$0xf]
      %v5134 = vld [vmem:[%s5007 + $0x2f4] sm:$0xff]
      %v5135 = vld [vmem:[%s5007 + $0x2fc] sm:$0xf]
      %v5136 = vld [vmem:[%s5007 + $0x300] sm:$0xff]
      %v5137 = vld [vmem:[%s5007 + $0x308] sm:$0xf]
      %v5138 = vld [vmem:[%s5007 + $0x30c] sm:$0xff]
      %v5139 = vld [vmem:[%s5007 + $0x314] sm:$0xf]
      %v5140 = vld [vmem:[%s5007 + $0x318] sm:$0xff]
      %v5141 = vld [vmem:[%s5007 + $0x320] sm:$0xf]
      %v5142 = vld [vmem:[%s5007 + $0x324] sm:$0xff]
      %v5143 = vld [vmem:[%s5007 + $0x32c] sm:$0xf]
      %v5144 = vld [vmem:[%s5007 + $0x330] sm:$0xff]
      %v5145 = vld [vmem:[%s5007 + $0x338] sm:$0xf]
      %v5146 = vld [vmem:[%s5007 + $0x33c] sm:$0xff]
      %v5147 = vld [vmem:[%s5007 + $0x344] sm:$0xf]
      %v5148 = vld [vmem:[%s5007 + $0x348] sm:$0xff]
      %v5149 = vld [vmem:[%s5007 + $0x350] sm:$0xf]
      %v5150 = vld [vmem:[%s5007 + $0x354] sm:$0xff]
      %v5151 = vld [vmem:[%s5007 + $0x35c] sm:$0xf]
      %v5152 = vld [vmem:[%s5007 + $0x360] sm:$0xff]
      %v5153 = vld [vmem:[%s5007 + $0x368] sm:$0xf]
      %v5154 = vld [vmem:[%s5007 + $0x36c] sm:$0xff]
      %v5155 = vld [vmem:[%s5007 + $0x374] sm:$0xf]
      %v5156 = vld [vmem:[%s5007 + $0x378] sm:$0xff]
      %v5157 = vld [vmem:[%s5007 + $0x380] sm:$0xf]
      %v5158 = vld [vmem:[%s5007 + $0x384] sm:$0xff]
      %v5159 = vld [vmem:[%s5007 + $0x38c] sm:$0xf]
      %v5160 = vld [vmem:[%s5007 + $0x390] sm:$0xff]
      %v5161 = vld [vmem:[%s5007 + $0x398] sm:$0xf]
      %v5162 = vld [vmem:[%s5007 + $0x39c] sm:$0xff]
      %v5163 = vld [vmem:[%s5007 + $0x3a4] sm:$0xf]
      %v5164 = vld [vmem:[%s5007 + $0x3a8] sm:$0xff]
      %v5165 = vld [vmem:[%s5007 + $0x3b0] sm:$0xf]
      %v5166 = vld [vmem:[%s5007 + $0x3b4] sm:$0xff]
      %v5167 = vld [vmem:[%s5007 + $0x3bc] sm:$0xf]
      %v5328 = vunpack.c.l.b16 %v5008
      %v5329 = vunpack.c.h.b16 %v5008
      %v5330 = vunpack.c.l.b16 %v5009
      %v5331 = vunpack.c.l.b16 %v5010
      %v5332 = vunpack.c.h.b16 %v5010
      %v5333 = vunpack.c.l.b16 %v5011
      %v5334 = vunpack.c.l.b16 %v5012
      %v5335 = vunpack.c.h.b16 %v5012
      %v5336 = vunpack.c.l.b16 %v5013
      %v5337 = vunpack.c.l.b16 %v5014
      %v5338 = vunpack.c.h.b16 %v5014
      %v5339 = vunpack.c.l.b16 %v5015
      %v5340 = vunpack.c.l.b16 %v5016
      %v5341 = vunpack.c.h.b16 %v5016
      %v5342 = vunpack.c.l.b16 %v5017
      %v5343 = vunpack.c.l.b16 %v5018
      %v5344 = vunpack.c.h.b16 %v5018
      %v5345 = vunpack.c.l.b16 %v5019
      %v5346 = vunpack.c.l.b16 %v5020
      %v5347 = vunpack.c.h.b16 %v5020
      %v5348 = vunpack.c.l.b16 %v5021
      %v5349 = vunpack.c.l.b16 %v5022
      %v5350 = vunpack.c.h.b16 %v5022
      %v5351 = vunpack.c.l.b16 %v5023
      %v5352 = vunpack.c.l.b16 %v5024
      %v5353 = vunpack.c.h.b16 %v5024
      %v5354 = vunpack.c.l.b16 %v5025
      %v5355 = vunpack.c.l.b16 %v5026
      %v5356 = vunpack.c.h.b16 %v5026
      %v5357 = vunpack.c.l.b16 %v5027
      %v5358 = vunpack.c.l.b16 %v5028
      %v5359 = vunpack.c.h.b16 %v5028
      %v5360 = vunpack.c.l.b16 %v5029
      %v5361 = vunpack.c.l.b16 %v5030
      %v5362 = vunpack.c.h.b16 %v5030
      %v5363 = vunpack.c.l.b16 %v5031
      %v5364 = vunpack.c.l.b16 %v5032
      %v5365 = vunpack.c.h.b16 %v5032
      %v5366 = vunpack.c.l.b16 %v5033
      %v5367 = vunpack.c.l.b16 %v5034
      %v5368 = vunpack.c.h.b16 %v5034
      %v5369 = vunpack.c.l.b16 %v5035
      %v5370 = vunpack.c.l.b16 %v5036
      %v5371 = vunpack.c.h.b16 %v5036
      %v5372 = vunpack.c.l.b16 %v5037
      %v5373 = vunpack.c.l.b16 %v5038
      %v5374 = vunpack.c.h.b16 %v5038
      %v5375 = vunpack.c.l.b16 %v5039
      %v5376 = vunpack.c.l.b16 %v5040
      %v5377 = vunpack.c.h.b16 %v5040
      %v5378 = vunpack.c.l.b16 %v5041
      %v5379 = vunpack.c.l.b16 %v5042
      %v5380 = vunpack.c.h.b16 %v5042
      %v5381 = vunpack.c.l.b16 %v5043
      %v5382 = vunpack.c.l.b16 %v5044
      %v5383 = vunpack.c.h.b16 %v5044
      %v5384 = vunpack.c.l.b16 %v5045
      %v5385 = vunpack.c.l.b16 %v5046
      %v5386 = vunpack.c.h.b16 %v5046
      %v5387 = vunpack.c.l.b16 %v5047
      %v5388 = vunpack.c.l.b16 %v5048
      %v5389 = vunpack.c.h.b16 %v5048
      %v5390 = vunpack.c.l.b16 %v5049
      %v5391 = vunpack.c.l.b16 %v5050
      %v5392 = vunpack.c.h.b16 %v5050
      %v5393 = vunpack.c.l.b16 %v5051
      %v5394 = vunpack.c.l.b16 %v5052
      %v5395 = vunpack.c.h.b16 %v5052
      %v5396 = vunpack.c.l.b16 %v5053
      %v5397 = vunpack.c.l.b16 %v5054
      %v5398 = vunpack.c.h.b16 %v5054
      %v5399 = vunpack.c.l.b16 %v5055
      %v5400 = vunpack.c.l.b16 %v5056
      %v5401 = vunpack.c.h.b16 %v5056
      %v5402 = vunpack.c.l.b16 %v5057
      %v5403 = vunpack.c.l.b16 %v5058
      %v5404 = vunpack.c.h.b16 %v5058
      %v5405 = vunpack.c.l.b16 %v5059
      %v5406 = vunpack.c.l.b16 %v5060
      %v5407 = vunpack.c.h.b16 %v5060
      %v5408 = vunpack.c.l.b16 %v5061
      %v5409 = vunpack.c.l.b16 %v5062
      %v5410 = vunpack.c.h.b16 %v5062
      %v5411 = vunpack.c.l.b16 %v5063
      %v5412 = vunpack.c.l.b16 %v5064
      %v5413 = vunpack.c.h.b16 %v5064
      %v5414 = vunpack.c.l.b16 %v5065
      %v5415 = vunpack.c.l.b16 %v5066
      %v5416 = vunpack.c.h.b16 %v5066
      %v5417 = vunpack.c.l.b16 %v5067
      %v5418 = vunpack.c.l.b16 %v5068
      %v5419 = vunpack.c.h.b16 %v5068
      %v5420 = vunpack.c.l.b16 %v5069
      %v5421 = vunpack.c.l.b16 %v5070
      %v5422 = vunpack.c.h.b16 %v5070
      %v5423 = vunpack.c.l.b16 %v5071
      %v5424 = vunpack.c.l.b16 %v5072
      %v5425 = vunpack.c.h.b16 %v5072
      %v5426 = vunpack.c.l.b16 %v5073
      %v5427 = vunpack.c.l.b16 %v5074
      %v5428 = vunpack.c.h.b16 %v5074
      %v5429 = vunpack.c.l.b16 %v5075
      %v5430 = vunpack.c.l.b16 %v5076
      %v5431 = vunpack.c.h.b16 %v5076
      %v5432 = vunpack.c.l.b16 %v5077
      %v5433 = vunpack.c.l.b16 %v5078
      %v5434 = vunpack.c.h.b16 %v5078
      %v5435 = vunpack.c.l.b16 %v5079
      %v5436 = vunpack.c.l.b16 %v5080
      %v5437 = vunpack.c.h.b16 %v5080
      %v5438 = vunpack.c.l.b16 %v5081
      %v5439 = vunpack.c.l.b16 %v5082
      %v5440 = vunpack.c.h.b16 %v5082
      %v5441 = vunpack.c.l.b16 %v5083
      %v5442 = vunpack.c.l.b16 %v5084
      %v5443 = vunpack.c.h.b16 %v5084
      %v5444 = vunpack.c.l.b16 %v5085
      %v5445 = vunpack.c.l.b16 %v5086
      %v5446 = vunpack.c.h.b16 %v5086
      %v5447 = vunpack.c.l.b16 %v5087
      %v5448 = vunpack.c.l.b16 %v5088
      %v5449 = vunpack.c.h.b16 %v5088
      %v5450 = vunpack.c.l.b16 %v5089
      %v5451 = vunpack.c.l.b16 %v5090
      %v5452 = vunpack.c.h.b16 %v5090
      %v5453 = vunpack.c.l.b16 %v5091
      %v5454 = vunpack.c.l.b16 %v5092
      %v5455 = vunpack.c.h.b16 %v5092
      %v5456 = vunpack.c.l.b16 %v5093
      %v5457 = vunpack.c.l.b16 %v5094
      %v5458 = vunpack.c.h.b16 %v5094
      %v5459 = vunpack.c.l.b16 %v5095
      %v5460 = vunpack.c.l.b16 %v5096
      %v5461 = vunpack.c.h.b16 %v5096
      %v5462 = vunpack.c.l.b16 %v5097
      %v5463 = vunpack.c.l.b16 %v5098
      %v5464 = vunpack.c.h.b16 %v5098
      %v5465 = vunpack.c.l.b16 %v5099
      %v5466 = vunpack.c.l.b16 %v5100
      %v5467 = vunpack.c.h.b16 %v5100
      %v5468 = vunpack.c.l.b16 %v5101
      %v5469 = vunpack.c.l.b16 %v5102
      %v5470 = vunpack.c.h.b16 %v5102
      %v5471 = vunpack.c.l.b16 %v5103
      %v5472 = vunpack.c.l.b16 %v5104
      %v5473 = vunpack.c.h.b16 %v5104
      %v5474 = vunpack.c.l.b16 %v5105
      %v5475 = vunpack.c.l.b16 %v5106
      %v5476 = vunpack.c.h.b16 %v5106
      %v5477 = vunpack.c.l.b16 %v5107
      %v5478 = vunpack.c.l.b16 %v5108
      %v5479 = vunpack.c.h.b16 %v5108
      %v5480 = vunpack.c.l.b16 %v5109
      %v5481 = vunpack.c.l.b16 %v5110
      %v5482 = vunpack.c.h.b16 %v5110
      %v5483 = vunpack.c.l.b16 %v5111
      %v5484 = vunpack.c.l.b16 %v5112
      %v5485 = vunpack.c.h.b16 %v5112
      %v5486 = vunpack.c.l.b16 %v5113
      %v5487 = vunpack.c.l.b16 %v5114
      %v5488 = vunpack.c.h.b16 %v5114
      %v5489 = vunpack.c.l.b16 %v5115
      %v5490 = vunpack.c.l.b16 %v5116
      %v5491 = vunpack.c.h.b16 %v5116
      %v5492 = vunpack.c.l.b16 %v5117
      %v5493 = vunpack.c.l.b16 %v5118
      %v5494 = vunpack.c.h.b16 %v5118
      %v5495 = vunpack.c.l.b16 %v5119
      %v5496 = vunpack.c.l.b16 %v5120
      %v5497 = vunpack.c.h.b16 %v5120
      %v5498 = vunpack.c.l.b16 %v5121
      %v5499 = vunpack.c.l.b16 %v5122
      %v5500 = vunpack.c.h.b16 %v5122
      %v5501 = vunpack.c.l.b16 %v5123
      %v5502 = vunpack.c.l.b16 %v5124
      %v5503 = vunpack.c.h.b16 %v5124
      %v5504 = vunpack.c.l.b16 %v5125
      %v5505 = vunpack.c.l.b16 %v5126
      %v5506 = vunpack.c.h.b16 %v5126
      %v5507 = vunpack.c.l.b16 %v5127
      %v5508 = vunpack.c.l.b16 %v5128
      %v5509 = vunpack.c.h.b16 %v5128
      %v5510 = vunpack.c.l.b16 %v5129
      %v5511 = vunpack.c.l.b16 %v5130
      %v5512 = vunpack.c.h.b16 %v5130
      %v5513 = vunpack.c.l.b16 %v5131
      %v5514 = vunpack.c.l.b16 %v5132
      %v5515 = vunpack.c.h.b16 %v5132
      %v5516 = vunpack.c.l.b16 %v5133
      %v5517 = vunpack.c.l.b16 %v5134
      %v5518 = vunpack.c.h.b16 %v5134
      %v5519 = vunpack.c.l.b16 %v5135
      %v5520 = vunpack.c.l.b16 %v5136
      %v5521 = vunpack.c.h.b16 %v5136
      %v5522 = vunpack.c.l.b16 %v5137
      %v5523 = vunpack.c.l.b16 %v5138
      %v5524 = vunpack.c.h.b16 %v5138
      %v5525 = vunpack.c.l.b16 %v5139
      %v5526 = vunpack.c.l.b16 %v5140
      %v5527 = vunpack.c.h.b16 %v5140
      %v5528 = vunpack.c.l.b16 %v5141
      %v5529 = vunpack.c.l.b16 %v5142
      %v5530 = vunpack.c.h.b16 %v5142
      %v5531 = vunpack.c.l.b16 %v5143
      %v5532 = vunpack.c.l.b16 %v5144
      %v5533 = vunpack.c.h.b16 %v5144
      %v5534 = vunpack.c.l.b16 %v5145
      %v5535 = vunpack.c.l.b16 %v5146
      %v5536 = vunpack.c.h.b16 %v5146
      %v5537 = vunpack.c.l.b16 %v5147
      %v5538 = vunpack.c.l.b16 %v5148
      %v5539 = vunpack.c.h.b16 %v5148
      %v5540 = vunpack.c.l.b16 %v5149
      %v5541 = vunpack.c.l.b16 %v5150
      %v5542 = vunpack.c.h.b16 %v5150
      %v5543 = vunpack.c.l.b16 %v5151
      %v5544 = vunpack.c.l.b16 %v5152
      %v5545 = vunpack.c.h.b16 %v5152
      %v5546 = vunpack.c.l.b16 %v5153
      %v5547 = vunpack.c.l.b16 %v5154
      %v5548 = vunpack.c.h.b16 %v5154
      %v5549 = vunpack.c.l.b16 %v5155
      %v5550 = vunpack.c.l.b16 %v5156
      %v5551 = vunpack.c.h.b16 %v5156
      %v5552 = vunpack.c.l.b16 %v5157
      %v5553 = vunpack.c.l.b16 %v5158
      %v5554 = vunpack.c.h.b16 %v5158
      %v5555 = vunpack.c.l.b16 %v5159
      %v5556 = vunpack.c.l.b16 %v5160
      %v5557 = vunpack.c.h.b16 %v5160
      %v5558 = vunpack.c.l.b16 %v5161
      %v5559 = vunpack.c.l.b16 %v5162
      %v5560 = vunpack.c.h.b16 %v5162
      %v5561 = vunpack.c.l.b16 %v5163
      %v5562 = vunpack.c.l.b16 %v5164
      %v5563 = vunpack.c.h.b16 %v5164
      %v5564 = vunpack.c.l.b16 %v5165
      %v5565 = vunpack.c.l.b16 %v5166
      %v5566 = vunpack.c.h.b16 %v5166
      %v5567 = vunpack.c.l.b16 %v5167
      %v5568 = vpack.c.b16 %v5331, %v5328
      %v5569 = vpack.c.b16 %v5332, %v5329
      %v5570 = vpack.c.b16 %v5333, %v5330
      %v5571 = vpack.c.b16 %v5337, %v5334
      %v5572 = vpack.c.b16 %v5338, %v5335
      %v5573 = vpack.c.b16 %v5339, %v5336
      %v5574 = vpack.c.b16 %v5343, %v5340
      %v5575 = vpack.c.b16 %v5344, %v5341
      %v5576 = vpack.c.b16 %v5345, %v5342
      %v5577 = vpack.c.b16 %v5349, %v5346
      %v5578 = vpack.c.b16 %v5350, %v5347
      %v5579 = vpack.c.b16 %v5351, %v5348
      %v5580 = vpack.c.b16 %v5355, %v5352
      %v5581 = vpack.c.b16 %v5356, %v5353
      %v5582 = vpack.c.b16 %v5357, %v5354
      %v5583 = vpack.c.b16 %v5361, %v5358
      %v5584 = vpack.c.b16 %v5362, %v5359
      %v5585 = vpack.c.b16 %v5363, %v5360
      %v5586 = vpack.c.b16 %v5367, %v5364
      %v5587 = vpack.c.b16 %v5368, %v5365
      %v5588 = vpack.c.b16 %v5369, %v5366
      %v5589 = vpack.c.b16 %v5373, %v5370
      %v5590 = vpack.c.b16 %v5374, %v5371
      %v5591 = vpack.c.b16 %v5375, %v5372
      %v5592 = vpack.c.b16 %v5379, %v5376
      %v5593 = vpack.c.b16 %v5380, %v5377
      %v5594 = vpack.c.b16 %v5381, %v5378
      %v5595 = vpack.c.b16 %v5385, %v5382
      %v5596 = vpack.c.b16 %v5386, %v5383
      %v5597 = vpack.c.b16 %v5387, %v5384
      %v5598 = vpack.c.b16 %v5391, %v5388
      %v5599 = vpack.c.b16 %v5392, %v5389
      %v5600 = vpack.c.b16 %v5393, %v5390
      %v5601 = vpack.c.b16 %v5397, %v5394
      %v5602 = vpack.c.b16 %v5398, %v5395
      %v5603 = vpack.c.b16 %v5399, %v5396
      %v5604 = vpack.c.b16 %v5403, %v5400
      %v5605 = vpack.c.b16 %v5404, %v5401
      %v5606 = vpack.c.b16 %v5405, %v5402
      %v5607 = vpack.c.b16 %v5409, %v5406
      %v5608 = vpack.c.b16 %v5410, %v5407
      %v5609 = vpack.c.b16 %v5411, %v5408
      %v5610 = vpack.c.b16 %v5415, %v5412
      %v5611 = vpack.c.b16 %v5416, %v5413
      %v5612 = vpack.c.b16 %v5417, %v5414
      %v5613 = vpack.c.b16 %v5421, %v5418
      %v5614 = vpack.c.b16 %v5422, %v5419
      %v5615 = vpack.c.b16 %v5423, %v5420
      %v5616 = vpack.c.b16 %v5427, %v5424
      %v5617 = vpack.c.b16 %v5428, %v5425
      %v5618 = vpack.c.b16 %v5429, %v5426
      %v5619 = vpack.c.b16 %v5433, %v5430
      %v5620 = vpack.c.b16 %v5434, %v5431
      %v5621 = vpack.c.b16 %v5435, %v5432
      %v5622 = vpack.c.b16 %v5439, %v5436
      %v5623 = vpack.c.b16 %v5440, %v5437
      %v5624 = vpack.c.b16 %v5441, %v5438
      %v5625 = vpack.c.b16 %v5445, %v5442
      %v5626 = vpack.c.b16 %v5446, %v5443
      %v5627 = vpack.c.b16 %v5447, %v5444
      %v5628 = vpack.c.b16 %v5451, %v5448
      %v5629 = vpack.c.b16 %v5452, %v5449
      %v5630 = vpack.c.b16 %v5453, %v5450
      %v5631 = vpack.c.b16 %v5457, %v5454
      %v5632 = vpack.c.b16 %v5458, %v5455
      %v5633 = vpack.c.b16 %v5459, %v5456
      %v5634 = vpack.c.b16 %v5463, %v5460
      %v5635 = vpack.c.b16 %v5464, %v5461
      %v5636 = vpack.c.b16 %v5465, %v5462
      %v5637 = vpack.c.b16 %v5469, %v5466
      %v5638 = vpack.c.b16 %v5470, %v5467
      %v5639 = vpack.c.b16 %v5471, %v5468
      %v5640 = vpack.c.b16 %v5475, %v5472
      %v5641 = vpack.c.b16 %v5476, %v5473
      %v5642 = vpack.c.b16 %v5477, %v5474
      %v5643 = vpack.c.b16 %v5481, %v5478
      %v5644 = vpack.c.b16 %v5482, %v5479
      %v5645 = vpack.c.b16 %v5483, %v5480
      %v5646 = vpack.c.b16 %v5487, %v5484
      %v5647 = vpack.c.b16 %v5488, %v5485
      %v5648 = vpack.c.b16 %v5489, %v5486
      %v5649 = vpack.c.b16 %v5493, %v5490
      %v5650 = vpack.c.b16 %v5494, %v5491
      %v5651 = vpack.c.b16 %v5495, %v5492
      %v5652 = vpack.c.b16 %v5499, %v5496
      %v5653 = vpack.c.b16 %v5500, %v5497
      %v5654 = vpack.c.b16 %v5501, %v5498
      %v5655 = vpack.c.b16 %v5505, %v5502
      %v5656 = vpack.c.b16 %v5506, %v5503
      %v5657 = vpack.c.b16 %v5507, %v5504
      %v5658 = vpack.c.b16 %v5511, %v5508
      %v5659 = vpack.c.b16 %v5512, %v5509
      %v5660 = vpack.c.b16 %v5513, %v5510
      %v5661 = vpack.c.b16 %v5517, %v5514
      %v5662 = vpack.c.b16 %v5518, %v5515
      %v5663 = vpack.c.b16 %v5519, %v5516
      %v5664 = vpack.c.b16 %v5523, %v5520
      %v5665 = vpack.c.b16 %v5524, %v5521
      %v5666 = vpack.c.b16 %v5525, %v5522
      %v5667 = vpack.c.b16 %v5529, %v5526
      %v5668 = vpack.c.b16 %v5530, %v5527
      %v5669 = vpack.c.b16 %v5531, %v5528
      %v5670 = vpack.c.b16 %v5535, %v5532
      %v5671 = vpack.c.b16 %v5536, %v5533
      %v5672 = vpack.c.b16 %v5537, %v5534
      %v5673 = vpack.c.b16 %v5541, %v5538
      %v5674 = vpack.c.b16 %v5542, %v5539
      %v5675 = vpack.c.b16 %v5543, %v5540
      %v5676 = vpack.c.b16 %v5547, %v5544
      %v5677 = vpack.c.b16 %v5548, %v5545
      %v5678 = vpack.c.b16 %v5549, %v5546
      %v5679 = vpack.c.b16 %v5553, %v5550
      %v5680 = vpack.c.b16 %v5554, %v5551
      %v5681 = vpack.c.b16 %v5555, %v5552
      %v5682 = vpack.c.b16 %v5559, %v5556
      %v5683 = vpack.c.b16 %v5560, %v5557
      %v5684 = vpack.c.b16 %v5561, %v5558
      %v5685 = vpack.c.b16 %v5565, %v5562
      %v5686 = vpack.c.b16 %v5566, %v5563
      %v5687 = vpack.c.b16 %v5567, %v5564
      %5808 = vmatprep.subr.bf16.mxu0 %v5590
      %5809 = vmatpush1.bf16.msra.mxu0 %v5589
      %5810 = vmatprep.subr.bf16.mxu0 %v5587
      %5811 = vmatpush1.bf16.msra.mxu0 %v5586
      %5812 = vmatprep.subr.bf16.mxu0 %v5584
      %5813 = vmatpush1.bf16.msra.mxu0 %v5583
      %5814 = vmatprep.subr.bf16.mxu0 %v5581
      %5815 = vmatpush1.bf16.msra.mxu0 %v5580
      %5816 = vmatprep.subr.bf16.mxu0 %v5578
      %5817 = vmatpush1.bf16.msra.mxu0 %v5577
      %5818 = vmatprep.subr.bf16.mxu0 %v5575
      %5819 = vmatpush1.bf16.msra.mxu0 %v5574
      %5820 = vmatprep.subr.bf16.mxu0 %v5572
      %5821 = vmatpush1.bf16.msra.mxu0 %v5571
      %5822 = vmatprep.subr.bf16.mxu0 %v5569
      %5823 = vmatpush1.bf16.msra.mxu0 %v5568
      %5824 = vmatprep.subr.bf16.mxu0 %v5614
      %5825 = vmatpush2.bf16.msra.mxu0 %v5613
      %5826 = vmatprep.subr.bf16.mxu0 %v5611
      %5827 = vmatpush2.bf16.msra.mxu0 %v5610
      %5828 = vmatprep.subr.bf16.mxu0 %v5608
      %5829 = vmatpush2.bf16.msra.mxu0 %v5607
      %5830 = vmatprep.subr.bf16.mxu0 %v5605
      %5831 = vmatpush2.bf16.msra.mxu0 %v5604
      %5832 = vmatprep.subr.bf16.mxu0 %v5602
      %5833 = vmatpush2.bf16.msra.mxu0 %v5601
      %5834 = vmatprep.subr.bf16.mxu0 %v5599
      %5835 = vmatpush2.bf16.msra.mxu0 %v5598
      %5836 = vmatprep.subr.bf16.mxu0 %v5596
      %5837 = vmatpush2.bf16.msra.mxu0 %v5595
      %5838 = vmatprep.subr.bf16.mxu0 %v5593
      %5839 = vmatpush2.bf16.msra.mxu0 %v5592
      %5840 = vmatprep.mubr.bf16.mxu0 %v5003
      %5841 = vmatmul.mubr.bf16.gmra.mxu0 %v5002
      %v5842 = vpop.f32.mrf.mxu0
      %v5843 = vadd.f32 0.0, %v5842
      %v5844 = vpop.f32.mrf.mxu0
      %v5845 = vadd.f32 0.0, %v5844
      %v5846 = vpop.f32.mrf.mxu0
      %v5847 = vadd.f32 0.0, %v5846
      %v5848 = vpop.f32.mrf.mxu0
      %v5849 = vadd.f32 0.0, %v5848
      %5850 = vdwg.mxu0
      %5851 = vmatprep.subr.bf16.mxu0 %v5638
      %5852 = vmatpush1.bf16.msra.mxu0 %v5637
      %5853 = vmatprep.subr.bf16.mxu0 %v5635
      %5854 = vmatpush1.bf16.msra.mxu0 %v5634
      %5855 = vmatprep.subr.bf16.mxu0 %v5632
      %5856 = vmatpush1.bf16.msra.mxu0 %v5631
      %5857 = vmatprep.subr.bf16.mxu0 %v5629
      %5858 = vmatpush1.bf16.msra.mxu0 %v5628
      %5859 = vmatprep.subr.bf16.mxu0 %v5626
      %5860 = vmatpush1.bf16.msra.mxu0 %v5625
      %5861 = vmatprep.subr.bf16.mxu0 %v5623
      %5862 = vmatpush1.bf16.msra.mxu0 %v5622
      %5863 = vmatprep.subr.bf16.mxu0 %v5620
      %5864 = vmatpush1.bf16.msra.mxu0 %v5619
      %5865 = vmatprep.subr.bf16.mxu0 %v5617
      %5866 = vmatpush1.bf16.msra.mxu0 %v5616
      %5867 = vmatprep.subr.bf16.mxu0 %v5662
      %5868 = vmatpush2.bf16.msra.mxu0 %v5661
      %5869 = vmatprep.subr.bf16.mxu0 %v5659
      %5870 = vmatpush2.bf16.msra.mxu0 %v5658
      %5871 = vmatprep.subr.bf16.mxu0 %v5656
      %5872 = vmatpush2.bf16.msra.mxu0 %v5655
      %5873 = vmatprep.subr.bf16.mxu0 %v5653
      %5874 = vmatpush2.bf16.msra.mxu0 %v5652
      %5875 = vmatprep.subr.bf16.mxu0 %v5650
      %5876 = vmatpush2.bf16.msra.mxu0 %v5649
      %5877 = vmatprep.subr.bf16.mxu0 %v5647
      %5878 = vmatpush2.bf16.msra.mxu0 %v5646
      %5879 = vmatprep.subr.bf16.mxu0 %v5644
      %5880 = vmatpush2.bf16.msra.mxu0 %v5643
      %5881 = vmatprep.subr.bf16.mxu0 %v5641
      %5882 = vmatpush2.bf16.msra.mxu0 %v5640
      %5883 = vmatprep.mubr.bf16.mxu0 %v5005
      %5884 = vmatmul.mubr.bf16.gmra.mxu0 %v5004
      %v5885 = vpop.f32.mrf.mxu0
      %v5886 = vadd.f32 %v5843, %v5885
      %v5887 = vpop.f32.mrf.mxu0
      %v5888 = vadd.f32 %v5845, %v5887
      %v5889 = vpop.f32.mrf.mxu0
      %v5890 = vadd.f32 %v5847, %v5889
      %v5891 = vpop.f32.mrf.mxu0
      %v5892 = vadd.f32 %v5849, %v5891
      %5893 = vdwg.mxu0
      %5894 = vmatprep.subr.bf16.mxu0 %v5686
      %5895 = vmatpush1.bf16.msra.mxu0 %v5685
      %5896 = vmatprep.subr.bf16.mxu0 %v5683
      %5897 = vmatpush1.bf16.msra.mxu0 %v5682
      %5898 = vmatprep.subr.bf16.mxu0 %v5680
      %5899 = vmatpush1.bf16.msra.mxu0 %v5679
      %5900 = vmatprep.subr.bf16.mxu0 %v5677
      %5901 = vmatpush1.bf16.msra.mxu0 %v5676
      %5902 = vmatprep.subr.bf16.mxu0 %v5674
      %5903 = vmatpush1.bf16.msra.mxu0 %v5673
      %5904 = vmatprep.subr.bf16.mxu0 %v5671
      %5905 = vmatpush1.bf16.msra.mxu0 %v5670
      %5906 = vmatprep.subr.bf16.mxu0 %v5668
      %5907 = vmatpush1.bf16.msra.mxu0 %v5667
      %5908 = vmatprep.subr.bf16.mxu0 %v5665
      %5909 = vmatpush1.bf16.msra.mxu0 %v5664
      %5910 = vmatprep.subr.bf16.mxu0 0
      %5911 = vmatpush2.bf16.msra.mxu0 0
      %5912 = vmatprep.subr.bf16.mxu0 0
      %5913 = vmatpush2.bf16.msra.mxu0 0
      %5914 = vmatprep.subr.bf16.mxu0 0
      %5915 = vmatpush2.bf16.msra.mxu0 0
      %5916 = vmatprep.subr.bf16.mxu0 0
      %5917 = vmatpush2.bf16.msra.mxu0 0
      %5918 = vmatprep.subr.bf16.mxu0 0
      %5919 = vmatpush2.bf16.msra.mxu0 0
      %5920 = vmatprep.subr.bf16.mxu0 0
      %5921 = vmatpush2.bf16.msra.mxu0 0
      %5922 = vmatprep.subr.bf16.mxu0 0
      %5923 = vmatpush2.bf16.msra.mxu0 0
      %5924 = vmatprep.subr.bf16.mxu0 0
      %5925 = vmatpush2.bf16.msra.mxu0 0
      %5926 = vmatprep.mubr.bf16.mxu0 0
      %5927 = vmatmul.mubr.bf16.gmra.mxu0 %v5006
      %v5928 = vpop.f32.mrf.mxu0
      %v5929 = vadd.f32 %v5886, %v5928
      %v5930 = vpop.f32.mrf.mxu0
      %v5931 = vadd.f32 %v5888, %v5930
      %v5932 = vpop.f32.mrf.mxu0
      %v5933 = vadd.f32 %v5890, %v5932
      %v5934 = vpop.f32.mrf.mxu0
      %v5935 = vadd.f32 %v5892, %v5934
      %5936 = vdwg.mxu0
      %5937 = vmatprep.subr.bf16.mxu0 0
      %5938 = vmatpush1.bf16.msra.mxu0 %v5591
      %5939 = vmatprep.subr.bf16.mxu0 0
      %5940 = vmatpush1.bf16.msra.mxu0 %v5588
      %5941 = vmatprep.subr.bf16.mxu0 0
      %5942 = vmatpush1.bf16.msra.mxu0 %v5585
      %5943 = vmatprep.subr.bf16.mxu0 0
      %5944 = vmatpush1.bf16.msra.mxu0 %v5582
      %5945 = vmatprep.subr.bf16.mxu0 0
      %5946 = vmatpush1.bf16.msra.mxu0 %v5579
      %5947 = vmatprep.subr.bf16.mxu0 0
      %5948 = vmatpush1.bf16.msra.mxu0 %v5576
      %5949 = vmatprep.subr.bf16.mxu0 0
      %5950 = vmatpush1.bf16.msra.mxu0 %v5573
      %5951 = vmatprep.subr.bf16.mxu0 0
      %5952 = vmatpush1.bf16.msra.mxu0 %v5570
      %5953 = vmatprep.subr.bf16.mxu0 0
      %5954 = vmatpush2.bf16.msra.mxu0 %v5615
      %5955 = vmatprep.subr.bf16.mxu0 0
      %5956 = vmatpush2.bf16.msra.mxu0 %v5612
      %5957 = vmatprep.subr.bf16.mxu0 0
      %5958 = vmatpush2.bf16.msra.mxu0 %v5609
      %5959 = vmatprep.subr.bf16.mxu0 0
      %5960 = vmatpush2.bf16.msra.mxu0 %v5606
      %5961 = vmatprep.subr.bf16.mxu0 0
      %5962 = vmatpush2.bf16.msra.mxu0 %v5603
      %5963 = vmatprep.subr.bf16.mxu0 0
      %5964 = vmatpush2.bf16.msra.mxu0 %v5600
      %5965 = vmatprep.subr.bf16.mxu0 0
      %5966 = vmatpush2.bf16.msra.mxu0 %v5597
      %5967 = vmatprep.subr.bf16.mxu0 0
      %5968 = vmatpush2.bf16.msra.mxu0 %v5594
      %5969 = vmatprep.mubr.bf16.mxu0 %v5003
      %5970 = vmatmul.mubr.bf16.gmra.mxu0 %v5002
      %v5971 = vpop.f32.mrf.mxu0
      %v5972 = vadd.f32 0.0, %v5971
      %v5973 = vpop.f32.mrf.mxu0
      %v5974 = vpop.f32.mrf.mxu0
      %v5975 = vadd.f32 0.0, %v5974
      %v5976 = vpop.f32.mrf.mxu0
      %5977 = vdwg.mxu0
      %5978 = vmatprep.subr.bf16.mxu0 0
      %5979 = vmatpush1.bf16.msra.mxu0 %v5639
      %5980 = vmatprep.subr.bf16.mxu0 0
      %5981 = vmatpush1.bf16.msra.mxu0 %v5636
      %5982 = vmatprep.subr.bf16.mxu0 0
      %5983 = vmatpush1.bf16.msra.mxu0 %v5633
      %5984 = vmatprep.subr.bf16.mxu0 0
      %5985 = vmatpush1.bf16.msra.mxu0 %v5630
      %5986 = vmatprep.subr.bf16.mxu0 0
      %5987 = vmatpush1.bf16.msra.mxu0 %v5627
      %5988 = vmatprep.subr.bf16.mxu0 0
      %5989 = vmatpush1.bf16.msra.mxu0 %v5624
      %5990 = vmatprep.subr.bf16.mxu0 0
      %5991 = vmatpush1.bf16.msra.mxu0 %v5621
      %5992 = vmatprep.subr.bf16.mxu0 0
      %5993 = vmatpush1.bf16.msra.mxu0 %v5618
      %5994 = vmatprep.subr.bf16.mxu0 0
      %5995 = vmatpush2.bf16.msra.mxu0 %v5663
      %5996 = vmatprep.subr.bf16.mxu0 0
      %5997 = vmatpush2.bf16.msra.mxu0 %v5660
      %5998 = vmatprep.subr.bf16.mxu0 0
      %5999 = vmatpush2.bf16.msra.mxu0 %v5657
      %6000 = vmatprep.subr.bf16.mxu0 0
      %6001 = vmatpush2.bf16.msra.mxu0 %v5654
      %6002 = vmatprep.subr.bf16.mxu0 0
      %6003 = vmatpush2.bf16.msra.mxu0 %v5651
      %6004 = vmatprep.subr.bf16.mxu0 0
      %6005 = vmatpush2.bf16.msra.mxu0 %v5648
      %6006 = vmatprep.subr.bf16.mxu0 0
      %6007 = vmatpush2.bf16.msra.mxu0 %v5645
      %6008 = vmatprep.subr.bf16.mxu0 0
      %6009 = vmatpush2.bf16.msra.mxu0 %v5642
      %6010 = vmatprep.mubr.bf16.mxu0 %v5005
      %6011 = vmatmul.mubr.bf16.gmra.mxu0 %v5004
      %v6012 = vpop.f32.mrf.mxu0
      %v6013 = vadd.f32 %v5972, %v6012
      %v6014 = vpop.f32.mrf.mxu0
      %v6015 = vpop.f32.mrf.mxu0
      %v6016 = vadd.f32 %v5975, %v6015
      %v6017 = vpop.f32.mrf.mxu0
      %6018 = vdwg.mxu0
      %6019 = vmatprep.subr.bf16.mxu0 0
      %6020 = vmatpush1.bf16.msra.mxu0 %v5687
      %6021 = vmatprep.subr.bf16.mxu0 0
      %6022 = vmatpush1.bf16.msra.mxu0 %v5684
      %6023 = vmatprep.subr.bf16.mxu0 0
      %6024 = vmatpush1.bf16.msra.mxu0 %v5681
      %6025 = vmatprep.subr.bf16.mxu0 0
      %6026 = vmatpush1.bf16.msra.mxu0 %v5678
      %6027 = vmatprep.subr.bf16.mxu0 0
      %6028 = vmatpush1.bf16.msra.mxu0 %v5675
      %6029 = vmatprep.subr.bf16.mxu0 0
      %6030 = vmatpush1.bf16.msra.mxu0 %v5672
      %6031 = vmatprep.subr.bf16.mxu0 0
      %6032 = vmatpush1.bf16.msra.mxu0 %v5669
      %6033 = vmatprep.subr.bf16.mxu0 0
      %6034 = vmatpush1.bf16.msra.mxu0 %v5666
      %6035 = vmatprep.subr.bf16.mxu0 0
      %6036 = vmatpush2.bf16.msra.mxu0 0
      %6037 = vmatprep.subr.bf16.mxu0 0
      %6038 = vmatpush2.bf16.msra.mxu0 0
      %6039 = vmatprep.subr.bf16.mxu0 0
      %6040 = vmatpush2.bf16.msra.mxu0 0
      %6041 = vmatprep.subr.bf16.mxu0 0
      %6042 = vmatpush2.bf16.msra.mxu0 0
      %6043 = vmatprep.subr.bf16.mxu0 0
      %6044 = vmatpush2.bf16.msra.mxu0 0
      %6045 = vmatprep.subr.bf16.mxu0 0
      %6046 = vmatpush2.bf16.msra.mxu0 0
      %6047 = vmatprep.subr.bf16.mxu0 0
      %6048 = vmatpush2.bf16.msra.mxu0 0
      %6049 = vmatprep.subr.bf16.mxu0 0
      %6050 = vmatpush2.bf16.msra.mxu0 0
      %6051 = vmatprep.mubr.bf16.mxu0 0
      %6052 = vmatmul.mubr.bf16.gmra.mxu0 %v5006
      %v6053 = vpop.f32.mrf.mxu0
      %v6054 = vadd.f32 %v6013, %v6053
      %v6055 = vpop.f32.mrf.mxu0
      %v6056 = vpop.f32.mrf.mxu0
      %v6057 = vadd.f32 %v6016, %v6056
      %v6058 = vpop.f32.mrf.mxu0
      %6059 = vdwg.mxu0
      %v6220 = vunpack.c.l.b16 %v4704
      %v6221 = vunpack.c.h.b16 %v4704
      %v6222 = vunpack.c.l.b16 %v4705
      %v6223 = vunpack.c.l.b16 %v4706
      %v6224 = vunpack.c.h.b16 %v4706
      %v6225 = vunpack.c.l.b16 %v4707
      %v6226 = vunpack.c.l.b16 %v4708
      %v6227 = vunpack.c.h.b16 %v4708
      %v6228 = vunpack.c.l.b16 %v4709
      %v6229 = vunpack.c.l.b16 %v4710
      %v6230 = vunpack.c.h.b16 %v4710
      %v6231 = vunpack.c.l.b16 %v4711
      %v6232 = vunpack.c.l.b16 %v4712
      %v6233 = vunpack.c.h.b16 %v4712
      %v6234 = vunpack.c.l.b16 %v4713
      %v6235 = vunpack.c.l.b16 %v4714
      %v6236 = vunpack.c.h.b16 %v4714
      %v6237 = vunpack.c.l.b16 %v4715
      %v6238 = vunpack.c.l.b16 %v4716
      %v6239 = vunpack.c.h.b16 %v4716
      %v6240 = vunpack.c.l.b16 %v4717
      %v6241 = vunpack.c.l.b16 %v4718
      %v6242 = vunpack.c.h.b16 %v4718
      %v6243 = vunpack.c.l.b16 %v4719
      %v6244 = vunpack.c.l.b16 %v4720
      %v6245 = vunpack.c.h.b16 %v4720
      %v6246 = vunpack.c.l.b16 %v4721
      %v6247 = vunpack.c.l.b16 %v4722
      %v6248 = vunpack.c.h.b16 %v4722
      %v6249 = vunpack.c.l.b16 %v4723
      %v6250 = vunpack.c.l.b16 %v4724
      %v6251 = vunpack.c.h.b16 %v4724
      %v6252 = vunpack.c.l.b16 %v4725
      %v6253 = vunpack.c.l.b16 %v4726
      %v6254 = vunpack.c.h.b16 %v4726
      %v6255 = vunpack.c.l.b16 %v4727
      %v6256 = vunpack.c.l.b16 %v4728
      %v6257 = vunpack.c.h.b16 %v4728
      %v6258 = vunpack.c.l.b16 %v4729
      %v6259 = vunpack.c.l.b16 %v4730
      %v6260 = vunpack.c.h.b16 %v4730
      %v6261 = vunpack.c.l.b16 %v4731
      %v6262 = vunpack.c.l.b16 %v4732
      %v6263 = vunpack.c.h.b16 %v4732
      %v6264 = vunpack.c.l.b16 %v4733
      %v6265 = vunpack.c.l.b16 %v4734
      %v6266 = vunpack.c.h.b16 %v4734
      %v6267 = vunpack.c.l.b16 %v4735
      %v6268 = vunpack.c.l.b16 %v4736
      %v6269 = vunpack.c.h.b16 %v4736
      %v6270 = vunpack.c.l.b16 %v4737
      %v6271 = vunpack.c.l.b16 %v4738
      %v6272 = vunpack.c.h.b16 %v4738
      %v6273 = vunpack.c.l.b16 %v4739
      %v6274 = vunpack.c.l.b16 %v4740
      %v6275 = vunpack.c.h.b16 %v4740
      %v6276 = vunpack.c.l.b16 %v4741
      %v6277 = vunpack.c.l.b16 %v4742
      %v6278 = vunpack.c.h.b16 %v4742
      %v6279 = vunpack.c.l.b16 %v4743
      %v6280 = vunpack.c.l.b16 %v4744
      %v6281 = vunpack.c.h.b16 %v4744
      %v6282 = vunpack.c.l.b16 %v4745
      %v6283 = vunpack.c.l.b16 %v4746
      %v6284 = vunpack.c.h.b16 %v4746
      %v6285 = vunpack.c.l.b16 %v4747
      %v6286 = vunpack.c.l.b16 %v4748
      %v6287 = vunpack.c.h.b16 %v4748
      %v6288 = vunpack.c.l.b16 %v4749
      %v6289 = vunpack.c.l.b16 %v4750
      %v6290 = vunpack.c.h.b16 %v4750
      %v6291 = vunpack.c.l.b16 %v4751
      %v6292 = vunpack.c.l.b16 %v4752
      %v6293 = vunpack.c.h.b16 %v4752
      %v6294 = vunpack.c.l.b16 %v4753
      %v6295 = vunpack.c.l.b16 %v4754
      %v6296 = vunpack.c.h.b16 %v4754
      %v6297 = vunpack.c.l.b16 %v4755
      %v6298 = vunpack.c.l.b16 %v4756
      %v6299 = vunpack.c.h.b16 %v4756
      %v6300 = vunpack.c.l.b16 %v4757
      %v6301 = vunpack.c.l.b16 %v4758
      %v6302 = vunpack.c.h.b16 %v4758
      %v6303 = vunpack.c.l.b16 %v4759
      %v6304 = vunpack.c.l.b16 %v4760
      %v6305 = vunpack.c.h.b16 %v4760
      %v6306 = vunpack.c.l.b16 %v4761
      %v6307 = vunpack.c.l.b16 %v4762
      %v6308 = vunpack.c.h.b16 %v4762
      %v6309 = vunpack.c.l.b16 %v4763
      %v6310 = vunpack.c.l.b16 %v4764
      %v6311 = vunpack.c.h.b16 %v4764
      %v6312 = vunpack.c.l.b16 %v4765
      %v6313 = vunpack.c.l.b16 %v4766
      %v6314 = vunpack.c.h.b16 %v4766
      %v6315 = vunpack.c.l.b16 %v4767
      %v6316 = vunpack.c.l.b16 %v4768
      %v6317 = vunpack.c.h.b16 %v4768
      %v6318 = vunpack.c.l.b16 %v4769
      %v6319 = vunpack.c.l.b16 %v4770
      %v6320 = vunpack.c.h.b16 %v4770
      %v6321 = vunpack.c.l.b16 %v4771
      %v6322 = vunpack.c.l.b16 %v4772
      %v6323 = vunpack.c.h.b16 %v4772
      %v6324 = vunpack.c.l.b16 %v4773
      %v6325 = vunpack.c.l.b16 %v4774
      %v6326 = vunpack.c.h.b16 %v4774
      %v6327 = vunpack.c.l.b16 %v4775
      %v6328 = vunpack.c.l.b16 %v4776
      %v6329 = vunpack.c.h.b16 %v4776
      %v6330 = vunpack.c.l.b16 %v4777
      %v6331 = vunpack.c.l.b16 %v4778
      %v6332 = vunpack.c.h.b16 %v4778
      %v6333 = vunpack.c.l.b16 %v4779
      %v6334 = vunpack.c.l.b16 %v4780
      %v6335 = vunpack.c.h.b16 %v4780
      %v6336 = vunpack.c.l.b16 %v4781
      %v6337 = vunpack.c.l.b16 %v4782
      %v6338 = vunpack.c.h.b16 %v4782
      %v6339 = vunpack.c.l.b16 %v4783
      %v6340 = vunpack.c.l.b16 %v4784
      %v6341 = vunpack.c.h.b16 %v4784
      %v6342 = vunpack.c.l.b16 %v4785
      %v6343 = vunpack.c.l.b16 %v4786
      %v6344 = vunpack.c.h.b16 %v4786
      %v6345 = vunpack.c.l.b16 %v4787
      %v6346 = vunpack.c.l.b16 %v4788
      %v6347 = vunpack.c.h.b16 %v4788
      %v6348 = vunpack.c.l.b16 %v4789
      %v6349 = vunpack.c.l.b16 %v4790
      %v6350 = vunpack.c.h.b16 %v4790
      %v6351 = vunpack.c.l.b16 %v4791
      %v6352 = vunpack.c.l.b16 %v4792
      %v6353 = vunpack.c.h.b16 %v4792
      %v6354 = vunpack.c.l.b16 %v4793
      %v6355 = vunpack.c.l.b16 %v4794
      %v6356 = vunpack.c.h.b16 %v4794
      %v6357 = vunpack.c.l.b16 %v4795
      %v6358 = vunpack.c.l.b16 %v4796
      %v6359 = vunpack.c.h.b16 %v4796
      %v6360 = vunpack.c.l.b16 %v4797
      %v6361 = vunpack.c.l.b16 %v4798
      %v6362 = vunpack.c.h.b16 %v4798
      %v6363 = vunpack.c.l.b16 %v4799
      %v6364 = vunpack.c.l.b16 %v4800
      %v6365 = vunpack.c.h.b16 %v4800
      %v6366 = vunpack.c.l.b16 %v4801
      %v6367 = vunpack.c.l.b16 %v4802
      %v6368 = vunpack.c.h.b16 %v4802
      %v6369 = vunpack.c.l.b16 %v4803
      %v6370 = vunpack.c.l.b16 %v4804
      %v6371 = vunpack.c.h.b16 %v4804
      %v6372 = vunpack.c.l.b16 %v4805
      %v6373 = vunpack.c.l.b16 %v4806
      %v6374 = vunpack.c.h.b16 %v4806
      %v6375 = vunpack.c.l.b16 %v4807
      %v6376 = vunpack.c.l.b16 %v4808
      %v6377 = vunpack.c.h.b16 %v4808
      %v6378 = vunpack.c.l.b16 %v4809
      %v6379 = vunpack.c.l.b16 %v4810
      %v6380 = vunpack.c.h.b16 %v4810
      %v6381 = vunpack.c.l.b16 %v4811
      %v6382 = vunpack.c.l.b16 %v4812
      %v6383 = vunpack.c.h.b16 %v4812
      %v6384 = vunpack.c.l.b16 %v4813
      %v6385 = vunpack.c.l.b16 %v4814
      %v6386 = vunpack.c.h.b16 %v4814
      %v6387 = vunpack.c.l.b16 %v4815
      %v6388 = vunpack.c.l.b16 %v4816
      %v6389 = vunpack.c.h.b16 %v4816
      %v6390 = vunpack.c.l.b16 %v4817
      %v6391 = vunpack.c.l.b16 %v4818
      %v6392 = vunpack.c.h.b16 %v4818
      %v6393 = vunpack.c.l.b16 %v4819
      %v6394 = vunpack.c.l.b16 %v4820
      %v6395 = vunpack.c.h.b16 %v4820
      %v6396 = vunpack.c.l.b16 %v4821
      %v6397 = vunpack.c.l.b16 %v4822
      %v6398 = vunpack.c.h.b16 %v4822
      %v6399 = vunpack.c.l.b16 %v4823
      %v6400 = vunpack.c.l.b16 %v4824
      %v6401 = vunpack.c.h.b16 %v4824
      %v6402 = vunpack.c.l.b16 %v4825
      %v6403 = vunpack.c.l.b16 %v4826
      %v6404 = vunpack.c.h.b16 %v4826
      %v6405 = vunpack.c.l.b16 %v4827
      %v6406 = vunpack.c.l.b16 %v4828
      %v6407 = vunpack.c.h.b16 %v4828
      %v6408 = vunpack.c.l.b16 %v4829
      %v6409 = vunpack.c.l.b16 %v4830
      %v6410 = vunpack.c.h.b16 %v4830
      %v6411 = vunpack.c.l.b16 %v4831
      %v6412 = vunpack.c.l.b16 %v4832
      %v6413 = vunpack.c.h.b16 %v4832
      %v6414 = vunpack.c.l.b16 %v4833
      %v6415 = vunpack.c.l.b16 %v4834
      %v6416 = vunpack.c.h.b16 %v4834
      %v6417 = vunpack.c.l.b16 %v4835
      %v6418 = vunpack.c.l.b16 %v4836
      %v6419 = vunpack.c.h.b16 %v4836
      %v6420 = vunpack.c.l.b16 %v4837
      %v6421 = vunpack.c.l.b16 %v4838
      %v6422 = vunpack.c.h.b16 %v4838
      %v6423 = vunpack.c.l.b16 %v4839
      %v6424 = vunpack.c.l.b16 %v4840
      %v6425 = vunpack.c.h.b16 %v4840
      %v6426 = vunpack.c.l.b16 %v4841
      %v6427 = vunpack.c.l.b16 %v4842
      %v6428 = vunpack.c.h.b16 %v4842
      %v6429 = vunpack.c.l.b16 %v4843
      %v6430 = vunpack.c.l.b16 %v4844
      %v6431 = vunpack.c.h.b16 %v4844
      %v6432 = vunpack.c.l.b16 %v4845
      %v6433 = vunpack.c.l.b16 %v4846
      %v6434 = vunpack.c.h.b16 %v4846
      %v6435 = vunpack.c.l.b16 %v4847
      %v6436 = vunpack.c.l.b16 %v4848
      %v6437 = vunpack.c.h.b16 %v4848
      %v6438 = vunpack.c.l.b16 %v4849
      %v6439 = vunpack.c.l.b16 %v4850
      %v6440 = vunpack.c.h.b16 %v4850
      %v6441 = vunpack.c.l.b16 %v4851
      %v6442 = vunpack.c.l.b16 %v4852
      %v6443 = vunpack.c.h.b16 %v4852
      %v6444 = vunpack.c.l.b16 %v4853
      %v6445 = vunpack.c.l.b16 %v4854
      %v6446 = vunpack.c.h.b16 %v4854
      %v6447 = vunpack.c.l.b16 %v4855
      %v6448 = vunpack.c.l.b16 %v4856
      %v6449 = vunpack.c.h.b16 %v4856
      %v6450 = vunpack.c.l.b16 %v4857
      %v6451 = vunpack.c.l.b16 %v4858
      %v6452 = vunpack.c.h.b16 %v4858
      %v6453 = vunpack.c.l.b16 %v4859
      %v6454 = vunpack.c.l.b16 %v4860
      %v6455 = vunpack.c.h.b16 %v4860
      %v6456 = vunpack.c.l.b16 %v4861
      %v6457 = vunpack.c.l.b16 %v4862
      %v6458 = vunpack.c.h.b16 %v4862
      %v6459 = vunpack.c.l.b16 %v4863
      %v6460 = vpack.c.b16 %v6223, %v6220
      %v6461 = vpack.c.b16 %v6224, %v6221
      %v6462 = vpack.c.b16 %v6225, %v6222
      %v6463 = vpack.c.b16 %v6229, %v6226
      %v6464 = vpack.c.b16 %v6230, %v6227
      %v6465 = vpack.c.b16 %v6231, %v6228
      %v6466 = vpack.c.b16 %v6235, %v6232
      %v6467 = vpack.c.b16 %v6236, %v6233
      %v6468 = vpack.c.b16 %v6237, %v6234
      %v6469 = vpack.c.b16 %v6241, %v6238
      %v6470 = vpack.c.b16 %v6242, %v6239
      %v6471 = vpack.c.b16 %v6243, %v6240
      %v6472 = vpack.c.b16 %v6247, %v6244
      %v6473 = vpack.c.b16 %v6248, %v6245
      %v6474 = vpack.c.b16 %v6249, %v6246
      %v6475 = vpack.c.b16 %v6253, %v6250
      %v6476 = vpack.c.b16 %v6254, %v6251
      %v6477 = vpack.c.b16 %v6255, %v6252
      %v6478 = vpack.c.b16 %v6259, %v6256
      %v6479 = vpack.c.b16 %v6260, %v6257
      %v6480 = vpack.c.b16 %v6261, %v6258
      %v6481 = vpack.c.b16 %v6265, %v6262
      %v6482 = vpack.c.b16 %v6266, %v6263
      %v6483 = vpack.c.b16 %v6267, %v6264
      %v6484 = vpack.c.b16 %v6271, %v6268
      %v6485 = vpack.c.b16 %v6272, %v6269
      %v6486 = vpack.c.b16 %v6273, %v6270
      %v6487 = vpack.c.b16 %v6277, %v6274
      %v6488 = vpack.c.b16 %v6278, %v6275
      %v6489 = vpack.c.b16 %v6279, %v6276
      %v6490 = vpack.c.b16 %v6283, %v6280
      %v6491 = vpack.c.b16 %v6284, %v6281
      %v6492 = vpack.c.b16 %v6285, %v6282
      %v6493 = vpack.c.b16 %v6289, %v6286
      %v6494 = vpack.c.b16 %v6290, %v6287
      %v6495 = vpack.c.b16 %v6291, %v6288
      %v6496 = vpack.c.b16 %v6295, %v6292
      %v6497 = vpack.c.b16 %v6296, %v6293
      %v6498 = vpack.c.b16 %v6297, %v6294
      %v6499 = vpack.c.b16 %v6301, %v6298
      %v6500 = vpack.c.b16 %v6302, %v6299
      %v6501 = vpack.c.b16 %v6303, %v6300
      %v6502 = vpack.c.b16 %v6307, %v6304
      %v6503 = vpack.c.b16 %v6308, %v6305
      %v6504 = vpack.c.b16 %v6309, %v6306
      %v6505 = vpack.c.b16 %v6313, %v6310
      %v6506 = vpack.c.b16 %v6314, %v6311
      %v6507 = vpack.c.b16 %v6315, %v6312
      %v6508 = vpack.c.b16 %v6319, %v6316
      %v6509 = vpack.c.b16 %v6320, %v6317
      %v6510 = vpack.c.b16 %v6321, %v6318
      %v6511 = vpack.c.b16 %v6325, %v6322
      %v6512 = vpack.c.b16 %v6326, %v6323
      %v6513 = vpack.c.b16 %v6327, %v6324
      %v6514 = vpack.c.b16 %v6331, %v6328
      %v6515 = vpack.c.b16 %v6332, %v6329
      %v6516 = vpack.c.b16 %v6333, %v6330
      %v6517 = vpack.c.b16 %v6337, %v6334
      %v6518 = vpack.c.b16 %v6338, %v6335
      %v6519 = vpack.c.b16 %v6339, %v6336
      %v6520 = vpack.c.b16 %v6343, %v6340
      %v6521 = vpack.c.b16 %v6344, %v6341
      %v6522 = vpack.c.b16 %v6345, %v6342
      %v6523 = vpack.c.b16 %v6349, %v6346
      %v6524 = vpack.c.b16 %v6350, %v6347
      %v6525 = vpack.c.b16 %v6351, %v6348
      %v6526 = vpack.c.b16 %v6355, %v6352
      %v6527 = vpack.c.b16 %v6356, %v6353
      %v6528 = vpack.c.b16 %v6357, %v6354
      %v6529 = vpack.c.b16 %v6361, %v6358
      %v6530 = vpack.c.b16 %v6362, %v6359
      %v6531 = vpack.c.b16 %v6363, %v6360
      %v6532 = vpack.c.b16 %v6367, %v6364
      %v6533 = vpack.c.b16 %v6368, %v6365
      %v6534 = vpack.c.b16 %v6369, %v6366
      %v6535 = vpack.c.b16 %v6373, %v6370
      %v6536 = vpack.c.b16 %v6374, %v6371
      %v6537 = vpack.c.b16 %v6375, %v6372
      %v6538 = vpack.c.b16 %v6379, %v6376
      %v6539 = vpack.c.b16 %v6380, %v6377
      %v6540 = vpack.c.b16 %v6381, %v6378
      %v6541 = vpack.c.b16 %v6385, %v6382
      %v6542 = vpack.c.b16 %v6386, %v6383
      %v6543 = vpack.c.b16 %v6387, %v6384
      %v6544 = vpack.c.b16 %v6391, %v6388
      %v6545 = vpack.c.b16 %v6392, %v6389
      %v6546 = vpack.c.b16 %v6393, %v6390
      %v6547 = vpack.c.b16 %v6397, %v6394
      %v6548 = vpack.c.b16 %v6398, %v6395
      %v6549 = vpack.c.b16 %v6399, %v6396
      %v6550 = vpack.c.b16 %v6403, %v6400
      %v6551 = vpack.c.b16 %v6404, %v6401
      %v6552 = vpack.c.b16 %v6405, %v6402
      %v6553 = vpack.c.b16 %v6409, %v6406
      %v6554 = vpack.c.b16 %v6410, %v6407
      %v6555 = vpack.c.b16 %v6411, %v6408
      %v6556 = vpack.c.b16 %v6415, %v6412
      %v6557 = vpack.c.b16 %v6416, %v6413
      %v6558 = vpack.c.b16 %v6417, %v6414
      %v6559 = vpack.c.b16 %v6421, %v6418
      %v6560 = vpack.c.b16 %v6422, %v6419
      %v6561 = vpack.c.b16 %v6423, %v6420
      %v6562 = vpack.c.b16 %v6427, %v6424
      %v6563 = vpack.c.b16 %v6428, %v6425
      %v6564 = vpack.c.b16 %v6429, %v6426
      %v6565 = vpack.c.b16 %v6433, %v6430
      %v6566 = vpack.c.b16 %v6434, %v6431
      %v6567 = vpack.c.b16 %v6435, %v6432
      %v6568 = vpack.c.b16 %v6439, %v6436
      %v6569 = vpack.c.b16 %v6440, %v6437
      %v6570 = vpack.c.b16 %v6441, %v6438
      %v6571 = vpack.c.b16 %v6445, %v6442
      %v6572 = vpack.c.b16 %v6446, %v6443
      %v6573 = vpack.c.b16 %v6447, %v6444
      %v6574 = vpack.c.b16 %v6451, %v6448
      %v6575 = vpack.c.b16 %v6452, %v6449
      %v6576 = vpack.c.b16 %v6453, %v6450
      %v6577 = vpack.c.b16 %v6457, %v6454
      %v6578 = vpack.c.b16 %v6458, %v6455
      %v6579 = vpack.c.b16 %v6459, %v6456
      %6700 = vmatprep.subr.bf16.mxu0 %v6482
      %6701 = vmatpush1.bf16.msra.mxu0 %v6481
      %6702 = vmatprep.subr.bf16.mxu0 %v6479
      %6703 = vmatpush1.bf16.msra.mxu0 %v6478
      %6704 = vmatprep.subr.bf16.mxu0 %v6476
      %6705 = vmatpush1.bf16.msra.mxu0 %v6475
      %6706 = vmatprep.subr.bf16.mxu0 %v6473
      %6707 = vmatpush1.bf16.msra.mxu0 %v6472
      %6708 = vmatprep.subr.bf16.mxu0 %v6470
      %6709 = vmatpush1.bf16.msra.mxu0 %v6469
      %6710 = vmatprep.subr.bf16.mxu0 %v6467
      %6711 = vmatpush1.bf16.msra.mxu0 %v6466
      %6712 = vmatprep.subr.bf16.mxu0 %v6464
      %6713 = vmatpush1.bf16.msra.mxu0 %v6463
      %6714 = vmatprep.subr.bf16.mxu0 %v6461
      %6715 = vmatpush1.bf16.msra.mxu0 %v6460
      %6716 = vmatprep.subr.bf16.mxu0 %v6506
      %6717 = vmatpush2.bf16.msra.mxu0 %v6505
      %6718 = vmatprep.subr.bf16.mxu0 %v6503
      %6719 = vmatpush2.bf16.msra.mxu0 %v6502
      %6720 = vmatprep.subr.bf16.mxu0 %v6500
      %6721 = vmatpush2.bf16.msra.mxu0 %v6499
      %6722 = vmatprep.subr.bf16.mxu0 %v6497
      %6723 = vmatpush2.bf16.msra.mxu0 %v6496
      %6724 = vmatprep.subr.bf16.mxu0 %v6494
      %6725 = vmatpush2.bf16.msra.mxu0 %v6493
      %6726 = vmatprep.subr.bf16.mxu0 %v6491
      %6727 = vmatpush2.bf16.msra.mxu0 %v6490
      %6728 = vmatprep.subr.bf16.mxu0 %v6488
      %6729 = vmatpush2.bf16.msra.mxu0 %v6487
      %6730 = vmatprep.subr.bf16.mxu0 %v6485
      %6731 = vmatpush2.bf16.msra.mxu0 %v6484
      %6732 = vmatprep.mubr.bf16.mxu0 %v4700
      %6733 = vmatmul.mubr.bf16.gmra.mxu0 %v4699
      %v6734 = vpop.f32.mrf.mxu0
      %v6735 = vadd.f32 %v5929, %v6734
      %v6736 = vpop.f32.mrf.mxu0
      %v6737 = vadd.f32 %v5931, %v6736
      %v6738 = vpop.f32.mrf.mxu0
      %v6739 = vadd.f32 %v5933, %v6738
      %v6740 = vpop.f32.mrf.mxu0
      %v6741 = vadd.f32 %v5935, %v6740
      %6742 = vdwg.mxu0
      %6743 = vmatprep.subr.bf16.mxu0 %v6530
      %6744 = vmatpush1.bf16.msra.mxu0 %v6529
      %6745 = vmatprep.subr.bf16.mxu0 %v6527
      %6746 = vmatpush1.bf16.msra.mxu0 %v6526
      %6747 = vmatprep.subr.bf16.mxu0 %v6524
      %6748 = vmatpush1.bf16.msra.mxu0 %v6523
      %6749 = vmatprep.subr.bf16.mxu0 %v6521
      %6750 = vmatpush1.bf16.msra.mxu0 %v6520
      %6751 = vmatprep.subr.bf16.mxu0 %v6518
      %6752 = vmatpush1.bf16.msra.mxu0 %v6517
      %6753 = vmatprep.subr.bf16.mxu0 %v6515
      %6754 = vmatpush1.bf16.msra.mxu0 %v6514
      %6755 = vmatprep.subr.bf16.mxu0 %v6512
      %6756 = vmatpush1.bf16.msra.mxu0 %v6511
      %6757 = vmatprep.subr.bf16.mxu0 %v6509
      %6758 = vmatpush1.bf16.msra.mxu0 %v6508
      %6759 = vmatprep.subr.bf16.mxu0 %v6554
      %6760 = vmatpush2.bf16.msra.mxu0 %v6553
      %6761 = vmatprep.subr.bf16.mxu0 %v6551
      %6762 = vmatpush2.bf16.msra.mxu0 %v6550
      %6763 = vmatprep.subr.bf16.mxu0 %v6548
      %6764 = vmatpush2.bf16.msra.mxu0 %v6547
      %6765 = vmatprep.subr.bf16.mxu0 %v6545
      %6766 = vmatpush2.bf16.msra.mxu0 %v6544
      %6767 = vmatprep.subr.bf16.mxu0 %v6542
      %6768 = vmatpush2.bf16.msra.mxu0 %v6541
      %6769 = vmatprep.subr.bf16.mxu0 %v6539
      %6770 = vmatpush2.bf16.msra.mxu0 %v6538
      %6771 = vmatprep.subr.bf16.mxu0 %v6536
      %6772 = vmatpush2.bf16.msra.mxu0 %v6535
      %6773 = vmatprep.subr.bf16.mxu0 %v6533
      %6774 = vmatpush2.bf16.msra.mxu0 %v6532
      %6775 = vmatprep.mubr.bf16.mxu0 %v4702
      %6776 = vmatmul.mubr.bf16.gmra.mxu0 %v4701
      %v6777 = vpop.f32.mrf.mxu0
      %v6778 = vadd.f32 %v6735, %v6777
      %v6779 = vpop.f32.mrf.mxu0
      %v6780 = vadd.f32 %v6737, %v6779
      %v6781 = vpop.f32.mrf.mxu0
      %v6782 = vadd.f32 %v6739, %v6781
      %v6783 = vpop.f32.mrf.mxu0
      %v6784 = vadd.f32 %v6741, %v6783
      %6785 = vdwg.mxu0
      %6786 = vmatprep.subr.bf16.mxu0 %v6578
      %6787 = vmatpush1.bf16.msra.mxu0 %v6577
      %6788 = vmatprep.subr.bf16.mxu0 %v6575
      %6789 = vmatpush1.bf16.msra.mxu0 %v6574
      %6790 = vmatprep.subr.bf16.mxu0 %v6572
      %6791 = vmatpush1.bf16.msra.mxu0 %v6571
      %6792 = vmatprep.subr.bf16.mxu0 %v6569
      %6793 = vmatpush1.bf16.msra.mxu0 %v6568
      %6794 = vmatprep.subr.bf16.mxu0 %v6566
      %6795 = vmatpush1.bf16.msra.mxu0 %v6565
      %6796 = vmatprep.subr.bf16.mxu0 %v6563
      %6797 = vmatpush1.bf16.msra.mxu0 %v6562
      %6798 = vmatprep.subr.bf16.mxu0 %v6560
      %6799 = vmatpush1.bf16.msra.mxu0 %v6559
      %6800 = vmatprep.subr.bf16.mxu0 %v6557
      %6801 = vmatpush1.bf16.msra.mxu0 %v6556
      %6802 = vmatprep.subr.bf16.mxu0 0
      %6803 = vmatpush2.bf16.msra.mxu0 0
      %6804 = vmatprep.subr.bf16.mxu0 0
      %6805 = vmatpush2.bf16.msra.mxu0 0
      %6806 = vmatprep.subr.bf16.mxu0 0
      %6807 = vmatpush2.bf16.msra.mxu0 0
      %6808 = vmatprep.subr.bf16.mxu0 0
      %6809 = vmatpush2.bf16.msra.mxu0 0
      %6810 = vmatprep.subr.bf16.mxu0 0
      %6811 = vmatpush2.bf16.msra.mxu0 0
      %6812 = vmatprep.subr.bf16.mxu0 0
      %6813 = vmatpush2.bf16.msra.mxu0 0
      %6814 = vmatprep.subr.bf16.mxu0 0
      %6815 = vmatpush2.bf16.msra.mxu0 0
      %6816 = vmatprep.subr.bf16.mxu0 0
      %6817 = vmatpush2.bf16.msra.mxu0 0
      %6818 = vmatprep.mubr.bf16.mxu0 0
      %6819 = vmatmul.mubr.bf16.gmra.mxu0 %v4703
      %v6820 = vpop.f32.mrf.mxu0
      %v6821 = vadd.f32 %v6778, %v6820
      %v6822 = vpop.f32.mrf.mxu0
      %v6823 = vadd.f32 %v6780, %v6822
      %v6824 = vpop.f32.mrf.mxu0
      %v6825 = vadd.f32 %v6782, %v6824
      %v6826 = vpop.f32.mrf.mxu0
      %v6827 = vadd.f32 %v6784, %v6826
      %6828 = vdwg.mxu0
      %6829 = vmatprep.subr.bf16.mxu0 0
      %6830 = vmatpush1.bf16.msra.mxu0 %v6483
      %6831 = vmatprep.subr.bf16.mxu0 0
      %6832 = vmatpush1.bf16.msra.mxu0 %v6480
      %6833 = vmatprep.subr.bf16.mxu0 0
      %6834 = vmatpush1.bf16.msra.mxu0 %v6477
      %6835 = vmatprep.subr.bf16.mxu0 0
      %6836 = vmatpush1.bf16.msra.mxu0 %v6474
      %6837 = vmatprep.subr.bf16.mxu0 0
      %6838 = vmatpush1.bf16.msra.mxu0 %v6471
      %6839 = vmatprep.subr.bf16.mxu0 0
      %6840 = vmatpush1.bf16.msra.mxu0 %v6468
      %6841 = vmatprep.subr.bf16.mxu0 0
      %6842 = vmatpush1.bf16.msra.mxu0 %v6465
      %6843 = vmatprep.subr.bf16.mxu0 0
      %6844 = vmatpush1.bf16.msra.mxu0 %v6462
      %6845 = vmatprep.subr.bf16.mxu0 0
      %6846 = vmatpush2.bf16.msra.mxu0 %v6507
      %6847 = vmatprep.subr.bf16.mxu0 0
      %6848 = vmatpush2.bf16.msra.mxu0 %v6504
      %6849 = vmatprep.subr.bf16.mxu0 0
      %6850 = vmatpush2.bf16.msra.mxu0 %v6501
      %6851 = vmatprep.subr.bf16.mxu0 0
      %6852 = vmatpush2.bf16.msra.mxu0 %v6498
      %6853 = vmatprep.subr.bf16.mxu0 0
      %6854 = vmatpush2.bf16.msra.mxu0 %v6495
      %6855 = vmatprep.subr.bf16.mxu0 0
      %6856 = vmatpush2.bf16.msra.mxu0 %v6492
      %6857 = vmatprep.subr.bf16.mxu0 0
      %6858 = vmatpush2.bf16.msra.mxu0 %v6489
      %6859 = vmatprep.subr.bf16.mxu0 0
      %6860 = vmatpush2.bf16.msra.mxu0 %v6486
      %6861 = vmatprep.mubr.bf16.mxu0 %v4700
      %6862 = vmatmul.mubr.bf16.gmra.mxu0 %v4699
      %v6863 = vpop.f32.mrf.mxu0
      %v6864 = vadd.f32 %v6054, %v6863
      %v6865 = vpop.f32.mrf.mxu0
      %v6866 = vpop.f32.mrf.mxu0
      %v6867 = vadd.f32 %v6057, %v6866
      %v6868 = vpop.f32.mrf.mxu0
      %6869 = vdwg.mxu0
      %6870 = vmatprep.subr.bf16.mxu0 0
      %6871 = vmatpush1.bf16.msra.mxu0 %v6531
      %6872 = vmatprep.subr.bf16.mxu0 0
      %6873 = vmatpush1.bf16.msra.mxu0 %v6528
      %6874 = vmatprep.subr.bf16.mxu0 0
      %6875 = vmatpush1.bf16.msra.mxu0 %v6525
      %6876 = vmatprep.subr.bf16.mxu0 0
      %6877 = vmatpush1.bf16.msra.mxu0 %v6522
      %6878 = vmatprep.subr.bf16.mxu0 0
      %6879 = vmatpush1.bf16.msra.mxu0 %v6519
      %6880 = vmatprep.subr.bf16.mxu0 0
      %6881 = vmatpush1.bf16.msra.mxu0 %v6516
      %6882 = vmatprep.subr.bf16.mxu0 0
      %6883 = vmatpush1.bf16.msra.mxu0 %v6513
      %6884 = vmatprep.subr.bf16.mxu0 0
      %6885 = vmatpush1.bf16.msra.mxu0 %v6510
      %6886 = vmatprep.subr.bf16.mxu0 0
      %6887 = vmatpush2.bf16.msra.mxu0 %v6555
      %6888 = vmatprep.subr.bf16.mxu0 0
      %6889 = vmatpush2.bf16.msra.mxu0 %v6552
      %6890 = vmatprep.subr.bf16.mxu0 0
      %6891 = vmatpush2.bf16.msra.mxu0 %v6549
      %6892 = vmatprep.subr.bf16.mxu0 0
      %6893 = vmatpush2.bf16.msra.mxu0 %v6546
      %6894 = vmatprep.subr.bf16.mxu0 0
      %6895 = vmatpush2.bf16.msra.mxu0 %v6543
      %6896 = vmatprep.subr.bf16.mxu0 0
      %6897 = vmatpush2.bf16.msra.mxu0 %v6540
      %6898 = vmatprep.subr.bf16.mxu0 0
      %6899 = vmatpush2.bf16.msra.mxu0 %v6537
      %6900 = vmatprep.subr.bf16.mxu0 0
      %6901 = vmatpush2.bf16.msra.mxu0 %v6534
      %6902 = vmatprep.mubr.bf16.mxu0 %v4702
      %6903 = vmatmul.mubr.bf16.gmra.mxu0 %v4701
      %v6904 = vpop.f32.mrf.mxu0
      %v6905 = vadd.f32 %v6864, %v6904
      %v6906 = vpop.f32.mrf.mxu0
      %v6907 = vpop.f32.mrf.mxu0
      %v6908 = vadd.f32 %v6867, %v6907
      %v6909 = vpop.f32.mrf.mxu0
      %6910 = vdwg.mxu0
      %6911 = vmatprep.subr.bf16.mxu0 0
      %6912 = vmatpush1.bf16.msra.mxu0 %v6579
      %6913 = vmatprep.subr.bf16.mxu0 0
      %6914 = vmatpush1.bf16.msra.mxu0 %v6576
      %6915 = vmatprep.subr.bf16.mxu0 0
      %6916 = vmatpush1.bf16.msra.mxu0 %v6573
      %6917 = vmatprep.subr.bf16.mxu0 0
      %6918 = vmatpush1.bf16.msra.mxu0 %v6570
      %6919 = vmatprep.subr.bf16.mxu0 0
      %6920 = vmatpush1.bf16.msra.mxu0 %v6567
      %6921 = vmatprep.subr.bf16.mxu0 0
      %6922 = vmatpush1.bf16.msra.mxu0 %v6564
      %6923 = vmatprep.subr.bf16.mxu0 0
      %6924 = vmatpush1.bf16.msra.mxu0 %v6561
      %6925 = vmatprep.subr.bf16.mxu0 0
      %6926 = vmatpush1.bf16.msra.mxu0 %v6558
      %6927 = vmatprep.subr.bf16.mxu0 0
      %6928 = vmatpush2.bf16.msra.mxu0 0
      %6929 = vmatprep.subr.bf16.mxu0 0
      %6930 = vmatpush2.bf16.msra.mxu0 0
      %6931 = vmatprep.subr.bf16.mxu0 0
      %6932 = vmatpush2.bf16.msra.mxu0 0
      %6933 = vmatprep.subr.bf16.mxu0 0
      %6934 = vmatpush2.bf16.msra.mxu0 0
      %6935 = vmatprep.subr.bf16.mxu0 0
      %6936 = vmatpush2.bf16.msra.mxu0 0
      %6937 = vmatprep.subr.bf16.mxu0 0
      %6938 = vmatpush2.bf16.msra.mxu0 0
      %6939 = vmatprep.subr.bf16.mxu0 0
      %6940 = vmatpush2.bf16.msra.mxu0 0
      %6941 = vmatprep.subr.bf16.mxu0 0
      %6942 = vmatpush2.bf16.msra.mxu0 0
      %6943 = vmatprep.mubr.bf16.mxu0 0
      %6944 = vmatmul.mubr.bf16.gmra.mxu0 %v4703
      %v6945 = vpop.f32.mrf.mxu0
      %v6946 = vadd.f32 %v6905, %v6945
      %v6947 = vpop.f32.mrf.mxu0
      %v6948 = vpop.f32.mrf.mxu0
      %v6949 = vadd.f32 %v6908, %v6948
      %v6950 = vpop.f32.mrf.mxu0
      %6951 = vdwg.mxu0
      %s6952 = scalar_lea.vmem %s4, 16
      %v6953 = vld [vmem:[%s6952] sm:$0xf]
      %v6954 = vld [vmem:[%s6952 + $0x4] sm:$0x1]
      %v6957 = vunpack.c.l.b16 %v6953
      %v6958 = vunpack.c.l.b16 %v6954
      %v6959 = vpack.c.b16 %v6958, %v6957
      %v6961 = vsel %vm4552, %v6959, 0
      %6963 = vmatprep.subr.bf16.mxu0 0
      %6964 = vmatpush1.bf16.msra.mxu0 0
      %6965 = vmatprep.subr.bf16.mxu0 0
      %6966 = vmatpush1.bf16.msra.mxu0 0
      %6967 = vmatprep.subr.bf16.mxu0 0
      %6968 = vmatpush1.bf16.msra.mxu0 0
      %6969 = vmatprep.subr.bf16.mxu0 0
      %6970 = vmatpush1.bf16.msra.mxu0 0
      %6971 = vmatprep.subr.bf16.mxu0 0
      %6972 = vmatpush1.bf16.msra.mxu0 0
      %6973 = vmatprep.subr.bf16.mxu0 0
      %6974 = vmatpush1.bf16.msra.mxu0 0
      %6975 = vmatprep.subr.bf16.mxu0 %v4561
      %6976 = vmatpush1.bf16.msra.mxu0 %v4558
      %6977 = vmatprep.subr.bf16.mxu0 %v4536
      %6978 = vmatpush1.bf16.msra.mxu0 %v4535
      %6979 = vmatprep.subr.bf16.mxu0 0
      %6980 = vmatpush2.bf16.msra.mxu0 0
      %6981 = vmatprep.subr.bf16.mxu0 0
      %6982 = vmatpush2.bf16.msra.mxu0 0
      %6983 = vmatprep.subr.bf16.mxu0 0
      %6984 = vmatpush2.bf16.msra.mxu0 0
      %6985 = vmatprep.subr.bf16.mxu0 0
      %6986 = vmatpush2.bf16.msra.mxu0 0
      %6987 = vmatprep.subr.bf16.mxu0 0
      %6988 = vmatpush2.bf16.msra.mxu0 0
      %6989 = vmatprep.subr.bf16.mxu0 0
      %6990 = vmatpush2.bf16.msra.mxu0 0
      %6991 = vmatprep.subr.bf16.mxu0 0
      %6992 = vmatpush2.bf16.msra.mxu0 0
      %6993 = vmatprep.subr.bf16.mxu0 0
      %6994 = vmatpush2.bf16.msra.mxu0 0
      %6995 = vmatprep.mubr.bf16.mxu0 0
      %6996 = vmatmul.mubr.bf16.gmra.mxu0 %v6961
      %v6997 = vpop.f32.mrf.mxu0
      %v6998 = vadd.f32 0.0, %v6997
      %v6999 = vpop.f32.mrf.mxu0
      %v7000 = vadd.f32 0.0, %v6999
      %v7001 = vpop.f32.mrf.mxu0
      %v7002 = vadd.f32 0.0, %v7001
      %v7003 = vpop.f32.mrf.mxu0
      %v7004 = vadd.f32 0.0, %v7003
      %7005 = vdwg.mxu0
      %7006 = vmatprep.subr.bf16.mxu0 0
      %7007 = vmatpush1.bf16.msra.mxu0 0
      %7008 = vmatprep.subr.bf16.mxu0 0
      %7009 = vmatpush1.bf16.msra.mxu0 0
      %7010 = vmatprep.subr.bf16.mxu0 0
      %7011 = vmatpush1.bf16.msra.mxu0 0
      %7012 = vmatprep.subr.bf16.mxu0 0
      %7013 = vmatpush1.bf16.msra.mxu0 0
      %7014 = vmatprep.subr.bf16.mxu0 0
      %7015 = vmatpush1.bf16.msra.mxu0 0
      %7016 = vmatprep.subr.bf16.mxu0 0
      %7017 = vmatpush1.bf16.msra.mxu0 0
      %7018 = vmatprep.subr.bf16.mxu0 %v4567
      %7019 = vmatpush1.bf16.msra.mxu0 %v4564
      %7020 = vmatprep.subr.bf16.mxu0 %v4538
      %7021 = vmatpush1.bf16.msra.mxu0 %v4537
      %7022 = vmatprep.subr.bf16.mxu0 0
      %7023 = vmatpush2.bf16.msra.mxu0 0
      %7024 = vmatprep.subr.bf16.mxu0 0
      %7025 = vmatpush2.bf16.msra.mxu0 0
      %7026 = vmatprep.subr.bf16.mxu0 0
      %7027 = vmatpush2.bf16.msra.mxu0 0
      %7028 = vmatprep.subr.bf16.mxu0 0
      %7029 = vmatpush2.bf16.msra.mxu0 0
      %7030 = vmatprep.subr.bf16.mxu0 0
      %7031 = vmatpush2.bf16.msra.mxu0 0
      %7032 = vmatprep.subr.bf16.mxu0 0
      %7033 = vmatpush2.bf16.msra.mxu0 0
      %7034 = vmatprep.subr.bf16.mxu0 0
      %7035 = vmatpush2.bf16.msra.mxu0 0
      %7036 = vmatprep.subr.bf16.mxu0 0
      %7037 = vmatpush2.bf16.msra.mxu0 0
      %7038 = vmatprep.mubr.bf16.mxu0 0
      %7039 = vmatmul.mubr.bf16.gmra.mxu0 %v6961
      %v7040 = vpop.f32.mrf.mxu0
      %v7041 = vadd.f32 0.0, %v7040
      %v7042 = vpop.f32.mrf.mxu0
      %v7043 = vadd.f32 0.0, %v7042
      %v7044 = vpop.f32.mrf.mxu0
      %v7045 = vadd.f32 0.0, %v7044
      %v7046 = vpop.f32.mrf.mxu0
      %v7047 = vadd.f32 0.0, %v7046
      %7048 = vdwg.mxu0
      %7049 = vmatprep.subr.bf16.mxu0 0
      %7050 = vmatpush1.bf16.msra.mxu0 0
      %7051 = vmatprep.subr.bf16.mxu0 0
      %7052 = vmatpush1.bf16.msra.mxu0 0
      %7053 = vmatprep.subr.bf16.mxu0 0
      %7054 = vmatpush1.bf16.msra.mxu0 0
      %7055 = vmatprep.subr.bf16.mxu0 0
      %7056 = vmatpush1.bf16.msra.mxu0 0
      %7057 = vmatprep.subr.bf16.mxu0 0
      %7058 = vmatpush1.bf16.msra.mxu0 0
      %7059 = vmatprep.subr.bf16.mxu0 0
      %7060 = vmatpush1.bf16.msra.mxu0 0
      %7061 = vmatprep.subr.bf16.mxu0 0
      %7062 = vmatpush1.bf16.msra.mxu0 %v4570
      %7063 = vmatprep.subr.bf16.mxu0 0
      %7064 = vmatpush1.bf16.msra.mxu0 %v4539
      %7065 = vmatprep.subr.bf16.mxu0 0
      %7066 = vmatpush2.bf16.msra.mxu0 0
      %7067 = vmatprep.subr.bf16.mxu0 0
      %7068 = vmatpush2.bf16.msra.mxu0 0
      %7069 = vmatprep.subr.bf16.mxu0 0
      %7070 = vmatpush2.bf16.msra.mxu0 0
      %7071 = vmatprep.subr.bf16.mxu0 0
      %7072 = vmatpush2.bf16.msra.mxu0 0
      %7073 = vmatprep.subr.bf16.mxu0 0
      %7074 = vmatpush2.bf16.msra.mxu0 0
      %7075 = vmatprep.subr.bf16.mxu0 0
      %7076 = vmatpush2.bf16.msra.mxu0 0
      %7077 = vmatprep.subr.bf16.mxu0 0
      %7078 = vmatpush2.bf16.msra.mxu0 0
      %7079 = vmatprep.subr.bf16.mxu0 0
      %7080 = vmatpush2.bf16.msra.mxu0 0
      %7081 = vmatprep.mubr.bf16.mxu0 0
      %7082 = vmatmul.mubr.bf16.gmra.mxu0 %v6961
      %v7083 = vpop.f32.mrf.mxu0
      %v7084 = vadd.f32 0.0, %v7083
      %v7085 = vpop.f32.mrf.mxu0
      %v7086 = vpop.f32.mrf.mxu0
      %v7087 = vadd.f32 0.0, %v7086
      %v7088 = vpop.f32.mrf.mxu0
      %7089 = vdwg.mxu0
      %v7090 = vpack.c.bf16 %v7002, %v6998
      %v7091 = vpack.c.bf16 %v7004, %v7000
      %v7092 = vpack.c.bf16 %v7045, %v7041
      %v7093 = vpack.c.bf16 %v7047, %v7043
      %v7094 = vpack.c.bf16 %v7087, %v7084
      %s7095 = scalar_lea.vmem %s5, 1920
      %v7096 = vld [vmem:[%s7095] sm:$0xff]
      %v7097 = vld [vmem:[%s7095 + $0x8] sm:$0xf]
      %v7098 = vld [vmem:[%s7095 + $0xc] sm:$0xff]
      %v7099 = vld [vmem:[%s7095 + $0x14] sm:$0xf]
      %v7100 = vld [vmem:[%s7095 + $0x18] sm:$0xff]
      %v7101 = vld [vmem:[%s7095 + $0x20] sm:$0xf]
      %v7102 = vld [vmem:[%s7095 + $0x24] sm:$0xff]
      %v7103 = vld [vmem:[%s7095 + $0x2c] sm:$0xf]
      %v7104 = vld [vmem:[%s7095 + $0x30] sm:$0xff]
      %v7105 = vld [vmem:[%s7095 + $0x38] sm:$0xf]
      %v7106 = vld [vmem:[%s7095 + $0x3c] sm:$0xff]
      %v7107 = vld [vmem:[%s7095 + $0x44] sm:$0xf]
      %v7108 = vld [vmem:[%s7095 + $0x48] sm:$0xff]
      %v7109 = vld [vmem:[%s7095 + $0x50] sm:$0xf]
      %v7110 = vld [vmem:[%s7095 + $0x54] sm:$0xff]
      %v7111 = vld [vmem:[%s7095 + $0x5c] sm:$0xf]
      %v7112 = vld [vmem:[%s7095 + $0x60] sm:$0xff]
      %v7113 = vld [vmem:[%s7095 + $0x68] sm:$0xf]
      %v7114 = vld [vmem:[%s7095 + $0x6c] sm:$0xff]
      %v7115 = vld [vmem:[%s7095 + $0x74] sm:$0xf]
      %v7116 = vld [vmem:[%s7095 + $0x78] sm:$0xff]
      %v7117 = vld [vmem:[%s7095 + $0x80] sm:$0xf]
      %v7118 = vld [vmem:[%s7095 + $0x84] sm:$0xff]
      %v7119 = vld [vmem:[%s7095 + $0x8c] sm:$0xf]
      %v7120 = vld [vmem:[%s7095 + $0x90] sm:$0xff]
      %v7121 = vld [vmem:[%s7095 + $0x98] sm:$0xf]
      %v7122 = vld [vmem:[%s7095 + $0x9c] sm:$0xff]
      %v7123 = vld [vmem:[%s7095 + $0xa4] sm:$0xf]
      %v7124 = vld [vmem:[%s7095 + $0xa8] sm:$0xff]
      %v7125 = vld [vmem:[%s7095 + $0xb0] sm:$0xf]
      %v7126 = vld [vmem:[%s7095 + $0xb4] sm:$0xff]
      %v7127 = vld [vmem:[%s7095 + $0xbc] sm:$0xf]
      %v7128 = vld [vmem:[%s7095 + $0xc0] sm:$0xff]
      %v7129 = vld [vmem:[%s7095 + $0xc8] sm:$0xf]
      %v7130 = vld [vmem:[%s7095 + $0xcc] sm:$0xff]
      %v7131 = vld [vmem:[%s7095 + $0xd4] sm:$0xf]
      %v7132 = vld [vmem:[%s7095 + $0xd8] sm:$0xff]
      %v7133 = vld [vmem:[%s7095 + $0xe0] sm:$0xf]
      %v7134 = vld [vmem:[%s7095 + $0xe4] sm:$0xff]
      %v7135 = vld [vmem:[%s7095 + $0xec] sm:$0xf]
      %v7136 = vld [vmem:[%s7095 + $0xf0] sm:$0xff]
      %v7137 = vld [vmem:[%s7095 + $0xf8] sm:$0xf]
      %v7138 = vld [vmem:[%s7095 + $0xfc] sm:$0xff]
      %v7139 = vld [vmem:[%s7095 + $0x104] sm:$0xf]
      %v7140 = vld [vmem:[%s7095 + $0x108] sm:$0xff]
      %v7141 = vld [vmem:[%s7095 + $0x110] sm:$0xf]
      %v7142 = vld [vmem:[%s7095 + $0x114] sm:$0xff]
      %v7143 = vld [vmem:[%s7095 + $0x11c] sm:$0xf]
      %v7144 = vld [vmem:[%s7095 + $0x120] sm:$0xff]
      %v7145 = vld [vmem:[%s7095 + $0x128] sm:$0xf]
      %v7146 = vld [vmem:[%s7095 + $0x12c] sm:$0xff]
      %v7147 = vld [vmem:[%s7095 + $0x134] sm:$0xf]
      %v7148 = vld [vmem:[%s7095 + $0x138] sm:$0xff]
      %v7149 = vld [vmem:[%s7095 + $0x140] sm:$0xf]
      %v7150 = vld [vmem:[%s7095 + $0x144] sm:$0xff]
      %v7151 = vld [vmem:[%s7095 + $0x14c] sm:$0xf]
      %v7152 = vld [vmem:[%s7095 + $0x150] sm:$0xff]
      %v7153 = vld [vmem:[%s7095 + $0x158] sm:$0xf]
      %v7154 = vld [vmem:[%s7095 + $0x15c] sm:$0xff]
      %v7155 = vld [vmem:[%s7095 + $0x164] sm:$0xf]
      %v7156 = vld [vmem:[%s7095 + $0x168] sm:$0xff]
      %v7157 = vld [vmem:[%s7095 + $0x170] sm:$0xf]
      %v7158 = vld [vmem:[%s7095 + $0x174] sm:$0xff]
      %v7159 = vld [vmem:[%s7095 + $0x17c] sm:$0xf]
      %v7160 = vld [vmem:[%s7095 + $0x180] sm:$0xff]
      %v7161 = vld [vmem:[%s7095 + $0x188] sm:$0xf]
      %v7162 = vld [vmem:[%s7095 + $0x18c] sm:$0xff]
      %v7163 = vld [vmem:[%s7095 + $0x194] sm:$0xf]
      %v7164 = vld [vmem:[%s7095 + $0x198] sm:$0xff]
      %v7165 = vld [vmem:[%s7095 + $0x1a0] sm:$0xf]
      %v7166 = vld [vmem:[%s7095 + $0x1a4] sm:$0xff]
      %v7167 = vld [vmem:[%s7095 + $0x1ac] sm:$0xf]
      %v7168 = vld [vmem:[%s7095 + $0x1b0] sm:$0xff]
      %v7169 = vld [vmem:[%s7095 + $0x1b8] sm:$0xf]
      %v7170 = vld [vmem:[%s7095 + $0x1bc] sm:$0xff]
      %v7171 = vld [vmem:[%s7095 + $0x1c4] sm:$0xf]
      %v7172 = vld [vmem:[%s7095 + $0x1c8] sm:$0xff]
      %v7173 = vld [vmem:[%s7095 + $0x1d0] sm:$0xf]
      %v7174 = vld [vmem:[%s7095 + $0x1d4] sm:$0xff]
      %v7175 = vld [vmem:[%s7095 + $0x1dc] sm:$0xf]
      %v7176 = vld [vmem:[%s7095 + $0x1e0] sm:$0xff]
      %v7177 = vld [vmem:[%s7095 + $0x1e8] sm:$0xf]
      %v7178 = vld [vmem:[%s7095 + $0x1ec] sm:$0xff]
      %v7179 = vld [vmem:[%s7095 + $0x1f4] sm:$0xf]
      %v7180 = vld [vmem:[%s7095 + $0x1f8] sm:$0xff]
      %v7181 = vld [vmem:[%s7095 + $0x200] sm:$0xf]
      %v7182 = vld [vmem:[%s7095 + $0x204] sm:$0xff]
      %v7183 = vld [vmem:[%s7095 + $0x20c] sm:$0xf]
      %v7184 = vld [vmem:[%s7095 + $0x210] sm:$0xff]
      %v7185 = vld [vmem:[%s7095 + $0x218] sm:$0xf]
      %v7186 = vld [vmem:[%s7095 + $0x21c] sm:$0xff]
      %v7187 = vld [vmem:[%s7095 + $0x224] sm:$0xf]
      %v7188 = vld [vmem:[%s7095 + $0x228] sm:$0xff]
      %v7189 = vld [vmem:[%s7095 + $0x230] sm:$0xf]
      %v7190 = vld [vmem:[%s7095 + $0x234] sm:$0xff]
      %v7191 = vld [vmem:[%s7095 + $0x23c] sm:$0xf]
      %v7192 = vld [vmem:[%s7095 + $0x240] sm:$0xff]
      %v7193 = vld [vmem:[%s7095 + $0x248] sm:$0xf]
      %v7194 = vld [vmem:[%s7095 + $0x24c] sm:$0xff]
      %v7195 = vld [vmem:[%s7095 + $0x254] sm:$0xf]
      %v7196 = vld [vmem:[%s7095 + $0x258] sm:$0xff]
      %v7197 = vld [vmem:[%s7095 + $0x260] sm:$0xf]
      %v7198 = vld [vmem:[%s7095 + $0x264] sm:$0xff]
      %v7199 = vld [vmem:[%s7095 + $0x26c] sm:$0xf]
      %v7200 = vld [vmem:[%s7095 + $0x270] sm:$0xff]
      %v7201 = vld [vmem:[%s7095 + $0x278] sm:$0xf]
      %v7202 = vld [vmem:[%s7095 + $0x27c] sm:$0xff]
      %v7203 = vld [vmem:[%s7095 + $0x284] sm:$0xf]
      %v7204 = vld [vmem:[%s7095 + $0x288] sm:$0xff]
      %v7205 = vld [vmem:[%s7095 + $0x290] sm:$0xf]
      %v7206 = vld [vmem:[%s7095 + $0x294] sm:$0xff]
      %v7207 = vld [vmem:[%s7095 + $0x29c] sm:$0xf]
      %v7208 = vld [vmem:[%s7095 + $0x2a0] sm:$0xff]
      %v7209 = vld [vmem:[%s7095 + $0x2a8] sm:$0xf]
      %v7210 = vld [vmem:[%s7095 + $0x2ac] sm:$0xff]
      %v7211 = vld [vmem:[%s7095 + $0x2b4] sm:$0xf]
      %v7212 = vld [vmem:[%s7095 + $0x2b8] sm:$0xff]
      %v7213 = vld [vmem:[%s7095 + $0x2c0] sm:$0xf]
      %v7214 = vld [vmem:[%s7095 + $0x2c4] sm:$0xff]
      %v7215 = vld [vmem:[%s7095 + $0x2cc] sm:$0xf]
      %v7216 = vld [vmem:[%s7095 + $0x2d0] sm:$0xff]
      %v7217 = vld [vmem:[%s7095 + $0x2d8] sm:$0xf]
      %v7218 = vld [vmem:[%s7095 + $0x2dc] sm:$0xff]
      %v7219 = vld [vmem:[%s7095 + $0x2e4] sm:$0xf]
      %v7220 = vld [vmem:[%s7095 + $0x2e8] sm:$0xff]
      %v7221 = vld [vmem:[%s7095 + $0x2f0] sm:$0xf]
      %v7222 = vld [vmem:[%s7095 + $0x2f4] sm:$0xff]
      %v7223 = vld [vmem:[%s7095 + $0x2fc] sm:$0xf]
      %v7224 = vld [vmem:[%s7095 + $0x300] sm:$0xff]
      %v7225 = vld [vmem:[%s7095 + $0x308] sm:$0xf]
      %v7226 = vld [vmem:[%s7095 + $0x30c] sm:$0xff]
      %v7227 = vld [vmem:[%s7095 + $0x314] sm:$0xf]
      %v7228 = vld [vmem:[%s7095 + $0x318] sm:$0xff]
      %v7229 = vld [vmem:[%s7095 + $0x320] sm:$0xf]
      %v7230 = vld [vmem:[%s7095 + $0x324] sm:$0xff]
      %v7231 = vld [vmem:[%s7095 + $0x32c] sm:$0xf]
      %v7232 = vld [vmem:[%s7095 + $0x330] sm:$0xff]
      %v7233 = vld [vmem:[%s7095 + $0x338] sm:$0xf]
      %v7234 = vld [vmem:[%s7095 + $0x33c] sm:$0xff]
      %v7235 = vld [vmem:[%s7095 + $0x344] sm:$0xf]
      %v7236 = vld [vmem:[%s7095 + $0x348] sm:$0xff]
      %v7237 = vld [vmem:[%s7095 + $0x350] sm:$0xf]
      %v7238 = vld [vmem:[%s7095 + $0x354] sm:$0xff]
      %v7239 = vld [vmem:[%s7095 + $0x35c] sm:$0xf]
      %v7240 = vld [vmem:[%s7095 + $0x360] sm:$0xff]
      %v7241 = vld [vmem:[%s7095 + $0x368] sm:$0xf]
      %v7242 = vld [vmem:[%s7095 + $0x36c] sm:$0xff]
      %v7243 = vld [vmem:[%s7095 + $0x374] sm:$0xf]
      %v7244 = vld [vmem:[%s7095 + $0x378] sm:$0xff]
      %v7245 = vld [vmem:[%s7095 + $0x380] sm:$0xf]
      %v7246 = vld [vmem:[%s7095 + $0x384] sm:$0xff]
      %v7247 = vld [vmem:[%s7095 + $0x38c] sm:$0xf]
      %v7248 = vld [vmem:[%s7095 + $0x390] sm:$0xff]
      %v7249 = vld [vmem:[%s7095 + $0x398] sm:$0xf]
      %v7250 = vld [vmem:[%s7095 + $0x39c] sm:$0xff]
      %v7251 = vld [vmem:[%s7095 + $0x3a4] sm:$0xf]
      %v7252 = vld [vmem:[%s7095 + $0x3a8] sm:$0xff]
      %v7253 = vld [vmem:[%s7095 + $0x3b0] sm:$0xf]
      %v7254 = vld [vmem:[%s7095 + $0x3b4] sm:$0xff]
      %v7255 = vld [vmem:[%s7095 + $0x3bc] sm:$0xf]
      %v7416 = vunpack.c.l.b16 %v7096
      %v7417 = vunpack.c.h.b16 %v7096
      %v7418 = vunpack.c.l.b16 %v7097
      %v7419 = vunpack.c.l.b16 %v7098
      %v7420 = vunpack.c.h.b16 %v7098
      %v7421 = vunpack.c.l.b16 %v7099
      %v7422 = vunpack.c.l.b16 %v7100
      %v7423 = vunpack.c.h.b16 %v7100
      %v7424 = vunpack.c.l.b16 %v7101
      %v7425 = vunpack.c.l.b16 %v7102
      %v7426 = vunpack.c.h.b16 %v7102
      %v7427 = vunpack.c.l.b16 %v7103
      %v7428 = vunpack.c.l.b16 %v7104
      %v7429 = vunpack.c.h.b16 %v7104
      %v7430 = vunpack.c.l.b16 %v7105
      %v7431 = vunpack.c.l.b16 %v7106
      %v7432 = vunpack.c.h.b16 %v7106
      %v7433 = vunpack.c.l.b16 %v7107
      %v7434 = vunpack.c.l.b16 %v7108
      %v7435 = vunpack.c.h.b16 %v7108
      %v7436 = vunpack.c.l.b16 %v7109
      %v7437 = vunpack.c.l.b16 %v7110
      %v7438 = vunpack.c.h.b16 %v7110
      %v7439 = vunpack.c.l.b16 %v7111
      %v7440 = vunpack.c.l.b16 %v7112
      %v7441 = vunpack.c.h.b16 %v7112
      %v7442 = vunpack.c.l.b16 %v7113
      %v7443 = vunpack.c.l.b16 %v7114
      %v7444 = vunpack.c.h.b16 %v7114
      %v7445 = vunpack.c.l.b16 %v7115
      %v7446 = vunpack.c.l.b16 %v7116
      %v7447 = vunpack.c.h.b16 %v7116
      %v7448 = vunpack.c.l.b16 %v7117
      %v7449 = vunpack.c.l.b16 %v7118
      %v7450 = vunpack.c.h.b16 %v7118
      %v7451 = vunpack.c.l.b16 %v7119
      %v7452 = vunpack.c.l.b16 %v7120
      %v7453 = vunpack.c.h.b16 %v7120
      %v7454 = vunpack.c.l.b16 %v7121
      %v7455 = vunpack.c.l.b16 %v7122
      %v7456 = vunpack.c.h.b16 %v7122
      %v7457 = vunpack.c.l.b16 %v7123
      %v7458 = vunpack.c.l.b16 %v7124
      %v7459 = vunpack.c.h.b16 %v7124
      %v7460 = vunpack.c.l.b16 %v7125
      %v7461 = vunpack.c.l.b16 %v7126
      %v7462 = vunpack.c.h.b16 %v7126
      %v7463 = vunpack.c.l.b16 %v7127
      %v7464 = vunpack.c.l.b16 %v7128
      %v7465 = vunpack.c.h.b16 %v7128
      %v7466 = vunpack.c.l.b16 %v7129
      %v7467 = vunpack.c.l.b16 %v7130
      %v7468 = vunpack.c.h.b16 %v7130
      %v7469 = vunpack.c.l.b16 %v7131
      %v7470 = vunpack.c.l.b16 %v7132
      %v7471 = vunpack.c.h.b16 %v7132
      %v7472 = vunpack.c.l.b16 %v7133
      %v7473 = vunpack.c.l.b16 %v7134
      %v7474 = vunpack.c.h.b16 %v7134
      %v7475 = vunpack.c.l.b16 %v7135
      %v7476 = vunpack.c.l.b16 %v7136
      %v7477 = vunpack.c.h.b16 %v7136
      %v7478 = vunpack.c.l.b16 %v7137
      %v7479 = vunpack.c.l.b16 %v7138
      %v7480 = vunpack.c.h.b16 %v7138
      %v7481 = vunpack.c.l.b16 %v7139
      %v7482 = vunpack.c.l.b16 %v7140
      %v7483 = vunpack.c.h.b16 %v7140
      %v7484 = vunpack.c.l.b16 %v7141
      %v7485 = vunpack.c.l.b16 %v7142
      %v7486 = vunpack.c.h.b16 %v7142
      %v7487 = vunpack.c.l.b16 %v7143
      %v7488 = vunpack.c.l.b16 %v7144
      %v7489 = vunpack.c.h.b16 %v7144
      %v7490 = vunpack.c.l.b16 %v7145
      %v7491 = vunpack.c.l.b16 %v7146
      %v7492 = vunpack.c.h.b16 %v7146
      %v7493 = vunpack.c.l.b16 %v7147
      %v7494 = vunpack.c.l.b16 %v7148
      %v7495 = vunpack.c.h.b16 %v7148
      %v7496 = vunpack.c.l.b16 %v7149
      %v7497 = vunpack.c.l.b16 %v7150
      %v7498 = vunpack.c.h.b16 %v7150
      %v7499 = vunpack.c.l.b16 %v7151
      %v7500 = vunpack.c.l.b16 %v7152
      %v7501 = vunpack.c.h.b16 %v7152
      %v7502 = vunpack.c.l.b16 %v7153
      %v7503 = vunpack.c.l.b16 %v7154
      %v7504 = vunpack.c.h.b16 %v7154
      %v7505 = vunpack.c.l.b16 %v7155
      %v7506 = vunpack.c.l.b16 %v7156
      %v7507 = vunpack.c.h.b16 %v7156
      %v7508 = vunpack.c.l.b16 %v7157
      %v7509 = vunpack.c.l.b16 %v7158
      %v7510 = vunpack.c.h.b16 %v7158
      %v7511 = vunpack.c.l.b16 %v7159
      %v7512 = vunpack.c.l.b16 %v7160
      %v7513 = vunpack.c.h.b16 %v7160
      %v7514 = vunpack.c.l.b16 %v7161
      %v7515 = vunpack.c.l.b16 %v7162
      %v7516 = vunpack.c.h.b16 %v7162
      %v7517 = vunpack.c.l.b16 %v7163
      %v7518 = vunpack.c.l.b16 %v7164
      %v7519 = vunpack.c.h.b16 %v7164
      %v7520 = vunpack.c.l.b16 %v7165
      %v7521 = vunpack.c.l.b16 %v7166
      %v7522 = vunpack.c.h.b16 %v7166
      %v7523 = vunpack.c.l.b16 %v7167
      %v7524 = vunpack.c.l.b16 %v7168
      %v7525 = vunpack.c.h.b16 %v7168
      %v7526 = vunpack.c.l.b16 %v7169
      %v7527 = vunpack.c.l.b16 %v7170
      %v7528 = vunpack.c.h.b16 %v7170
      %v7529 = vunpack.c.l.b16 %v7171
      %v7530 = vunpack.c.l.b16 %v7172
      %v7531 = vunpack.c.h.b16 %v7172
      %v7532 = vunpack.c.l.b16 %v7173
      %v7533 = vunpack.c.l.b16 %v7174
      %v7534 = vunpack.c.h.b16 %v7174
      %v7535 = vunpack.c.l.b16 %v7175
      %v7536 = vunpack.c.l.b16 %v7176
      %v7537 = vunpack.c.h.b16 %v7176
      %v7538 = vunpack.c.l.b16 %v7177
      %v7539 = vunpack.c.l.b16 %v7178
      %v7540 = vunpack.c.h.b16 %v7178
      %v7541 = vunpack.c.l.b16 %v7179
      %v7542 = vunpack.c.l.b16 %v7180
      %v7543 = vunpack.c.h.b16 %v7180
      %v7544 = vunpack.c.l.b16 %v7181
      %v7545 = vunpack.c.l.b16 %v7182
      %v7546 = vunpack.c.h.b16 %v7182
      %v7547 = vunpack.c.l.b16 %v7183
      %v7548 = vunpack.c.l.b16 %v7184
      %v7549 = vunpack.c.h.b16 %v7184
      %v7550 = vunpack.c.l.b16 %v7185
      %v7551 = vunpack.c.l.b16 %v7186
      %v7552 = vunpack.c.h.b16 %v7186
      %v7553 = vunpack.c.l.b16 %v7187
      %v7554 = vunpack.c.l.b16 %v7188
      %v7555 = vunpack.c.h.b16 %v7188
      %v7556 = vunpack.c.l.b16 %v7189
      %v7557 = vunpack.c.l.b16 %v7190
      %v7558 = vunpack.c.h.b16 %v7190
      %v7559 = vunpack.c.l.b16 %v7191
      %v7560 = vunpack.c.l.b16 %v7192
      %v7561 = vunpack.c.h.b16 %v7192
      %v7562 = vunpack.c.l.b16 %v7193
      %v7563 = vunpack.c.l.b16 %v7194
      %v7564 = vunpack.c.h.b16 %v7194
      %v7565 = vunpack.c.l.b16 %v7195
      %v7566 = vunpack.c.l.b16 %v7196
      %v7567 = vunpack.c.h.b16 %v7196
      %v7568 = vunpack.c.l.b16 %v7197
      %v7569 = vunpack.c.l.b16 %v7198
      %v7570 = vunpack.c.h.b16 %v7198
      %v7571 = vunpack.c.l.b16 %v7199
      %v7572 = vunpack.c.l.b16 %v7200
      %v7573 = vunpack.c.h.b16 %v7200
      %v7574 = vunpack.c.l.b16 %v7201
      %v7575 = vunpack.c.l.b16 %v7202
      %v7576 = vunpack.c.h.b16 %v7202
      %v7577 = vunpack.c.l.b16 %v7203
      %v7578 = vunpack.c.l.b16 %v7204
      %v7579 = vunpack.c.h.b16 %v7204
      %v7580 = vunpack.c.l.b16 %v7205
      %v7581 = vunpack.c.l.b16 %v7206
      %v7582 = vunpack.c.h.b16 %v7206
      %v7583 = vunpack.c.l.b16 %v7207
      %v7584 = vunpack.c.l.b16 %v7208
      %v7585 = vunpack.c.h.b16 %v7208
      %v7586 = vunpack.c.l.b16 %v7209
      %v7587 = vunpack.c.l.b16 %v7210
      %v7588 = vunpack.c.h.b16 %v7210
      %v7589 = vunpack.c.l.b16 %v7211
      %v7590 = vunpack.c.l.b16 %v7212
      %v7591 = vunpack.c.h.b16 %v7212
      %v7592 = vunpack.c.l.b16 %v7213
      %v7593 = vunpack.c.l.b16 %v7214
      %v7594 = vunpack.c.h.b16 %v7214
      %v7595 = vunpack.c.l.b16 %v7215
      %v7596 = vunpack.c.l.b16 %v7216
      %v7597 = vunpack.c.h.b16 %v7216
      %v7598 = vunpack.c.l.b16 %v7217
      %v7599 = vunpack.c.l.b16 %v7218
      %v7600 = vunpack.c.h.b16 %v7218
      %v7601 = vunpack.c.l.b16 %v7219
      %v7602 = vunpack.c.l.b16 %v7220
      %v7603 = vunpack.c.h.b16 %v7220
      %v7604 = vunpack.c.l.b16 %v7221
      %v7605 = vunpack.c.l.b16 %v7222
      %v7606 = vunpack.c.h.b16 %v7222
      %v7607 = vunpack.c.l.b16 %v7223
      %v7608 = vunpack.c.l.b16 %v7224
      %v7609 = vunpack.c.h.b16 %v7224
      %v7610 = vunpack.c.l.b16 %v7225
      %v7611 = vunpack.c.l.b16 %v7226
      %v7612 = vunpack.c.h.b16 %v7226
      %v7613 = vunpack.c.l.b16 %v7227
      %v7614 = vunpack.c.l.b16 %v7228
      %v7615 = vunpack.c.h.b16 %v7228
      %v7616 = vunpack.c.l.b16 %v7229
      %v7617 = vunpack.c.l.b16 %v7230
      %v7618 = vunpack.c.h.b16 %v7230
      %v7619 = vunpack.c.l.b16 %v7231
      %v7620 = vunpack.c.l.b16 %v7232
      %v7621 = vunpack.c.h.b16 %v7232
      %v7622 = vunpack.c.l.b16 %v7233
      %v7623 = vunpack.c.l.b16 %v7234
      %v7624 = vunpack.c.h.b16 %v7234
      %v7625 = vunpack.c.l.b16 %v7235
      %v7626 = vunpack.c.l.b16 %v7236
      %v7627 = vunpack.c.h.b16 %v7236
      %v7628 = vunpack.c.l.b16 %v7237
      %v7629 = vunpack.c.l.b16 %v7238
      %v7630 = vunpack.c.h.b16 %v7238
      %v7631 = vunpack.c.l.b16 %v7239
      %v7632 = vunpack.c.l.b16 %v7240
      %v7633 = vunpack.c.h.b16 %v7240
      %v7634 = vunpack.c.l.b16 %v7241
      %v7635 = vunpack.c.l.b16 %v7242
      %v7636 = vunpack.c.h.b16 %v7242
      %v7637 = vunpack.c.l.b16 %v7243
      %v7638 = vunpack.c.l.b16 %v7244
      %v7639 = vunpack.c.h.b16 %v7244
      %v7640 = vunpack.c.l.b16 %v7245
      %v7641 = vunpack.c.l.b16 %v7246
      %v7642 = vunpack.c.h.b16 %v7246
      %v7643 = vunpack.c.l.b16 %v7247
      %v7644 = vunpack.c.l.b16 %v7248
      %v7645 = vunpack.c.h.b16 %v7248
      %v7646 = vunpack.c.l.b16 %v7249
      %v7647 = vunpack.c.l.b16 %v7250
      %v7648 = vunpack.c.h.b16 %v7250
      %v7649 = vunpack.c.l.b16 %v7251
      %v7650 = vunpack.c.l.b16 %v7252
      %v7651 = vunpack.c.h.b16 %v7252
      %v7652 = vunpack.c.l.b16 %v7253
      %v7653 = vunpack.c.l.b16 %v7254
      %v7654 = vunpack.c.h.b16 %v7254
      %v7655 = vunpack.c.l.b16 %v7255
      %v7656 = vpack.c.b16 %v7419, %v7416
      %v7657 = vpack.c.b16 %v7420, %v7417
      %v7658 = vpack.c.b16 %v7421, %v7418
      %v7659 = vpack.c.b16 %v7425, %v7422
      %v7660 = vpack.c.b16 %v7426, %v7423
      %v7661 = vpack.c.b16 %v7427, %v7424
      %v7662 = vpack.c.b16 %v7431, %v7428
      %v7663 = vpack.c.b16 %v7432, %v7429
      %v7664 = vpack.c.b16 %v7433, %v7430
      %v7665 = vpack.c.b16 %v7437, %v7434
      %v7666 = vpack.c.b16 %v7438, %v7435
      %v7667 = vpack.c.b16 %v7439, %v7436
      %v7668 = vpack.c.b16 %v7443, %v7440
      %v7669 = vpack.c.b16 %v7444, %v7441
      %v7670 = vpack.c.b16 %v7445, %v7442
      %v7671 = vpack.c.b16 %v7449, %v7446
      %v7672 = vpack.c.b16 %v7450, %v7447
      %v7673 = vpack.c.b16 %v7451, %v7448
      %v7674 = vpack.c.b16 %v7455, %v7452
      %v7675 = vpack.c.b16 %v7456, %v7453
      %v7676 = vpack.c.b16 %v7457, %v7454
      %v7677 = vpack.c.b16 %v7461, %v7458
      %v7678 = vpack.c.b16 %v7462, %v7459
      %v7679 = vpack.c.b16 %v7463, %v7460
      %v7680 = vpack.c.b16 %v7467, %v7464
      %v7681 = vpack.c.b16 %v7468, %v7465
      %v7682 = vpack.c.b16 %v7469, %v7466
      %v7683 = vpack.c.b16 %v7473, %v7470
      %v7684 = vpack.c.b16 %v7474, %v7471
      %v7685 = vpack.c.b16 %v7475, %v7472
      %v7686 = vpack.c.b16 %v7479, %v7476
      %v7687 = vpack.c.b16 %v7480, %v7477
      %v7688 = vpack.c.b16 %v7481, %v7478
      %v7689 = vpack.c.b16 %v7485, %v7482
      %v7690 = vpack.c.b16 %v7486, %v7483
      %v7691 = vpack.c.b16 %v7487, %v7484
      %v7692 = vpack.c.b16 %v7491, %v7488
      %v7693 = vpack.c.b16 %v7492, %v7489
      %v7694 = vpack.c.b16 %v7493, %v7490
      %v7695 = vpack.c.b16 %v7497, %v7494
      %v7696 = vpack.c.b16 %v7498, %v7495
      %v7697 = vpack.c.b16 %v7499, %v7496
      %v7698 = vpack.c.b16 %v7503, %v7500
      %v7699 = vpack.c.b16 %v7504, %v7501
      %v7700 = vpack.c.b16 %v7505, %v7502
      %v7701 = vpack.c.b16 %v7509, %v7506
      %v7702 = vpack.c.b16 %v7510, %v7507
      %v7703 = vpack.c.b16 %v7511, %v7508
      %v7704 = vpack.c.b16 %v7515, %v7512
      %v7705 = vpack.c.b16 %v7516, %v7513
      %v7706 = vpack.c.b16 %v7517, %v7514
      %v7707 = vpack.c.b16 %v7521, %v7518
      %v7708 = vpack.c.b16 %v7522, %v7519
      %v7709 = vpack.c.b16 %v7523, %v7520
      %v7710 = vpack.c.b16 %v7527, %v7524
      %v7711 = vpack.c.b16 %v7528, %v7525
      %v7712 = vpack.c.b16 %v7529, %v7526
      %v7713 = vpack.c.b16 %v7533, %v7530
      %v7714 = vpack.c.b16 %v7534, %v7531
      %v7715 = vpack.c.b16 %v7535, %v7532
      %v7716 = vpack.c.b16 %v7539, %v7536
      %v7717 = vpack.c.b16 %v7540, %v7537
      %v7718 = vpack.c.b16 %v7541, %v7538
      %v7719 = vpack.c.b16 %v7545, %v7542
      %v7720 = vpack.c.b16 %v7546, %v7543
      %v7721 = vpack.c.b16 %v7547, %v7544
      %v7722 = vpack.c.b16 %v7551, %v7548
      %v7723 = vpack.c.b16 %v7552, %v7549
      %v7724 = vpack.c.b16 %v7553, %v7550
      %v7725 = vpack.c.b16 %v7557, %v7554
      %v7726 = vpack.c.b16 %v7558, %v7555
      %v7727 = vpack.c.b16 %v7559, %v7556
      %v7728 = vpack.c.b16 %v7563, %v7560
      %v7729 = vpack.c.b16 %v7564, %v7561
      %v7730 = vpack.c.b16 %v7565, %v7562
      %v7731 = vpack.c.b16 %v7569, %v7566
      %v7732 = vpack.c.b16 %v7570, %v7567
      %v7733 = vpack.c.b16 %v7571, %v7568
      %v7734 = vpack.c.b16 %v7575, %v7572
      %v7735 = vpack.c.b16 %v7576, %v7573
      %v7736 = vpack.c.b16 %v7577, %v7574
      %v7737 = vpack.c.b16 %v7581, %v7578
      %v7738 = vpack.c.b16 %v7582, %v7579
      %v7739 = vpack.c.b16 %v7583, %v7580
      %v7740 = vpack.c.b16 %v7587, %v7584
      %v7741 = vpack.c.b16 %v7588, %v7585
      %v7742 = vpack.c.b16 %v7589, %v7586
      %v7743 = vpack.c.b16 %v7593, %v7590
      %v7744 = vpack.c.b16 %v7594, %v7591
      %v7745 = vpack.c.b16 %v7595, %v7592
      %v7746 = vpack.c.b16 %v7599, %v7596
      %v7747 = vpack.c.b16 %v7600, %v7597
      %v7748 = vpack.c.b16 %v7601, %v7598
      %v7749 = vpack.c.b16 %v7605, %v7602
      %v7750 = vpack.c.b16 %v7606, %v7603
      %v7751 = vpack.c.b16 %v7607, %v7604
      %v7752 = vpack.c.b16 %v7611, %v7608
      %v7753 = vpack.c.b16 %v7612, %v7609
      %v7754 = vpack.c.b16 %v7613, %v7610
      %v7755 = vpack.c.b16 %v7617, %v7614
      %v7756 = vpack.c.b16 %v7618, %v7615
      %v7757 = vpack.c.b16 %v7619, %v7616
      %v7758 = vpack.c.b16 %v7623, %v7620
      %v7759 = vpack.c.b16 %v7624, %v7621
      %v7760 = vpack.c.b16 %v7625, %v7622
      %v7761 = vpack.c.b16 %v7629, %v7626
      %v7762 = vpack.c.b16 %v7630, %v7627
      %v7763 = vpack.c.b16 %v7631, %v7628
      %v7764 = vpack.c.b16 %v7635, %v7632
      %v7765 = vpack.c.b16 %v7636, %v7633
      %v7766 = vpack.c.b16 %v7637, %v7634
      %v7767 = vpack.c.b16 %v7641, %v7638
      %v7768 = vpack.c.b16 %v7642, %v7639
      %v7769 = vpack.c.b16 %v7643, %v7640
      %v7770 = vpack.c.b16 %v7647, %v7644
      %v7771 = vpack.c.b16 %v7648, %v7645
      %v7772 = vpack.c.b16 %v7649, %v7646
      %v7773 = vpack.c.b16 %v7653, %v7650
      %v7774 = vpack.c.b16 %v7654, %v7651
      %v7775 = vpack.c.b16 %v7655, %v7652
      %7896 = vmatprep.subr.bf16.mxu0 %v7678
      %7897 = vmatpush1.bf16.msra.mxu0 %v7677
      %7898 = vmatprep.subr.bf16.mxu0 %v7675
      %7899 = vmatpush1.bf16.msra.mxu0 %v7674
      %7900 = vmatprep.subr.bf16.mxu0 %v7672
      %7901 = vmatpush1.bf16.msra.mxu0 %v7671
      %7902 = vmatprep.subr.bf16.mxu0 %v7669
      %7903 = vmatpush1.bf16.msra.mxu0 %v7668
      %7904 = vmatprep.subr.bf16.mxu0 %v7666
      %7905 = vmatpush1.bf16.msra.mxu0 %v7665
      %7906 = vmatprep.subr.bf16.mxu0 %v7663
      %7907 = vmatpush1.bf16.msra.mxu0 %v7662
      %7908 = vmatprep.subr.bf16.mxu0 %v7660
      %7909 = vmatpush1.bf16.msra.mxu0 %v7659
      %7910 = vmatprep.subr.bf16.mxu0 %v7657
      %7911 = vmatpush1.bf16.msra.mxu0 %v7656
      %7912 = vmatprep.subr.bf16.mxu0 %v7702
      %7913 = vmatpush2.bf16.msra.mxu0 %v7701
      %7914 = vmatprep.subr.bf16.mxu0 %v7699
      %7915 = vmatpush2.bf16.msra.mxu0 %v7698
      %7916 = vmatprep.subr.bf16.mxu0 %v7696
      %7917 = vmatpush2.bf16.msra.mxu0 %v7695
      %7918 = vmatprep.subr.bf16.mxu0 %v7693
      %7919 = vmatpush2.bf16.msra.mxu0 %v7692
      %7920 = vmatprep.subr.bf16.mxu0 %v7690
      %7921 = vmatpush2.bf16.msra.mxu0 %v7689
      %7922 = vmatprep.subr.bf16.mxu0 %v7687
      %7923 = vmatpush2.bf16.msra.mxu0 %v7686
      %7924 = vmatprep.subr.bf16.mxu0 %v7684
      %7925 = vmatpush2.bf16.msra.mxu0 %v7683
      %7926 = vmatprep.subr.bf16.mxu0 %v7681
      %7927 = vmatpush2.bf16.msra.mxu0 %v7680
      %7928 = vmatprep.mubr.bf16.mxu0 %v7091
      %7929 = vmatmul.mubr.bf16.gmra.mxu0 %v7090
      %v7930 = vpop.f32.mrf.mxu0
      %v7931 = vadd.f32 0.0, %v7930
      %v7932 = vpop.f32.mrf.mxu0
      %v7933 = vadd.f32 0.0, %v7932
      %v7934 = vpop.f32.mrf.mxu0
      %v7935 = vadd.f32 0.0, %v7934
      %v7936 = vpop.f32.mrf.mxu0
      %v7937 = vadd.f32 0.0, %v7936
      %7938 = vdwg.mxu0
      %7939 = vmatprep.subr.bf16.mxu0 %v7726
      %7940 = vmatpush1.bf16.msra.mxu0 %v7725
      %7941 = vmatprep.subr.bf16.mxu0 %v7723
      %7942 = vmatpush1.bf16.msra.mxu0 %v7722
      %7943 = vmatprep.subr.bf16.mxu0 %v7720
      %7944 = vmatpush1.bf16.msra.mxu0 %v7719
      %7945 = vmatprep.subr.bf16.mxu0 %v7717
      %7946 = vmatpush1.bf16.msra.mxu0 %v7716
      %7947 = vmatprep.subr.bf16.mxu0 %v7714
      %7948 = vmatpush1.bf16.msra.mxu0 %v7713
      %7949 = vmatprep.subr.bf16.mxu0 %v7711
      %7950 = vmatpush1.bf16.msra.mxu0 %v7710
      %7951 = vmatprep.subr.bf16.mxu0 %v7708
      %7952 = vmatpush1.bf16.msra.mxu0 %v7707
      %7953 = vmatprep.subr.bf16.mxu0 %v7705
      %7954 = vmatpush1.bf16.msra.mxu0 %v7704
      %7955 = vmatprep.subr.bf16.mxu0 %v7750
      %7956 = vmatpush2.bf16.msra.mxu0 %v7749
      %7957 = vmatprep.subr.bf16.mxu0 %v7747
      %7958 = vmatpush2.bf16.msra.mxu0 %v7746
      %7959 = vmatprep.subr.bf16.mxu0 %v7744
      %7960 = vmatpush2.bf16.msra.mxu0 %v7743
      %7961 = vmatprep.subr.bf16.mxu0 %v7741
      %7962 = vmatpush2.bf16.msra.mxu0 %v7740
      %7963 = vmatprep.subr.bf16.mxu0 %v7738
      %7964 = vmatpush2.bf16.msra.mxu0 %v7737
      %7965 = vmatprep.subr.bf16.mxu0 %v7735
      %7966 = vmatpush2.bf16.msra.mxu0 %v7734
      %7967 = vmatprep.subr.bf16.mxu0 %v7732
      %7968 = vmatpush2.bf16.msra.mxu0 %v7731
      %7969 = vmatprep.subr.bf16.mxu0 %v7729
      %7970 = vmatpush2.bf16.msra.mxu0 %v7728
      %7971 = vmatprep.mubr.bf16.mxu0 %v7093
      %7972 = vmatmul.mubr.bf16.gmra.mxu0 %v7092
      %v7973 = vpop.f32.mrf.mxu0
      %v7974 = vadd.f32 %v7931, %v7973
      %v7975 = vpop.f32.mrf.mxu0
      %v7976 = vadd.f32 %v7933, %v7975
      %v7977 = vpop.f32.mrf.mxu0
      %v7978 = vadd.f32 %v7935, %v7977
      %v7979 = vpop.f32.mrf.mxu0
      %v7980 = vadd.f32 %v7937, %v7979
      %7981 = vdwg.mxu0
      %7982 = vmatprep.subr.bf16.mxu0 %v7774
      %7983 = vmatpush1.bf16.msra.mxu0 %v7773
      %7984 = vmatprep.subr.bf16.mxu0 %v7771
      %7985 = vmatpush1.bf16.msra.mxu0 %v7770
      %7986 = vmatprep.subr.bf16.mxu0 %v7768
      %7987 = vmatpush1.bf16.msra.mxu0 %v7767
      %7988 = vmatprep.subr.bf16.mxu0 %v7765
      %7989 = vmatpush1.bf16.msra.mxu0 %v7764
      %7990 = vmatprep.subr.bf16.mxu0 %v7762
      %7991 = vmatpush1.bf16.msra.mxu0 %v7761
      %7992 = vmatprep.subr.bf16.mxu0 %v7759
      %7993 = vmatpush1.bf16.msra.mxu0 %v7758
      %7994 = vmatprep.subr.bf16.mxu0 %v7756
      %7995 = vmatpush1.bf16.msra.mxu0 %v7755
      %7996 = vmatprep.subr.bf16.mxu0 %v7753
      %7997 = vmatpush1.bf16.msra.mxu0 %v7752
      %7998 = vmatprep.subr.bf16.mxu0 0
      %7999 = vmatpush2.bf16.msra.mxu0 0
      %8000 = vmatprep.subr.bf16.mxu0 0
      %8001 = vmatpush2.bf16.msra.mxu0 0
      %8002 = vmatprep.subr.bf16.mxu0 0
      %8003 = vmatpush2.bf16.msra.mxu0 0
      %8004 = vmatprep.subr.bf16.mxu0 0
      %8005 = vmatpush2.bf16.msra.mxu0 0
      %8006 = vmatprep.subr.bf16.mxu0 0
      %8007 = vmatpush2.bf16.msra.mxu0 0
      %8008 = vmatprep.subr.bf16.mxu0 0
      %8009 = vmatpush2.bf16.msra.mxu0 0
      %8010 = vmatprep.subr.bf16.mxu0 0
      %8011 = vmatpush2.bf16.msra.mxu0 0
      %8012 = vmatprep.subr.bf16.mxu0 0
      %8013 = vmatpush2.bf16.msra.mxu0 0
      %8014 = vmatprep.mubr.bf16.mxu0 0
      %8015 = vmatmul.mubr.bf16.gmra.mxu0 %v7094
      %v8016 = vpop.f32.mrf.mxu0
      %v8017 = vadd.f32 %v7974, %v8016
      %v8018 = vpop.f32.mrf.mxu0
      %v8019 = vadd.f32 %v7976, %v8018
      %v8020 = vpop.f32.mrf.mxu0
      %v8021 = vadd.f32 %v7978, %v8020
      %v8022 = vpop.f32.mrf.mxu0
      %v8023 = vadd.f32 %v7980, %v8022
      %8024 = vdwg.mxu0
      %8025 = vmatprep.subr.bf16.mxu0 0
      %8026 = vmatpush1.bf16.msra.mxu0 %v7679
      %8027 = vmatprep.subr.bf16.mxu0 0
      %8028 = vmatpush1.bf16.msra.mxu0 %v7676
      %8029 = vmatprep.subr.bf16.mxu0 0
      %8030 = vmatpush1.bf16.msra.mxu0 %v7673
      %8031 = vmatprep.subr.bf16.mxu0 0
      %8032 = vmatpush1.bf16.msra.mxu0 %v7670
      %8033 = vmatprep.subr.bf16.mxu0 0
      %8034 = vmatpush1.bf16.msra.mxu0 %v7667
      %8035 = vmatprep.subr.bf16.mxu0 0
      %8036 = vmatpush1.bf16.msra.mxu0 %v7664
      %8037 = vmatprep.subr.bf16.mxu0 0
      %8038 = vmatpush1.bf16.msra.mxu0 %v7661
      %8039 = vmatprep.subr.bf16.mxu0 0
      %8040 = vmatpush1.bf16.msra.mxu0 %v7658
      %8041 = vmatprep.subr.bf16.mxu0 0
      %8042 = vmatpush2.bf16.msra.mxu0 %v7703
      %8043 = vmatprep.subr.bf16.mxu0 0
      %8044 = vmatpush2.bf16.msra.mxu0 %v7700
      %8045 = vmatprep.subr.bf16.mxu0 0
      %8046 = vmatpush2.bf16.msra.mxu0 %v7697
      %8047 = vmatprep.subr.bf16.mxu0 0
      %8048 = vmatpush2.bf16.msra.mxu0 %v7694
      %8049 = vmatprep.subr.bf16.mxu0 0
      %8050 = vmatpush2.bf16.msra.mxu0 %v7691
      %8051 = vmatprep.subr.bf16.mxu0 0
      %8052 = vmatpush2.bf16.msra.mxu0 %v7688
      %8053 = vmatprep.subr.bf16.mxu0 0
      %8054 = vmatpush2.bf16.msra.mxu0 %v7685
      %8055 = vmatprep.subr.bf16.mxu0 0
      %8056 = vmatpush2.bf16.msra.mxu0 %v7682
      %8057 = vmatprep.mubr.bf16.mxu0 %v7091
      %8058 = vmatmul.mubr.bf16.gmra.mxu0 %v7090
      %v8059 = vpop.f32.mrf.mxu0
      %v8060 = vadd.f32 0.0, %v8059
      %v8061 = vpop.f32.mrf.mxu0
      %v8062 = vpop.f32.mrf.mxu0
      %v8063 = vadd.f32 0.0, %v8062
      %v8064 = vpop.f32.mrf.mxu0
      %8065 = vdwg.mxu0
      %8066 = vmatprep.subr.bf16.mxu0 0
      %8067 = vmatpush1.bf16.msra.mxu0 %v7727
      %8068 = vmatprep.subr.bf16.mxu0 0
      %8069 = vmatpush1.bf16.msra.mxu0 %v7724
      %8070 = vmatprep.subr.bf16.mxu0 0
      %8071 = vmatpush1.bf16.msra.mxu0 %v7721
      %8072 = vmatprep.subr.bf16.mxu0 0
      %8073 = vmatpush1.bf16.msra.mxu0 %v7718
      %8074 = vmatprep.subr.bf16.mxu0 0
      %8075 = vmatpush1.bf16.msra.mxu0 %v7715
      %8076 = vmatprep.subr.bf16.mxu0 0
      %8077 = vmatpush1.bf16.msra.mxu0 %v7712
      %8078 = vmatprep.subr.bf16.mxu0 0
      %8079 = vmatpush1.bf16.msra.mxu0 %v7709
      %8080 = vmatprep.subr.bf16.mxu0 0
      %8081 = vmatpush1.bf16.msra.mxu0 %v7706
      %8082 = vmatprep.subr.bf16.mxu0 0
      %8083 = vmatpush2.bf16.msra.mxu0 %v7751
      %8084 = vmatprep.subr.bf16.mxu0 0
      %8085 = vmatpush2.bf16.msra.mxu0 %v7748
      %8086 = vmatprep.subr.bf16.mxu0 0
      %8087 = vmatpush2.bf16.msra.mxu0 %v7745
      %8088 = vmatprep.subr.bf16.mxu0 0
      %8089 = vmatpush2.bf16.msra.mxu0 %v7742
      %8090 = vmatprep.subr.bf16.mxu0 0
      %8091 = vmatpush2.bf16.msra.mxu0 %v7739
      %8092 = vmatprep.subr.bf16.mxu0 0
      %8093 = vmatpush2.bf16.msra.mxu0 %v7736
      %8094 = vmatprep.subr.bf16.mxu0 0
      %8095 = vmatpush2.bf16.msra.mxu0 %v7733
      %8096 = vmatprep.subr.bf16.mxu0 0
      %8097 = vmatpush2.bf16.msra.mxu0 %v7730
      %8098 = vmatprep.mubr.bf16.mxu0 %v7093
      %8099 = vmatmul.mubr.bf16.gmra.mxu0 %v7092
      %v8100 = vpop.f32.mrf.mxu0
      %v8101 = vadd.f32 %v8060, %v8100
      %v8102 = vpop.f32.mrf.mxu0
      %v8103 = vpop.f32.mrf.mxu0
      %v8104 = vadd.f32 %v8063, %v8103
      %v8105 = vpop.f32.mrf.mxu0
      %8106 = vdwg.mxu0
      %8107 = vmatprep.subr.bf16.mxu0 0
      %8108 = vmatpush1.bf16.msra.mxu0 %v7775
      %8109 = vmatprep.subr.bf16.mxu0 0
      %8110 = vmatpush1.bf16.msra.mxu0 %v7772
      %8111 = vmatprep.subr.bf16.mxu0 0
      %8112 = vmatpush1.bf16.msra.mxu0 %v7769
      %8113 = vmatprep.subr.bf16.mxu0 0
      %8114 = vmatpush1.bf16.msra.mxu0 %v7766
      %8115 = vmatprep.subr.bf16.mxu0 0
      %8116 = vmatpush1.bf16.msra.mxu0 %v7763
      %8117 = vmatprep.subr.bf16.mxu0 0
      %8118 = vmatpush1.bf16.msra.mxu0 %v7760
      %8119 = vmatprep.subr.bf16.mxu0 0
      %8120 = vmatpush1.bf16.msra.mxu0 %v7757
      %8121 = vmatprep.subr.bf16.mxu0 0
      %8122 = vmatpush1.bf16.msra.mxu0 %v7754
      %8123 = vmatprep.subr.bf16.mxu0 0
      %8124 = vmatpush2.bf16.msra.mxu0 0
      %8125 = vmatprep.subr.bf16.mxu0 0
      %8126 = vmatpush2.bf16.msra.mxu0 0
      %8127 = vmatprep.subr.bf16.mxu0 0
      %8128 = vmatpush2.bf16.msra.mxu0 0
      %8129 = vmatprep.subr.bf16.mxu0 0
      %8130 = vmatpush2.bf16.msra.mxu0 0
      %8131 = vmatprep.subr.bf16.mxu0 0
      %8132 = vmatpush2.bf16.msra.mxu0 0
      %8133 = vmatprep.subr.bf16.mxu0 0
      %8134 = vmatpush2.bf16.msra.mxu0 0
      %8135 = vmatprep.subr.bf16.mxu0 0
      %8136 = vmatpush2.bf16.msra.mxu0 0
      %8137 = vmatprep.subr.bf16.mxu0 0
      %8138 = vmatpush2.bf16.msra.mxu0 0
      %8139 = vmatprep.mubr.bf16.mxu0 0
      %8140 = vmatmul.mubr.bf16.gmra.mxu0 %v7094
      %v8141 = vpop.f32.mrf.mxu0
      %v8142 = vadd.f32 %v8101, %v8141
      %v8143 = vpop.f32.mrf.mxu0
      %v8144 = vpop.f32.mrf.mxu0
      %v8145 = vadd.f32 %v8104, %v8144
      %v8146 = vpop.f32.mrf.mxu0
      %8147 = vdwg.mxu0
      %v8148 = vadd.f32 %v6821, %v8017
      %v8149 = vadd.f32 %v6823, %v8019
      %v8150 = vadd.f32 %v6946, %v8142
      %v8151 = vadd.f32 %v6825, %v8021
      %v8152 = vadd.f32 %v6827, %v8023
      %v8153 = vadd.f32 %v6949, %v8145
      %v8154 = vld [vmem:[%s6] sm:$0x7]
      %v8156 = vlaneseq
      %v8157 = vshrl.u32 %v8156, 7
      %v8158 = vsub.s32 0, %v8157
      %v8159 = vrot.slane %v8154, %v8158
      %v8160 = vlaneseq
      %v8161 = vshrl.u32 %v8160, 7
      %v8162 = vsub.s32 1, %v8161
      %v8163 = vrot.slane %v8154, %v8162
      %v8164 = vlaneseq
      %v8165 = vshrl.u32 %v8164, 7
      %v8166 = vsub.s32 2, %v8165
      %v8167 = vrot.slane %v8154, %v8166
      %v8171 = vadd.f32 %v8148, %v8159
      %v8172 = vadd.f32 %v8149, %v8163
      %v8173 = vadd.f32 %v8150, %v8167
      %v8174 = vadd.f32 %v8151, %v8159
      %v8175 = vadd.f32 %v8152, %v8163
      %v8176 = vadd.f32 %v8153, %v8167
      %v8177 = vmax.f32 %v8171, 0.0
      %v8178 = vmax.f32 %v8172, 0.0
      %v8179 = vmax.f32 %v8173, 0.0
      %v8180 = vmax.f32 %v8174, 0.0
      %v8181 = vmax.f32 %v8175, 0.0
      %v8182 = vmax.f32 %v8176, 0.0
      %v8183 = vpack.c.bf16 %v8180, %v8177
      %v8184 = vpack.c.bf16 %v8181, %v8178
      %v8185 = vpack.c.bf16 %v8182, %v8179
      %v8186 = vld [vmem:[%s7] sm:$0x3]
      %vm8187 = vcmask 72704
      %v8189 = vsel %vm8187, %v8186, 0
      %vm8191 = vcmask 1043456
      %v8192 = vsel %vm8191, 4294967295, 65535
      %v8193 = vsel %vm494, %v8192, 0
      %v8195 = vand.u32 %v8183, %v8193
      %v8198 = vand.u32 %v8184, %v8193
      %v8201 = vand.u32 %v8185, %v8193
      %8203 = vmatprep.subr.bf16.mxu0 0
      %8204 = vmatpush1.bf16.msra.mxu0 0
      %8205 = vmatprep.subr.bf16.mxu0 0
      %8206 = vmatpush1.bf16.msra.mxu0 0
      %8207 = vmatprep.subr.bf16.mxu0 0
      %8208 = vmatpush1.bf16.msra.mxu0 0
      %8209 = vmatprep.subr.bf16.mxu0 0
      %8210 = vmatpush1.bf16.msra.mxu0 0
      %8211 = vmatprep.subr.bf16.mxu0 0
      %8212 = vmatpush1.bf16.msra.mxu0 0
      %8213 = vmatprep.subr.bf16.mxu0 0
      %8214 = vmatpush1.bf16.msra.mxu0 0
      %8215 = vmatprep.subr.bf16.mxu0 0
      %8216 = vmatpush1.bf16.msra.mxu0 0
      %8217 = vmatprep.subr.bf16.mxu0 %v8198
      %8218 = vmatpush1.bf16.msra.mxu0 %v8195
      %8219 = vmatprep.subr.bf16.mxu0 0
      %8220 = vmatpush2.bf16.msra.mxu0 0
      %8221 = vmatprep.subr.bf16.mxu0 0
      %8222 = vmatpush2.bf16.msra.mxu0 0
      %8223 = vmatprep.subr.bf16.mxu0 0
      %8224 = vmatpush2.bf16.msra.mxu0 0
      %8225 = vmatprep.subr.bf16.mxu0 0
      %8226 = vmatpush2.bf16.msra.mxu0 0
      %8227 = vmatprep.subr.bf16.mxu0 0
      %8228 = vmatpush2.bf16.msra.mxu0 0
      %8229 = vmatprep.subr.bf16.mxu0 0
      %8230 = vmatpush2.bf16.msra.mxu0 0
      %8231 = vmatprep.subr.bf16.mxu0 0
      %8232 = vmatpush2.bf16.msra.mxu0 0
      %8233 = vmatprep.subr.bf16.mxu0 0
      %8234 = vmatpush2.bf16.msra.mxu0 0
      %8235 = vmatprep.mubr.bf16.mxu0 0
      %8236 = vmatmul.mubr.bf16.gmra.mxu0 %v8189
      %v8237 = vpop.f32.mrf.mxu0
      %v8238 = vadd.f32 0.0, %v8237
      %v8239 = vpop.f32.mrf.mxu0
      %v8240 = vadd.f32 0.0, %v8239
      %v8241 = vpop.f32.mrf.mxu0
      %v8242 = vpop.f32.mrf.mxu0
      %8243 = vdwg.mxu0
      %8244 = vmatprep.subr.bf16.mxu0 0
      %8245 = vmatpush1.bf16.msra.mxu0 0
      %8246 = vmatprep.subr.bf16.mxu0 0
      %8247 = vmatpush1.bf16.msra.mxu0 0
      %8248 = vmatprep.subr.bf16.mxu0 0
      %8249 = vmatpush1.bf16.msra.mxu0 0
      %8250 = vmatprep.subr.bf16.mxu0 0
      %8251 = vmatpush1.bf16.msra.mxu0 0
      %8252 = vmatprep.subr.bf16.mxu0 0
      %8253 = vmatpush1.bf16.msra.mxu0 0
      %8254 = vmatprep.subr.bf16.mxu0 0
      %8255 = vmatpush1.bf16.msra.mxu0 0
      %8256 = vmatprep.subr.bf16.mxu0 0
      %8257 = vmatpush1.bf16.msra.mxu0 0
      %8258 = vmatprep.subr.bf16.mxu0 0
      %8259 = vmatpush1.bf16.msra.mxu0 %v8201
      %8260 = vmatprep.subr.bf16.mxu0 0
      %8261 = vmatpush2.bf16.msra.mxu0 0
      %8262 = vmatprep.subr.bf16.mxu0 0
      %8263 = vmatpush2.bf16.msra.mxu0 0
      %8264 = vmatprep.subr.bf16.mxu0 0
      %8265 = vmatpush2.bf16.msra.mxu0 0
      %8266 = vmatprep.subr.bf16.mxu0 0
      %8267 = vmatpush2.bf16.msra.mxu0 0
      %8268 = vmatprep.subr.bf16.mxu0 0
      %8269 = vmatpush2.bf16.msra.mxu0 0
      %8270 = vmatprep.subr.bf16.mxu0 0
      %8271 = vmatpush2.bf16.msra.mxu0 0
      %8272 = vmatprep.subr.bf16.mxu0 0
      %8273 = vmatpush2.bf16.msra.mxu0 0
      %8274 = vmatprep.subr.bf16.mxu0 0
      %8275 = vmatpush2.bf16.msra.mxu0 0
      %8276 = vmatprep.mubr.bf16.mxu0 0
      %8277 = vmatmul.mubr.bf16.gmra.mxu0 %v8189
      %v8278 = vpop.f32.mrf.mxu0
      %v8279 = vadd.f32 0.0, %v8278
      %v8280 = vpop.f32.mrf.mxu0
      %v8281 = vpop.f32.mrf.mxu0
      %v8282 = vpop.f32.mrf.mxu0
      %8283 = vdwg.mxu0
      %v8284 = vpack.c.bf16 %v8238, %v8238
      %v8285 = vpack.c.bf16 %v8240, %v8240
      %v8286 = vpack.c.bf16 %v8279, %v8279
      %v8287 = vld [vmem:[%s8] sm:$0xf]
      %v8288 = vld [vmem:[%s8 + $0x4] sm:$0xf]
      %v8289 = vld [vmem:[%s8 + $0x8] sm:$0xf]
      %v8290 = vld [vmem:[%s8 + $0xc] sm:$0xf]
      %v8291 = vld [vmem:[%s8 + $0x10] sm:$0xf]
      %v8292 = vld [vmem:[%s8 + $0x14] sm:$0xf]
      %v8293 = vld [vmem:[%s8 + $0x18] sm:$0xf]
      %v8294 = vld [vmem:[%s8 + $0x1c] sm:$0xf]
      %v8295 = vld [vmem:[%s8 + $0x20] sm:$0xf]
      %v8296 = vld [vmem:[%s8 + $0x24] sm:$0xf]
      %v8297 = vld [vmem:[%s8 + $0x28] sm:$0xf]
      %v8298 = vld [vmem:[%s8 + $0x2c] sm:$0xf]
      %v8299 = vld [vmem:[%s8 + $0x30] sm:$0xf]
      %v8300 = vld [vmem:[%s8 + $0x34] sm:$0xf]
      %v8301 = vld [vmem:[%s8 + $0x38] sm:$0xf]
      %v8302 = vld [vmem:[%s8 + $0x3c] sm:$0xf]
      %v8303 = vld [vmem:[%s8 + $0x40] sm:$0xf]
      %v8304 = vld [vmem:[%s8 + $0x44] sm:$0xf]
      %v8305 = vld [vmem:[%s8 + $0x48] sm:$0xf]
      %v8306 = vld [vmem:[%s8 + $0x4c] sm:$0xf]
      %v8307 = vld [vmem:[%s8 + $0x50] sm:$0xf]
      %v8308 = vld [vmem:[%s8 + $0x54] sm:$0xf]
      %v8309 = vld [vmem:[%s8 + $0x58] sm:$0xf]
      %v8310 = vld [vmem:[%s8 + $0x5c] sm:$0xf]
      %v8311 = vld [vmem:[%s8 + $0x60] sm:$0xf]
      %v8312 = vld [vmem:[%s8 + $0x64] sm:$0xf]
      %v8313 = vld [vmem:[%s8 + $0x68] sm:$0xf]
      %v8314 = vld [vmem:[%s8 + $0x6c] sm:$0xf]
      %v8315 = vld [vmem:[%s8 + $0x70] sm:$0xf]
      %v8316 = vld [vmem:[%s8 + $0x74] sm:$0xf]
      %v8317 = vld [vmem:[%s8 + $0x78] sm:$0xf]
      %v8318 = vld [vmem:[%s8 + $0x7c] sm:$0xf]
      %v8319 = vld [vmem:[%s8 + $0x80] sm:$0xf]
      %v8320 = vld [vmem:[%s8 + $0x84] sm:$0xf]
      %v8321 = vld [vmem:[%s8 + $0x88] sm:$0xf]
      %v8322 = vld [vmem:[%s8 + $0x8c] sm:$0xf]
      %s8323 = scalar_lea.vmem %s7, 2
      %v8324 = vld [vmem:[%s8323] sm:$0x3]
      %v8326 = vsel %vm8187, %v8324, 0
      %8328 = vmatprep.subr.bf16.mxu0 0
      %8329 = vmatpush1.bf16.msra.mxu0 0
      %8330 = vmatprep.subr.bf16.mxu0 0
      %8331 = vmatpush1.bf16.msra.mxu0 0
      %8332 = vmatprep.subr.bf16.mxu0 0
      %8333 = vmatpush1.bf16.msra.mxu0 0
      %8334 = vmatprep.subr.bf16.mxu0 0
      %8335 = vmatpush1.bf16.msra.mxu0 0
      %8336 = vmatprep.subr.bf16.mxu0 0
      %8337 = vmatpush1.bf16.msra.mxu0 0
      %8338 = vmatprep.subr.bf16.mxu0 0
      %8339 = vmatpush1.bf16.msra.mxu0 0
      %8340 = vmatprep.subr.bf16.mxu0 0
      %8341 = vmatpush1.bf16.msra.mxu0 0
      %8342 = vmatprep.subr.bf16.mxu0 %v8198
      %8343 = vmatpush1.bf16.msra.mxu0 %v8195
      %8344 = vmatprep.subr.bf16.mxu0 0
      %8345 = vmatpush2.bf16.msra.mxu0 0
      %8346 = vmatprep.subr.bf16.mxu0 0
      %8347 = vmatpush2.bf16.msra.mxu0 0
      %8348 = vmatprep.subr.bf16.mxu0 0
      %8349 = vmatpush2.bf16.msra.mxu0 0
      %8350 = vmatprep.subr.bf16.mxu0 0
      %8351 = vmatpush2.bf16.msra.mxu0 0
      %8352 = vmatprep.subr.bf16.mxu0 0
      %8353 = vmatpush2.bf16.msra.mxu0 0
      %8354 = vmatprep.subr.bf16.mxu0 0
      %8355 = vmatpush2.bf16.msra.mxu0 0
      %8356 = vmatprep.subr.bf16.mxu0 0
      %8357 = vmatpush2.bf16.msra.mxu0 0
      %8358 = vmatprep.subr.bf16.mxu0 0
      %8359 = vmatpush2.bf16.msra.mxu0 0
      %8360 = vmatprep.mubr.bf16.mxu0 0
      %8361 = vmatmul.mubr.bf16.gmra.mxu0 %v8326
      %v8362 = vpop.f32.mrf.mxu0
      %v8363 = vadd.f32 0.0, %v8362
      %v8364 = vpop.f32.mrf.mxu0
      %v8365 = vadd.f32 0.0, %v8364
      %v8366 = vpop.f32.mrf.mxu0
      %v8367 = vpop.f32.mrf.mxu0
      %8368 = vdwg.mxu0
      %8369 = vmatprep.subr.bf16.mxu0 0
      %8370 = vmatpush1.bf16.msra.mxu0 0
      %8371 = vmatprep.subr.bf16.mxu0 0
      %8372 = vmatpush1.bf16.msra.mxu0 0
      %8373 = vmatprep.subr.bf16.mxu0 0
      %8374 = vmatpush1.bf16.msra.mxu0 0
      %8375 = vmatprep.subr.bf16.mxu0 0
      %8376 = vmatpush1.bf16.msra.mxu0 0
      %8377 = vmatprep.subr.bf16.mxu0 0
      %8378 = vmatpush1.bf16.msra.mxu0 0
      %8379 = vmatprep.subr.bf16.mxu0 0
      %8380 = vmatpush1.bf16.msra.mxu0 0
      %8381 = vmatprep.subr.bf16.mxu0 0
      %8382 = vmatpush1.bf16.msra.mxu0 0
      %8383 = vmatprep.subr.bf16.mxu0 0
      %8384 = vmatpush1.bf16.msra.mxu0 %v8201
      %8385 = vmatprep.subr.bf16.mxu0 0
      %8386 = vmatpush2.bf16.msra.mxu0 0
      %8387 = vmatprep.subr.bf16.mxu0 0
      %8388 = vmatpush2.bf16.msra.mxu0 0
      %8389 = vmatprep.subr.bf16.mxu0 0
      %8390 = vmatpush2.bf16.msra.mxu0 0
      %8391 = vmatprep.subr.bf16.mxu0 0
      %8392 = vmatpush2.bf16.msra.mxu0 0
      %8393 = vmatprep.subr.bf16.mxu0 0
      %8394 = vmatpush2.bf16.msra.mxu0 0
      %8395 = vmatprep.subr.bf16.mxu0 0
      %8396 = vmatpush2.bf16.msra.mxu0 0
      %8397 = vmatprep.subr.bf16.mxu0 0
      %8398 = vmatpush2.bf16.msra.mxu0 0
      %8399 = vmatprep.subr.bf16.mxu0 0
      %8400 = vmatpush2.bf16.msra.mxu0 0
      %8401 = vmatprep.mubr.bf16.mxu0 0
      %8402 = vmatmul.mubr.bf16.gmra.mxu0 %v8326
      %v8403 = vpop.f32.mrf.mxu0
      %v8404 = vadd.f32 0.0, %v8403
      %v8405 = vpop.f32.mrf.mxu0
      %v8406 = vpop.f32.mrf.mxu0
      %v8407 = vpop.f32.mrf.mxu0
      %8408 = vdwg.mxu0
      %v8409 = vpack.c.bf16 %v8363, %v8363
      %v8410 = vpack.c.bf16 %v8365, %v8365
      %v8411 = vpack.c.bf16 %v8404, %v8404
      %s8412 = scalar_lea.vmem %s8, 144
      %v8413 = vld [vmem:[%s8412] sm:$0xf]
      %v8414 = vld [vmem:[%s8412 + $0x4] sm:$0xf]
      %v8415 = vld [vmem:[%s8412 + $0x8] sm:$0xf]
      %v8416 = vld [vmem:[%s8412 + $0xc] sm:$0xf]
      %v8417 = vld [vmem:[%s8412 + $0x10] sm:$0xf]
      %v8418 = vld [vmem:[%s8412 + $0x14] sm:$0xf]
      %v8419 = vld [vmem:[%s8412 + $0x18] sm:$0xf]
      %v8420 = vld [vmem:[%s8412 + $0x1c] sm:$0xf]
      %v8421 = vld [vmem:[%s8412 + $0x20] sm:$0xf]
      %v8422 = vld [vmem:[%s8412 + $0x24] sm:$0xf]
      %v8423 = vld [vmem:[%s8412 + $0x28] sm:$0xf]
      %v8424 = vld [vmem:[%s8412 + $0x2c] sm:$0xf]
      %v8425 = vld [vmem:[%s8412 + $0x30] sm:$0xf]
      %v8426 = vld [vmem:[%s8412 + $0x34] sm:$0xf]
      %v8427 = vld [vmem:[%s8412 + $0x38] sm:$0xf]
      %v8428 = vld [vmem:[%s8412 + $0x3c] sm:$0xf]
      %v8429 = vld [vmem:[%s8412 + $0x40] sm:$0xf]
      %v8430 = vld [vmem:[%s8412 + $0x44] sm:$0xf]
      %v8431 = vld [vmem:[%s8412 + $0x48] sm:$0xf]
      %v8432 = vld [vmem:[%s8412 + $0x4c] sm:$0xf]
      %v8433 = vld [vmem:[%s8412 + $0x50] sm:$0xf]
      %v8434 = vld [vmem:[%s8412 + $0x54] sm:$0xf]
      %v8435 = vld [vmem:[%s8412 + $0x58] sm:$0xf]
      %v8436 = vld [vmem:[%s8412 + $0x5c] sm:$0xf]
      %v8437 = vld [vmem:[%s8412 + $0x60] sm:$0xf]
      %v8438 = vld [vmem:[%s8412 + $0x64] sm:$0xf]
      %v8439 = vld [vmem:[%s8412 + $0x68] sm:$0xf]
      %v8440 = vld [vmem:[%s8412 + $0x6c] sm:$0xf]
      %v8441 = vld [vmem:[%s8412 + $0x70] sm:$0xf]
      %v8442 = vld [vmem:[%s8412 + $0x74] sm:$0xf]
      %v8443 = vld [vmem:[%s8412 + $0x78] sm:$0xf]
      %v8444 = vld [vmem:[%s8412 + $0x7c] sm:$0xf]
      %v8445 = vld [vmem:[%s8412 + $0x80] sm:$0xf]
      %v8446 = vld [vmem:[%s8412 + $0x84] sm:$0xf]
      %v8447 = vld [vmem:[%s8412 + $0x88] sm:$0xf]
      %v8448 = vld [vmem:[%s8412 + $0x8c] sm:$0xf]
      %v8485 = vunpack.c.l.b16 %v8413
      %v8486 = vunpack.c.l.b16 %v8414
      %v8487 = vunpack.c.l.b16 %v8415
      %v8488 = vunpack.c.l.b16 %v8416
      %v8489 = vunpack.c.l.b16 %v8417
      %v8490 = vunpack.c.l.b16 %v8418
      %v8491 = vunpack.c.l.b16 %v8419
      %v8492 = vunpack.c.l.b16 %v8420
      %v8493 = vunpack.c.l.b16 %v8421
      %v8494 = vunpack.c.l.b16 %v8422
      %v8495 = vunpack.c.l.b16 %v8423
      %v8496 = vunpack.c.l.b16 %v8424
      %v8497 = vunpack.c.l.b16 %v8425
      %v8498 = vunpack.c.l.b16 %v8426
      %v8499 = vunpack.c.l.b16 %v8427
      %v8500 = vunpack.c.l.b16 %v8428
      %v8501 = vunpack.c.l.b16 %v8429
      %v8502 = vunpack.c.l.b16 %v8430
      %v8503 = vunpack.c.l.b16 %v8431
      %v8504 = vunpack.c.l.b16 %v8432
      %v8505 = vunpack.c.l.b16 %v8433
      %v8506 = vunpack.c.l.b16 %v8434
      %v8507 = vunpack.c.l.b16 %v8435
      %v8508 = vunpack.c.l.b16 %v8436
      %v8509 = vunpack.c.l.b16 %v8437
      %v8510 = vunpack.c.l.b16 %v8438
      %v8511 = vunpack.c.l.b16 %v8439
      %v8512 = vunpack.c.l.b16 %v8440
      %v8513 = vunpack.c.l.b16 %v8441
      %v8514 = vunpack.c.l.b16 %v8442
      %v8515 = vunpack.c.l.b16 %v8443
      %v8516 = vunpack.c.l.b16 %v8444
      %v8517 = vunpack.c.l.b16 %v8445
      %v8518 = vunpack.c.l.b16 %v8446
      %v8519 = vunpack.c.l.b16 %v8447
      %v8520 = vunpack.c.l.b16 %v8448
      %v8521 = vpack.c.b16 %v8486, %v8485
      %v8522 = vpack.c.b16 %v8488, %v8487
      %v8523 = vpack.c.b16 %v8490, %v8489
      %v8524 = vpack.c.b16 %v8492, %v8491
      %v8525 = vpack.c.b16 %v8494, %v8493
      %v8526 = vpack.c.b16 %v8496, %v8495
      %v8527 = vpack.c.b16 %v8498, %v8497
      %v8528 = vpack.c.b16 %v8500, %v8499
      %v8529 = vpack.c.b16 %v8502, %v8501
      %v8530 = vpack.c.b16 %v8504, %v8503
      %v8531 = vpack.c.b16 %v8506, %v8505
      %v8532 = vpack.c.b16 %v8508, %v8507
      %v8533 = vpack.c.b16 %v8510, %v8509
      %v8534 = vpack.c.b16 %v8512, %v8511
      %v8535 = vpack.c.b16 %v8514, %v8513
      %v8536 = vpack.c.b16 %v8516, %v8515
      %v8537 = vpack.c.b16 %v8518, %v8517
      %v8538 = vpack.c.b16 %v8520, %v8519
      %vm8557 = vcmask 261120
      %v8559 = vsel %vm8557, %v8411, 0
      %8561 = vmatprep.subr.bf16.mxu0 0
      %8562 = vmatpush1.bf16.msra.mxu0 %v8528
      %8563 = vmatprep.subr.bf16.mxu0 0
      %8564 = vmatpush1.bf16.msra.mxu0 %v8527
      %8565 = vmatprep.subr.bf16.mxu0 0
      %8566 = vmatpush1.bf16.msra.mxu0 %v8526
      %8567 = vmatprep.subr.bf16.mxu0 0
      %8568 = vmatpush1.bf16.msra.mxu0 %v8525
      %8569 = vmatprep.subr.bf16.mxu0 0
      %8570 = vmatpush1.bf16.msra.mxu0 %v8524
      %8571 = vmatprep.subr.bf16.mxu0 0
      %8572 = vmatpush1.bf16.msra.mxu0 %v8523
      %8573 = vmatprep.subr.bf16.mxu0 0
      %8574 = vmatpush1.bf16.msra.mxu0 %v8522
      %8575 = vmatprep.subr.bf16.mxu0 0
      %8576 = vmatpush1.bf16.msra.mxu0 %v8521
      %8577 = vmatprep.subr.bf16.mxu0 0
      %8578 = vmatpush2.bf16.msra.mxu0 %v8536
      %8579 = vmatprep.subr.bf16.mxu0 0
      %8580 = vmatpush2.bf16.msra.mxu0 %v8535
      %8581 = vmatprep.subr.bf16.mxu0 0
      %8582 = vmatpush2.bf16.msra.mxu0 %v8534
      %8583 = vmatprep.subr.bf16.mxu0 0
      %8584 = vmatpush2.bf16.msra.mxu0 %v8533
      %8585 = vmatprep.subr.bf16.mxu0 0
      %8586 = vmatpush2.bf16.msra.mxu0 %v8532
      %8587 = vmatprep.subr.bf16.mxu0 0
      %8588 = vmatpush2.bf16.msra.mxu0 %v8531
      %8589 = vmatprep.subr.bf16.mxu0 0
      %8590 = vmatpush2.bf16.msra.mxu0 %v8530
      %8591 = vmatprep.subr.bf16.mxu0 0
      %8592 = vmatpush2.bf16.msra.mxu0 %v8529
      %8593 = vmatprep.mubr.bf16.mxu0 %v8410
      %8594 = vmatmul.mubr.bf16.gmra.mxu0 %v8409
      %v8595 = vpop.f32.mrf.mxu0
      %v8596 = vadd.f32 0.0, %v8595
      %v8597 = vpop.f32.mrf.mxu0
      %v8598 = vpop.f32.mrf.mxu0
      %v8599 = vpop.f32.mrf.mxu0
      %8600 = vdwg.mxu0
      %8601 = vmatprep.subr.bf16.mxu0 0
      %8602 = vmatpush1.bf16.msra.mxu0 0
      %8603 = vmatprep.subr.bf16.mxu0 0
      %8604 = vmatpush1.bf16.msra.mxu0 0
      %8605 = vmatprep.subr.bf16.mxu0 0
      %8606 = vmatpush1.bf16.msra.mxu0 0
      %8607 = vmatprep.subr.bf16.mxu0 0
      %8608 = vmatpush1.bf16.msra.mxu0 0
      %8609 = vmatprep.subr.bf16.mxu0 0
      %8610 = vmatpush1.bf16.msra.mxu0 0
      %8611 = vmatprep.subr.bf16.mxu0 0
      %8612 = vmatpush1.bf16.msra.mxu0 0
      %8613 = vmatprep.subr.bf16.mxu0 0
      %8614 = vmatpush1.bf16.msra.mxu0 %v8538
      %8615 = vmatprep.subr.bf16.mxu0 0
      %8616 = vmatpush1.bf16.msra.mxu0 %v8537
      %8617 = vmatprep.subr.bf16.mxu0 0
      %8618 = vmatpush2.bf16.msra.mxu0 0
      %8619 = vmatprep.subr.bf16.mxu0 0
      %8620 = vmatpush2.bf16.msra.mxu0 0
      %8621 = vmatprep.subr.bf16.mxu0 0
      %8622 = vmatpush2.bf16.msra.mxu0 0
      %8623 = vmatprep.subr.bf16.mxu0 0
      %8624 = vmatpush2.bf16.msra.mxu0 0
      %8625 = vmatprep.subr.bf16.mxu0 0
      %8626 = vmatpush2.bf16.msra.mxu0 0
      %8627 = vmatprep.subr.bf16.mxu0 0
      %8628 = vmatpush2.bf16.msra.mxu0 0
      %8629 = vmatprep.subr.bf16.mxu0 0
      %8630 = vmatpush2.bf16.msra.mxu0 0
      %8631 = vmatprep.subr.bf16.mxu0 0
      %8632 = vmatpush2.bf16.msra.mxu0 0
      %8633 = vmatprep.mubr.bf16.mxu0 0
      %8634 = vmatmul.mubr.bf16.gmra.mxu0 %v8559
      %v8635 = vpop.f32.mrf.mxu0
      %v8636 = vadd.f32 %v8596, %v8635
      %v8637 = vpop.f32.mrf.mxu0
      %v8638 = vpop.f32.mrf.mxu0
      %v8639 = vpop.f32.mrf.mxu0
      %8640 = vdwg.mxu0
      %v8677 = vunpack.c.l.b16 %v8287
      %v8678 = vunpack.c.l.b16 %v8288
      %v8679 = vunpack.c.l.b16 %v8289
      %v8680 = vunpack.c.l.b16 %v8290
      %v8681 = vunpack.c.l.b16 %v8291
      %v8682 = vunpack.c.l.b16 %v8292
      %v8683 = vunpack.c.l.b16 %v8293
      %v8684 = vunpack.c.l.b16 %v8294
      %v8685 = vunpack.c.l.b16 %v8295
      %v8686 = vunpack.c.l.b16 %v8296
      %v8687 = vunpack.c.l.b16 %v8297
      %v8688 = vunpack.c.l.b16 %v8298
      %v8689 = vunpack.c.l.b16 %v8299
      %v8690 = vunpack.c.l.b16 %v8300
      %v8691 = vunpack.c.l.b16 %v8301
      %v8692 = vunpack.c.l.b16 %v8302
      %v8693 = vunpack.c.l.b16 %v8303
      %v8694 = vunpack.c.l.b16 %v8304
      %v8695 = vunpack.c.l.b16 %v8305
      %v8696 = vunpack.c.l.b16 %v8306
      %v8697 = vunpack.c.l.b16 %v8307
      %v8698 = vunpack.c.l.b16 %v8308
      %v8699 = vunpack.c.l.b16 %v8309
      %v8700 = vunpack.c.l.b16 %v8310
      %v8701 = vunpack.c.l.b16 %v8311
      %v8702 = vunpack.c.l.b16 %v8312
      %v8703 = vunpack.c.l.b16 %v8313
      %v8704 = vunpack.c.l.b16 %v8314
      %v8705 = vunpack.c.l.b16 %v8315
      %v8706 = vunpack.c.l.b16 %v8316
      %v8707 = vunpack.c.l.b16 %v8317
      %v8708 = vunpack.c.l.b16 %v8318
      %v8709 = vunpack.c.l.b16 %v8319
      %v8710 = vunpack.c.l.b16 %v8320
      %v8711 = vunpack.c.l.b16 %v8321
      %v8712 = vunpack.c.l.b16 %v8322
      %v8713 = vpack.c.b16 %v8678, %v8677
      %v8714 = vpack.c.b16 %v8680, %v8679
      %v8715 = vpack.c.b16 %v8682, %v8681
      %v8716 = vpack.c.b16 %v8684, %v8683
      %v8717 = vpack.c.b16 %v8686, %v8685
      %v8718 = vpack.c.b16 %v8688, %v8687
      %v8719 = vpack.c.b16 %v8690, %v8689
      %v8720 = vpack.c.b16 %v8692, %v8691
      %v8721 = vpack.c.b16 %v8694, %v8693
      %v8722 = vpack.c.b16 %v8696, %v8695
      %v8723 = vpack.c.b16 %v8698, %v8697
      %v8724 = vpack.c.b16 %v8700, %v8699
      %v8725 = vpack.c.b16 %v8702, %v8701
      %v8726 = vpack.c.b16 %v8704, %v8703
      %v8727 = vpack.c.b16 %v8706, %v8705
      %v8728 = vpack.c.b16 %v8708, %v8707
      %v8729 = vpack.c.b16 %v8710, %v8709
      %v8730 = vpack.c.b16 %v8712, %v8711
      %v8750 = vsel %vm8557, %v8286, 0
      %8752 = vmatprep.subr.bf16.mxu0 0
      %8753 = vmatpush1.bf16.msra.mxu0 %v8720
      %8754 = vmatprep.subr.bf16.mxu0 0
      %8755 = vmatpush1.bf16.msra.mxu0 %v8719
      %8756 = vmatprep.subr.bf16.mxu0 0
      %8757 = vmatpush1.bf16.msra.mxu0 %v8718
      %8758 = vmatprep.subr.bf16.mxu0 0
      %8759 = vmatpush1.bf16.msra.mxu0 %v8717
      %8760 = vmatprep.subr.bf16.mxu0 0
      %8761 = vmatpush1.bf16.msra.mxu0 %v8716
      %8762 = vmatprep.subr.bf16.mxu0 0
      %8763 = vmatpush1.bf16.msra.mxu0 %v8715
      %8764 = vmatprep.subr.bf16.mxu0 0
      %8765 = vmatpush1.bf16.msra.mxu0 %v8714
      %8766 = vmatprep.subr.bf16.mxu0 0
      %8767 = vmatpush1.bf16.msra.mxu0 %v8713
      %8768 = vmatprep.subr.bf16.mxu0 0
      %8769 = vmatpush2.bf16.msra.mxu0 %v8728
      %8770 = vmatprep.subr.bf16.mxu0 0
      %8771 = vmatpush2.bf16.msra.mxu0 %v8727
      %8772 = vmatprep.subr.bf16.mxu0 0
      %8773 = vmatpush2.bf16.msra.mxu0 %v8726
      %8774 = vmatprep.subr.bf16.mxu0 0
      %8775 = vmatpush2.bf16.msra.mxu0 %v8725
      %8776 = vmatprep.subr.bf16.mxu0 0
      %8777 = vmatpush2.bf16.msra.mxu0 %v8724
      %8778 = vmatprep.subr.bf16.mxu0 0
      %8779 = vmatpush2.bf16.msra.mxu0 %v8723
      %8780 = vmatprep.subr.bf16.mxu0 0
      %8781 = vmatpush2.bf16.msra.mxu0 %v8722
      %8782 = vmatprep.subr.bf16.mxu0 0
      %8783 = vmatpush2.bf16.msra.mxu0 %v8721
      %8784 = vmatprep.mubr.bf16.mxu0 %v8285
      %8785 = vmatmul.mubr.bf16.gmra.mxu0 %v8284
      %v8786 = vpop.f32.mrf.mxu0
      %v8787 = vadd.f32 %v8636, %v8786
      %v8788 = vpop.f32.mrf.mxu0
      %v8789 = vpop.f32.mrf.mxu0
      %v8790 = vpop.f32.mrf.mxu0
      %8791 = vdwg.mxu0
      %8792 = vmatprep.subr.bf16.mxu0 0
      %8793 = vmatpush1.bf16.msra.mxu0 0
      %8794 = vmatprep.subr.bf16.mxu0 0
      %8795 = vmatpush1.bf16.msra.mxu0 0
      %8796 = vmatprep.subr.bf16.mxu0 0
      %8797 = vmatpush1.bf16.msra.mxu0 0
      %8798 = vmatprep.subr.bf16.mxu0 0
      %8799 = vmatpush1.bf16.msra.mxu0 0
      %8800 = vmatprep.subr.bf16.mxu0 0
      %8801 = vmatpush1.bf16.msra.mxu0 0
      %8802 = vmatprep.subr.bf16.mxu0 0
      %8803 = vmatpush1.bf16.msra.mxu0 0
      %8804 = vmatprep.subr.bf16.mxu0 0
      %8805 = vmatpush1.bf16.msra.mxu0 %v8730
      %8806 = vmatprep.subr.bf16.mxu0 0
      %8807 = vmatpush1.bf16.msra.mxu0 %v8729
      %8808 = vmatprep.subr.bf16.mxu0 0
      %8809 = vmatpush2.bf16.msra.mxu0 0
      %8810 = vmatprep.subr.bf16.mxu0 0
      %8811 = vmatpush2.bf16.msra.mxu0 0
      %8812 = vmatprep.subr.bf16.mxu0 0
      %8813 = vmatpush2.bf16.msra.mxu0 0
      %8814 = vmatprep.subr.bf16.mxu0 0
      %8815 = vmatpush2.bf16.msra.mxu0 0
      %8816 = vmatprep.subr.bf16.mxu0 0
      %8817 = vmatpush2.bf16.msra.mxu0 0
      %8818 = vmatprep.subr.bf16.mxu0 0
      %8819 = vmatpush2.bf16.msra.mxu0 0
      %8820 = vmatprep.subr.bf16.mxu0 0
      %8821 = vmatpush2.bf16.msra.mxu0 0
      %8822 = vmatprep.subr.bf16.mxu0 0
      %8823 = vmatpush2.bf16.msra.mxu0 0
      %8824 = vmatprep.mubr.bf16.mxu0 0
      %8825 = vmatmul.mubr.bf16.gmra.mxu0 %v8750
      %v8826 = vpop.f32.mrf.mxu0
      %v8827 = vadd.f32 %v8787, %v8826
      %v8828 = vpop.f32.mrf.mxu0
      %v8829 = vpop.f32.mrf.mxu0
      %v8830 = vpop.f32.mrf.mxu0
      %8831 = vdwg.mxu0
      %s8832 = scalar_lea.vmem %s7, 4
      %v8833 = vld [vmem:[%s8832] sm:$0x3]
      %v8835 = vsel %vm8187, %v8833, 0
      %8837 = vmatprep.subr.bf16.mxu0 0
      %8838 = vmatpush1.bf16.msra.mxu0 0
      %8839 = vmatprep.subr.bf16.mxu0 0
      %8840 = vmatpush1.bf16.msra.mxu0 0
      %8841 = vmatprep.subr.bf16.mxu0 0
      %8842 = vmatpush1.bf16.msra.mxu0 0
      %8843 = vmatprep.subr.bf16.mxu0 0
      %8844 = vmatpush1.bf16.msra.mxu0 0
      %8845 = vmatprep.subr.bf16.mxu0 0
      %8846 = vmatpush1.bf16.msra.mxu0 0
      %8847 = vmatprep.subr.bf16.mxu0 0
      %8848 = vmatpush1.bf16.msra.mxu0 0
      %8849 = vmatprep.subr.bf16.mxu0 0
      %8850 = vmatpush1.bf16.msra.mxu0 0
      %8851 = vmatprep.subr.bf16.mxu0 %v8198
      %8852 = vmatpush1.bf16.msra.mxu0 %v8195
      %8853 = vmatprep.subr.bf16.mxu0 0
      %8854 = vmatpush2.bf16.msra.mxu0 0
      %8855 = vmatprep.subr.bf16.mxu0 0
      %8856 = vmatpush2.bf16.msra.mxu0 0
      %8857 = vmatprep.subr.bf16.mxu0 0
      %8858 = vmatpush2.bf16.msra.mxu0 0
      %8859 = vmatprep.subr.bf16.mxu0 0
      %8860 = vmatpush2.bf16.msra.mxu0 0
      %8861 = vmatprep.subr.bf16.mxu0 0
      %8862 = vmatpush2.bf16.msra.mxu0 0
      %8863 = vmatprep.subr.bf16.mxu0 0
      %8864 = vmatpush2.bf16.msra.mxu0 0
      %8865 = vmatprep.subr.bf16.mxu0 0
      %8866 = vmatpush2.bf16.msra.mxu0 0
      %8867 = vmatprep.subr.bf16.mxu0 0
      %8868 = vmatpush2.bf16.msra.mxu0 0
      %8869 = vmatprep.mubr.bf16.mxu0 0
      %8870 = vmatmul.mubr.bf16.gmra.mxu0 %v8835
      %v8871 = vpop.f32.mrf.mxu0
      %v8872 = vadd.f32 0.0, %v8871
      %v8873 = vpop.f32.mrf.mxu0
      %v8874 = vadd.f32 0.0, %v8873
      %v8875 = vpop.f32.mrf.mxu0
      %v8876 = vpop.f32.mrf.mxu0
      %8877 = vdwg.mxu0
      %8878 = vmatprep.subr.bf16.mxu0 0
      %8879 = vmatpush1.bf16.msra.mxu0 0
      %8880 = vmatprep.subr.bf16.mxu0 0
      %8881 = vmatpush1.bf16.msra.mxu0 0
      %8882 = vmatprep.subr.bf16.mxu0 0
      %8883 = vmatpush1.bf16.msra.mxu0 0
      %8884 = vmatprep.subr.bf16.mxu0 0
      %8885 = vmatpush1.bf16.msra.mxu0 0
      %8886 = vmatprep.subr.bf16.mxu0 0
      %8887 = vmatpush1.bf16.msra.mxu0 0
      %8888 = vmatprep.subr.bf16.mxu0 0
      %8889 = vmatpush1.bf16.msra.mxu0 0
      %8890 = vmatprep.subr.bf16.mxu0 0
      %8891 = vmatpush1.bf16.msra.mxu0 0
      %8892 = vmatprep.subr.bf16.mxu0 0
      %8893 = vmatpush1.bf16.msra.mxu0 %v8201
      %8894 = vmatprep.subr.bf16.mxu0 0
      %8895 = vmatpush2.bf16.msra.mxu0 0
      %8896 = vmatprep.subr.bf16.mxu0 0
      %8897 = vmatpush2.bf16.msra.mxu0 0
      %8898 = vmatprep.subr.bf16.mxu0 0
      %8899 = vmatpush2.bf16.msra.mxu0 0
      %8900 = vmatprep.subr.bf16.mxu0 0
      %8901 = vmatpush2.bf16.msra.mxu0 0
      %8902 = vmatprep.subr.bf16.mxu0 0
      %8903 = vmatpush2.bf16.msra.mxu0 0
      %8904 = vmatprep.subr.bf16.mxu0 0
      %8905 = vmatpush2.bf16.msra.mxu0 0
      %8906 = vmatprep.subr.bf16.mxu0 0
      %8907 = vmatpush2.bf16.msra.mxu0 0
      %8908 = vmatprep.subr.bf16.mxu0 0
      %8909 = vmatpush2.bf16.msra.mxu0 0
      %8910 = vmatprep.mubr.bf16.mxu0 0
      %8911 = vmatmul.mubr.bf16.gmra.mxu0 %v8835
      %v8912 = vpop.f32.mrf.mxu0
      %v8913 = vadd.f32 0.0, %v8912
      %v8914 = vpop.f32.mrf.mxu0
      %v8915 = vpop.f32.mrf.mxu0
      %v8916 = vpop.f32.mrf.mxu0
      %8917 = vdwg.mxu0
      %v8918 = vpack.c.bf16 %v8872, %v8872
      %v8919 = vpack.c.bf16 %v8874, %v8874
      %v8920 = vpack.c.bf16 %v8913, %v8913
      %s8921 = scalar_lea.vmem %s8, 288
      %v8922 = vld [vmem:[%s8921] sm:$0xf]
      %v8923 = vld [vmem:[%s8921 + $0x4] sm:$0xf]
      %v8924 = vld [vmem:[%s8921 + $0x8] sm:$0xf]
      %v8925 = vld [vmem:[%s8921 + $0xc] sm:$0xf]
      %v8926 = vld [vmem:[%s8921 + $0x10] sm:$0xf]
      %v8927 = vld [vmem:[%s8921 + $0x14] sm:$0xf]
      %v8928 = vld [vmem:[%s8921 + $0x18] sm:$0xf]
      %v8929 = vld [vmem:[%s8921 + $0x1c] sm:$0xf]
      %v8930 = vld [vmem:[%s8921 + $0x20] sm:$0xf]
      %v8931 = vld [vmem:[%s8921 + $0x24] sm:$0xf]
      %v8932 = vld [vmem:[%s8921 + $0x28] sm:$0xf]
      %v8933 = vld [vmem:[%s8921 + $0x2c] sm:$0xf]
      %v8934 = vld [vmem:[%s8921 + $0x30] sm:$0xf]
      %v8935 = vld [vmem:[%s8921 + $0x34] sm:$0xf]
      %v8936 = vld [vmem:[%s8921 + $0x38] sm:$0xf]
      %v8937 = vld [vmem:[%s8921 + $0x3c] sm:$0xf]
      %v8938 = vld [vmem:[%s8921 + $0x40] sm:$0xf]
      %v8939 = vld [vmem:[%s8921 + $0x44] sm:$0xf]
      %v8940 = vld [vmem:[%s8921 + $0x48] sm:$0xf]
      %v8941 = vld [vmem:[%s8921 + $0x4c] sm:$0xf]
      %v8942 = vld [vmem:[%s8921 + $0x50] sm:$0xf]
      %v8943 = vld [vmem:[%s8921 + $0x54] sm:$0xf]
      %v8944 = vld [vmem:[%s8921 + $0x58] sm:$0xf]
      %v8945 = vld [vmem:[%s8921 + $0x5c] sm:$0xf]
      %v8946 = vld [vmem:[%s8921 + $0x60] sm:$0xf]
      %v8947 = vld [vmem:[%s8921 + $0x64] sm:$0xf]
      %v8948 = vld [vmem:[%s8921 + $0x68] sm:$0xf]
      %v8949 = vld [vmem:[%s8921 + $0x6c] sm:$0xf]
      %v8950 = vld [vmem:[%s8921 + $0x70] sm:$0xf]
      %v8951 = vld [vmem:[%s8921 + $0x74] sm:$0xf]
      %v8952 = vld [vmem:[%s8921 + $0x78] sm:$0xf]
      %v8953 = vld [vmem:[%s8921 + $0x7c] sm:$0xf]
      %v8954 = vld [vmem:[%s8921 + $0x80] sm:$0xf]
      %v8955 = vld [vmem:[%s8921 + $0x84] sm:$0xf]
      %v8956 = vld [vmem:[%s8921 + $0x88] sm:$0xf]
      %v8957 = vld [vmem:[%s8921 + $0x8c] sm:$0xf]
      %v8994 = vunpack.c.l.b16 %v8922
      %v8995 = vunpack.c.l.b16 %v8923
      %v8996 = vunpack.c.l.b16 %v8924
      %v8997 = vunpack.c.l.b16 %v8925
      %v8998 = vunpack.c.l.b16 %v8926
      %v8999 = vunpack.c.l.b16 %v8927
      %v9000 = vunpack.c.l.b16 %v8928
      %v9001 = vunpack.c.l.b16 %v8929
      %v9002 = vunpack.c.l.b16 %v8930
      %v9003 = vunpack.c.l.b16 %v8931
      %v9004 = vunpack.c.l.b16 %v8932
      %v9005 = vunpack.c.l.b16 %v8933
      %v9006 = vunpack.c.l.b16 %v8934
      %v9007 = vunpack.c.l.b16 %v8935
      %v9008 = vunpack.c.l.b16 %v8936
      %v9009 = vunpack.c.l.b16 %v8937
      %v9010 = vunpack.c.l.b16 %v8938
      %v9011 = vunpack.c.l.b16 %v8939
      %v9012 = vunpack.c.l.b16 %v8940
      %v9013 = vunpack.c.l.b16 %v8941
      %v9014 = vunpack.c.l.b16 %v8942
      %v9015 = vunpack.c.l.b16 %v8943
      %v9016 = vunpack.c.l.b16 %v8944
      %v9017 = vunpack.c.l.b16 %v8945
      %v9018 = vunpack.c.l.b16 %v8946
      %v9019 = vunpack.c.l.b16 %v8947
      %v9020 = vunpack.c.l.b16 %v8948
      %v9021 = vunpack.c.l.b16 %v8949
      %v9022 = vunpack.c.l.b16 %v8950
      %v9023 = vunpack.c.l.b16 %v8951
      %v9024 = vunpack.c.l.b16 %v8952
      %v9025 = vunpack.c.l.b16 %v8953
      %v9026 = vunpack.c.l.b16 %v8954
      %v9027 = vunpack.c.l.b16 %v8955
      %v9028 = vunpack.c.l.b16 %v8956
      %v9029 = vunpack.c.l.b16 %v8957
      %v9030 = vpack.c.b16 %v8995, %v8994
      %v9031 = vpack.c.b16 %v8997, %v8996
      %v9032 = vpack.c.b16 %v8999, %v8998
      %v9033 = vpack.c.b16 %v9001, %v9000
      %v9034 = vpack.c.b16 %v9003, %v9002
      %v9035 = vpack.c.b16 %v9005, %v9004
      %v9036 = vpack.c.b16 %v9007, %v9006
      %v9037 = vpack.c.b16 %v9009, %v9008
      %v9038 = vpack.c.b16 %v9011, %v9010
      %v9039 = vpack.c.b16 %v9013, %v9012
      %v9040 = vpack.c.b16 %v9015, %v9014
      %v9041 = vpack.c.b16 %v9017, %v9016
      %v9042 = vpack.c.b16 %v9019, %v9018
      %v9043 = vpack.c.b16 %v9021, %v9020
      %v9044 = vpack.c.b16 %v9023, %v9022
      %v9045 = vpack.c.b16 %v9025, %v9024
      %v9046 = vpack.c.b16 %v9027, %v9026
      %v9047 = vpack.c.b16 %v9029, %v9028
      %v9067 = vsel %vm8557, %v8920, 0
      %9069 = vmatprep.subr.bf16.mxu0 0
      %9070 = vmatpush1.bf16.msra.mxu0 %v9037
      %9071 = vmatprep.subr.bf16.mxu0 0
      %9072 = vmatpush1.bf16.msra.mxu0 %v9036
      %9073 = vmatprep.subr.bf16.mxu0 0
      %9074 = vmatpush1.bf16.msra.mxu0 %v9035
      %9075 = vmatprep.subr.bf16.mxu0 0
      %9076 = vmatpush1.bf16.msra.mxu0 %v9034
      %9077 = vmatprep.subr.bf16.mxu0 0
      %9078 = vmatpush1.bf16.msra.mxu0 %v9033
      %9079 = vmatprep.subr.bf16.mxu0 0
      %9080 = vmatpush1.bf16.msra.mxu0 %v9032
      %9081 = vmatprep.subr.bf16.mxu0 0
      %9082 = vmatpush1.bf16.msra.mxu0 %v9031
      %9083 = vmatprep.subr.bf16.mxu0 0
      %9084 = vmatpush1.bf16.msra.mxu0 %v9030
      %9085 = vmatprep.subr.bf16.mxu0 0
      %9086 = vmatpush2.bf16.msra.mxu0 %v9045
      %9087 = vmatprep.subr.bf16.mxu0 0
      %9088 = vmatpush2.bf16.msra.mxu0 %v9044
      %9089 = vmatprep.subr.bf16.mxu0 0
      %9090 = vmatpush2.bf16.msra.mxu0 %v9043
      %9091 = vmatprep.subr.bf16.mxu0 0
      %9092 = vmatpush2.bf16.msra.mxu0 %v9042
      %9093 = vmatprep.subr.bf16.mxu0 0
      %9094 = vmatpush2.bf16.msra.mxu0 %v9041
      %9095 = vmatprep.subr.bf16.mxu0 0
      %9096 = vmatpush2.bf16.msra.mxu0 %v9040
      %9097 = vmatprep.subr.bf16.mxu0 0
      %9098 = vmatpush2.bf16.msra.mxu0 %v9039
      %9099 = vmatprep.subr.bf16.mxu0 0
      %9100 = vmatpush2.bf16.msra.mxu0 %v9038
      %9101 = vmatprep.mubr.bf16.mxu0 %v8919
      %9102 = vmatmul.mubr.bf16.gmra.mxu0 %v8918
      %v9103 = vpop.f32.mrf.mxu0
      %v9104 = vadd.f32 0.0, %v9103
      %v9105 = vpop.f32.mrf.mxu0
      %v9106 = vpop.f32.mrf.mxu0
      %v9107 = vpop.f32.mrf.mxu0
      %9108 = vdwg.mxu0
      %9109 = vmatprep.subr.bf16.mxu0 0
      %9110 = vmatpush1.bf16.msra.mxu0 0
      %9111 = vmatprep.subr.bf16.mxu0 0
      %9112 = vmatpush1.bf16.msra.mxu0 0
      %9113 = vmatprep.subr.bf16.mxu0 0
      %9114 = vmatpush1.bf16.msra.mxu0 0
      %9115 = vmatprep.subr.bf16.mxu0 0
      %9116 = vmatpush1.bf16.msra.mxu0 0
      %9117 = vmatprep.subr.bf16.mxu0 0
      %9118 = vmatpush1.bf16.msra.mxu0 0
      %9119 = vmatprep.subr.bf16.mxu0 0
      %9120 = vmatpush1.bf16.msra.mxu0 0
      %9121 = vmatprep.subr.bf16.mxu0 0
      %9122 = vmatpush1.bf16.msra.mxu0 %v9047
      %9123 = vmatprep.subr.bf16.mxu0 0
      %9124 = vmatpush1.bf16.msra.mxu0 %v9046
      %9125 = vmatprep.subr.bf16.mxu0 0
      %9126 = vmatpush2.bf16.msra.mxu0 0
      %9127 = vmatprep.subr.bf16.mxu0 0
      %9128 = vmatpush2.bf16.msra.mxu0 0
      %9129 = vmatprep.subr.bf16.mxu0 0
      %9130 = vmatpush2.bf16.msra.mxu0 0
      %9131 = vmatprep.subr.bf16.mxu0 0
      %9132 = vmatpush2.bf16.msra.mxu0 0
      %9133 = vmatprep.subr.bf16.mxu0 0
      %9134 = vmatpush2.bf16.msra.mxu0 0
      %9135 = vmatprep.subr.bf16.mxu0 0
      %9136 = vmatpush2.bf16.msra.mxu0 0
      %9137 = vmatprep.subr.bf16.mxu0 0
      %9138 = vmatpush2.bf16.msra.mxu0 0
      %9139 = vmatprep.subr.bf16.mxu0 0
      %9140 = vmatpush2.bf16.msra.mxu0 0
      %9141 = vmatprep.mubr.bf16.mxu0 0
      %9142 = vmatmul.mubr.bf16.gmra.mxu0 %v9067
      %v9143 = vpop.f32.mrf.mxu0
      %v9144 = vadd.f32 %v9104, %v9143
      %v9145 = vpop.f32.mrf.mxu0
      %v9146 = vpop.f32.mrf.mxu0
      %v9147 = vpop.f32.mrf.mxu0
      %9148 = vdwg.mxu0
      %v9149 = vadd.f32 %v8827, %v9144
      %v9150 = vld [vmem:[%s9] sm:$0x1]
      %v9152 = vlaneseq
      %v9153 = vshrl.u32 %v9152, 7
      %v9154 = vsub.s32 0, %v9153
      %v9155 = vrot.slane %v9150, %v9154
      %v9157 = vadd.f32 %v9149, %v9155
      %v9158 = vmax.f32 %v9157, 0.0
      %v9159 = vpack.c.bf16 %v9158, %v9158
      %v9160 = vld [vmem:[%s10] sm:$0xf]
      %v9161 = vld [vmem:[%s10 + $0x4] sm:$0xf]
      %v9162 = vld [vmem:[%s10 + $0x8] sm:$0xf]
      %v9163 = vld [vmem:[%s10 + $0xc] sm:$0xf]
      %v9164 = vld [vmem:[%s10 + $0x10] sm:$0xf]
      %v9165 = vld [vmem:[%s10 + $0x14] sm:$0xf]
      %v9166 = vld [vmem:[%s10 + $0x18] sm:$0xf]
      %v9167 = vld [vmem:[%s10 + $0x1c] sm:$0xf]
      %v9168 = vld [vmem:[%s10 + $0x20] sm:$0xf]
      %v9169 = vld [vmem:[%s10 + $0x24] sm:$0xf]
      %v9170 = vld [vmem:[%s10 + $0x28] sm:$0xf]
      %v9171 = vld [vmem:[%s10 + $0x2c] sm:$0xf]
      %v9172 = vld [vmem:[%s10 + $0x30] sm:$0xf]
      %v9173 = vld [vmem:[%s10 + $0x34] sm:$0xf]
      %v9174 = vld [vmem:[%s10 + $0x38] sm:$0xf]
      %v9175 = vld [vmem:[%s10 + $0x3c] sm:$0xf]
      %s9176 = scalar_lea.vmem %s10, 64
      %v9177 = vld [vmem:[%s9176] sm:$0xf]
      %v9178 = vld [vmem:[%s9176 + $0x4] sm:$0xf]
      %v9179 = vld [vmem:[%s9176 + $0x8] sm:$0xf]
      %v9180 = vld [vmem:[%s9176 + $0xc] sm:$0xf]
      %v9181 = vld [vmem:[%s9176 + $0x10] sm:$0xf]
      %v9182 = vld [vmem:[%s9176 + $0x14] sm:$0xf]
      %v9183 = vld [vmem:[%s9176 + $0x18] sm:$0xf]
      %v9184 = vld [vmem:[%s9176 + $0x1c] sm:$0xf]
      %v9185 = vld [vmem:[%s9176 + $0x20] sm:$0xf]
      %v9186 = vld [vmem:[%s9176 + $0x24] sm:$0xf]
      %v9187 = vld [vmem:[%s9176 + $0x28] sm:$0xf]
      %v9188 = vld [vmem:[%s9176 + $0x2c] sm:$0xf]
      %v9189 = vld [vmem:[%s9176 + $0x30] sm:$0xf]
      %v9190 = vld [vmem:[%s9176 + $0x34] sm:$0xf]
      %v9191 = vld [vmem:[%s9176 + $0x38] sm:$0xf]
      %v9192 = vld [vmem:[%s9176 + $0x3c] sm:$0xf]
      %v9194 = vshrl.u32 %v9159, 16
      %v9213 = vunpack.c.l.b16 %v9177
      %v9214 = vunpack.c.l.b16 %v9178
      %v9215 = vunpack.c.l.b16 %v9179
      %v9216 = vunpack.c.l.b16 %v9180
      %v9217 = vunpack.c.l.b16 %v9181
      %v9218 = vunpack.c.l.b16 %v9182
      %v9219 = vunpack.c.l.b16 %v9183
      %v9220 = vunpack.c.l.b16 %v9184
      %v9221 = vunpack.c.l.b16 %v9185
      %v9222 = vunpack.c.l.b16 %v9186
      %v9223 = vunpack.c.l.b16 %v9187
      %v9224 = vunpack.c.l.b16 %v9188
      %v9225 = vunpack.c.l.b16 %v9189
      %v9226 = vunpack.c.l.b16 %v9190
      %v9227 = vunpack.c.l.b16 %v9191
      %v9228 = vunpack.c.l.b16 %v9192
      %v9229 = vpack.c.b16 %v9214, %v9213
      %v9230 = vpack.c.b16 %v9216, %v9215
      %v9231 = vpack.c.b16 %v9218, %v9217
      %v9232 = vpack.c.b16 %v9220, %v9219
      %v9233 = vpack.c.b16 %v9222, %v9221
      %v9234 = vpack.c.b16 %v9224, %v9223
      %v9235 = vpack.c.b16 %v9226, %v9225
      %v9236 = vpack.c.b16 %v9228, %v9227
      %9245 = vmatprep.subr.bf16.mxu0 0
      %9246 = vmatpush1.bf16.msra.mxu0 %v9236
      %9247 = vmatprep.subr.bf16.mxu0 0
      %9248 = vmatpush1.bf16.msra.mxu0 %v9235
      %9249 = vmatprep.subr.bf16.mxu0 0
      %9250 = vmatpush1.bf16.msra.mxu0 %v9234
      %9251 = vmatprep.subr.bf16.mxu0 0
      %9252 = vmatpush1.bf16.msra.mxu0 %v9233
      %9253 = vmatprep.subr.bf16.mxu0 0
      %9254 = vmatpush1.bf16.msra.mxu0 %v9232
      %9255 = vmatprep.subr.bf16.mxu0 0
      %9256 = vmatpush1.bf16.msra.mxu0 %v9231
      %9257 = vmatprep.subr.bf16.mxu0 0
      %9258 = vmatpush1.bf16.msra.mxu0 %v9230
      %9259 = vmatprep.subr.bf16.mxu0 0
      %9260 = vmatpush1.bf16.msra.mxu0 %v9229
      %9261 = vmatprep.subr.bf16.mxu0 0
      %9262 = vmatpush2.bf16.msra.mxu0 0
      %9263 = vmatprep.subr.bf16.mxu0 0
      %9264 = vmatpush2.bf16.msra.mxu0 0
      %9265 = vmatprep.subr.bf16.mxu0 0
      %9266 = vmatpush2.bf16.msra.mxu0 0
      %9267 = vmatprep.subr.bf16.mxu0 0
      %9268 = vmatpush2.bf16.msra.mxu0 0
      %9269 = vmatprep.subr.bf16.mxu0 0
      %9270 = vmatpush2.bf16.msra.mxu0 0
      %9271 = vmatprep.subr.bf16.mxu0 0
      %9272 = vmatpush2.bf16.msra.mxu0 0
      %9273 = vmatprep.subr.bf16.mxu0 0
      %9274 = vmatpush2.bf16.msra.mxu0 0
      %9275 = vmatprep.subr.bf16.mxu0 0
      %9276 = vmatpush2.bf16.msra.mxu0 0
      %9277 = vmatprep.mubr.bf16.mxu0 0
      %9278 = vmatmul.mubr.bf16.gmra.mxu0 %v9194
      %v9279 = vpop.f32.mrf.mxu0
      %v9280 = vadd.f32 0.0, %v9279
      %v9281 = vpop.f32.mrf.mxu0
      %v9282 = vpop.f32.mrf.mxu0
      %v9283 = vpop.f32.mrf.mxu0
      %9284 = vdwg.mxu0
      %v9301 = vunpack.c.l.b16 %v9160
      %v9302 = vunpack.c.l.b16 %v9161
      %v9303 = vunpack.c.l.b16 %v9162
      %v9304 = vunpack.c.l.b16 %v9163
      %v9305 = vunpack.c.l.b16 %v9164
      %v9306 = vunpack.c.l.b16 %v9165
      %v9307 = vunpack.c.l.b16 %v9166
      %v9308 = vunpack.c.l.b16 %v9167
      %v9309 = vunpack.c.l.b16 %v9168
      %v9310 = vunpack.c.l.b16 %v9169
      %v9311 = vunpack.c.l.b16 %v9170
      %v9312 = vunpack.c.l.b16 %v9171
      %v9313 = vunpack.c.l.b16 %v9172
      %v9314 = vunpack.c.l.b16 %v9173
      %v9315 = vunpack.c.l.b16 %v9174
      %v9316 = vunpack.c.l.b16 %v9175
      %v9317 = vpack.c.b16 %v9302, %v9301
      %v9318 = vpack.c.b16 %v9304, %v9303
      %v9319 = vpack.c.b16 %v9306, %v9305
      %v9320 = vpack.c.b16 %v9308, %v9307
      %v9321 = vpack.c.b16 %v9310, %v9309
      %v9322 = vpack.c.b16 %v9312, %v9311
      %v9323 = vpack.c.b16 %v9314, %v9313
      %v9324 = vpack.c.b16 %v9316, %v9315
      %9333 = vmatprep.subr.bf16.mxu0 0
      %9334 = vmatpush1.bf16.msra.mxu0 %v9324
      %9335 = vmatprep.subr.bf16.mxu0 0
      %9336 = vmatpush1.bf16.msra.mxu0 %v9323
      %9337 = vmatprep.subr.bf16.mxu0 0
      %9338 = vmatpush1.bf16.msra.mxu0 %v9322
      %9339 = vmatprep.subr.bf16.mxu0 0
      %9340 = vmatpush1.bf16.msra.mxu0 %v9321
      %9341 = vmatprep.subr.bf16.mxu0 0
      %9342 = vmatpush1.bf16.msra.mxu0 %v9320
      %9343 = vmatprep.subr.bf16.mxu0 0
      %9344 = vmatpush1.bf16.msra.mxu0 %v9319
      %9345 = vmatprep.subr.bf16.mxu0 0
      %9346 = vmatpush1.bf16.msra.mxu0 %v9318
      %9347 = vmatprep.subr.bf16.mxu0 0
      %9348 = vmatpush1.bf16.msra.mxu0 %v9317
      %9349 = vmatprep.subr.bf16.mxu0 0
      %9350 = vmatpush2.bf16.msra.mxu0 0
      %9351 = vmatprep.subr.bf16.mxu0 0
      %9352 = vmatpush2.bf16.msra.mxu0 0
      %9353 = vmatprep.subr.bf16.mxu0 0
      %9354 = vmatpush2.bf16.msra.mxu0 0
      %9355 = vmatprep.subr.bf16.mxu0 0
      %9356 = vmatpush2.bf16.msra.mxu0 0
      %9357 = vmatprep.subr.bf16.mxu0 0
      %9358 = vmatpush2.bf16.msra.mxu0 0
      %9359 = vmatprep.subr.bf16.mxu0 0
      %9360 = vmatpush2.bf16.msra.mxu0 0
      %9361 = vmatprep.subr.bf16.mxu0 0
      %9362 = vmatpush2.bf16.msra.mxu0 0
      %9363 = vmatprep.subr.bf16.mxu0 0
      %9364 = vmatpush2.bf16.msra.mxu0 0
      %9365 = vmatprep.mubr.bf16.mxu0 0
      %9366 = vmatmul.mubr.bf16.gmra.mxu0 %v9159
      %v9367 = vpop.f32.mrf.mxu0
      %v9368 = vadd.f32 %v9280, %v9367
      %v9369 = vpop.f32.mrf.mxu0
      %v9370 = vpop.f32.mrf.mxu0
      %v9371 = vpop.f32.mrf.mxu0
      %9372 = vdwg.mxu0
      %s9373 = scalar_lea.vmem %s10, 128
      %v9374 = vld [vmem:[%s9373] sm:$0xf]
      %v9375 = vld [vmem:[%s9373 + $0x4] sm:$0xf]
      %v9376 = vld [vmem:[%s9373 + $0x8] sm:$0xf]
      %v9377 = vld [vmem:[%s9373 + $0xc] sm:$0xf]
      %v9378 = vld [vmem:[%s9373 + $0x10] sm:$0xf]
      %v9379 = vld [vmem:[%s9373 + $0x14] sm:$0xf]
      %v9380 = vld [vmem:[%s9373 + $0x18] sm:$0xf]
      %v9381 = vld [vmem:[%s9373 + $0x1c] sm:$0xf]
      %v9382 = vld [vmem:[%s9373 + $0x20] sm:$0xf]
      %v9383 = vld [vmem:[%s9373 + $0x24] sm:$0xf]
      %v9384 = vld [vmem:[%s9373 + $0x28] sm:$0xf]
      %v9385 = vld [vmem:[%s9373 + $0x2c] sm:$0xf]
      %v9386 = vld [vmem:[%s9373 + $0x30] sm:$0xf]
      %v9387 = vld [vmem:[%s9373 + $0x34] sm:$0xf]
      %v9388 = vld [vmem:[%s9373 + $0x38] sm:$0xf]
      %v9389 = vld [vmem:[%s9373 + $0x3c] sm:$0xf]
      %v9391 = vrot.slane %v9159, 1
      %v9409 = vunpack.c.l.b16 %v9374
      %v9410 = vunpack.c.l.b16 %v9375
      %v9411 = vunpack.c.l.b16 %v9376
      %v9412 = vunpack.c.l.b16 %v9377
      %v9413 = vunpack.c.l.b16 %v9378
      %v9414 = vunpack.c.l.b16 %v9379
      %v9415 = vunpack.c.l.b16 %v9380
      %v9416 = vunpack.c.l.b16 %v9381
      %v9417 = vunpack.c.l.b16 %v9382
      %v9418 = vunpack.c.l.b16 %v9383
      %v9419 = vunpack.c.l.b16 %v9384
      %v9420 = vunpack.c.l.b16 %v9385
      %v9421 = vunpack.c.l.b16 %v9386
      %v9422 = vunpack.c.l.b16 %v9387
      %v9423 = vunpack.c.l.b16 %v9388
      %v9424 = vunpack.c.l.b16 %v9389
      %v9425 = vpack.c.b16 %v9410, %v9409
      %v9426 = vpack.c.b16 %v9412, %v9411
      %v9427 = vpack.c.b16 %v9414, %v9413
      %v9428 = vpack.c.b16 %v9416, %v9415
      %v9429 = vpack.c.b16 %v9418, %v9417
      %v9430 = vpack.c.b16 %v9420, %v9419
      %v9431 = vpack.c.b16 %v9422, %v9421
      %v9432 = vpack.c.b16 %v9424, %v9423
      %9441 = vmatprep.subr.bf16.mxu0 0
      %9442 = vmatpush1.bf16.msra.mxu0 %v9432
      %9443 = vmatprep.subr.bf16.mxu0 0
      %9444 = vmatpush1.bf16.msra.mxu0 %v9431
      %9445 = vmatprep.subr.bf16.mxu0 0
      %9446 = vmatpush1.bf16.msra.mxu0 %v9430
      %9447 = vmatprep.subr.bf16.mxu0 0
      %9448 = vmatpush1.bf16.msra.mxu0 %v9429
      %9449 = vmatprep.subr.bf16.mxu0 0
      %9450 = vmatpush1.bf16.msra.mxu0 %v9428
      %9451 = vmatprep.subr.bf16.mxu0 0
      %9452 = vmatpush1.bf16.msra.mxu0 %v9427
      %9453 = vmatprep.subr.bf16.mxu0 0
      %9454 = vmatpush1.bf16.msra.mxu0 %v9426
      %9455 = vmatprep.subr.bf16.mxu0 0
      %9456 = vmatpush1.bf16.msra.mxu0 %v9425
      %9457 = vmatprep.subr.bf16.mxu0 0
      %9458 = vmatpush2.bf16.msra.mxu0 0
      %9459 = vmatprep.subr.bf16.mxu0 0
      %9460 = vmatpush2.bf16.msra.mxu0 0
      %9461 = vmatprep.subr.bf16.mxu0 0
      %9462 = vmatpush2.bf16.msra.mxu0 0
      %9463 = vmatprep.subr.bf16.mxu0 0
      %9464 = vmatpush2.bf16.msra.mxu0 0
      %9465 = vmatprep.subr.bf16.mxu0 0
      %9466 = vmatpush2.bf16.msra.mxu0 0
      %9467 = vmatprep.subr.bf16.mxu0 0
      %9468 = vmatpush2.bf16.msra.mxu0 0
      %9469 = vmatprep.subr.bf16.mxu0 0
      %9470 = vmatpush2.bf16.msra.mxu0 0
      %9471 = vmatprep.subr.bf16.mxu0 0
      %9472 = vmatpush2.bf16.msra.mxu0 0
      %9473 = vmatprep.mubr.bf16.mxu0 0
      %9474 = vmatmul.mubr.bf16.gmra.mxu0 %v9391
      %v9475 = vpop.f32.mrf.mxu0
      %v9476 = vadd.f32 0.0, %v9475
      %v9477 = vpop.f32.mrf.mxu0
      %v9478 = vpop.f32.mrf.mxu0
      %v9479 = vpop.f32.mrf.mxu0
      %9480 = vdwg.mxu0
      %v9481 = vadd.f32 %v9368, %v9476
      %s9482 = scalar_lea.vmem %s10, 192
      %v9483 = vld [vmem:[%s9482] sm:$0xf]
      %v9484 = vld [vmem:[%s9482 + $0x4] sm:$0xf]
      %v9485 = vld [vmem:[%s9482 + $0x8] sm:$0xf]
      %v9486 = vld [vmem:[%s9482 + $0xc] sm:$0xf]
      %v9487 = vld [vmem:[%s9482 + $0x10] sm:$0xf]
      %v9488 = vld [vmem:[%s9482 + $0x14] sm:$0xf]
      %v9489 = vld [vmem:[%s9482 + $0x18] sm:$0xf]
      %v9490 = vld [vmem:[%s9482 + $0x1c] sm:$0xf]
      %v9491 = vld [vmem:[%s9482 + $0x20] sm:$0xf]
      %v9492 = vld [vmem:[%s9482 + $0x24] sm:$0xf]
      %v9493 = vld [vmem:[%s9482 + $0x28] sm:$0xf]
      %v9494 = vld [vmem:[%s9482 + $0x2c] sm:$0xf]
      %v9495 = vld [vmem:[%s9482 + $0x30] sm:$0xf]
      %v9496 = vld [vmem:[%s9482 + $0x34] sm:$0xf]
      %v9497 = vld [vmem:[%s9482 + $0x38] sm:$0xf]
      %v9498 = vld [vmem:[%s9482 + $0x3c] sm:$0xf]
      %v9499 = vrot.slane %v9194, 1
      %v9517 = vunpack.c.l.b16 %v9483
      %v9518 = vunpack.c.l.b16 %v9484
      %v9519 = vunpack.c.l.b16 %v9485
      %v9520 = vunpack.c.l.b16 %v9486
      %v9521 = vunpack.c.l.b16 %v9487
      %v9522 = vunpack.c.l.b16 %v9488
      %v9523 = vunpack.c.l.b16 %v9489
      %v9524 = vunpack.c.l.b16 %v9490
      %v9525 = vunpack.c.l.b16 %v9491
      %v9526 = vunpack.c.l.b16 %v9492
      %v9527 = vunpack.c.l.b16 %v9493
      %v9528 = vunpack.c.l.b16 %v9494
      %v9529 = vunpack.c.l.b16 %v9495
      %v9530 = vunpack.c.l.b16 %v9496
      %v9531 = vunpack.c.l.b16 %v9497
      %v9532 = vunpack.c.l.b16 %v9498
      %v9533 = vpack.c.b16 %v9518, %v9517
      %v9534 = vpack.c.b16 %v9520, %v9519
      %v9535 = vpack.c.b16 %v9522, %v9521
      %v9536 = vpack.c.b16 %v9524, %v9523
      %v9537 = vpack.c.b16 %v9526, %v9525
      %v9538 = vpack.c.b16 %v9528, %v9527
      %v9539 = vpack.c.b16 %v9530, %v9529
      %v9540 = vpack.c.b16 %v9532, %v9531
      %9549 = vmatprep.subr.bf16.mxu0 0
      %9550 = vmatpush1.bf16.msra.mxu0 %v9540
      %9551 = vmatprep.subr.bf16.mxu0 0
      %9552 = vmatpush1.bf16.msra.mxu0 %v9539
      %9553 = vmatprep.subr.bf16.mxu0 0
      %9554 = vmatpush1.bf16.msra.mxu0 %v9538
      %9555 = vmatprep.subr.bf16.mxu0 0
      %9556 = vmatpush1.bf16.msra.mxu0 %v9537
      %9557 = vmatprep.subr.bf16.mxu0 0
      %9558 = vmatpush1.bf16.msra.mxu0 %v9536
      %9559 = vmatprep.subr.bf16.mxu0 0
      %9560 = vmatpush1.bf16.msra.mxu0 %v9535
      %9561 = vmatprep.subr.bf16.mxu0 0
      %9562 = vmatpush1.bf16.msra.mxu0 %v9534
      %9563 = vmatprep.subr.bf16.mxu0 0
      %9564 = vmatpush1.bf16.msra.mxu0 %v9533
      %9565 = vmatprep.subr.bf16.mxu0 0
      %9566 = vmatpush2.bf16.msra.mxu0 0
      %9567 = vmatprep.subr.bf16.mxu0 0
      %9568 = vmatpush2.bf16.msra.mxu0 0
      %9569 = vmatprep.subr.bf16.mxu0 0
      %9570 = vmatpush2.bf16.msra.mxu0 0
      %9571 = vmatprep.subr.bf16.mxu0 0
      %9572 = vmatpush2.bf16.msra.mxu0 0
      %9573 = vmatprep.subr.bf16.mxu0 0
      %9574 = vmatpush2.bf16.msra.mxu0 0
      %9575 = vmatprep.subr.bf16.mxu0 0
      %9576 = vmatpush2.bf16.msra.mxu0 0
      %9577 = vmatprep.subr.bf16.mxu0 0
      %9578 = vmatpush2.bf16.msra.mxu0 0
      %9579 = vmatprep.subr.bf16.mxu0 0
      %9580 = vmatpush2.bf16.msra.mxu0 0
      %9581 = vmatprep.mubr.bf16.mxu0 0
      %9582 = vmatmul.mubr.bf16.gmra.mxu0 %v9499
      %v9583 = vpop.f32.mrf.mxu0
      %v9584 = vadd.f32 0.0, %v9583
      %v9585 = vpop.f32.mrf.mxu0
      %v9586 = vpop.f32.mrf.mxu0
      %v9587 = vpop.f32.mrf.mxu0
      %9588 = vdwg.mxu0
      %v9589 = vadd.f32 %v9481, %v9584
      %v9590 = vld [vmem:[%s11] sm:$0x1]
      %v9591 = vadd.f32 %v9589, %v9590
      %v9592 = vmax.f32 %v9591, 0.0
      %v9593 = vpack.c.bf16 %v9592, %v9592
      %v9594 = vld [vmem:[%s12] sm:$0xf]
      %v9595 = vld [vmem:[%s12 + $0x4] sm:$0xf]
      %v9596 = vld [vmem:[%s12 + $0x8] sm:$0xf]
      %v9597 = vld [vmem:[%s12 + $0xc] sm:$0xf]
      %v9598 = vld [vmem:[%s12 + $0x10] sm:$0xf]
      %v9599 = vld [vmem:[%s12 + $0x14] sm:$0xf]
      %v9600 = vld [vmem:[%s12 + $0x18] sm:$0xf]
      %v9601 = vld [vmem:[%s12 + $0x1c] sm:$0xf]
      %v9602 = vld [vmem:[%s12 + $0x20] sm:$0xf]
      %v9603 = vld [vmem:[%s12 + $0x24] sm:$0xf]
      %v9604 = vld [vmem:[%s12 + $0x28] sm:$0xf]
      %v9605 = vld [vmem:[%s12 + $0x2c] sm:$0xf]
      %v9606 = vld [vmem:[%s12 + $0x30] sm:$0xf]
      %v9607 = vld [vmem:[%s12 + $0x34] sm:$0xf]
      %v9608 = vld [vmem:[%s12 + $0x38] sm:$0xf]
      %v9609 = vld [vmem:[%s12 + $0x3c] sm:$0xf]
      %v9610 = vld [vmem:[%s13] sm:$0x1]
      %v9627 = vunpack.c.l.b16 %v9594
      %v9628 = vunpack.c.l.b16 %v9595
      %v9629 = vunpack.c.l.b16 %v9596
      %v9630 = vunpack.c.l.b16 %v9597
      %v9631 = vunpack.c.l.b16 %v9598
      %v9632 = vunpack.c.l.b16 %v9599
      %v9633 = vunpack.c.l.b16 %v9600
      %v9634 = vunpack.c.l.b16 %v9601
      %v9635 = vunpack.c.l.b16 %v9602
      %v9636 = vunpack.c.l.b16 %v9603
      %v9637 = vunpack.c.l.b16 %v9604
      %v9638 = vunpack.c.l.b16 %v9605
      %v9639 = vunpack.c.l.b16 %v9606
      %v9640 = vunpack.c.l.b16 %v9607
      %v9641 = vunpack.c.l.b16 %v9608
      %v9642 = vunpack.c.l.b16 %v9609
      %v9643 = vpack.c.b16 %v9628, %v9627
      %v9644 = vpack.c.b16 %v9630, %v9629
      %v9645 = vpack.c.b16 %v9632, %v9631
      %v9646 = vpack.c.b16 %v9634, %v9633
      %v9647 = vpack.c.b16 %v9636, %v9635
      %v9648 = vpack.c.b16 %v9638, %v9637
      %v9649 = vpack.c.b16 %v9640, %v9639
      %v9650 = vpack.c.b16 %v9642, %v9641
      %9659 = vmatprep.subr.bf16.mxu0 0
      %9660 = vmatpush1.bf16.msra.mxu0 %v9650
      %9661 = vmatprep.subr.bf16.mxu0 0
      %9662 = vmatpush1.bf16.msra.mxu0 %v9649
      %9663 = vmatprep.subr.bf16.mxu0 0
      %9664 = vmatpush1.bf16.msra.mxu0 %v9648
      %9665 = vmatprep.subr.bf16.mxu0 0
      %9666 = vmatpush1.bf16.msra.mxu0 %v9647
      %9667 = vmatprep.subr.bf16.mxu0 0
      %9668 = vmatpush1.bf16.msra.mxu0 %v9646
      %9669 = vmatprep.subr.bf16.mxu0 0
      %9670 = vmatpush1.bf16.msra.mxu0 %v9645
      %9671 = vmatprep.subr.bf16.mxu0 0
      %9672 = vmatpush1.bf16.msra.mxu0 %v9644
      %9673 = vmatprep.subr.bf16.mxu0 0
      %9674 = vmatpush1.bf16.msra.mxu0 %v9643
      %9675 = vmatprep.subr.bf16.mxu0 0
      %9676 = vmatpush2.bf16.msra.mxu0 0
      %9677 = vmatprep.subr.bf16.mxu0 0
      %9678 = vmatpush2.bf16.msra.mxu0 0
      %9679 = vmatprep.subr.bf16.mxu0 0
      %9680 = vmatpush2.bf16.msra.mxu0 0
      %9681 = vmatprep.subr.bf16.mxu0 0
      %9682 = vmatpush2.bf16.msra.mxu0 0
      %9683 = vmatprep.subr.bf16.mxu0 0
      %9684 = vmatpush2.bf16.msra.mxu0 0
      %9685 = vmatprep.subr.bf16.mxu0 0
      %9686 = vmatpush2.bf16.msra.mxu0 0
      %9687 = vmatprep.subr.bf16.mxu0 0
      %9688 = vmatpush2.bf16.msra.mxu0 0
      %9689 = vmatprep.subr.bf16.mxu0 0
      %9690 = vmatpush2.bf16.msra.mxu0 0
      %9691 = vmatprep.mubr.bf16.mxu0 0
      %9692 = vmatmul.mubr.bf16.gmra.mxu0 %v9593
      %v9693 = vpop.f32.mrf.mxu0
      %v9694 = vadd.f32 %v9610, %v9693
      %v9695 = vpop.f32.mrf.mxu0
      %v9696 = vpop.f32.mrf.mxu0
      %v9697 = vpop.f32.mrf.mxu0
      %9698 = vdwg.mxu0
      %v9699 = vlaneseq
      %v9700 = vshrl.u32 %v9699, 7
      %v9701 = vsub.s32 0, %v9700
      %v9702 = vrot.slane %v9694, %v9701
      %9703 = vst [vmem:[%s465] sm:$0xff] %v9702
      %p9704 = scmp.lt.s32.totalorder %s25, 1
      %s9705 = scalar_select %p9704, %s25, 1
      %s9706 = smul.addr %s9705, 8
      %s9707 = scalar_lea.vmem %s14, %s9706
      // Predicated region
      $region77: #{network_forward.1} parent=75 // pred_check
        %p9708 = pneg %p342
      $region78: #{network_forward.1} parent=75 // pred_check_branch
        %9710 = sbr.rel (%p9708) target = $region80
      $region79: #{network_forward.1} parent=75 // pred_region
        _
      $region80: #{network_forward.1} parent=75 // pred_fallthru
        _
    $region76: #{network_forward.1} parent=5 // pred_fallthru
      _
    %p9711 = scmp.le.s32.totalorder 2, %s20
    // Predicated region
    $region81: #{network_forward.1} parent=5 // pred_check
      %p9712 = pneg %p9711
    $region82: #{network_forward.1} parent=5 // pred_check_branch
      %9714 = sbr.rel (%p9712) target = $region84
    $region83: #{network_forward.1} parent=5 // pred_region
      %s9715 = ssub.s32 %s20, 2
      // Predicated region
      $region85: #{network_forward.1} parent=83 // pred_check
        %p9716 = pneg %p348
      $region86: #{network_forward.1} parent=83 // pred_check_branch
        %9718 = sbr.rel (%p9716) target = $region88
      $region87: #{network_forward.1} parent=83 // pred_region
        %p9719 = scmp.lt.s32.totalorder %s26, 1
        %s9720 = scalar_select %p9719, %s26, 1
        %s9721 = smul.addr %s9720, 8
        %s9722 = scalar_lea.vmem %s14, %s9721
      $region88: #{network_forward.1} parent=83 // pred_fallthru
        _
    $region84: #{network_forward.1} parent=5 // pred_fallthru
      _
  $region6: #{network_forward.1} parent=0 // loop_footer
    %s24 = sadd.s32 1, %s20
  $region7: #{network_forward.1} parent=0 // loop_footer_branch
    %19 = sbr.rel target = $region3
  $region8: #{network_forward.1} parent=0 // loop_exit
    _

</llo_original>
